<compile_context>
chip_gen: v7x
topology: tpu7x:2x2x1
jax: 0.10.0
libtpu: 0.0.40
codegen_flags: <defaults>
</compile_context>

<pallas_src>
import functools

import jax
import jax.numpy as jnp
from jax.experimental import pallas as pl
from jax.experimental.pallas import tpu as pltpu

# Small synthetic config (DCGAN default is nz=100, ngf=64, nc=3).
CONFIG = {"nz": 16, "ngf": 8, "nc": 3}

_BN_EPS = 1e-5


def _pad_ch(c):
    """Pad a channel count to >=32 so every conv matmul output (4 * c_pad
    columns) is a multiple of 128 lanes."""
    return max(32, c)


# ---------------------------------------------------------------------------
# In-kernel math helpers
# ---------------------------------------------------------------------------
def _bn_relu_math(x, gamma, beta):
    """Training-mode BatchNorm2d (batch stats, biased variance, eps=1e-5) +
    ReLU on a lane-dense f32 slab x of shape (R, L) where the channel of an
    element is (lane % C), C = gamma.shape[1].  Per-channel fold / broadcast
    uses two tiny MXU matmuls so no lane<->sublane relayouts are needed."""
    R, L = x.shape
    C = gamma.shape[1]
    assert L % C == 0 and (C & (C - 1)) == 0
    count = float(R * (L // C))

    # fold[l, c]  = 1.0 iff (l mod C) == c        (L, C)
    lane_f = jax.lax.broadcasted_iota(jnp.int32, (L, C), 0) & (C - 1)
    ch_f = jax.lax.broadcasted_iota(jnp.int32, (L, C), 1)
    fold = jnp.where(lane_f == ch_f, 1.0, 0.0).astype(jnp.float32)
    # unfold[c, l] = 1.0 iff (l mod C) == c        (C, L)
    lane_u = jax.lax.broadcasted_iota(jnp.int32, (C, L), 1) & (C - 1)
    ch_u = jax.lax.broadcasted_iota(jnp.int32, (C, L), 0)
    unfold = jnp.where(lane_u == ch_u, 1.0, 0.0).astype(jnp.float32)

    s = jnp.sum(x, axis=0, keepdims=True)          # (1, L)
    sq = jnp.sum(x * x, axis=0, keepdims=True)     # (1, L)
    stats = jnp.dot(jnp.concatenate([s, sq], axis=0), fold,
                    preferred_element_type=jnp.float32)            # (2, C)
    mean = stats[0:1] / count
    var = jnp.maximum(stats[1:2] / count - mean * mean, 0.0)       # biased var
    inv = jax.lax.rsqrt(var + _BN_EPS)
    scale_c = gamma * inv                                          # (1, C)
    shift_c = beta - mean * scale_c                                # (1, C)
    sl = jnp.dot(jnp.concatenate([scale_c, shift_c], axis=0), unfold,
                 preferred_element_type=jnp.float32)               # (2, L)
    return jnp.maximum(x * sl[0:1] + sl[1:2], 0.0)


# ---------------------------------------------------------------------------
# Pallas kernels
# ---------------------------------------------------------------------------
def stem_kernel(x_ref, w_ref, gamma_ref, beta_ref, o_ref):
    # Layer 0: ConvT(nz->C0, k=4, s=1, p=0) on a 1x1 input is a plain matmul
    # (B, nz) @ (nz, 16*C0) with columns ordered (kh, kw, cout); BN + ReLU fused.
    h = jnp.dot(x_ref[...], w_ref[...], preferred_element_type=jnp.float32)
    o_ref[...] = _bn_relu_math(h, gamma_ref[...], beta_ref[...]).astype(o_ref.dtype)


def matmul_kernel(a_ref, b_ref, o_ref):
    # K always fits a single block here -> no accumulator scratch / pl.when.
    o_ref[...] = jnp.dot(a_ref[...], b_ref[...],
                         preferred_element_type=jnp.float32)


def bn_relu_kernel(x_ref, gamma_ref, beta_ref, o_ref):
    o_ref[...] = _bn_relu_math(x_ref[...], gamma_ref[...],
                               beta_ref[...]).astype(o_ref.dtype)


def tanh_kernel(x_ref, o_ref):
    o_ref[...] = jnp.tanh(x_ref[...])


# ---------------------------------------------------------------------------
# Pallas wrappers
# ---------------------------------------------------------------------------
def pallas_stem(x, w, gamma, beta):
    """x: (B, nz) bf16, w: (nz, 16*C0) bf16, gamma/beta: (1, C0) f32
    -> (B, 16*C0) bf16 (ConvT layer 0 + BN + ReLU, fully fused)."""
    B, K = x.shape
    _, N = w.shape
    C = gamma.shape[1]
    return pl.pallas_call(
        stem_kernel,
        out_shape=jax.ShapeDtypeStruct((B, N), jnp.bfloat16),
        grid_spec=pltpu.PrefetchScalarGridSpec(
            num_scalar_prefetch=0,
            grid=(1,),
            in_specs=[pl.BlockSpec((B, K), lambda i: (0, 0)),
                      pl.BlockSpec((K, N), lambda i: (0, 0)),
                      pl.BlockSpec((1, C), lambda i: (0, 0)),
                      pl.BlockSpec((1, C), lambda i: (0, 0))],
            out_specs=pl.BlockSpec((B, N), lambda i: (0, 0))),
    )(x, w, gamma, beta)


def pallas_matmul(a, b):
    """a: (M, K) bf16, b: (K, N) bf16 -> (M, N) f32.  Full-K / full-N blocks;
    M split into >=2 parallel blocks on the large layers (v7x megacore)."""
    M, K = a.shape
    K2, N = b.shape
    assert K == K2
    tm = M if M <= 256 else M // 2
    return pl.pallas_call(
        matmul_kernel,
        out_shape=jax.ShapeDtypeStruct((M, N), jnp.float32),
        grid_spec=pltpu.PrefetchScalarGridSpec(
            num_scalar_prefetch=0,
            grid=(M // tm,),
            in_specs=[pl.BlockSpec((tm, K), lambda i: (i, 0)),
                      pl.BlockSpec((K, N), lambda i: (0, 0))],
            out_specs=pl.BlockSpec((tm, N), lambda i: (i, 0))),
        compiler_params=pltpu.CompilerParams(
            dimension_semantics=("parallel",)),
        cost_estimate=pl.CostEstimate(
            flops=2 * M * N * K,
            transcendentals=0,
            bytes_accessed=2 * M * K + 2 * K * N + 4 * M * N),
    )(a, b)


def pallas_bn_relu(x, gamma, beta):
    """x: (M, 128) f32 lane-dense conv output (channel = lane % C).
    Single fused stats+apply BatchNorm2d + ReLU; bf16 output."""
    M, L = x.shape
    C = gamma.shape[0]
    g = gamma.reshape(1, C).astype(jnp.float32)
    bt = beta.reshape(1, C).astype(jnp.float32)
    return pl.pallas_call(
        bn_relu_kernel,
        out_shape=jax.ShapeDtypeStruct((M, L), jnp.bfloat16),
        grid_spec=pltpu.PrefetchScalarGridSpec(
            num_scalar_prefetch=0,
            grid=(1,),
            in_specs=[pl.BlockSpec((M, L), lambda i: (0, 0)),
                      pl.BlockSpec((1, C), lambda i: (0, 0)),
                      pl.BlockSpec((1, C), lambda i: (0, 0))],
            out_specs=pl.BlockSpec((M, L), lambda i: (0, 0))),
    )(x, g, bt)


def pallas_tanh(x):
    """Tiled, lane-dense elementwise tanh over a (M, 128) f32 slab."""
    M, N = x.shape
    tm = M if M <= 512 else M // 2
    return pl.pallas_call(
        tanh_kernel,
        out_shape=jax.ShapeDtypeStruct((M, N), x.dtype),
        grid_spec=pltpu.PrefetchScalarGridSpec(
            num_scalar_prefetch=0,
            grid=(M // tm,),
            in_specs=[pl.BlockSpec((tm, N), lambda i: (i, 0))],
            out_specs=pl.BlockSpec((tm, N), lambda i: (i, 0))),
        compiler_params=pltpu.CompilerParams(
            dimension_semantics=("parallel",)),
        cost_estimate=pl.CostEstimate(
            flops=0, transcendentals=M * N, bytes_accessed=8 * M * N),
    )(x)


# ---------------------------------------------------------------------------
# XLA-side layout glue (pure data movement, fuses into ~1 copy kernel each)
# ---------------------------------------------------------------------------
def _im2col3x3(a_sp):
    """(B, H, W, C) -> (B*H*W, 9*C): overlapping 3x3 patches of the 1-padded
    input, channels innermost, tap order (dh, dw)."""
    # TODO(synk): patch extraction (pad + 9 shifted slices) stays in XLA; an
    # in-kernel gather would require lane/sublane relayout reshapes in Mosaic.
    B, H, W, C = a_sp.shape
    xp = jnp.pad(a_sp, ((0, 0), (1, 1), (1, 1), (0, 0)))
    cols = [xp[:, dh:dh + H, dw:dw + W, :]
            for dh in range(3) for dw in range(3)]
    return jnp.concatenate(cols, axis=-1).reshape(B * H * W, 9 * C)


def _depth_to_space(t):
    """(B, H, W, 2, 2, C) parity tensor -> (B, 2H, 2W, C) spatial tensor."""
    B, H, W, _, _, C = t.shape
    return t.transpose(0, 1, 3, 2, 4, 5).reshape(B, 2 * H, 2 * W, C)


# ---------------------------------------------------------------------------
# Parameters
# ---------------------------------------------------------------------------
def _build_parity_weight(w, cin_pad, cout_pad):
    """PyTorch ConvTranspose2d weight (cin, cout, 4, 4) with stride 2, pad 1
    -> (9*cin_pad, 4*cout_pad) matmul weight for the 3x3-patch parity form:
       out[b, 2m+py, 2n+px, co] =
           sum_{dh,dw,ci} xpad[b, m+dh, n+dw, ci] * w[ci, co, 3+py-2dh, 3+px-2dw]
    (taps with kernel index outside [0,3] and padded channels are zero)."""
    cin, cout = w.shape[0], w.shape[1]
    big = jnp.zeros((3, 3, cin_pad, 2, 2, cout_pad), jnp.float32)
    for dh in range(3):
        for py in range(2):
            kh = 3 + py - 2 * dh
            if kh < 0 or kh > 3:
                continue
            for dw in range(3):
                for px in range(2):
                    kw = 3 + px - 2 * dw
                    if kw < 0 or kw > 3:
                        continue
                    big = big.at[dh, dw, :cin, py, px, :cout].set(w[:, :, kh, kw])
    return big.reshape(9 * cin_pad, 4 * cout_pad).astype(jnp.bfloat16)


def _layer_channels():
    nz, ngf, nc = CONFIG["nz"], CONFIG["ngf"], CONFIG["nc"]
    return [(nz, ngf * 8), (ngf * 8, ngf * 4), (ngf * 4, ngf * 2),
            (ngf * 2, ngf), (ngf, nc)]


def init_params(key):
    chans = _layer_channels()
    ws, gammas, betas = [], [], []
    for i, (cin, cout) in enumerate(chans):
        key, k1, k2 = jax.random.split(key, 3)
        # DCGAN init: conv weights ~ N(0, 0.02), BN gamma ~ N(1, 0.02), beta=0.
        w = 0.02 * jax.random.normal(k1, (cin, cout, 4, 4), jnp.float32)
        if i == 0:
            # Stem matmul layout (nz, kh*kw*cout) with cout innermost.
            ws.append(w.transpose(0, 2, 3, 1).reshape(cin, 16 * cout)
                      .astype(jnp.bfloat16))
        else:
            cin_pad = _pad_ch(chans[i - 1][1])
            ws.append(_build_parity_weight(w, cin_pad, _pad_ch(cout)))
        if i < len(chans) - 1:
            cpad = _pad_ch(cout)
            g = jnp.ones((cpad,), jnp.float32)
            g = g.at[:cout].set(
                1.0 + 0.02 * jax.random.normal(k2, (cout,), jnp.float32))
            gammas.append(g)
            betas.append(jnp.zeros((cpad,), jnp.float32))
    return {"w": ws, "gamma": gammas, "beta": betas}


# ---------------------------------------------------------------------------
# Generator forward
# ---------------------------------------------------------------------------
def generator_forward(x, params):
    """x: (B, nz, 1, 1) NCHW -> (B, nc, 64, 64) NCHW (PyTorch-compatible)."""
    nz, nc = CONFIG["nz"], CONFIG["nc"]
    chans = _layer_channels()
    B = x.shape[0]
    c0 = chans[0][1]

    # Layer 0 (ConvT 1x1 -> 4x4) + BN + ReLU: one fused stem kernel.
    g0 = params["gamma"][0].reshape(1, c0).astype(jnp.float32)
    b0 = params["beta"][0].reshape(1, c0).astype(jnp.float32)
    a = pallas_stem(x.reshape(B, nz).astype(jnp.bfloat16),
                    params["w"][0], g0, b0)                 # (B, 16*c0) bf16
    a_sp = a.reshape(B, 4, 4, c0)
    H = W = 4

    for li in range(1, 5):
        cout_pad = params["w"][li].shape[1] // 4
        patches = _im2col3x3(a_sp)                          # (B*H*W, 9*cin_pad)
        y = pallas_matmul(patches, params["w"][li])         # (B*H*W, 128) f32
        if li < 4:
            yb = pallas_bn_relu(y, params["gamma"][li], params["beta"][li])
            a_sp = _depth_to_space(yb.reshape(B, H, W, 2, 2, cout_pad))
            H, W = 2 * H, 2 * W
        else:
            t = pallas_tanh(y)                              # (B*H*W, 128) f32
            t6 = t.reshape(B, H, W, 2, 2, cout_pad)[..., :nc]
            # depth-to-space + padded-channel strip + NHWC->NCHW in one transpose
            return t6.transpose(0, 5, 1, 3, 2, 4).reshape(B, nc, 2 * H, 2 * W)


if __name__ == "__main__":
    key = jax.random.PRNGKey(0)
    pkey, xkey = jax.random.split(key)
    params = init_params(pkey)
    x = jax.random.normal(xkey, (2, CONFIG["nz"], 1, 1), jnp.float32)

    fwd = jax.jit(functools.partial(generator_forward, params=params))
    out = jax.block_until_ready(fwd(x))

    assert out.shape == (2, CONFIG["nc"], 64, 64), out.shape
    assert bool(jnp.all(jnp.isfinite(out)))
    assert bool(jnp.all(jnp.abs(out) <= 1.0))  # tanh output range
    print("KERNEL_OK")
</pallas_src>

<mosaic_0001>
module attributes {stable_mosaic.version = 11 : i64} {
  func.func @stem_kernel(%arg0: i32, %arg1: memref<2x16xbf16, #tpu.memory_space<vmem>>, %arg2: memref<16x1024xbf16, #tpu.memory_space<vmem>>, %arg3: memref<1x64xf32, #tpu.memory_space<vmem>>, %arg4: memref<1x64xf32, #tpu.memory_space<vmem>>, %arg5: memref<2x1024xbf16, #tpu.memory_space<vmem>>) attributes {dimension_semantics = [#tpu.dimension_semantics<arbitrary>], iteration_bounds = array<i64: 1>, scalar_prefetch = 0 : i64, scratch_operands = 0 : i64, tpu.core_type = #tpu.core_type<tc>, window_params = [{pipeline_mode = #tpu.pipeline_mode<synchronous>, transform_indices = @transform_0, window_bounds = array<i64: 2, 16>}, {pipeline_mode = #tpu.pipeline_mode<synchronous>, transform_indices = @transform_1, window_bounds = array<i64: 16, 1024>}, {pipeline_mode = #tpu.pipeline_mode<synchronous>, transform_indices = @transform_2, window_bounds = array<i64: 1, 64>}, {pipeline_mode = #tpu.pipeline_mode<synchronous>, transform_indices = @transform_3, window_bounds = array<i64: 1, 64>}, {pipeline_mode = #tpu.pipeline_mode<synchronous>, transform_indices = @transform_4, window_bounds = array<i64: 2, 1024>}]} {
    %c0 = arith.constant 0 : index
    %c0_0 = arith.constant 0 : index
    %0 = vector.load %arg1[%c0, %c0_0] : memref<2x16xbf16, #tpu.memory_space<vmem>>, vector<2x16xbf16>
    %c0_1 = arith.constant 0 : index
    %c0_2 = arith.constant 0 : index
    %1 = vector.load %arg2[%c0_1, %c0_2] : memref<16x1024xbf16, #tpu.memory_space<vmem>>, vector<16x1024xbf16>
    %cst = arith.constant dense<0.000000e+00> : vector<2x1024xf32>
    %2 = tpu.matmul %0, %1, %cst {dimension_numbers = #tpu.dot_dimension_numbers<[1], [0], [0], [1], [0, 0, 1, 1], [], []>} : vector<2x16xbf16>, vector<16x1024xbf16>, vector<2x1024xf32> -> vector<2x1024xf32>
    %c0_3 = arith.constant 0 : index
    %c0_4 = arith.constant 0 : index
    %3 = vector.load %arg3[%c0_3, %c0_4] : memref<1x64xf32, #tpu.memory_space<vmem>>, vector<1x64xf32>
    %c0_5 = arith.constant 0 : index
    %c0_6 = arith.constant 0 : index
    %4 = vector.load %arg4[%c0_5, %c0_6] : memref<1x64xf32, #tpu.memory_space<vmem>>, vector<1x64xf32>
    %5 = tpu.iota {dimensions = array<i32: 0>} : vector<1024x64xi32>
    %c63_i32 = arith.constant 63 : i32
    %6 = vector.broadcast %c63_i32 : i32 to vector<1024x64xi32>
    %7 = arith.andi %5, %6 : vector<1024x64xi32>
    %8 = tpu.iota {dimensions = array<i32: 1>} : vector<1024x64xi32>
    %9 = arith.cmpi eq, %7, %8 : vector<1024x64xi32>
    %cst_7 = arith.constant 1.000000e+00 : f32
    %cst_8 = arith.constant 0.000000e+00 : f32
    %10 = vector.broadcast %cst_7 : f32 to vector<1024x64xf32>
    %11 = vector.broadcast %cst_8 : f32 to vector<1024x64xf32>
    %12 = arith.select %9, %10, %11 : vector<1024x64xi1>, vector<1024x64xf32>
    %13 = tpu.iota {dimensions = array<i32: 1>} : vector<64x1024xi32>
    %c63_i32_9 = arith.constant 63 : i32
    %14 = vector.broadcast %c63_i32_9 : i32 to vector<64x1024xi32>
    %15 = arith.andi %13, %14 : vector<64x1024xi32>
    %16 = tpu.iota {dimensions = array<i32: 0>} : vector<64x1024xi32>
    %17 = arith.cmpi eq, %15, %16 : vector<64x1024xi32>
    %cst_10 = arith.constant 1.000000e+00 : f32
    %cst_11 = arith.constant 0.000000e+00 : f32
    %18 = vector.broadcast %cst_10 : f32 to vector<64x1024xf32>
    %19 = vector.broadcast %cst_11 : f32 to vector<64x1024xf32>
    %20 = arith.select %17, %18, %19 : vector<64x1024xi1>, vector<64x1024xf32>
    %cst_12 = arith.constant dense<0.000000e+00> : vector<1024xf32>
    %21 = vector.multi_reduction <add>, %2, %cst_12 [0] : vector<2x1024xf32> to vector<1024xf32>
    %22 = vector.shape_cast %21 : vector<1024xf32> to vector<1x1024xf32>
    %23 = arith.mulf %2, %2 : vector<2x1024xf32>
    %cst_13 = arith.constant dense<0.000000e+00> : vector<1024xf32>
    %24 = vector.multi_reduction <add>, %23, %cst_13 [0] : vector<2x1024xf32> to vector<1024xf32>
    %25 = vector.shape_cast %24 : vector<1024xf32> to vector<1x1024xf32>
    %26 = tpu.concatenate %22, %25 in 0 : vector<1x1024xf32>, vector<1x1024xf32> -> vector<2x1024xf32>
    %cst_14 = arith.constant dense<0.000000e+00> : vector<2x64xf32>
    %27 = tpu.matmul %26, %12, %cst_14 {dimension_numbers = #tpu.dot_dimension_numbers<[1], [0], [0], [1], [0, 0, 1, 1], [], []>} : vector<2x1024xf32>, vector<1024x64xf32>, vector<2x64xf32> -> vector<2x64xf32>
    %28 = vector.extract_strided_slice %27 {offsets = [0, 0], sizes = [1, 64], strides = [1, 1]} : vector<2x64xf32> to vector<1x64xf32>
    %cst_15 = arith.constant 3.200000e+01 : f32
    %29 = vector.broadcast %cst_15 : f32 to vector<1x64xf32>
    %30 = arith.divf %28, %29 : vector<1x64xf32>
    %31 = vector.extract_strided_slice %27 {offsets = [1, 0], sizes = [1, 64], strides = [1, 1]} : vector<2x64xf32> to vector<1x64xf32>
    %cst_16 = arith.constant 3.200000e+01 : f32
    %32 = vector.broadcast %cst_16 : f32 to vector<1x64xf32>
    %33 = arith.divf %31, %32 : vector<1x64xf32>
    %34 = arith.mulf %30, %30 : vector<1x64xf32>
    %35 = arith.subf %33, %34 : vector<1x64xf32>
    %cst_17 = arith.constant 0.000000e+00 : f32
    %36 = vector.broadcast %cst_17 : f32 to vector<1x64xf32>
    %37 = arith.maximumf %35, %36 : vector<1x64xf32>
    %cst_18 = arith.constant 9.99999974E-6 : f32
    %38 = vector.broadcast %cst_18 : f32 to vector<1x64xf32>
    %39 = arith.addf %37, %38 : vector<1x64xf32>
    %40 = math.rsqrt %39 : vector<1x64xf32>
    %41 = arith.mulf %3, %40 : vector<1x64xf32>
    %42 = arith.mulf %30, %41 : vector<1x64xf32>
    %43 = arith.subf %4, %42 : vector<1x64xf32>
    %44 = tpu.concatenate %41, %43 in 0 : vector<1x64xf32>, vector<1x64xf32> -> vector<2x64xf32>
    %cst_19 = arith.constant dense<0.000000e+00> : vector<2x1024xf32>
    %45 = tpu.matmul %44, %20, %cst_19 {dimension_numbers = #tpu.dot_dimension_numbers<[1], [0], [0], [1], [0, 0, 1, 1], [], []>} : vector<2x64xf32>, vector<64x1024xf32>, vector<2x1024xf32> -> vector<2x1024xf32>
    %46 = vector.extract_strided_slice %45 {offsets = [0, 0], sizes = [1, 1024], strides = [1, 1]} : vector<2x1024xf32> to vector<1x1024xf32>
    %47 = vector.broadcast %46 : vector<1x1024xf32> to vector<2x1024xf32>
    %48 = arith.mulf %2, %47 : vector<2x1024xf32>
    %49 = vector.extract_strided_slice %45 {offsets = [1, 0], sizes = [1, 1024], strides = [1, 1]} : vector<2x1024xf32> to vector<1x1024xf32>
    %50 = vector.broadcast %49 : vector<1x1024xf32> to vector<2x1024xf32>
    %51 = arith.addf %48, %50 : vector<2x1024xf32>
    %cst_20 = arith.constant 0.000000e+00 : f32
    %52 = vector.broadcast %cst_20 : f32 to vector<2x1024xf32>
    %53 = arith.maximumf %51, %52 : vector<2x1024xf32>
    %54 = arith.truncf %53 : vector<2x1024xf32> to vector<2x1024xbf16>
    %c0_21 = arith.constant 0 : index
    %c0_22 = arith.constant 0 : index
    %55 = vector.load %arg5[%c0_21, %c0_22] : memref<2x1024xbf16, #tpu.memory_space<vmem>>, vector<2x1024xbf16>
    tpu.vector_store %arg5[%c0_21, %c0_22], %54 {strides = array<i32>} : memref<2x1024xbf16, #tpu.memory_space<vmem>>, vector<2x1024xbf16>,
    return
  }
  func.func @transform_0(%arg0: i32) -> (i32, i32) {
    %c0_i32 = arith.constant 0 : i32
    %c0_i32_0 = arith.constant 0 : i32
    %c0_i32_1 = arith.constant 0 : i32
    return %c0_i32, %c0_i32_0 : i32, i32
  }
  func.func @transform_1(%arg0: i32) -> (i32, i32) {
    %c0_i32 = arith.constant 0 : i32
    %c0_i32_0 = arith.constant 0 : i32
    %c0_i32_1 = arith.constant 0 : i32
    return %c0_i32, %c0_i32_0 : i32, i32
  }
  func.func @transform_2(%arg0: i32) -> (i32, i32) {
    %c0_i32 = arith.constant 0 : i32
    %c0_i32_0 = arith.constant 0 : i32
    %c0_i32_1 = arith.constant 0 : i32
    return %c0_i32, %c0_i32_0 : i32, i32
  }
  func.func @transform_3(%arg0: i32) -> (i32, i32) {
    %c0_i32 = arith.constant 0 : i32
    %c0_i32_0 = arith.constant 0 : i32
    %c0_i32_1 = arith.constant 0 : i32
    return %c0_i32, %c0_i32_0 : i32, i32
  }
  func.func @transform_4(%arg0: i32) -> (i32, i32) {
    %c0_i32 = arith.constant 0 : i32
    %c0_i32_0 = arith.constant 0 : i32
    %c0_i32_1 = arith.constant 0 : i32
    return %c0_i32, %c0_i32_0 : i32, i32
  }
}

module attributes {stable_mosaic.version = 11 : i64} {
  func.func @matmul_kernel(%arg0: i32, %arg1: memref<32x576xbf16, #tpu.memory_space<vmem>>, %arg2: memref<576x128xbf16, #tpu.memory_space<vmem>>, %arg3: memref<32x128xf32, #tpu.memory_space<vmem>>) attributes {dimension_semantics = [#tpu.dimension_semantics<parallel>], iteration_bounds = array<i64: 1>, scalar_prefetch = 0 : i64, scratch_operands = 0 : i64, tpu.core_type = #tpu.core_type<tc>, window_params = [{transform_indices = @transform_0, window_bounds = array<i64: 32, 576>}, {pipeline_mode = #tpu.pipeline_mode<synchronous>, transform_indices = @transform_1, window_bounds = array<i64: 576, 128>}, {transform_indices = @transform_2, window_bounds = array<i64: 32, 128>}]} {
    %c0 = arith.constant 0 : index
    %c0_0 = arith.constant 0 : index
    %0 = vector.load %arg1[%c0, %c0_0] : memref<32x576xbf16, #tpu.memory_space<vmem>>, vector<32x576xbf16>
    %c0_1 = arith.constant 0 : index
    %c0_2 = arith.constant 0 : index
    %1 = vector.load %arg2[%c0_1, %c0_2] : memref<576x128xbf16, #tpu.memory_space<vmem>>, vector<576x128xbf16>
    %cst = arith.constant dense<0.000000e+00> : vector<32x128xf32>
    %2 = tpu.matmul %0, %1, %cst {dimension_numbers = #tpu.dot_dimension_numbers<[1], [0], [0], [1], [0, 0, 1, 1], [], []>} : vector<32x576xbf16>, vector<576x128xbf16>, vector<32x128xf32> -> vector<32x128xf32>
    %c0_3 = arith.constant 0 : index
    %c0_4 = arith.constant 0 : index
    %3 = vector.load %arg3[%c0_3, %c0_4] : memref<32x128xf32, #tpu.memory_space<vmem>>, vector<32x128xf32>
    tpu.vector_store %arg3[%c0_3, %c0_4], %2 {strides = array<i32>} : memref<32x128xf32, #tpu.memory_space<vmem>>, vector<32x128xf32>,
    return
  }
  func.func @transform_0(%arg0: i32) -> (i32, i32) {
    %c0_i32 = arith.constant 0 : i32
    %c0_i32_0 = arith.constant 0 : i32
    return %arg0, %c0_i32 : i32, i32
  }
  func.func @transform_1(%arg0: i32) -> (i32, i32) {
    %c0_i32 = arith.constant 0 : i32
    %c0_i32_0 = arith.constant 0 : i32
    %c0_i32_1 = arith.constant 0 : i32
    return %c0_i32, %c0_i32_0 : i32, i32
  }
  func.func @transform_2(%arg0: i32) -> (i32, i32) {
    %c0_i32 = arith.constant 0 : i32
    %c0_i32_0 = arith.constant 0 : i32
    return %arg0, %c0_i32 : i32, i32
  }
}

module attributes {stable_mosaic.version = 11 : i64} {
  func.func @bn_relu_kernel(%arg0: i32, %arg1: memref<32x128xf32, #tpu.memory_space<vmem>>, %arg2: memref<1x32xf32, #tpu.memory_space<vmem>>, %arg3: memref<1x32xf32, #tpu.memory_space<vmem>>, %arg4: memref<32x128xbf16, #tpu.memory_space<vmem>>) attributes {dimension_semantics = [#tpu.dimension_semantics<arbitrary>], iteration_bounds = array<i64: 1>, scalar_prefetch = 0 : i64, scratch_operands = 0 : i64, tpu.core_type = #tpu.core_type<tc>, window_params = [{pipeline_mode = #tpu.pipeline_mode<synchronous>, transform_indices = @transform_0, window_bounds = array<i64: 32, 128>}, {pipeline_mode = #tpu.pipeline_mode<synchronous>, transform_indices = @transform_1, window_bounds = array<i64: 1, 32>}, {pipeline_mode = #tpu.pipeline_mode<synchronous>, transform_indices = @transform_2, window_bounds = array<i64: 1, 32>}, {pipeline_mode = #tpu.pipeline_mode<synchronous>, transform_indices = @transform_3, window_bounds = array<i64: 32, 128>}]} {
    %c0 = arith.constant 0 : index
    %c0_0 = arith.constant 0 : index
    %0 = vector.load %arg1[%c0, %c0_0] : memref<32x128xf32, #tpu.memory_space<vmem>>, vector<32x128xf32>
    %c0_1 = arith.constant 0 : index
    %c0_2 = arith.constant 0 : index
    %1 = vector.load %arg2[%c0_1, %c0_2] : memref<1x32xf32, #tpu.memory_space<vmem>>, vector<1x32xf32>
    %c0_3 = arith.constant 0 : index
    %c0_4 = arith.constant 0 : index
    %2 = vector.load %arg3[%c0_3, %c0_4] : memref<1x32xf32, #tpu.memory_space<vmem>>, vector<1x32xf32>
    %3 = tpu.iota {dimensions = array<i32: 0>} : vector<128x32xi32>
    %c31_i32 = arith.constant 31 : i32
    %4 = vector.broadcast %c31_i32 : i32 to vector<128x32xi32>
    %5 = arith.andi %3, %4 : vector<128x32xi32>
    %6 = tpu.iota {dimensions = array<i32: 1>} : vector<128x32xi32>
    %7 = arith.cmpi eq, %5, %6 : vector<128x32xi32>
    %cst = arith.constant 1.000000e+00 : f32
    %cst_5 = arith.constant 0.000000e+00 : f32
    %8 = vector.broadcast %cst : f32 to vector<128x32xf32>
    %9 = vector.broadcast %cst_5 : f32 to vector<128x32xf32>
    %10 = arith.select %7, %8, %9 : vector<128x32xi1>, vector<128x32xf32>
    %11 = tpu.iota {dimensions = array<i32: 1>} : vector<32x128xi32>
    %c31_i32_6 = arith.constant 31 : i32
    %12 = vector.broadcast %c31_i32_6 : i32 to vector<32x128xi32>
    %13 = arith.andi %11, %12 : vector<32x128xi32>
    %14 = tpu.iota {dimensions = array<i32: 0>} : vector<32x128xi32>
    %15 = arith.cmpi eq, %13, %14 : vector<32x128xi32>
    %cst_7 = arith.constant 1.000000e+00 : f32
    %cst_8 = arith.constant 0.000000e+00 : f32
    %16 = vector.broadcast %cst_7 : f32 to vector<32x128xf32>
    %17 = vector.broadcast %cst_8 : f32 to vector<32x128xf32>
    %18 = arith.select %15, %16, %17 : vector<32x128xi1>, vector<32x128xf32>
    %cst_9 = arith.constant dense<0.000000e+00> : vector<128xf32>
    %19 = vector.multi_reduction <add>, %0, %cst_9 [0] : vector<32x128xf32> to vector<128xf32>
    %20 = vector.shape_cast %19 : vector<128xf32> to vector<1x128xf32>
    %21 = arith.mulf %0, %0 : vector<32x128xf32>
    %cst_10 = arith.constant dense<0.000000e+00> : vector<128xf32>
    %22 = vector.multi_reduction <add>, %21, %cst_10 [0] : vector<32x128xf32> to vector<128xf32>
    %23 = vector.shape_cast %22 : vector<128xf32> to vector<1x128xf32>
    %24 = tpu.concatenate %20, %23 in 0 : vector<1x128xf32>, vector<1x128xf32> -> vector<2x128xf32>
    %cst_11 = arith.constant dense<0.000000e+00> : vector<2x32xf32>
    %25 = tpu.matmul %24, %10, %cst_11 {dimension_numbers = #tpu.dot_dimension_numbers<[1], [0], [0], [1], [0, 0, 1, 1], [], []>} : vector<2x128xf32>, vector<128x32xf32>, vector<2x32xf32> -> vector<2x32xf32>
    %26 = vector.extract_strided_slice %25 {offsets = [0, 0], sizes = [1, 32], strides = [1, 1]} : vector<2x32xf32> to vector<1x32xf32>
    %cst_12 = arith.constant 1.280000e+02 : f32
    %27 = vector.broadcast %cst_12 : f32 to vector<1x32xf32>
    %28 = arith.divf %26, %27 : vector<1x32xf32>
    %29 = vector.extract_strided_slice %25 {offsets = [1, 0], sizes = [1, 32], strides = [1, 1]} : vector<2x32xf32> to vector<1x32xf32>
    %cst_13 = arith.constant 1.280000e+02 : f32
    %30 = vector.broadcast %cst_13 : f32 to vector<1x32xf32>
    %31 = arith.divf %29, %30 : vector<1x32xf32>
    %32 = arith.mulf %28, %28 : vector<1x32xf32>
    %33 = arith.subf %31, %32 : vector<1x32xf32>
    %cst_14 = arith.constant 0.000000e+00 : f32
    %34 = vector.broadcast %cst_14 : f32 to vector<1x32xf32>
    %35 = arith.maximumf %33, %34 : vector<1x32xf32>
    %cst_15 = arith.constant 9.99999974E-6 : f32
    %36 = vector.broadcast %cst_15 : f32 to vector<1x32xf32>
    %37 = arith.addf %35, %36 : vector<1x32xf32>
    %38 = math.rsqrt %37 : vector<1x32xf32>
    %39 = arith.mulf %1, %38 : vector<1x32xf32>
    %40 = arith.mulf %28, %39 : vector<1x32xf32>
    %41 = arith.subf %2, %40 : vector<1x32xf32>
    %42 = tpu.concatenate %39, %41 in 0 : vector<1x32xf32>, vector<1x32xf32> -> vector<2x32xf32>
    %cst_16 = arith.constant dense<0.000000e+00> : vector<2x128xf32>
    %43 = tpu.matmul %42, %18, %cst_16 {dimension_numbers = #tpu.dot_dimension_numbers<[1], [0], [0], [1], [0, 0, 1, 1], [], []>} : vector<2x32xf32>, vector<32x128xf32>, vector<2x128xf32> -> vector<2x128xf32>
    %44 = vector.extract_strided_slice %43 {offsets = [0, 0], sizes = [1, 128], strides = [1, 1]} : vector<2x128xf32> to vector<1x128xf32>
    %45 = vector.broadcast %44 : vector<1x128xf32> to vector<32x128xf32>
    %46 = arith.mulf %0, %45 : vector<32x128xf32>
    %47 = vector.extract_strided_slice %43 {offsets = [1, 0], sizes = [1, 128], strides = [1, 1]} : vector<2x128xf32> to vector<1x128xf32>
    %48 = vector.broadcast %47 : vector<1x128xf32> to vector<32x128xf32>
    %49 = arith.addf %46, %48 : vector<32x128xf32>
    %cst_17 = arith.constant 0.000000e+00 : f32
    %50 = vector.broadcast %cst_17 : f32 to vector<32x128xf32>
    %51 = arith.maximumf %49, %50 : vector<32x128xf32>
    %52 = arith.truncf %51 : vector<32x128xf32> to vector<32x128xbf16>
    %c0_18 = arith.constant 0 : index
    %c0_19 = arith.constant 0 : index
    %53 = vector.load %arg4[%c0_18, %c0_19] : memref<32x128xbf16, #tpu.memory_space<vmem>>, vector<32x128xbf16>
    tpu.vector_store %arg4[%c0_18, %c0_19], %52 {strides = array<i32>} : memref<32x128xbf16, #tpu.memory_space<vmem>>, vector<32x128xbf16>,
    return
  }
  func.func @transform_0(%arg0: i32) -> (i32, i32) {
    %c0_i32 = arith.constant 0 : i32
    %c0_i32_0 = arith.constant 0 : i32
    %c0_i32_1 = arith.constant 0 : i32
    return %c0_i32, %c0_i32_0 : i32, i32
  }
  func.func @transform_1(%arg0: i32) -> (i32, i32) {
    %c0_i32 = arith.constant 0 : i32
    %c0_i32_0 = arith.constant 0 : i32
    %c0_i32_1 = arith.constant 0 : i32
    return %c0_i32, %c0_i32_0 : i32, i32
  }
  func.func @transform_2(%arg0: i32) -> (i32, i32) {
    %c0_i32 = arith.constant 0 : i32
    %c0_i32_0 = arith.constant 0 : i32
    %c0_i32_1 = arith.constant 0 : i32
    return %c0_i32, %c0_i32_0 : i32, i32
  }
  func.func @transform_3(%arg0: i32) -> (i32, i32) {
    %c0_i32 = arith.constant 0 : i32
    %c0_i32_0 = arith.constant 0 : i32
    %c0_i32_1 = arith.constant 0 : i32
    return %c0_i32, %c0_i32_0 : i32, i32
  }
}

module attributes {stable_mosaic.version = 11 : i64} {
  func.func @matmul_kernel(%arg0: i32, %arg1: memref<128x288xbf16, #tpu.memory_space<vmem>>, %arg2: memref<288x128xbf16, #tpu.memory_space<vmem>>, %arg3: memref<128x128xf32, #tpu.memory_space<vmem>>) attributes {dimension_semantics = [#tpu.dimension_semantics<parallel>], iteration_bounds = array<i64: 1>, scalar_prefetch = 0 : i64, scratch_operands = 0 : i64, tpu.core_type = #tpu.core_type<tc>, window_params = [{transform_indices = @transform_0, window_bounds = array<i64: 128, 288>}, {pipeline_mode = #tpu.pipeline_mode<synchronous>, transform_indices = @transform_1, window_bounds = array<i64: 288, 128>}, {transform_indices = @transform_2, window_bounds = array<i64: 128, 128>}]} {
    %c0 = arith.constant 0 : index
    %c0_0 = arith.constant 0 : index
    %0 = vector.load %arg1[%c0, %c0_0] : memref<128x288xbf16, #tpu.memory_space<vmem>>, vector<128x288xbf16>
    %c0_1 = arith.constant 0 : index
    %c0_2 = arith.constant 0 : index
    %1 = vector.load %arg2[%c0_1, %c0_2] : memref<288x128xbf16, #tpu.memory_space<vmem>>, vector<288x128xbf16>
    %cst = arith.constant dense<0.000000e+00> : vector<128x128xf32>
    %2 = tpu.matmul %0, %1, %cst {dimension_numbers = #tpu.dot_dimension_numbers<[1], [0], [0], [1], [0, 0, 1, 1], [], []>} : vector<128x288xbf16>, vector<288x128xbf16>, vector<128x128xf32> -> vector<128x128xf32>
    %c0_3 = arith.constant 0 : index
    %c0_4 = arith.constant 0 : index
    %3 = vector.load %arg3[%c0_3, %c0_4] : memref<128x128xf32, #tpu.memory_space<vmem>>, vector<128x128xf32>
    tpu.vector_store %arg3[%c0_3, %c0_4], %2 {strides = array<i32>} : memref<128x128xf32, #tpu.memory_space<vmem>>, vector<128x128xf32>,
    return
  }
  func.func @transform_0(%arg0: i32) -> (i32, i32) {
    %c0_i32 = arith.constant 0 : i32
    %c0_i32_0 = arith.constant 0 : i32
    return %arg0, %c0_i32 : i32, i32
  }
  func.func @transform_1(%arg0: i32) -> (i32, i32) {
    %c0_i32 = arith.constant 0 : i32
    %c0_i32_0 = arith.constant 0 : i32
    %c0_i32_1 = arith.constant 0 : i32
    return %c0_i32, %c0_i32_0 : i32, i32
  }
  func.func @transform_2(%arg0: i32) -> (i32, i32) {
    %c0_i32 = arith.constant 0 : i32
    %c0_i32_0 = arith.constant 0 : i32
    return %arg0, %c0_i32 : i32, i32
  }
}

module attributes {stable_mosaic.version = 11 : i64} {
  func.func @bn_relu_kernel(%arg0: i32, %arg1: memref<128x128xf32, #tpu.memory_space<vmem>>, %arg2: memref<1x32xf32, #tpu.memory_space<vmem>>, %arg3: memref<1x32xf32, #tpu.memory_space<vmem>>, %arg4: memref<128x128xbf16, #tpu.memory_space<vmem>>) attributes {dimension_semantics = [#tpu.dimension_semantics<arbitrary>], iteration_bounds = array<i64: 1>, scalar_prefetch = 0 : i64, scratch_operands = 0 : i64, tpu.core_type = #tpu.core_type<tc>, window_params = [{pipeline_mode = #tpu.pipeline_mode<synchronous>, transform_indices = @transform_0, window_bounds = array<i64: 128, 128>}, {pipeline_mode = #tpu.pipeline_mode<synchronous>, transform_indices = @transform_1, window_bounds = array<i64: 1, 32>}, {pipeline_mode = #tpu.pipeline_mode<synchronous>, transform_indices = @transform_2, window_bounds = array<i64: 1, 32>}, {pipeline_mode = #tpu.pipeline_mode<synchronous>, transform_indices = @transform_3, window_bounds = array<i64: 128, 128>}]} {
    %c0 = arith.constant 0 : index
    %c0_0 = arith.constant 0 : index
    %0 = vector.load %arg1[%c0, %c0_0] : memref<128x128xf32, #tpu.memory_space<vmem>>, vector<128x128xf32>
    %c0_1 = arith.constant 0 : index
    %c0_2 = arith.constant 0 : index
    %1 = vector.load %arg2[%c0_1, %c0_2] : memref<1x32xf32, #tpu.memory_space<vmem>>, vector<1x32xf32>
    %c0_3 = arith.constant 0 : index
    %c0_4 = arith.constant 0 : index
    %2 = vector.load %arg3[%c0_3, %c0_4] : memref<1x32xf32, #tpu.memory_space<vmem>>, vector<1x32xf32>
    %3 = tpu.iota {dimensions = array<i32: 0>} : vector<128x32xi32>
    %c31_i32 = arith.constant 31 : i32
    %4 = vector.broadcast %c31_i32 : i32 to vector<128x32xi32>
    %5 = arith.andi %3, %4 : vector<128x32xi32>
    %6 = tpu.iota {dimensions = array<i32: 1>} : vector<128x32xi32>
    %7 = arith.cmpi eq, %5, %6 : vector<128x32xi32>
    %cst = arith.constant 1.000000e+00 : f32
    %cst_5 = arith.constant 0.000000e+00 : f32
    %8 = vector.broadcast %cst : f32 to vector<128x32xf32>
    %9 = vector.broadcast %cst_5 : f32 to vector<128x32xf32>
    %10 = arith.select %7, %8, %9 : vector<128x32xi1>, vector<128x32xf32>
    %11 = tpu.iota {dimensions = array<i32: 1>} : vector<32x128xi32>
    %c31_i32_6 = arith.constant 31 : i32
    %12 = vector.broadcast %c31_i32_6 : i32 to vector<32x128xi32>
    %13 = arith.andi %11, %12 : vector<32x128xi32>
    %14 = tpu.iota {dimensions = array<i32: 0>} : vector<32x128xi32>
    %15 = arith.cmpi eq, %13, %14 : vector<32x128xi32>
    %cst_7 = arith.constant 1.000000e+00 : f32
    %cst_8 = arith.constant 0.000000e+00 : f32
    %16 = vector.broadcast %cst_7 : f32 to vector<32x128xf32>
    %17 = vector.broadcast %cst_8 : f32 to vector<32x128xf32>
    %18 = arith.select %15, %16, %17 : vector<32x128xi1>, vector<32x128xf32>
    %cst_9 = arith.constant dense<0.000000e+00> : vector<128xf32>
    %19 = vector.multi_reduction <add>, %0, %cst_9 [0] : vector<128x128xf32> to vector<128xf32>
    %20 = vector.shape_cast %19 : vector<128xf32> to vector<1x128xf32>
    %21 = arith.mulf %0, %0 : vector<128x128xf32>
    %cst_10 = arith.constant dense<0.000000e+00> : vector<128xf32>
    %22 = vector.multi_reduction <add>, %21, %cst_10 [0] : vector<128x128xf32> to vector<128xf32>
    %23 = vector.shape_cast %22 : vector<128xf32> to vector<1x128xf32>
    %24 = tpu.concatenate %20, %23 in 0 : vector<1x128xf32>, vector<1x128xf32> -> vector<2x128xf32>
    %cst_11 = arith.constant dense<0.000000e+00> : vector<2x32xf32>
    %25 = tpu.matmul %24, %10, %cst_11 {dimension_numbers = #tpu.dot_dimension_numbers<[1], [0], [0], [1], [0, 0, 1, 1], [], []>} : vector<2x128xf32>, vector<128x32xf32>, vector<2x32xf32> -> vector<2x32xf32>
    %26 = vector.extract_strided_slice %25 {offsets = [0, 0], sizes = [1, 32], strides = [1, 1]} : vector<2x32xf32> to vector<1x32xf32>
    %cst_12 = arith.constant 5.120000e+02 : f32
    %27 = vector.broadcast %cst_12 : f32 to vector<1x32xf32>
    %28 = arith.divf %26, %27 : vector<1x32xf32>
    %29 = vector.extract_strided_slice %25 {offsets = [1, 0], sizes = [1, 32], strides = [1, 1]} : vector<2x32xf32> to vector<1x32xf32>
    %cst_13 = arith.constant 5.120000e+02 : f32
    %30 = vector.broadcast %cst_13 : f32 to vector<1x32xf32>
    %31 = arith.divf %29, %30 : vector<1x32xf32>
    %32 = arith.mulf %28, %28 : vector<1x32xf32>
    %33 = arith.subf %31, %32 : vector<1x32xf32>
    %cst_14 = arith.constant 0.000000e+00 : f32
    %34 = vector.broadcast %cst_14 : f32 to vector<1x32xf32>
    %35 = arith.maximumf %33, %34 : vector<1x32xf32>
    %cst_15 = arith.constant 9.99999974E-6 : f32
    %36 = vector.broadcast %cst_15 : f32 to vector<1x32xf32>
    %37 = arith.addf %35, %36 : vector<1x32xf32>
    %38 = math.rsqrt %37 : vector<1x32xf32>
    %39 = arith.mulf %1, %38 : vector<1x32xf32>
    %40 = arith.mulf %28, %39 : vector<1x32xf32>
    %41 = arith.subf %2, %40 : vector<1x32xf32>
    %42 = tpu.concatenate %39, %41 in 0 : vector<1x32xf32>, vector<1x32xf32> -> vector<2x32xf32>
    %cst_16 = arith.constant dense<0.000000e+00> : vector<2x128xf32>
    %43 = tpu.matmul %42, %18, %cst_16 {dimension_numbers = #tpu.dot_dimension_numbers<[1], [0], [0], [1], [0, 0, 1, 1], [], []>} : vector<2x32xf32>, vector<32x128xf32>, vector<2x128xf32> -> vector<2x128xf32>
    %44 = vector.extract_strided_slice %43 {offsets = [0, 0], sizes = [1, 128], strides = [1, 1]} : vector<2x128xf32> to vector<1x128xf32>
    %45 = vector.broadcast %44 : vector<1x128xf32> to vector<128x128xf32>
    %46 = arith.mulf %0, %45 : vector<128x128xf32>
    %47 = vector.extract_strided_slice %43 {offsets = [1, 0], sizes = [1, 128], strides = [1, 1]} : vector<2x128xf32> to vector<1x128xf32>
    %48 = vector.broadcast %47 : vector<1x128xf32> to vector<128x128xf32>
    %49 = arith.addf %46, %48 : vector<128x128xf32>
    %cst_17 = arith.constant 0.000000e+00 : f32
    %50 = vector.broadcast %cst_17 : f32 to vector<128x128xf32>
    %51 = arith.maximumf %49, %50 : vector<128x128xf32>
    %52 = arith.truncf %51 : vector<128x128xf32> to vector<128x128xbf16>
    %c0_18 = arith.constant 0 : index
    %c0_19 = arith.constant 0 : index
    %53 = vector.load %arg4[%c0_18, %c0_19] : memref<128x128xbf16, #tpu.memory_space<vmem>>, vector<128x128xbf16>
    tpu.vector_store %arg4[%c0_18, %c0_19], %52 {strides = array<i32>} : memref<128x128xbf16, #tpu.memory_space<vmem>>, vector<128x128xbf16>,
    return
  }
  func.func @transform_0(%arg0: i32) -> (i32, i32) {
    %c0_i32 = arith.constant 0 : i32
    %c0_i32_0 = arith.constant 0 : i32
    %c0_i32_1 = arith.constant 0 : i32
    return %c0_i32, %c0_i32_0 : i32, i32
  }
  func.func @transform_1(%arg0: i32) -> (i32, i32) {
    %c0_i32 = arith.constant 0 : i32
    %c0_i32_0 = arith.constant 0 : i32
    %c0_i32_1 = arith.constant 0 : i32
    return %c0_i32, %c0_i32_0 : i32, i32
  }
  func.func @transform_2(%arg0: i32) -> (i32, i32) {
    %c0_i32 = arith.constant 0 : i32
    %c0_i32_0 = arith.constant 0 : i32
    %c0_i32_1 = arith.constant 0 : i32
    return %c0_i32, %c0_i32_0 : i32, i32
  }
  func.func @transform_3(%arg0: i32) -> (i32, i32) {
    %c0_i32 = arith.constant 0 : i32
    %c0_i32_0 = arith.constant 0 : i32
    %c0_i32_1 = arith.constant 0 : i32
    return %c0_i32, %c0_i32_0 : i32, i32
  }
}

module attributes {stable_mosaic.version = 11 : i64} {
  func.func @matmul_kernel(%arg0: i32, %arg1: memref<256x288xbf16, #tpu.memory_space<vmem>>, %arg2: memref<288x128xbf16, #tpu.memory_space<vmem>>, %arg3: memref<256x128xf32, #tpu.memory_space<vmem>>) attributes {dimension_semantics = [#tpu.dimension_semantics<parallel>], iteration_bounds = array<i64: 2>, scalar_prefetch = 0 : i64, scratch_operands = 0 : i64, tpu.core_type = #tpu.core_type<tc>, window_params = [{transform_indices = @transform_0, window_bounds = array<i64: 256, 288>}, {pipeline_mode = #tpu.pipeline_mode<synchronous>, transform_indices = @transform_1, window_bounds = array<i64: 288, 128>}, {transform_indices = @transform_2, window_bounds = array<i64: 256, 128>}]} {
    %c0 = arith.constant 0 : index
    %c0_0 = arith.constant 0 : index
    %0 = vector.load %arg1[%c0, %c0_0] : memref<256x288xbf16, #tpu.memory_space<vmem>>, vector<256x288xbf16>
    %c0_1 = arith.constant 0 : index
    %c0_2 = arith.constant 0 : index
    %1 = vector.load %arg2[%c0_1, %c0_2] : memref<288x128xbf16, #tpu.memory_space<vmem>>, vector<288x128xbf16>
    %cst = arith.constant dense<0.000000e+00> : vector<256x128xf32>
    %2 = tpu.matmul %0, %1, %cst {dimension_numbers = #tpu.dot_dimension_numbers<[1], [0], [0], [1], [0, 0, 1, 1], [], []>} : vector<256x288xbf16>, vector<288x128xbf16>, vector<256x128xf32> -> vector<256x128xf32>
    %c0_3 = arith.constant 0 : index
    %c0_4 = arith.constant 0 : index
    %3 = vector.load %arg3[%c0_3, %c0_4] : memref<256x128xf32, #tpu.memory_space<vmem>>, vector<256x128xf32>
    tpu.vector_store %arg3[%c0_3, %c0_4], %2 {strides = array<i32>} : memref<256x128xf32, #tpu.memory_space<vmem>>, vector<256x128xf32>,
    return
  }
  func.func @transform_0(%arg0: i32) -> (i32, i32) {
    %c0_i32 = arith.constant 0 : i32
    %c0_i32_0 = arith.constant 0 : i32
    return %arg0, %c0_i32 : i32, i32
  }
  func.func @transform_1(%arg0: i32) -> (i32, i32) {
    %c0_i32 = arith.constant 0 : i32
    %c0_i32_0 = arith.constant 0 : i32
    %c0_i32_1 = arith.constant 0 : i32
    return %c0_i32, %c0_i32_0 : i32, i32
  }
  func.func @transform_2(%arg0: i32) -> (i32, i32) {
    %c0_i32 = arith.constant 0 : i32
    %c0_i32_0 = arith.constant 0 : i32
    return %arg0, %c0_i32 : i32, i32
  }
}

module attributes {stable_mosaic.version = 11 : i64} {
  func.func @bn_relu_kernel(%arg0: i32, %arg1: memref<512x128xf32, #tpu.memory_space<vmem>>, %arg2: memref<1x32xf32, #tpu.memory_space<vmem>>, %arg3: memref<1x32xf32, #tpu.memory_space<vmem>>, %arg4: memref<512x128xbf16, #tpu.memory_space<vmem>>) attributes {dimension_semantics = [#tpu.dimension_semantics<arbitrary>], iteration_bounds = array<i64: 1>, scalar_prefetch = 0 : i64, scratch_operands = 0 : i64, tpu.core_type = #tpu.core_type<tc>, window_params = [{pipeline_mode = #tpu.pipeline_mode<synchronous>, transform_indices = @transform_0, window_bounds = array<i64: 512, 128>}, {pipeline_mode = #tpu.pipeline_mode<synchronous>, transform_indices = @transform_1, window_bounds = array<i64: 1, 32>}, {pipeline_mode = #tpu.pipeline_mode<synchronous>, transform_indices = @transform_2, window_bounds = array<i64: 1, 32>}, {pipeline_mode = #tpu.pipeline_mode<synchronous>, transform_indices = @transform_3, window_bounds = array<i64: 512, 128>}]} {
    %c0 = arith.constant 0 : index
    %c0_0 = arith.constant 0 : index
    %0 = vector.load %arg1[%c0, %c0_0] : memref<512x128xf32, #tpu.memory_space<vmem>>, vector<512x128xf32>
    %c0_1 = arith.constant 0 : index
    %c0_2 = arith.constant 0 : index
    %1 = vector.load %arg2[%c0_1, %c0_2] : memref<1x32xf32, #tpu.memory_space<vmem>>, vector<1x32xf32>
    %c0_3 = arith.constant 0 : index
    %c0_4 = arith.constant 0 : index
    %2 = vector.load %arg3[%c0_3, %c0_4] : memref<1x32xf32, #tpu.memory_space<vmem>>, vector<1x32xf32>
    %3 = tpu.iota {dimensions = array<i32: 0>} : vector<128x32xi32>
    %c31_i32 = arith.constant 31 : i32
    %4 = vector.broadcast %c31_i32 : i32 to vector<128x32xi32>
    %5 = arith.andi %3, %4 : vector<128x32xi32>
    %6 = tpu.iota {dimensions = array<i32: 1>} : vector<128x32xi32>
    %7 = arith.cmpi eq, %5, %6 : vector<128x32xi32>
    %cst = arith.constant 1.000000e+00 : f32
    %cst_5 = arith.constant 0.000000e+00 : f32
    %8 = vector.broadcast %cst : f32 to vector<128x32xf32>
    %9 = vector.broadcast %cst_5 : f32 to vector<128x32xf32>
    %10 = arith.select %7, %8, %9 : vector<128x32xi1>, vector<128x32xf32>
    %11 = tpu.iota {dimensions = array<i32: 1>} : vector<32x128xi32>
    %c31_i32_6 = arith.constant 31 : i32
    %12 = vector.broadcast %c31_i32_6 : i32 to vector<32x128xi32>
    %13 = arith.andi %11, %12 : vector<32x128xi32>
    %14 = tpu.iota {dimensions = array<i32: 0>} : vector<32x128xi32>
    %15 = arith.cmpi eq, %13, %14 : vector<32x128xi32>
    %cst_7 = arith.constant 1.000000e+00 : f32
    %cst_8 = arith.constant 0.000000e+00 : f32
    %16 = vector.broadcast %cst_7 : f32 to vector<32x128xf32>
    %17 = vector.broadcast %cst_8 : f32 to vector<32x128xf32>
    %18 = arith.select %15, %16, %17 : vector<32x128xi1>, vector<32x128xf32>
    %cst_9 = arith.constant dense<0.000000e+00> : vector<128xf32>
    %19 = vector.multi_reduction <add>, %0, %cst_9 [0] : vector<512x128xf32> to vector<128xf32>
    %20 = vector.shape_cast %19 : vector<128xf32> to vector<1x128xf32>
    %21 = arith.mulf %0, %0 : vector<512x128xf32>
    %cst_10 = arith.constant dense<0.000000e+00> : vector<128xf32>
    %22 = vector.multi_reduction <add>, %21, %cst_10 [0] : vector<512x128xf32> to vector<128xf32>
    %23 = vector.shape_cast %22 : vector<128xf32> to vector<1x128xf32>
    %24 = tpu.concatenate %20, %23 in 0 : vector<1x128xf32>, vector<1x128xf32> -> vector<2x128xf32>
    %cst_11 = arith.constant dense<0.000000e+00> : vector<2x32xf32>
    %25 = tpu.matmul %24, %10, %cst_11 {dimension_numbers = #tpu.dot_dimension_numbers<[1], [0], [0], [1], [0, 0, 1, 1], [], []>} : vector<2x128xf32>, vector<128x32xf32>, vector<2x32xf32> -> vector<2x32xf32>
    %26 = vector.extract_strided_slice %25 {offsets = [0, 0], sizes = [1, 32], strides = [1, 1]} : vector<2x32xf32> to vector<1x32xf32>
    %cst_12 = arith.constant 2.048000e+03 : f32
    %27 = vector.broadcast %cst_12 : f32 to vector<1x32xf32>
    %28 = arith.divf %26, %27 : vector<1x32xf32>
    %29 = vector.extract_strided_slice %25 {offsets = [1, 0], sizes = [1, 32], strides = [1, 1]} : vector<2x32xf32> to vector<1x32xf32>
    %cst_13 = arith.constant 2.048000e+03 : f32
    %30 = vector.broadcast %cst_13 : f32 to vector<1x32xf32>
    %31 = arith.divf %29, %30 : vector<1x32xf32>
    %32 = arith.mulf %28, %28 : vector<1x32xf32>
    %33 = arith.subf %31, %32 : vector<1x32xf32>
    %cst_14 = arith.constant 0.000000e+00 : f32
    %34 = vector.broadcast %cst_14 : f32 to vector<1x32xf32>
    %35 = arith.maximumf %33, %34 : vector<1x32xf32>
    %cst_15 = arith.constant 9.99999974E-6 : f32
    %36 = vector.broadcast %cst_15 : f32 to vector<1x32xf32>
    %37 = arith.addf %35, %36 : vector<1x32xf32>
    %38 = math.rsqrt %37 : vector<1x32xf32>
    %39 = arith.mulf %1, %38 : vector<1x32xf32>
    %40 = arith.mulf %28, %39 : vector<1x32xf32>
    %41 = arith.subf %2, %40 : vector<1x32xf32>
    %42 = tpu.concatenate %39, %41 in 0 : vector<1x32xf32>, vector<1x32xf32> -> vector<2x32xf32>
    %cst_16 = arith.constant dense<0.000000e+00> : vector<2x128xf32>
    %43 = tpu.matmul %42, %18, %cst_16 {dimension_numbers = #tpu.dot_dimension_numbers<[1], [0], [0], [1], [0, 0, 1, 1], [], []>} : vector<2x32xf32>, vector<32x128xf32>, vector<2x128xf32> -> vector<2x128xf32>
    %44 = vector.extract_strided_slice %43 {offsets = [0, 0], sizes = [1, 128], strides = [1, 1]} : vector<2x128xf32> to vector<1x128xf32>
    %45 = vector.broadcast %44 : vector<1x128xf32> to vector<512x128xf32>
    %46 = arith.mulf %0, %45 : vector<512x128xf32>
    %47 = vector.extract_strided_slice %43 {offsets = [1, 0], sizes = [1, 128], strides = [1, 1]} : vector<2x128xf32> to vector<1x128xf32>
    %48 = vector.broadcast %47 : vector<1x128xf32> to vector<512x128xf32>
    %49 = arith.addf %46, %48 : vector<512x128xf32>
    %cst_17 = arith.constant 0.000000e+00 : f32
    %50 = vector.broadcast %cst_17 : f32 to vector<512x128xf32>
    %51 = arith.maximumf %49, %50 : vector<512x128xf32>
    %52 = arith.truncf %51 : vector<512x128xf32> to vector<512x128xbf16>
    %c0_18 = arith.constant 0 : index
    %c0_19 = arith.constant 0 : index
    %53 = vector.load %arg4[%c0_18, %c0_19] : memref<512x128xbf16, #tpu.memory_space<vmem>>, vector<512x128xbf16>
    tpu.vector_store %arg4[%c0_18, %c0_19], %52 {strides = array<i32>} : memref<512x128xbf16, #tpu.memory_space<vmem>>, vector<512x128xbf16>,
    return
  }
  func.func @transform_0(%arg0: i32) -> (i32, i32) {
    %c0_i32 = arith.constant 0 : i32
    %c0_i32_0 = arith.constant 0 : i32
    %c0_i32_1 = arith.constant 0 : i32
    return %c0_i32, %c0_i32_0 : i32, i32
  }
  func.func @transform_1(%arg0: i32) -> (i32, i32) {
    %c0_i32 = arith.constant 0 : i32
    %c0_i32_0 = arith.constant 0 : i32
    %c0_i32_1 = arith.constant 0 : i32
    return %c0_i32, %c0_i32_0 : i32, i32
  }
  func.func @transform_2(%arg0: i32) -> (i32, i32) {
    %c0_i32 = arith.constant 0 : i32
    %c0_i32_0 = arith.constant 0 : i32
    %c0_i32_1 = arith.constant 0 : i32
    return %c0_i32, %c0_i32_0 : i32, i32
  }
  func.func @transform_3(%arg0: i32) -> (i32, i32) {
    %c0_i32 = arith.constant 0 : i32
    %c0_i32_0 = arith.constant 0 : i32
    %c0_i32_1 = arith.constant 0 : i32
    return %c0_i32, %c0_i32_0 : i32, i32
  }
}

module attributes {stable_mosaic.version = 11 : i64} {
  func.func @matmul_kernel(%arg0: i32, %arg1: memref<1024x288xbf16, #tpu.memory_space<vmem>>, %arg2: memref<288x128xbf16, #tpu.memory_space<vmem>>, %arg3: memref<1024x128xf32, #tpu.memory_space<vmem>>) attributes {dimension_semantics = [#tpu.dimension_semantics<parallel>], iteration_bounds = array<i64: 2>, scalar_prefetch = 0 : i64, scratch_operands = 0 : i64, tpu.core_type = #tpu.core_type<tc>, window_params = [{transform_indices = @transform_0, window_bounds = array<i64: 1024, 288>}, {pipeline_mode = #tpu.pipeline_mode<synchronous>, transform_indices = @transform_1, window_bounds = array<i64: 288, 128>}, {transform_indices = @transform_2, window_bounds = array<i64: 1024, 128>}]} {
    %c0 = arith.constant 0 : index
    %c0_0 = arith.constant 0 : index
    %0 = vector.load %arg1[%c0, %c0_0] : memref<1024x288xbf16, #tpu.memory_space<vmem>>, vector<1024x288xbf16>
    %c0_1 = arith.constant 0 : index
    %c0_2 = arith.constant 0 : index
    %1 = vector.load %arg2[%c0_1, %c0_2] : memref<288x128xbf16, #tpu.memory_space<vmem>>, vector<288x128xbf16>
    %cst = arith.constant dense<0.000000e+00> : vector<1024x128xf32>
    %2 = tpu.matmul %0, %1, %cst {dimension_numbers = #tpu.dot_dimension_numbers<[1], [0], [0], [1], [0, 0, 1, 1], [], []>} : vector<1024x288xbf16>, vector<288x128xbf16>, vector<1024x128xf32> -> vector<1024x128xf32>
    %c0_3 = arith.constant 0 : index
    %c0_4 = arith.constant 0 : index
    %3 = vector.load %arg3[%c0_3, %c0_4] : memref<1024x128xf32, #tpu.memory_space<vmem>>, vector<1024x128xf32>
    tpu.vector_store %arg3[%c0_3, %c0_4], %2 {strides = array<i32>} : memref<1024x128xf32, #tpu.memory_space<vmem>>, vector<1024x128xf32>,
    return
  }
  func.func @transform_0(%arg0: i32) -> (i32, i32) {
    %c0_i32 = arith.constant 0 : i32
    %c0_i32_0 = arith.constant 0 : i32
    return %arg0, %c0_i32 : i32, i32
  }
  func.func @transform_1(%arg0: i32) -> (i32, i32) {
    %c0_i32 = arith.constant 0 : i32
    %c0_i32_0 = arith.constant 0 : i32
    %c0_i32_1 = arith.constant 0 : i32
    return %c0_i32, %c0_i32_0 : i32, i32
  }
  func.func @transform_2(%arg0: i32) -> (i32, i32) {
    %c0_i32 = arith.constant 0 : i32
    %c0_i32_0 = arith.constant 0 : i32
    return %arg0, %c0_i32 : i32, i32
  }
}

module attributes {stable_mosaic.version = 11 : i64} {
  func.func @tanh_kernel(%arg0: i32, %arg1: memref<1024x128xf32, #tpu.memory_space<vmem>>, %arg2: memref<1024x128xf32, #tpu.memory_space<vmem>>) attributes {dimension_semantics = [#tpu.dimension_semantics<parallel>], iteration_bounds = array<i64: 2>, scalar_prefetch = 0 : i64, scratch_operands = 0 : i64, tpu.core_type = #tpu.core_type<tc>, window_params = [{transform_indices = @transform_0, window_bounds = array<i64: 1024, 128>}, {transform_indices = @transform_1, window_bounds = array<i64: 1024, 128>}]} {
    %c0 = arith.constant 0 : index
    %c0_0 = arith.constant 0 : index
    %0 = vector.load %arg1[%c0, %c0_0] : memref<1024x128xf32, #tpu.memory_space<vmem>>, vector<1024x128xf32>
    %1 = math.tanh %0 : vector<1024x128xf32>
    %c0_1 = arith.constant 0 : index
    %c0_2 = arith.constant 0 : index
    %2 = vector.load %arg2[%c0_1, %c0_2] : memref<1024x128xf32, #tpu.memory_space<vmem>>, vector<1024x128xf32>
    tpu.vector_store %arg2[%c0_1, %c0_2], %1 {strides = array<i32>} : memref<1024x128xf32, #tpu.memory_space<vmem>>, vector<1024x128xf32>,
    return
  }
  func.func @transform_0(%arg0: i32) -> (i32, i32) {
    %c0_i32 = arith.constant 0 : i32
    %c0_i32_0 = arith.constant 0 : i32
    return %arg0, %c0_i32 : i32, i32
  }
  func.func @transform_1(%arg0: i32) -> (i32, i32) {
    %c0_i32 = arith.constant 0 : i32
    %c0_i32_0 = arith.constant 0 : i32
    return %arg0, %c0_i32 : i32, i32
  }
}

</mosaic_0001>

<llo_original>
// kernel: generator_forward.11
$region0: #{generator_forward.11}
  #allocation0 [shape = 'u32[]', space=smem, size = 0x4, offset = 0x4, fixed_abs, tag = 'smem constant byte address 0x4 - core index']
  #allocation1 [shape = 'u32[144,128]{1,0:T(1,128)}', space=vmem, size = 0x12000, scoped, tag = 'internal scratch']
  %s0 = inlined_call_operand.vmem [shape: f32[32,128], index: 0, kind: input, shape index: {}]
  %s1 = inlined_call_operand.hbm [shape: f32[1,32], index: 1, kind: input, shape index: {}]
  %s2 = inlined_call_operand.vmem [shape: f32[1,32], index: 2, kind: input, shape index: {}]
  %s3 = inlined_call_operand.vmem [shape: bf16[32,128], index: 3, kind: output, shape index: {}]
  %s4 = sld [smem:[#allocation0]]
  $region26: #{generator_forward.11} parent=0
    _
  %s6 = ssub.s32 1, %s4
  %s7 = scalar_select 0, %s6, %s4
  $region1: #{generator_forward.11} parent=0
    #allocation2 [shape = 'u8[512]{0}', space=vmem, size = 0x400, scoped, tag = 'input window, operand 1, single buffered']
    #allocation3 [shape = 's32[1]{0}', space=sflag, size = 0x4, scoped, tag = 'scoped memory for generator_forward.11']
    %8 = vsyncpa [#allocation3], 0
    // Predicated region
    $region2: #{generator_forward.11} parent=1 // pred_check
      _
    $region3: #{generator_forward.11} parent=1 // pred_check_branch
      %10 = sbr.rel (0) target = $region5
    $region4: #{generator_forward.11} parent=1 // pred_region
      _
    $region5: #{generator_forward.11} parent=1 // pred_fallthru
      _
    // Predicated region
    $region6: #{generator_forward.11} parent=1 // pred_check
      _
    $region7: #{generator_forward.11} parent=1 // pred_check_branch
      %12 = sbr.rel (0) target = $region9
    $region8: #{generator_forward.11} parent=1 // pred_region
      %s14 = ssub.s32 16, 16
      %15 = vsyncadd [#allocation3], %s14
      %s17 = sshll.u32 [#allocation2], 4
      %s18 = int_to_ptr.vmem [resolvable:$true] %s17
      %20 = dma.hbm_to_vmem [thread:$0]  %s1, 16, %s18, [#allocation3]
    $region9: #{generator_forward.11} parent=1 // pred_fallthru
      _
    // Predicated region
    $region10: #{generator_forward.11} parent=1 // pred_check
      _
    $region11: #{generator_forward.11} parent=1 // pred_check_branch
      %22 = sbr.rel (0) target = $region13
    $region12: #{generator_forward.11} parent=1 // pred_region
      _
    $region13: #{generator_forward.11} parent=1 // pred_fallthru
      _
    // Predicated region
    $region14: #{generator_forward.11} parent=1 // pred_check
      _
    $region15: #{generator_forward.11} parent=1 // pred_check_branch
      %24 = sbr.rel (0) target = $region17
    $region16: #{generator_forward.11} parent=1 // pred_region
      %25 = dma.done [#allocation3], 16
    $region17: #{generator_forward.11} parent=1 // pred_fallthru
      _
    %v26 = vld [vmem:[%s0] sm:$0xff]
    %v27 = vld [vmem:[%s0 + $0x8] sm:$0xff]
    %v28 = vld [vmem:[%s0 + $0x10] sm:$0xff]
    %v29 = vld [vmem:[%s0 + $0x18] sm:$0xff]
    %v30 = vld [vmem:[#allocation2] sm:$0x1]
    %v31 = vld [vmem:[%s2] sm:$0x1]
    %v32 = vlaneseq
    %v33 = vshrl.u32 %v32, 7
    %v34 = vadd.s32 %v33, 8
    %v35 = vadd.s32 %v33, 16
    %v36 = vadd.s32 %v33, 24
    %v37 = vadd.s32 %v33, 32
    %v38 = vadd.s32 %v33, 40
    %v39 = vadd.s32 %v33, 48
    %v40 = vadd.s32 %v33, 56
    %v41 = vadd.s32 %v33, 64
    %v42 = vadd.s32 %v33, 72
    %v43 = vadd.s32 %v33, 80
    %v44 = vadd.s32 %v33, 88
    %v45 = vadd.s32 %v33, 96
    %v46 = vadd.s32 %v33, 104
    %v47 = vadd.s32 %v33, 112
    %v48 = vadd.s32 %v33, 120
    %v49 = vand.u32 %v33, 31
    %v50 = vand.u32 %v34, 31
    %v51 = vand.u32 %v35, 31
    %v52 = vand.u32 %v36, 31
    %v53 = vand.u32 %v37, 31
    %v54 = vand.u32 %v38, 31
    %v55 = vand.u32 %v39, 31
    %v56 = vand.u32 %v40, 31
    %v57 = vand.u32 %v41, 31
    %v58 = vand.u32 %v42, 31
    %v59 = vand.u32 %v43, 31
    %v60 = vand.u32 %v44, 31
    %v61 = vand.u32 %v45, 31
    %v62 = vand.u32 %v46, 31
    %v63 = vand.u32 %v47, 31
    %v64 = vand.u32 %v48, 31
    %v65 = vlaneseq
    %v66 = vand.u32 %v65, 127
    %vm67 = vcmp.eq.s32.totalorder %v49, %v66
    %vm68 = vcmp.eq.s32.totalorder %v50, %v66
    %vm69 = vcmp.eq.s32.totalorder %v51, %v66
    %vm70 = vcmp.eq.s32.totalorder %v52, %v66
    %vm71 = vcmp.eq.s32.totalorder %v53, %v66
    %vm72 = vcmp.eq.s32.totalorder %v54, %v66
    %vm73 = vcmp.eq.s32.totalorder %v55, %v66
    %vm74 = vcmp.eq.s32.totalorder %v56, %v66
    %vm75 = vcmp.eq.s32.totalorder %v57, %v66
    %vm76 = vcmp.eq.s32.totalorder %v58, %v66
    %vm77 = vcmp.eq.s32.totalorder %v59, %v66
    %vm78 = vcmp.eq.s32.totalorder %v60, %v66
    %vm79 = vcmp.eq.s32.totalorder %v61, %v66
    %vm80 = vcmp.eq.s32.totalorder %v62, %v66
    %vm81 = vcmp.eq.s32.totalorder %v63, %v66
    %vm82 = vcmp.eq.s32.totalorder %v64, %v66
    %v83 = vsel %vm67, 1.0, 0.0
    %v84 = vsel %vm68, 1.0, 0.0
    %v85 = vsel %vm69, 1.0, 0.0
    %v86 = vsel %vm70, 1.0, 0.0
    %v87 = vsel %vm71, 1.0, 0.0
    %v88 = vsel %vm72, 1.0, 0.0
    %v89 = vsel %vm73, 1.0, 0.0
    %v90 = vsel %vm74, 1.0, 0.0
    %v91 = vsel %vm75, 1.0, 0.0
    %v92 = vsel %vm76, 1.0, 0.0
    %v93 = vsel %vm77, 1.0, 0.0
    %v94 = vsel %vm78, 1.0, 0.0
    %v95 = vsel %vm79, 1.0, 0.0
    %v96 = vsel %vm80, 1.0, 0.0
    %v97 = vsel %vm81, 1.0, 0.0
    %v98 = vsel %vm82, 1.0, 0.0
    %v99 = vand.u32 %v66, 31
    %vm100 = vcmp.eq.s32.totalorder %v99, %v33
    %vm101 = vcmp.eq.s32.totalorder %v99, %v34
    %vm102 = vcmp.eq.s32.totalorder %v99, %v35
    %vm103 = vcmp.eq.s32.totalorder %v99, %v36
    %v104 = vsel %vm100, 1.0, 0.0
    %v105 = vsel %vm101, 1.0, 0.0
    %v106 = vsel %vm102, 1.0, 0.0
    %v107 = vsel %vm103, 1.0, 0.0
    %v108 = vadd.f32 %v26, %v27
    %v109 = vadd.f32 %v108, %v28
    %v110 = vadd.f32 %v109, %v29
    %v111 = vrot.slane %v110, 4
    %v112 = vadd.f32 %v110, %v111
    %v113 = vrot.slane %v112, 2
    %v114 = vadd.f32 %v112, %v113
    %v115 = vrot.slane %v114, 1
    %v116 = vadd.f32 %v114, %v115
    %v117 = vmul.f32 %v26, %v26
    %v118 = vmul.f32 %v27, %v27
    %v119 = vmul.f32 %v28, %v28
    %v120 = vmul.f32 %v29, %v29
    %v121 = vadd.f32 %v117, %v118
    %v122 = vadd.f32 %v121, %v119
    %v123 = vadd.f32 %v122, %v120
    %v124 = vrot.slane %v123, 4
    %v125 = vadd.f32 %v123, %v124
    %v126 = vrot.slane %v125, 2
    %v127 = vadd.f32 %v125, %v126
    %v128 = vrot.slane %v127, 1
    %v129 = vadd.f32 %v127, %v128
    %vm130 = vcmask 1040384
    %v131 = vsel %vm130, %v116, %v129
    %132 = vmatprep.subr.mxu0 0.0
    %133 = vmatpush1.msra.mxu0 %v83
    %134 = vmatprep.subr.mxu0 0.0
    %135 = vmatpush1.msra.mxu0 %v84
    %136 = vmatprep.subr.mxu0 0.0
    %137 = vmatpush1.msra.mxu0 %v85
    %138 = vmatprep.subr.mxu0 0.0
    %139 = vmatpush1.msra.mxu0 %v86
    %140 = vmatprep.subr.mxu0 0.0
    %141 = vmatpush1.msra.mxu0 %v87
    %142 = vmatprep.subr.mxu0 0.0
    %143 = vmatpush1.msra.mxu0 %v88
    %144 = vmatprep.subr.mxu0 0.0
    %145 = vmatpush1.msra.mxu0 %v89
    %146 = vmatprep.subr.mxu0 0.0
    %147 = vmatpush1.msra.mxu0 %v90
    %148 = vmatprep.subr.mxu0 0.0
    %149 = vmatpush1.msra.mxu0 %v91
    %150 = vmatprep.subr.mxu0 0.0
    %151 = vmatpush1.msra.mxu0 %v92
    %152 = vmatprep.subr.mxu0 0.0
    %153 = vmatpush1.msra.mxu0 %v93
    %154 = vmatprep.subr.mxu0 0.0
    %155 = vmatpush1.msra.mxu0 %v94
    %156 = vmatprep.subr.mxu0 0.0
    %157 = vmatpush1.msra.mxu0 %v95
    %158 = vmatprep.subr.mxu0 0.0
    %159 = vmatpush1.msra.mxu0 %v96
    %160 = vmatprep.subr.mxu0 0.0
    %161 = vmatpush1.msra.mxu0 %v97
    %162 = vmatprep.subr.mxu0 0.0
    %163 = vmatpush1.msra.mxu0 %v98
    %164 = vmatprep.subr.mxu0 0.0
    %165 = vmatpush1.msra.mxu0 0.0
    %166 = vmatprep.subr.mxu0 0.0
    %167 = vmatpush1.msra.mxu0 0.0
    %168 = vmatprep.subr.mxu0 0.0
    %169 = vmatpush1.msra.mxu0 0.0
    %170 = vmatprep.subr.mxu0 0.0
    %171 = vmatpush1.msra.mxu0 0.0
    %172 = vmatprep.subr.mxu0 0.0
    %173 = vmatpush1.msra.mxu0 0.0
    %174 = vmatprep.subr.mxu0 0.0
    %175 = vmatpush1.msra.mxu0 0.0
    %176 = vmatprep.subr.mxu0 0.0
    %177 = vmatpush1.msra.mxu0 0.0
    %178 = vmatprep.subr.mxu0 0.0
    %179 = vmatpush1.msra.mxu0 0.0
    %180 = vmatprep.subr.mxu0 0.0
    %181 = vmatpush1.msra.mxu0 0.0
    %182 = vmatprep.subr.mxu0 0.0
    %183 = vmatpush1.msra.mxu0 0.0
    %184 = vmatprep.subr.mxu0 0.0
    %185 = vmatpush1.msra.mxu0 0.0
    %186 = vmatprep.subr.mxu0 0.0
    %187 = vmatpush1.msra.mxu0 0.0
    %188 = vmatprep.subr.mxu0 0.0
    %189 = vmatpush1.msra.mxu0 0.0
    %190 = vmatprep.subr.mxu0 0.0
    %191 = vmatpush1.msra.mxu0 0.0
    %192 = vmatprep.subr.mxu0 0.0
    %193 = vmatpush1.msra.mxu0 0.0
    %194 = vmatprep.subr.mxu0 0.0
    %195 = vmatpush1.msra.mxu0 0.0
    %196 = vmatprep.mubr.f32.mxu0 0.0
    %197 = vmatmul.mubr.f32.gmra.mrb[0].mxu0 %v131
    %v198 = vpop.f32.mrb[0].mxu0
    %v199 = vadd.f32 0.0, %v198
    %v200 = vpop.f32.mrb[0].mxu0
    %201 = vdwg.mxu0
    %v202 = vrcp.pop 128.0
    %v203 = vmul.f32 %v199, %v202
    %v204 = vmul.f32 %v203, %v203
    %v206 = vrot.slane %v204, 7
    %v208 = vsub.f32 %v203, %v206
    %v209 = vmax.f32 %v208, 0.0
    %v210 = vadd.f32 %v209, 1e-05
    %v211 = vrsqrt.pop %v210
    %v214 = vunpack.c.l.s4 1966171168
    %v215 = vunpack.c.0.s8 %v214
    %v216 = vlaneseq
    %v217 = vshrl.u32 %v216, 7
    %v218 = vsub.s32 %v215, %v217
    %v219 = vrot.slane %v211, %v218
    %v220 = vcombine.high %v219, %v219
    %v222 = vunpack.c.l.s4 1966171168
    %v223 = vunpack.c.0.s8 %v222
    %v224 = vlaneseq
    %v225 = vshrl.u32 %v224, 7
    %v226 = vsub.s32 %v223, %v225
    %v227 = vrot.slane %v220, %v226
    %v229 = vmul.f32 %v30, %v227
    %v230 = vmul.f32 %v203, %v229
    %v231 = vsub.f32 %v31, %v230
    %v233 = vlaneseq
    %v234 = vshrl.u32 %v233, 7
    %v235 = vsub.s32 0, %v234
    %v236 = vrot.slane %v231, %v235
    %v238 = vsel %vm130, %v229, %v236
    %vm239 = vcmask 261120
    %v241 = vsel %vm239, %v238, 0
    %243 = vmatprep.subr.mxu0 0.0
    %244 = vmatpush1.msra.mxu0 %v104
    %245 = vmatprep.subr.mxu0 0.0
    %246 = vmatpush1.msra.mxu0 %v105
    %247 = vmatprep.subr.mxu0 0.0
    %248 = vmatpush1.msra.mxu0 %v106
    %249 = vmatprep.subr.mxu0 0.0
    %250 = vmatpush1.msra.mxu0 %v107
    %251 = vmatprep.subr.mxu0 0.0
    %252 = vmatpush1.msra.mxu0 0.0
    %253 = vmatprep.subr.mxu0 0.0
    %254 = vmatpush1.msra.mxu0 0.0
    %255 = vmatprep.subr.mxu0 0.0
    %256 = vmatpush1.msra.mxu0 0.0
    %257 = vmatprep.subr.mxu0 0.0
    %258 = vmatpush1.msra.mxu0 0.0
    %259 = vmatprep.subr.mxu0 0.0
    %260 = vmatpush1.msra.mxu0 0.0
    %261 = vmatprep.subr.mxu0 0.0
    %262 = vmatpush1.msra.mxu0 0.0
    %263 = vmatprep.subr.mxu0 0.0
    %264 = vmatpush1.msra.mxu0 0.0
    %265 = vmatprep.subr.mxu0 0.0
    %266 = vmatpush1.msra.mxu0 0.0
    %267 = vmatprep.subr.mxu0 0.0
    %268 = vmatpush1.msra.mxu0 0.0
    %269 = vmatprep.subr.mxu0 0.0
    %270 = vmatpush1.msra.mxu0 0.0
    %271 = vmatprep.subr.mxu0 0.0
    %272 = vmatpush1.msra.mxu0 0.0
    %273 = vmatprep.subr.mxu0 0.0
    %274 = vmatpush1.msra.mxu0 0.0
    %275 = vmatprep.subr.mxu0 0.0
    %276 = vmatpush1.msra.mxu0 0.0
    %277 = vmatprep.subr.mxu0 0.0
    %278 = vmatpush1.msra.mxu0 0.0
    %279 = vmatprep.subr.mxu0 0.0
    %280 = vmatpush1.msra.mxu0 0.0
    %281 = vmatprep.subr.mxu0 0.0
    %282 = vmatpush1.msra.mxu0 0.0
    %283 = vmatprep.subr.mxu0 0.0
    %284 = vmatpush1.msra.mxu0 0.0
    %285 = vmatprep.subr.mxu0 0.0
    %286 = vmatpush1.msra.mxu0 0.0
    %287 = vmatprep.subr.mxu0 0.0
    %288 = vmatpush1.msra.mxu0 0.0
    %289 = vmatprep.subr.mxu0 0.0
    %290 = vmatpush1.msra.mxu0 0.0
    %291 = vmatprep.subr.mxu0 0.0
    %292 = vmatpush1.msra.mxu0 0.0
    %293 = vmatprep.subr.mxu0 0.0
    %294 = vmatpush1.msra.mxu0 0.0
    %295 = vmatprep.subr.mxu0 0.0
    %296 = vmatpush1.msra.mxu0 0.0
    %297 = vmatprep.subr.mxu0 0.0
    %298 = vmatpush1.msra.mxu0 0.0
    %299 = vmatprep.subr.mxu0 0.0
    %300 = vmatpush1.msra.mxu0 0.0
    %301 = vmatprep.subr.mxu0 0.0
    %302 = vmatpush1.msra.mxu0 0.0
    %303 = vmatprep.subr.mxu0 0.0
    %304 = vmatpush1.msra.mxu0 0.0
    %305 = vmatprep.subr.mxu0 0.0
    %306 = vmatpush1.msra.mxu0 0.0
    %307 = vmatprep.mubr.f32.mxu0 0.0
    %308 = vmatmul.mubr.f32.gmra.mrb[0].mxu0 %v241
    %v309 = vpop.f32.mrb[0].mxu0
    %v310 = vadd.f32 0.0, %v309
    %v311 = vpop.f32.mrb[0].mxu0
    %312 = vdwg.mxu0
    %v313 = vlaneseq
    %v314 = vshrl.u32 %v313, 7
    %v315 = vsub.s32 0, %v314
    %v316 = vrot.slane %v310, %v315
    %v317 = vmul.f32 %v26, %v316
    %v318 = vmul.f32 %v27, %v316
    %v319 = vmul.f32 %v28, %v316
    %v320 = vmul.f32 %v29, %v316
    %v321 = vlaneseq
    %v322 = vshrl.u32 %v321, 7
    %v323 = vsub.s32 1, %v322
    %v324 = vrot.slane %v310, %v323
    %v325 = vadd.f32 %v317, %v324
    %v326 = vadd.f32 %v318, %v324
    %v327 = vadd.f32 %v319, %v324
    %v328 = vadd.f32 %v320, %v324
    %v329 = vmax.f32 %v325, 0.0
    %v330 = vmax.f32 %v326, 0.0
    %v331 = vmax.f32 %v327, 0.0
    %v332 = vmax.f32 %v328, 0.0
    %v333 = vpack.c.bf16 %v330, %v329
    %v334 = vpack.c.bf16 %v332, %v331
    %v337 = vunpack.c.l.b16 %v333
    %v338 = vunpack.c.h.b16 %v333
    %v339 = vunpack.c.l.b16 %v334
    %v340 = vunpack.c.h.b16 %v334
    %v341 = vpack.c.b16 %v337, %v337
    %v342 = vpack.c.b16 %v338, %v338
    %v343 = vpack.c.b16 %v339, %v339
    %v344 = vpack.c.b16 %v340, %v340
    %349 = vst [vmem:[%s3] sm:$0xf] %v341
    %350 = vst [vmem:[%s3 + $0x4] sm:$0xf] %v342
    %351 = vst [vmem:[%s3 + $0x8] sm:$0xf] %v343
    %352 = vst [vmem:[%s3 + $0xc] sm:$0xf] %v344
    // Predicated region
    $region18: #{generator_forward.11} parent=1 // pred_check
      _
    $region19: #{generator_forward.11} parent=1 // pred_check_branch
      %354 = sbr.rel (0) target = $region21
    $region20: #{generator_forward.11} parent=1 // pred_region
      _
    $region21: #{generator_forward.11} parent=1 // pred_fallthru
      _
    // Predicated region
    $region22: #{generator_forward.11} parent=1 // pred_check
      _
    $region23: #{generator_forward.11} parent=1 // pred_check_branch
      %356 = sbr.rel (0) target = $region25
    $region24: #{generator_forward.11} parent=1 // pred_region
      _
    $region25: #{generator_forward.11} parent=1 // pred_fallthru
      _
    %357 = vsyncpa [#allocation3], 1

// kernel: generator_forward.10
$region0: #{generator_forward.10}
  #allocation0 [shape = 'u32[]', space=smem, size = 0x4, offset = 0x4, fixed_abs, tag = 'smem constant byte address 0x4 - core index']
  #allocation1 [shape = 'u32[144,128]{1,0:T(1,128)}', space=vmem, size = 0x12000, scoped, tag = 'internal scratch']
  %s0 = inlined_call_operand.vmem [shape: bf16[32,576], index: 0, kind: input, shape index: {}]
  %s1 = inlined_call_operand.hbm [shape: bf16[576,128], index: 1, kind: input, shape index: {}]
  %s2 = inlined_call_operand.vmem [shape: f32[32,128], index: 2, kind: output, shape index: {}]
  %s3 = sld [smem:[#allocation0]]
  $region22: #{generator_forward.10} parent=0
    _
  %s5 = ssub.s32 1, %s3
  %s6 = scalar_select 0, %s5, %s3
  $region1: #{generator_forward.10} parent=0
    #allocation2 [shape = 'u8[147456]{0}', space=vmem, size = 0x24000, scoped, tag = 'input window, operand 1, single buffered']
    #allocation3 [shape = 's32[1]{0}', space=sflag, size = 0x4, scoped, tag = 'scoped memory for generator_forward.10']
    %7 = vsyncpa [#allocation3], 0
    // Predicated region
    $region2: #{generator_forward.10} parent=1 // pred_check
      _
    $region3: #{generator_forward.10} parent=1 // pred_check_branch
      %9 = sbr.rel (0) target = $region5
    $region4: #{generator_forward.10} parent=1 // pred_region
      _
    $region5: #{generator_forward.10} parent=1 // pred_fallthru
      _
    // Predicated region
    $region6: #{generator_forward.10} parent=1 // pred_check
      _
    $region7: #{generator_forward.10} parent=1 // pred_check_branch
      %11 = sbr.rel (0) target = $region9
    $region8: #{generator_forward.10} parent=1 // pred_region
      %s13 = ssub.s32 4608, 4608
      %14 = vsyncadd [#allocation3], %s13
      %s15 = sshll.u32 [#allocation2], 4
      %s16 = int_to_ptr.vmem [resolvable:$true] %s15
      %21 = dma.hbm_to_vmem [thread:$0]  %s1, 4608, %s16, [#allocation3], 64, 64, 4
    $region9: #{generator_forward.10} parent=1 // pred_fallthru
      _
    // Predicated region
    $region10: #{generator_forward.10} parent=1 // pred_check
      _
    $region11: #{generator_forward.10} parent=1 // pred_check_branch
      %23 = sbr.rel (0) target = $region13
    $region12: #{generator_forward.10} parent=1 // pred_region
      %24 = dma.done [#allocation3], 4608
    $region13: #{generator_forward.10} parent=1 // pred_fallthru
      _
    %v26 = vld [vmem:[%s0] sm:$0xff]
    %v27 = vld [vmem:[%s0 + $0x8] sm:$0xff]
    %v28 = vld [vmem:[%s0 + $0x10] sm:$0xf]
    %v29 = vld [vmem:[%s0 + $0x14] sm:$0xff]
    %v30 = vld [vmem:[%s0 + $0x1c] sm:$0xff]
    %v31 = vld [vmem:[%s0 + $0x24] sm:$0xf]
    %v32 = vld [vmem:[%s0 + $0x28] sm:$0xff]
    %v33 = vld [vmem:[%s0 + $0x30] sm:$0xff]
    %v34 = vld [vmem:[%s0 + $0x38] sm:$0xf]
    %v35 = vld [vmem:[%s0 + $0x3c] sm:$0xff]
    %v36 = vld [vmem:[%s0 + $0x44] sm:$0xff]
    %v37 = vld [vmem:[%s0 + $0x4c] sm:$0xf]
    %v38 = vld [vmem:[#allocation2] sm:$0xf]
    %v39 = vld [vmem:[#allocation2 + $0x4] sm:$0xf]
    %v40 = vld [vmem:[#allocation2 + $0x8] sm:$0xf]
    %v41 = vld [vmem:[#allocation2 + $0xc] sm:$0xf]
    %v42 = vld [vmem:[#allocation2 + $0x10] sm:$0xf]
    %v43 = vld [vmem:[#allocation2 + $0x14] sm:$0xf]
    %v44 = vld [vmem:[#allocation2 + $0x18] sm:$0xf]
    %v45 = vld [vmem:[#allocation2 + $0x1c] sm:$0xf]
    %v46 = vld [vmem:[#allocation2 + $0x20] sm:$0xf]
    %v47 = vld [vmem:[#allocation2 + $0x24] sm:$0xf]
    %v48 = vld [vmem:[#allocation2 + $0x28] sm:$0xf]
    %v49 = vld [vmem:[#allocation2 + $0x2c] sm:$0xf]
    %v50 = vld [vmem:[#allocation2 + $0x30] sm:$0xf]
    %v51 = vld [vmem:[#allocation2 + $0x34] sm:$0xf]
    %v52 = vld [vmem:[#allocation2 + $0x38] sm:$0xf]
    %v53 = vld [vmem:[#allocation2 + $0x3c] sm:$0xf]
    %v54 = vld [vmem:[#allocation2 + $0x40] sm:$0xf]
    %v55 = vld [vmem:[#allocation2 + $0x44] sm:$0xf]
    %v56 = vld [vmem:[#allocation2 + $0x48] sm:$0xf]
    %v57 = vld [vmem:[#allocation2 + $0x4c] sm:$0xf]
    %v58 = vld [vmem:[#allocation2 + $0x50] sm:$0xf]
    %v59 = vld [vmem:[#allocation2 + $0x54] sm:$0xf]
    %v60 = vld [vmem:[#allocation2 + $0x58] sm:$0xf]
    %v61 = vld [vmem:[#allocation2 + $0x5c] sm:$0xf]
    %v62 = vld [vmem:[#allocation2 + $0x60] sm:$0xf]
    %v63 = vld [vmem:[#allocation2 + $0x64] sm:$0xf]
    %v64 = vld [vmem:[#allocation2 + $0x68] sm:$0xf]
    %v65 = vld [vmem:[#allocation2 + $0x6c] sm:$0xf]
    %v66 = vld [vmem:[#allocation2 + $0x70] sm:$0xf]
    %v67 = vld [vmem:[#allocation2 + $0x74] sm:$0xf]
    %v68 = vld [vmem:[#allocation2 + $0x78] sm:$0xf]
    %v69 = vld [vmem:[#allocation2 + $0x7c] sm:$0xf]
    %v70 = vld [vmem:[#allocation2 + $0x80] sm:$0xf]
    %v71 = vld [vmem:[#allocation2 + $0x84] sm:$0xf]
    %v72 = vld [vmem:[#allocation2 + $0x88] sm:$0xf]
    %v73 = vld [vmem:[#allocation2 + $0x8c] sm:$0xf]
    %v74 = vld [vmem:[#allocation2 + $0x90] sm:$0xf]
    %v75 = vld [vmem:[#allocation2 + $0x94] sm:$0xf]
    %v76 = vld [vmem:[#allocation2 + $0x98] sm:$0xf]
    %v77 = vld [vmem:[#allocation2 + $0x9c] sm:$0xf]
    %v78 = vld [vmem:[#allocation2 + $0xa0] sm:$0xf]
    %v79 = vld [vmem:[#allocation2 + $0xa4] sm:$0xf]
    %v80 = vld [vmem:[#allocation2 + $0xa8] sm:$0xf]
    %v81 = vld [vmem:[#allocation2 + $0xac] sm:$0xf]
    %v82 = vld [vmem:[#allocation2 + $0xb0] sm:$0xf]
    %v83 = vld [vmem:[#allocation2 + $0xb4] sm:$0xf]
    %v84 = vld [vmem:[#allocation2 + $0xb8] sm:$0xf]
    %v85 = vld [vmem:[#allocation2 + $0xbc] sm:$0xf]
    %v86 = vld [vmem:[#allocation2 + $0xc0] sm:$0xf]
    %v87 = vld [vmem:[#allocation2 + $0xc4] sm:$0xf]
    %v88 = vld [vmem:[#allocation2 + $0xc8] sm:$0xf]
    %v89 = vld [vmem:[#allocation2 + $0xcc] sm:$0xf]
    %v90 = vld [vmem:[#allocation2 + $0xd0] sm:$0xf]
    %v91 = vld [vmem:[#allocation2 + $0xd4] sm:$0xf]
    %v92 = vld [vmem:[#allocation2 + $0xd8] sm:$0xf]
    %v93 = vld [vmem:[#allocation2 + $0xdc] sm:$0xf]
    %v94 = vld [vmem:[#allocation2 + $0xe0] sm:$0xf]
    %v95 = vld [vmem:[#allocation2 + $0xe4] sm:$0xf]
    %v96 = vld [vmem:[#allocation2 + $0xe8] sm:$0xf]
    %v97 = vld [vmem:[#allocation2 + $0xec] sm:$0xf]
    %v98 = vld [vmem:[#allocation2 + $0xf0] sm:$0xf]
    %v99 = vld [vmem:[#allocation2 + $0xf4] sm:$0xf]
    %v100 = vld [vmem:[#allocation2 + $0xf8] sm:$0xf]
    %v101 = vld [vmem:[#allocation2 + $0xfc] sm:$0xf]
    %v102 = vld [vmem:[#allocation2 + $0x100] sm:$0xf]
    %v103 = vld [vmem:[#allocation2 + $0x104] sm:$0xf]
    %v104 = vld [vmem:[#allocation2 + $0x108] sm:$0xf]
    %v105 = vld [vmem:[#allocation2 + $0x10c] sm:$0xf]
    %v106 = vld [vmem:[#allocation2 + $0x110] sm:$0xf]
    %v107 = vld [vmem:[#allocation2 + $0x114] sm:$0xf]
    %v108 = vld [vmem:[#allocation2 + $0x118] sm:$0xf]
    %v109 = vld [vmem:[#allocation2 + $0x11c] sm:$0xf]
    %v122 = vunpack.c.l.b16 %v26
    %v123 = vunpack.c.h.b16 %v26
    %v124 = vunpack.c.l.b16 %v27
    %v125 = vunpack.c.h.b16 %v27
    %v126 = vunpack.c.l.b16 %v28
    %v127 = vunpack.c.l.b16 %v29
    %v128 = vunpack.c.h.b16 %v29
    %v129 = vunpack.c.l.b16 %v30
    %v130 = vunpack.c.h.b16 %v30
    %v131 = vunpack.c.l.b16 %v31
    %v132 = vunpack.c.l.b16 %v32
    %v133 = vunpack.c.h.b16 %v32
    %v134 = vunpack.c.l.b16 %v33
    %v135 = vunpack.c.h.b16 %v33
    %v136 = vunpack.c.l.b16 %v34
    %v137 = vunpack.c.l.b16 %v35
    %v138 = vunpack.c.h.b16 %v35
    %v139 = vunpack.c.l.b16 %v36
    %v140 = vunpack.c.h.b16 %v36
    %v141 = vunpack.c.l.b16 %v37
    %v142 = vpack.c.b16 %v127, %v122
    %v143 = vpack.c.b16 %v128, %v123
    %v144 = vpack.c.b16 %v129, %v124
    %v145 = vpack.c.b16 %v130, %v125
    %v146 = vpack.c.b16 %v131, %v126
    %v147 = vpack.c.b16 %v137, %v132
    %v148 = vpack.c.b16 %v138, %v133
    %v149 = vpack.c.b16 %v139, %v134
    %v150 = vpack.c.b16 %v140, %v135
    %v151 = vpack.c.b16 %v141, %v136
    %v232 = vunpack.c.l.b16 %v38
    %v233 = vunpack.c.l.b16 %v39
    %v234 = vunpack.c.l.b16 %v40
    %v235 = vunpack.c.l.b16 %v41
    %v236 = vunpack.c.l.b16 %v42
    %v237 = vunpack.c.l.b16 %v43
    %v238 = vunpack.c.l.b16 %v44
    %v239 = vunpack.c.l.b16 %v45
    %v240 = vunpack.c.l.b16 %v46
    %v241 = vunpack.c.l.b16 %v47
    %v242 = vunpack.c.l.b16 %v48
    %v243 = vunpack.c.l.b16 %v49
    %v244 = vunpack.c.l.b16 %v50
    %v245 = vunpack.c.l.b16 %v51
    %v246 = vunpack.c.l.b16 %v52
    %v247 = vunpack.c.l.b16 %v53
    %v248 = vunpack.c.l.b16 %v54
    %v249 = vunpack.c.l.b16 %v55
    %v250 = vunpack.c.l.b16 %v56
    %v251 = vunpack.c.l.b16 %v57
    %v252 = vunpack.c.l.b16 %v58
    %v253 = vunpack.c.l.b16 %v59
    %v254 = vunpack.c.l.b16 %v60
    %v255 = vunpack.c.l.b16 %v61
    %v256 = vunpack.c.l.b16 %v62
    %v257 = vunpack.c.l.b16 %v63
    %v258 = vunpack.c.l.b16 %v64
    %v259 = vunpack.c.l.b16 %v65
    %v260 = vunpack.c.l.b16 %v66
    %v261 = vunpack.c.l.b16 %v67
    %v262 = vunpack.c.l.b16 %v68
    %v263 = vunpack.c.l.b16 %v69
    %v264 = vunpack.c.l.b16 %v70
    %v265 = vunpack.c.l.b16 %v71
    %v266 = vunpack.c.l.b16 %v72
    %v267 = vunpack.c.l.b16 %v73
    %v268 = vunpack.c.l.b16 %v74
    %v269 = vunpack.c.l.b16 %v75
    %v270 = vunpack.c.l.b16 %v76
    %v271 = vunpack.c.l.b16 %v77
    %v272 = vunpack.c.l.b16 %v78
    %v273 = vunpack.c.l.b16 %v79
    %v274 = vunpack.c.l.b16 %v80
    %v275 = vunpack.c.l.b16 %v81
    %v276 = vunpack.c.l.b16 %v82
    %v277 = vunpack.c.l.b16 %v83
    %v278 = vunpack.c.l.b16 %v84
    %v279 = vunpack.c.l.b16 %v85
    %v280 = vunpack.c.l.b16 %v86
    %v281 = vunpack.c.l.b16 %v87
    %v282 = vunpack.c.l.b16 %v88
    %v283 = vunpack.c.l.b16 %v89
    %v284 = vunpack.c.l.b16 %v90
    %v285 = vunpack.c.l.b16 %v91
    %v286 = vunpack.c.l.b16 %v92
    %v287 = vunpack.c.l.b16 %v93
    %v288 = vunpack.c.l.b16 %v94
    %v289 = vunpack.c.l.b16 %v95
    %v290 = vunpack.c.l.b16 %v96
    %v291 = vunpack.c.l.b16 %v97
    %v292 = vunpack.c.l.b16 %v98
    %v293 = vunpack.c.l.b16 %v99
    %v294 = vunpack.c.l.b16 %v100
    %v295 = vunpack.c.l.b16 %v101
    %v296 = vunpack.c.l.b16 %v102
    %v297 = vunpack.c.l.b16 %v103
    %v298 = vunpack.c.l.b16 %v104
    %v299 = vunpack.c.l.b16 %v105
    %v300 = vunpack.c.l.b16 %v106
    %v301 = vunpack.c.l.b16 %v107
    %v302 = vunpack.c.l.b16 %v108
    %v303 = vunpack.c.l.b16 %v109
    %v304 = vpack.c.b16 %v233, %v232
    %v305 = vpack.c.b16 %v235, %v234
    %v306 = vpack.c.b16 %v237, %v236
    %v307 = vpack.c.b16 %v239, %v238
    %v308 = vpack.c.b16 %v241, %v240
    %v309 = vpack.c.b16 %v243, %v242
    %v310 = vpack.c.b16 %v245, %v244
    %v311 = vpack.c.b16 %v247, %v246
    %v312 = vpack.c.b16 %v249, %v248
    %v313 = vpack.c.b16 %v251, %v250
    %v314 = vpack.c.b16 %v253, %v252
    %v315 = vpack.c.b16 %v255, %v254
    %v316 = vpack.c.b16 %v257, %v256
    %v317 = vpack.c.b16 %v259, %v258
    %v318 = vpack.c.b16 %v261, %v260
    %v319 = vpack.c.b16 %v263, %v262
    %v320 = vpack.c.b16 %v265, %v264
    %v321 = vpack.c.b16 %v267, %v266
    %v322 = vpack.c.b16 %v269, %v268
    %v323 = vpack.c.b16 %v271, %v270
    %v324 = vpack.c.b16 %v273, %v272
    %v325 = vpack.c.b16 %v275, %v274
    %v326 = vpack.c.b16 %v277, %v276
    %v327 = vpack.c.b16 %v279, %v278
    %v328 = vpack.c.b16 %v281, %v280
    %v329 = vpack.c.b16 %v283, %v282
    %v330 = vpack.c.b16 %v285, %v284
    %v331 = vpack.c.b16 %v287, %v286
    %v332 = vpack.c.b16 %v289, %v288
    %v333 = vpack.c.b16 %v291, %v290
    %v334 = vpack.c.b16 %v293, %v292
    %v335 = vpack.c.b16 %v295, %v294
    %v336 = vpack.c.b16 %v297, %v296
    %v337 = vpack.c.b16 %v299, %v298
    %v338 = vpack.c.b16 %v301, %v300
    %v339 = vpack.c.b16 %v303, %v302
    %vm376 = vcmask 523264
    %v378 = vsel %vm376, %v146, 0
    %v381 = vsel %vm376, %v151, 0
    %383 = vmatprep.subr.bf16.mxu0 0
    %384 = vmatpush1.bf16.msra.mxu0 %v304
    %385 = vmatprep.subr.bf16.mxu0 0
    %386 = vmatpush1.bf16.msra.mxu0 %v305
    %387 = vmatprep.subr.bf16.mxu0 0
    %388 = vmatpush1.bf16.msra.mxu0 %v306
    %389 = vmatprep.subr.bf16.mxu0 0
    %390 = vmatpush1.bf16.msra.mxu0 %v307
    %391 = vmatprep.subr.bf16.mxu0 0
    %392 = vmatpush1.bf16.msra.mxu0 %v308
    %393 = vmatprep.subr.bf16.mxu0 0
    %394 = vmatpush1.bf16.msra.mxu0 %v309
    %395 = vmatprep.subr.bf16.mxu0 0
    %396 = vmatpush1.bf16.msra.mxu0 %v310
    %397 = vmatprep.subr.bf16.mxu0 0
    %398 = vmatpush1.bf16.msra.mxu0 %v311
    %399 = vmatprep.subr.bf16.mxu0 0
    %400 = vmatpush1.bf16.msra.mxu0 %v312
    %401 = vmatprep.subr.bf16.mxu0 0
    %402 = vmatpush1.bf16.msra.mxu0 %v313
    %403 = vmatprep.subr.bf16.mxu0 0
    %404 = vmatpush1.bf16.msra.mxu0 %v314
    %405 = vmatprep.subr.bf16.mxu0 0
    %406 = vmatpush1.bf16.msra.mxu0 %v315
    %407 = vmatprep.subr.bf16.mxu0 0
    %408 = vmatpush1.bf16.msra.mxu0 %v316
    %409 = vmatprep.subr.bf16.mxu0 0
    %410 = vmatpush1.bf16.msra.mxu0 %v317
    %411 = vmatprep.subr.bf16.mxu0 0
    %412 = vmatpush1.bf16.msra.mxu0 %v318
    %413 = vmatprep.subr.bf16.mxu0 0
    %414 = vmatpush1.bf16.msra.mxu0 %v319
    %415 = vmatprep.mubr.bf16.mxu0 %v143
    %416 = vmatmul.mubr.bf16.gmra.mrb[0].mxu0 %v142
    %v417 = vpop.f32.mrb[0].mxu0
    %v418 = vadd.f32 0.0, %v417
    %v419 = vpop.f32.mrb[0].mxu0
    %v420 = vpop.f32.mrb[0].mxu0
    %v421 = vadd.f32 0.0, %v420
    %v422 = vpop.f32.mrb[0].mxu0
    %423 = vmatprep.mubr.bf16.mxu0 %v148
    %424 = vmatmul.mubr.bf16.gmra.mrb[0].mxu0 %v147
    %v425 = vpop.f32.mrb[0].mxu0
    %v426 = vadd.f32 0.0, %v425
    %v427 = vpop.f32.mrb[0].mxu0
    %v428 = vpop.f32.mrb[0].mxu0
    %v429 = vadd.f32 0.0, %v428
    %v430 = vpop.f32.mrb[0].mxu0
    %431 = vdwg.mxu0
    %432 = vmatprep.subr.bf16.mxu0 0
    %433 = vmatpush1.bf16.msra.mxu0 %v320
    %434 = vmatprep.subr.bf16.mxu0 0
    %435 = vmatpush1.bf16.msra.mxu0 %v321
    %436 = vmatprep.subr.bf16.mxu0 0
    %437 = vmatpush1.bf16.msra.mxu0 %v322
    %438 = vmatprep.subr.bf16.mxu0 0
    %439 = vmatpush1.bf16.msra.mxu0 %v323
    %440 = vmatprep.subr.bf16.mxu0 0
    %441 = vmatpush1.bf16.msra.mxu0 %v324
    %442 = vmatprep.subr.bf16.mxu0 0
    %443 = vmatpush1.bf16.msra.mxu0 %v325
    %444 = vmatprep.subr.bf16.mxu0 0
    %445 = vmatpush1.bf16.msra.mxu0 %v326
    %446 = vmatprep.subr.bf16.mxu0 0
    %447 = vmatpush1.bf16.msra.mxu0 %v327
    %448 = vmatprep.subr.bf16.mxu0 0
    %449 = vmatpush1.bf16.msra.mxu0 %v328
    %450 = vmatprep.subr.bf16.mxu0 0
    %451 = vmatpush1.bf16.msra.mxu0 %v329
    %452 = vmatprep.subr.bf16.mxu0 0
    %453 = vmatpush1.bf16.msra.mxu0 %v330
    %454 = vmatprep.subr.bf16.mxu0 0
    %455 = vmatpush1.bf16.msra.mxu0 %v331
    %456 = vmatprep.subr.bf16.mxu0 0
    %457 = vmatpush1.bf16.msra.mxu0 %v332
    %458 = vmatprep.subr.bf16.mxu0 0
    %459 = vmatpush1.bf16.msra.mxu0 %v333
    %460 = vmatprep.subr.bf16.mxu0 0
    %461 = vmatpush1.bf16.msra.mxu0 %v334
    %462 = vmatprep.subr.bf16.mxu0 0
    %463 = vmatpush1.bf16.msra.mxu0 %v335
    %464 = vmatprep.mubr.bf16.mxu0 %v145
    %465 = vmatmul.mubr.bf16.gmra.mrb[0].mxu0 %v144
    %v466 = vpop.f32.mrb[0].mxu0
    %v467 = vadd.f32 %v418, %v466
    %v468 = vpop.f32.mrb[0].mxu0
    %v469 = vpop.f32.mrb[0].mxu0
    %v470 = vadd.f32 %v421, %v469
    %v471 = vpop.f32.mrb[0].mxu0
    %472 = vmatprep.mubr.bf16.mxu0 %v150
    %473 = vmatmul.mubr.bf16.gmra.mrb[0].mxu0 %v149
    %v474 = vpop.f32.mrb[0].mxu0
    %v475 = vadd.f32 %v426, %v474
    %v476 = vpop.f32.mrb[0].mxu0
    %v477 = vpop.f32.mrb[0].mxu0
    %v478 = vadd.f32 %v429, %v477
    %v479 = vpop.f32.mrb[0].mxu0
    %480 = vdwg.mxu0
    %481 = vmatprep.subr.bf16.mxu0 0
    %482 = vmatpush1.bf16.msra.mxu0 %v336
    %483 = vmatprep.subr.bf16.mxu0 0
    %484 = vmatpush1.bf16.msra.mxu0 %v337
    %485 = vmatprep.subr.bf16.mxu0 0
    %486 = vmatpush1.bf16.msra.mxu0 %v338
    %487 = vmatprep.subr.bf16.mxu0 0
    %488 = vmatpush1.bf16.msra.mxu0 %v339
    %489 = vmatprep.subr.bf16.mxu0 0
    %490 = vmatpush1.bf16.msra.mxu0 0
    %491 = vmatprep.subr.bf16.mxu0 0
    %492 = vmatpush1.bf16.msra.mxu0 0
    %493 = vmatprep.subr.bf16.mxu0 0
    %494 = vmatpush1.bf16.msra.mxu0 0
    %495 = vmatprep.subr.bf16.mxu0 0
    %496 = vmatpush1.bf16.msra.mxu0 0
    %497 = vmatprep.subr.bf16.mxu0 0
    %498 = vmatpush1.bf16.msra.mxu0 0
    %499 = vmatprep.subr.bf16.mxu0 0
    %500 = vmatpush1.bf16.msra.mxu0 0
    %501 = vmatprep.subr.bf16.mxu0 0
    %502 = vmatpush1.bf16.msra.mxu0 0
    %503 = vmatprep.subr.bf16.mxu0 0
    %504 = vmatpush1.bf16.msra.mxu0 0
    %505 = vmatprep.subr.bf16.mxu0 0
    %506 = vmatpush1.bf16.msra.mxu0 0
    %507 = vmatprep.subr.bf16.mxu0 0
    %508 = vmatpush1.bf16.msra.mxu0 0
    %509 = vmatprep.subr.bf16.mxu0 0
    %510 = vmatpush1.bf16.msra.mxu0 0
    %511 = vmatprep.subr.bf16.mxu0 0
    %512 = vmatpush1.bf16.msra.mxu0 0
    %513 = vmatprep.mubr.bf16.mxu0 0
    %514 = vmatmul.mubr.bf16.gmra.mrb[0].mxu0 %v378
    %v515 = vpop.f32.mrb[0].mxu0
    %v516 = vadd.f32 %v467, %v515
    %v517 = vpop.f32.mrb[0].mxu0
    %v518 = vpop.f32.mrb[0].mxu0
    %v519 = vadd.f32 %v470, %v518
    %v520 = vpop.f32.mrb[0].mxu0
    %521 = vmatprep.mubr.bf16.mxu0 0
    %522 = vmatmul.mubr.bf16.gmra.mrb[0].mxu0 %v381
    %v523 = vpop.f32.mrb[0].mxu0
    %v524 = vadd.f32 %v475, %v523
    %v525 = vpop.f32.mrb[0].mxu0
    %v526 = vpop.f32.mrb[0].mxu0
    %v527 = vadd.f32 %v478, %v526
    %v528 = vpop.f32.mrb[0].mxu0
    %529 = vdwg.mxu0
    %530 = vst [vmem:[%s2] sm:$0xff] %v516
    %531 = vst [vmem:[%s2 + $0x8] sm:$0xff] %v519
    %532 = vst [vmem:[%s2 + $0x10] sm:$0xff] %v524
    %533 = vst [vmem:[%s2 + $0x18] sm:$0xff] %v527
    // Predicated region
    $region14: #{generator_forward.10} parent=1 // pred_check
      _
    $region15: #{generator_forward.10} parent=1 // pred_check_branch
      %535 = sbr.rel (0) target = $region17
    $region16: #{generator_forward.10} parent=1 // pred_region
      _
    $region17: #{generator_forward.10} parent=1 // pred_fallthru
      _
    // Predicated region
    $region18: #{generator_forward.10} parent=1 // pred_check
      _
    $region19: #{generator_forward.10} parent=1 // pred_check_branch
      %537 = sbr.rel (0) target = $region21
    $region20: #{generator_forward.10} parent=1 // pred_region
      _
    $region21: #{generator_forward.10} parent=1 // pred_fallthru
      _
    %538 = vsyncpa [#allocation3], 1

// kernel: generator_forward.9
$region0: #{generator_forward.9}
  #allocation0 [shape = 'u32[]', space=smem, size = 0x4, offset = 0x4, fixed_abs, tag = 'smem constant byte address 0x4 - core index']
  #allocation1 [shape = 'u32[144,128]{1,0:T(1,128)}', space=vmem, size = 0x12000, scoped, tag = 'internal scratch']
  %s0 = inlined_call_operand.vmem [shape: bf16[2,16], index: 0, kind: input, shape index: {}]
  %s1 = inlined_call_operand.vmem [shape: bf16[16,1024], index: 1, kind: input, shape index: {}]
  %s2 = inlined_call_operand.hbm [shape: f32[1,64], index: 2, kind: input, shape index: {}]
  %s3 = inlined_call_operand.vmem [shape: f32[1,64], index: 3, kind: input, shape index: {}]
  %s4 = inlined_call_operand.vmem [shape: bf16[2,1024], index: 4, kind: output, shape index: {}]
  %s5 = sld [smem:[#allocation0]]
  $region30: #{generator_forward.9} parent=0
    _
  %s7 = ssub.s32 1, %s5
  %s8 = scalar_select 0, %s7, %s5
  $region1: #{generator_forward.9} parent=0
    #allocation2 [shape = 'u8[512]{0}', space=vmem, size = 0x400, scoped, tag = 'input window, operand 2, single buffered']
    #allocation3 [shape = 's32[1]{0}', space=sflag, size = 0x4, scoped, tag = 'scoped memory for generator_forward.9']
    %9 = vsyncpa [#allocation3], 0
    // Predicated region
    $region2: #{generator_forward.9} parent=1 // pred_check
      _
    $region3: #{generator_forward.9} parent=1 // pred_check_branch
      %11 = sbr.rel (0) target = $region5
    $region4: #{generator_forward.9} parent=1 // pred_region
      _
    $region5: #{generator_forward.9} parent=1 // pred_fallthru
      _
    // Predicated region
    $region6: #{generator_forward.9} parent=1 // pred_check
      _
    $region7: #{generator_forward.9} parent=1 // pred_check_branch
      %13 = sbr.rel (0) target = $region9
    $region8: #{generator_forward.9} parent=1 // pred_region
      _
    $region9: #{generator_forward.9} parent=1 // pred_fallthru
      _
    // Predicated region
    $region10: #{generator_forward.9} parent=1 // pred_check
      _
    $region11: #{generator_forward.9} parent=1 // pred_check_branch
      %15 = sbr.rel (0) target = $region13
    $region12: #{generator_forward.9} parent=1 // pred_region
      %s17 = ssub.s32 16, 16
      %18 = vsyncadd [#allocation3], %s17
      %s20 = sshll.u32 [#allocation2], 4
      %s21 = int_to_ptr.vmem [resolvable:$true] %s20
      %23 = dma.hbm_to_vmem [thread:$0]  %s2, 16, %s21, [#allocation3]
    $region13: #{generator_forward.9} parent=1 // pred_fallthru
      _
    // Predicated region
    $region14: #{generator_forward.9} parent=1 // pred_check
      _
    $region15: #{generator_forward.9} parent=1 // pred_check_branch
      %25 = sbr.rel (0) target = $region17
    $region16: #{generator_forward.9} parent=1 // pred_region
      _
    $region17: #{generator_forward.9} parent=1 // pred_fallthru
      _
    // Predicated region
    $region18: #{generator_forward.9} parent=1 // pred_check
      _
    $region19: #{generator_forward.9} parent=1 // pred_check_branch
      %27 = sbr.rel (0) target = $region21
    $region20: #{generator_forward.9} parent=1 // pred_region
      %28 = dma.done [#allocation3], 16
    $region21: #{generator_forward.9} parent=1 // pred_fallthru
      _
    %v30 = vld [vmem:[%s0] sm:$0x1]
    %v31 = vld [vmem:[%s1] sm:$0xff]
    %v32 = vld [vmem:[%s1 + $0x8] sm:$0xff]
    %v33 = vld [vmem:[%s1 + $0x10] sm:$0xff]
    %v34 = vld [vmem:[%s1 + $0x18] sm:$0xff]
    %v35 = vld [vmem:[%s1 + $0x20] sm:$0xff]
    %v36 = vld [vmem:[%s1 + $0x28] sm:$0xff]
    %v37 = vld [vmem:[%s1 + $0x30] sm:$0xff]
    %v38 = vld [vmem:[%s1 + $0x38] sm:$0xff]
    %v47 = vunpack.c.l.b16 %v31
    %v48 = vunpack.c.h.b16 %v31
    %v49 = vunpack.c.l.b16 %v32
    %v50 = vunpack.c.h.b16 %v32
    %v51 = vunpack.c.l.b16 %v33
    %v52 = vunpack.c.h.b16 %v33
    %v53 = vunpack.c.l.b16 %v34
    %v54 = vunpack.c.h.b16 %v34
    %v55 = vunpack.c.l.b16 %v35
    %v56 = vunpack.c.h.b16 %v35
    %v57 = vunpack.c.l.b16 %v36
    %v58 = vunpack.c.h.b16 %v36
    %v59 = vunpack.c.l.b16 %v37
    %v60 = vunpack.c.h.b16 %v37
    %v61 = vunpack.c.l.b16 %v38
    %v62 = vunpack.c.h.b16 %v38
    %v63 = vpack.c.b16 %v55, %v47
    %v64 = vpack.c.b16 %v56, %v48
    %v65 = vpack.c.b16 %v57, %v49
    %v66 = vpack.c.b16 %v58, %v50
    %v67 = vpack.c.b16 %v59, %v51
    %v68 = vpack.c.b16 %v60, %v52
    %v69 = vpack.c.b16 %v61, %v53
    %v70 = vpack.c.b16 %v62, %v54
    %vm79 = vcmask 130048
    %v81 = vsel %vm79, %v30, 0
    %83 = vmatprep.subr.bf16.mxu0 %v64
    %84 = vmatpush1.bf16.msra.mxu0 %v63
    %85 = vmatprep.subr.bf16.mxu0 0
    %86 = vmatpush1.bf16.msra.mxu0 0
    %87 = vmatprep.subr.bf16.mxu0 0
    %88 = vmatpush1.bf16.msra.mxu0 0
    %89 = vmatprep.subr.bf16.mxu0 0
    %90 = vmatpush1.bf16.msra.mxu0 0
    %91 = vmatprep.subr.bf16.mxu0 0
    %92 = vmatpush1.bf16.msra.mxu0 0
    %93 = vmatprep.subr.bf16.mxu0 0
    %94 = vmatpush1.bf16.msra.mxu0 0
    %95 = vmatprep.subr.bf16.mxu0 0
    %96 = vmatpush1.bf16.msra.mxu0 0
    %97 = vmatprep.subr.bf16.mxu0 0
    %98 = vmatpush1.bf16.msra.mxu0 0
    %99 = vmatprep.subr.bf16.mxu0 0
    %100 = vmatpush1.bf16.msra.mxu0 0
    %101 = vmatprep.subr.bf16.mxu0 0
    %102 = vmatpush1.bf16.msra.mxu0 0
    %103 = vmatprep.subr.bf16.mxu0 0
    %104 = vmatpush1.bf16.msra.mxu0 0
    %105 = vmatprep.subr.bf16.mxu0 0
    %106 = vmatpush1.bf16.msra.mxu0 0
    %107 = vmatprep.subr.bf16.mxu0 0
    %108 = vmatpush1.bf16.msra.mxu0 0
    %109 = vmatprep.subr.bf16.mxu0 0
    %110 = vmatpush1.bf16.msra.mxu0 0
    %111 = vmatprep.subr.bf16.mxu0 0
    %112 = vmatpush1.bf16.msra.mxu0 0
    %113 = vmatprep.subr.bf16.mxu0 0
    %114 = vmatpush1.bf16.msra.mxu0 0
    %115 = vmatprep.mubr.bf16.mxu0 0
    %116 = vmatmul.mubr.bf16.gmra.mrb[0].mxu0 %v81
    %v117 = vpop.f32.mrb[0].mxu0
    %v118 = vadd.f32 0.0, %v117
    %v119 = vpop.f32.mrb[0].mxu0
    %v120 = vadd.f32 0.0, %v119
    %v121 = vpop.f32.mrb[0].mxu0
    %v122 = vpop.f32.mrb[0].mxu0
    %123 = vdwg.mxu0
    %124 = vmatprep.subr.bf16.mxu0 %v66
    %125 = vmatpush1.bf16.msra.mxu0 %v65
    %126 = vmatprep.subr.bf16.mxu0 0
    %127 = vmatpush1.bf16.msra.mxu0 0
    %128 = vmatprep.subr.bf16.mxu0 0
    %129 = vmatpush1.bf16.msra.mxu0 0
    %130 = vmatprep.subr.bf16.mxu0 0
    %131 = vmatpush1.bf16.msra.mxu0 0
    %132 = vmatprep.subr.bf16.mxu0 0
    %133 = vmatpush1.bf16.msra.mxu0 0
    %134 = vmatprep.subr.bf16.mxu0 0
    %135 = vmatpush1.bf16.msra.mxu0 0
    %136 = vmatprep.subr.bf16.mxu0 0
    %137 = vmatpush1.bf16.msra.mxu0 0
    %138 = vmatprep.subr.bf16.mxu0 0
    %139 = vmatpush1.bf16.msra.mxu0 0
    %140 = vmatprep.subr.bf16.mxu0 0
    %141 = vmatpush1.bf16.msra.mxu0 0
    %142 = vmatprep.subr.bf16.mxu0 0
    %143 = vmatpush1.bf16.msra.mxu0 0
    %144 = vmatprep.subr.bf16.mxu0 0
    %145 = vmatpush1.bf16.msra.mxu0 0
    %146 = vmatprep.subr.bf16.mxu0 0
    %147 = vmatpush1.bf16.msra.mxu0 0
    %148 = vmatprep.subr.bf16.mxu0 0
    %149 = vmatpush1.bf16.msra.mxu0 0
    %150 = vmatprep.subr.bf16.mxu0 0
    %151 = vmatpush1.bf16.msra.mxu0 0
    %152 = vmatprep.subr.bf16.mxu0 0
    %153 = vmatpush1.bf16.msra.mxu0 0
    %154 = vmatprep.subr.bf16.mxu0 0
    %155 = vmatpush1.bf16.msra.mxu0 0
    %156 = vmatprep.mubr.bf16.mxu0 0
    %157 = vmatmul.mubr.bf16.gmra.mrb[0].mxu0 %v81
    %v158 = vpop.f32.mrb[0].mxu0
    %v159 = vadd.f32 0.0, %v158
    %v160 = vpop.f32.mrb[0].mxu0
    %v161 = vadd.f32 0.0, %v160
    %v162 = vpop.f32.mrb[0].mxu0
    %v163 = vpop.f32.mrb[0].mxu0
    %164 = vdwg.mxu0
    %165 = vmatprep.subr.bf16.mxu0 %v68
    %166 = vmatpush1.bf16.msra.mxu0 %v67
    %167 = vmatprep.subr.bf16.mxu0 0
    %168 = vmatpush1.bf16.msra.mxu0 0
    %169 = vmatprep.subr.bf16.mxu0 0
    %170 = vmatpush1.bf16.msra.mxu0 0
    %171 = vmatprep.subr.bf16.mxu0 0
    %172 = vmatpush1.bf16.msra.mxu0 0
    %173 = vmatprep.subr.bf16.mxu0 0
    %174 = vmatpush1.bf16.msra.mxu0 0
    %175 = vmatprep.subr.bf16.mxu0 0
    %176 = vmatpush1.bf16.msra.mxu0 0
    %177 = vmatprep.subr.bf16.mxu0 0
    %178 = vmatpush1.bf16.msra.mxu0 0
    %179 = vmatprep.subr.bf16.mxu0 0
    %180 = vmatpush1.bf16.msra.mxu0 0
    %181 = vmatprep.subr.bf16.mxu0 0
    %182 = vmatpush1.bf16.msra.mxu0 0
    %183 = vmatprep.subr.bf16.mxu0 0
    %184 = vmatpush1.bf16.msra.mxu0 0
    %185 = vmatprep.subr.bf16.mxu0 0
    %186 = vmatpush1.bf16.msra.mxu0 0
    %187 = vmatprep.subr.bf16.mxu0 0
    %188 = vmatpush1.bf16.msra.mxu0 0
    %189 = vmatprep.subr.bf16.mxu0 0
    %190 = vmatpush1.bf16.msra.mxu0 0
    %191 = vmatprep.subr.bf16.mxu0 0
    %192 = vmatpush1.bf16.msra.mxu0 0
    %193 = vmatprep.subr.bf16.mxu0 0
    %194 = vmatpush1.bf16.msra.mxu0 0
    %195 = vmatprep.subr.bf16.mxu0 0
    %196 = vmatpush1.bf16.msra.mxu0 0
    %197 = vmatprep.mubr.bf16.mxu0 0
    %198 = vmatmul.mubr.bf16.gmra.mrb[0].mxu0 %v81
    %v199 = vpop.f32.mrb[0].mxu0
    %v200 = vadd.f32 0.0, %v199
    %v201 = vpop.f32.mrb[0].mxu0
    %v202 = vadd.f32 0.0, %v201
    %v203 = vpop.f32.mrb[0].mxu0
    %v204 = vpop.f32.mrb[0].mxu0
    %205 = vdwg.mxu0
    %206 = vmatprep.subr.bf16.mxu0 %v70
    %207 = vmatpush1.bf16.msra.mxu0 %v69
    %208 = vmatprep.subr.bf16.mxu0 0
    %209 = vmatpush1.bf16.msra.mxu0 0
    %210 = vmatprep.subr.bf16.mxu0 0
    %211 = vmatpush1.bf16.msra.mxu0 0
    %212 = vmatprep.subr.bf16.mxu0 0
    %213 = vmatpush1.bf16.msra.mxu0 0
    %214 = vmatprep.subr.bf16.mxu0 0
    %215 = vmatpush1.bf16.msra.mxu0 0
    %216 = vmatprep.subr.bf16.mxu0 0
    %217 = vmatpush1.bf16.msra.mxu0 0
    %218 = vmatprep.subr.bf16.mxu0 0
    %219 = vmatpush1.bf16.msra.mxu0 0
    %220 = vmatprep.subr.bf16.mxu0 0
    %221 = vmatpush1.bf16.msra.mxu0 0
    %222 = vmatprep.subr.bf16.mxu0 0
    %223 = vmatpush1.bf16.msra.mxu0 0
    %224 = vmatprep.subr.bf16.mxu0 0
    %225 = vmatpush1.bf16.msra.mxu0 0
    %226 = vmatprep.subr.bf16.mxu0 0
    %227 = vmatpush1.bf16.msra.mxu0 0
    %228 = vmatprep.subr.bf16.mxu0 0
    %229 = vmatpush1.bf16.msra.mxu0 0
    %230 = vmatprep.subr.bf16.mxu0 0
    %231 = vmatpush1.bf16.msra.mxu0 0
    %232 = vmatprep.subr.bf16.mxu0 0
    %233 = vmatpush1.bf16.msra.mxu0 0
    %234 = vmatprep.subr.bf16.mxu0 0
    %235 = vmatpush1.bf16.msra.mxu0 0
    %236 = vmatprep.subr.bf16.mxu0 0
    %237 = vmatpush1.bf16.msra.mxu0 0
    %238 = vmatprep.mubr.bf16.mxu0 0
    %239 = vmatmul.mubr.bf16.gmra.mrb[0].mxu0 %v81
    %v240 = vpop.f32.mrb[0].mxu0
    %v241 = vadd.f32 0.0, %v240
    %v242 = vpop.f32.mrb[0].mxu0
    %v243 = vadd.f32 0.0, %v242
    %v244 = vpop.f32.mrb[0].mxu0
    %v245 = vpop.f32.mrb[0].mxu0
    %246 = vdwg.mxu0
    %v247 = vld [vmem:[#allocation2] sm:$0x1]
    %v248 = vld [vmem:[%s3] sm:$0x1]
    %v249 = vlaneseq
    %v250 = vshrl.u32 %v249, 7
    %v251 = vadd.s32 %v250, 8
    %v252 = vadd.s32 %v250, 16
    %v253 = vadd.s32 %v250, 24
    %v254 = vadd.s32 %v250, 32
    %v255 = vadd.s32 %v250, 40
    %v256 = vadd.s32 %v250, 48
    %v257 = vadd.s32 %v250, 56
    %v258 = vadd.s32 %v250, 64
    %v259 = vadd.s32 %v250, 72
    %v260 = vadd.s32 %v250, 80
    %v261 = vadd.s32 %v250, 88
    %v262 = vadd.s32 %v250, 96
    %v263 = vadd.s32 %v250, 104
    %v264 = vadd.s32 %v250, 112
    %v265 = vadd.s32 %v250, 120
    %v266 = vadd.s32 %v250, 128
    %v267 = vadd.s32 %v250, 136
    %v268 = vadd.s32 %v250, 144
    %v269 = vadd.s32 %v250, 152
    %v270 = vadd.s32 %v250, 160
    %v271 = vadd.s32 %v250, 168
    %v272 = vadd.s32 %v250, 176
    %v273 = vadd.s32 %v250, 184
    %v274 = vadd.s32 %v250, 192
    %v275 = vadd.s32 %v250, 200
    %v276 = vadd.s32 %v250, 208
    %v277 = vadd.s32 %v250, 216
    %v278 = vadd.s32 %v250, 224
    %v279 = vadd.s32 %v250, 232
    %v280 = vadd.s32 %v250, 240
    %v281 = vadd.s32 %v250, 248
    %v282 = vadd.s32 %v250, 256
    %v283 = vadd.s32 %v250, 264
    %v284 = vadd.s32 %v250, 272
    %v285 = vadd.s32 %v250, 280
    %v286 = vadd.s32 %v250, 288
    %v287 = vadd.s32 %v250, 296
    %v288 = vadd.s32 %v250, 304
    %v289 = vadd.s32 %v250, 312
    %v290 = vadd.s32 %v250, 320
    %v291 = vadd.s32 %v250, 328
    %v292 = vadd.s32 %v250, 336
    %v293 = vadd.s32 %v250, 344
    %v294 = vadd.s32 %v250, 352
    %v295 = vadd.s32 %v250, 360
    %v296 = vadd.s32 %v250, 368
    %v297 = vadd.s32 %v250, 376
    %v298 = vadd.s32 %v250, 384
    %v299 = vadd.s32 %v250, 392
    %v300 = vadd.s32 %v250, 400
    %v301 = vadd.s32 %v250, 408
    %v302 = vadd.s32 %v250, 416
    %v303 = vadd.s32 %v250, 424
    %v304 = vadd.s32 %v250, 432
    %v305 = vadd.s32 %v250, 440
    %v306 = vadd.s32 %v250, 448
    %v307 = vadd.s32 %v250, 456
    %v308 = vadd.s32 %v250, 464
    %v309 = vadd.s32 %v250, 472
    %v310 = vadd.s32 %v250, 480
    %v311 = vadd.s32 %v250, 488
    %v312 = vadd.s32 %v250, 496
    %v313 = vadd.s32 %v250, 504
    %v314 = vadd.s32 %v250, 512
    %v315 = vadd.s32 %v250, 520
    %v316 = vadd.s32 %v250, 528
    %v317 = vadd.s32 %v250, 536
    %v318 = vadd.s32 %v250, 544
    %v319 = vadd.s32 %v250, 552
    %v320 = vadd.s32 %v250, 560
    %v321 = vadd.s32 %v250, 568
    %v322 = vadd.s32 %v250, 576
    %v323 = vadd.s32 %v250, 584
    %v324 = vadd.s32 %v250, 592
    %v325 = vadd.s32 %v250, 600
    %v326 = vadd.s32 %v250, 608
    %v327 = vadd.s32 %v250, 616
    %v328 = vadd.s32 %v250, 624
    %v329 = vadd.s32 %v250, 632
    %v330 = vadd.s32 %v250, 640
    %v331 = vadd.s32 %v250, 648
    %v332 = vadd.s32 %v250, 656
    %v333 = vadd.s32 %v250, 664
    %v334 = vadd.s32 %v250, 672
    %v335 = vadd.s32 %v250, 680
    %v336 = vadd.s32 %v250, 688
    %v337 = vadd.s32 %v250, 696
    %v338 = vadd.s32 %v250, 704
    %v339 = vadd.s32 %v250, 712
    %v340 = vadd.s32 %v250, 720
    %v341 = vadd.s32 %v250, 728
    %v342 = vadd.s32 %v250, 736
    %v343 = vadd.s32 %v250, 744
    %v344 = vadd.s32 %v250, 752
    %v345 = vadd.s32 %v250, 760
    %v346 = vadd.s32 %v250, 768
    %v347 = vadd.s32 %v250, 776
    %v348 = vadd.s32 %v250, 784
    %v349 = vadd.s32 %v250, 792
    %v350 = vadd.s32 %v250, 800
    %v351 = vadd.s32 %v250, 808
    %v352 = vadd.s32 %v250, 816
    %v353 = vadd.s32 %v250, 824
    %v354 = vadd.s32 %v250, 832
    %v355 = vadd.s32 %v250, 840
    %v356 = vadd.s32 %v250, 848
    %v357 = vadd.s32 %v250, 856
    %v358 = vadd.s32 %v250, 864
    %v359 = vadd.s32 %v250, 872
    %v360 = vadd.s32 %v250, 880
    %v361 = vadd.s32 %v250, 888
    %v362 = vadd.s32 %v250, 896
    %v363 = vadd.s32 %v250, 904
    %v364 = vadd.s32 %v250, 912
    %v365 = vadd.s32 %v250, 920
    %v366 = vadd.s32 %v250, 928
    %v367 = vadd.s32 %v250, 936
    %v368 = vadd.s32 %v250, 944
    %v369 = vadd.s32 %v250, 952
    %v370 = vadd.s32 %v250, 960
    %v371 = vadd.s32 %v250, 968
    %v372 = vadd.s32 %v250, 976
    %v373 = vadd.s32 %v250, 984
    %v374 = vadd.s32 %v250, 992
    %v375 = vadd.s32 %v250, 1000
    %v376 = vadd.s32 %v250, 1008
    %v377 = vadd.s32 %v250, 1016
    %v378 = vand.u32 %v250, 63
    %v379 = vand.u32 %v251, 63
    %v380 = vand.u32 %v252, 63
    %v381 = vand.u32 %v253, 63
    %v382 = vand.u32 %v254, 63
    %v383 = vand.u32 %v255, 63
    %v384 = vand.u32 %v256, 63
    %v385 = vand.u32 %v257, 63
    %v386 = vand.u32 %v258, 63
    %v387 = vand.u32 %v259, 63
    %v388 = vand.u32 %v260, 63
    %v389 = vand.u32 %v261, 63
    %v390 = vand.u32 %v262, 63
    %v391 = vand.u32 %v263, 63
    %v392 = vand.u32 %v264, 63
    %v393 = vand.u32 %v265, 63
    %v394 = vand.u32 %v266, 63
    %v395 = vand.u32 %v267, 63
    %v396 = vand.u32 %v268, 63
    %v397 = vand.u32 %v269, 63
    %v398 = vand.u32 %v270, 63
    %v399 = vand.u32 %v271, 63
    %v400 = vand.u32 %v272, 63
    %v401 = vand.u32 %v273, 63
    %v402 = vand.u32 %v274, 63
    %v403 = vand.u32 %v275, 63
    %v404 = vand.u32 %v276, 63
    %v405 = vand.u32 %v277, 63
    %v406 = vand.u32 %v278, 63
    %v407 = vand.u32 %v279, 63
    %v408 = vand.u32 %v280, 63
    %v409 = vand.u32 %v281, 63
    %v410 = vand.u32 %v282, 63
    %v411 = vand.u32 %v283, 63
    %v412 = vand.u32 %v284, 63
    %v413 = vand.u32 %v285, 63
    %v414 = vand.u32 %v286, 63
    %v415 = vand.u32 %v287, 63
    %v416 = vand.u32 %v288, 63
    %v417 = vand.u32 %v289, 63
    %v418 = vand.u32 %v290, 63
    %v419 = vand.u32 %v291, 63
    %v420 = vand.u32 %v292, 63
    %v421 = vand.u32 %v293, 63
    %v422 = vand.u32 %v294, 63
    %v423 = vand.u32 %v295, 63
    %v424 = vand.u32 %v296, 63
    %v425 = vand.u32 %v297, 63
    %v426 = vand.u32 %v298, 63
    %v427 = vand.u32 %v299, 63
    %v428 = vand.u32 %v300, 63
    %v429 = vand.u32 %v301, 63
    %v430 = vand.u32 %v302, 63
    %v431 = vand.u32 %v303, 63
    %v432 = vand.u32 %v304, 63
    %v433 = vand.u32 %v305, 63
    %v434 = vand.u32 %v306, 63
    %v435 = vand.u32 %v307, 63
    %v436 = vand.u32 %v308, 63
    %v437 = vand.u32 %v309, 63
    %v438 = vand.u32 %v310, 63
    %v439 = vand.u32 %v311, 63
    %v440 = vand.u32 %v312, 63
    %v441 = vand.u32 %v313, 63
    %v442 = vand.u32 %v314, 63
    %v443 = vand.u32 %v315, 63
    %v444 = vand.u32 %v316, 63
    %v445 = vand.u32 %v317, 63
    %v446 = vand.u32 %v318, 63
    %v447 = vand.u32 %v319, 63
    %v448 = vand.u32 %v320, 63
    %v449 = vand.u32 %v321, 63
    %v450 = vand.u32 %v322, 63
    %v451 = vand.u32 %v323, 63
    %v452 = vand.u32 %v324, 63
    %v453 = vand.u32 %v325, 63
    %v454 = vand.u32 %v326, 63
    %v455 = vand.u32 %v327, 63
    %v456 = vand.u32 %v328, 63
    %v457 = vand.u32 %v329, 63
    %v458 = vand.u32 %v330, 63
    %v459 = vand.u32 %v331, 63
    %v460 = vand.u32 %v332, 63
    %v461 = vand.u32 %v333, 63
    %v462 = vand.u32 %v334, 63
    %v463 = vand.u32 %v335, 63
    %v464 = vand.u32 %v336, 63
    %v465 = vand.u32 %v337, 63
    %v466 = vand.u32 %v338, 63
    %v467 = vand.u32 %v339, 63
    %v468 = vand.u32 %v340, 63
    %v469 = vand.u32 %v341, 63
    %v470 = vand.u32 %v342, 63
    %v471 = vand.u32 %v343, 63
    %v472 = vand.u32 %v344, 63
    %v473 = vand.u32 %v345, 63
    %v474 = vand.u32 %v346, 63
    %v475 = vand.u32 %v347, 63
    %v476 = vand.u32 %v348, 63
    %v477 = vand.u32 %v349, 63
    %v478 = vand.u32 %v350, 63
    %v479 = vand.u32 %v351, 63
    %v480 = vand.u32 %v352, 63
    %v481 = vand.u32 %v353, 63
    %v482 = vand.u32 %v354, 63
    %v483 = vand.u32 %v355, 63
    %v484 = vand.u32 %v356, 63
    %v485 = vand.u32 %v357, 63
    %v486 = vand.u32 %v358, 63
    %v487 = vand.u32 %v359, 63
    %v488 = vand.u32 %v360, 63
    %v489 = vand.u32 %v361, 63
    %v490 = vand.u32 %v362, 63
    %v491 = vand.u32 %v363, 63
    %v492 = vand.u32 %v364, 63
    %v493 = vand.u32 %v365, 63
    %v494 = vand.u32 %v366, 63
    %v495 = vand.u32 %v367, 63
    %v496 = vand.u32 %v368, 63
    %v497 = vand.u32 %v369, 63
    %v498 = vand.u32 %v370, 63
    %v499 = vand.u32 %v371, 63
    %v500 = vand.u32 %v372, 63
    %v501 = vand.u32 %v373, 63
    %v502 = vand.u32 %v374, 63
    %v503 = vand.u32 %v375, 63
    %v504 = vand.u32 %v376, 63
    %v505 = vand.u32 %v377, 63
    %v506 = vlaneseq
    %v507 = vand.u32 %v506, 127
    %vm508 = vcmp.eq.s32.totalorder %v378, %v507
    %vm509 = vcmp.eq.s32.totalorder %v379, %v507
    %vm510 = vcmp.eq.s32.totalorder %v380, %v507
    %vm511 = vcmp.eq.s32.totalorder %v381, %v507
    %vm512 = vcmp.eq.s32.totalorder %v382, %v507
    %vm513 = vcmp.eq.s32.totalorder %v383, %v507
    %vm514 = vcmp.eq.s32.totalorder %v384, %v507
    %vm515 = vcmp.eq.s32.totalorder %v385, %v507
    %vm516 = vcmp.eq.s32.totalorder %v386, %v507
    %vm517 = vcmp.eq.s32.totalorder %v387, %v507
    %vm518 = vcmp.eq.s32.totalorder %v388, %v507
    %vm519 = vcmp.eq.s32.totalorder %v389, %v507
    %vm520 = vcmp.eq.s32.totalorder %v390, %v507
    %vm521 = vcmp.eq.s32.totalorder %v391, %v507
    %vm522 = vcmp.eq.s32.totalorder %v392, %v507
    %vm523 = vcmp.eq.s32.totalorder %v393, %v507
    %vm524 = vcmp.eq.s32.totalorder %v394, %v507
    %vm525 = vcmp.eq.s32.totalorder %v395, %v507
    %vm526 = vcmp.eq.s32.totalorder %v396, %v507
    %vm527 = vcmp.eq.s32.totalorder %v397, %v507
    %vm528 = vcmp.eq.s32.totalorder %v398, %v507
    %vm529 = vcmp.eq.s32.totalorder %v399, %v507
    %vm530 = vcmp.eq.s32.totalorder %v400, %v507
    %vm531 = vcmp.eq.s32.totalorder %v401, %v507
    %vm532 = vcmp.eq.s32.totalorder %v402, %v507
    %vm533 = vcmp.eq.s32.totalorder %v403, %v507
    %vm534 = vcmp.eq.s32.totalorder %v404, %v507
    %vm535 = vcmp.eq.s32.totalorder %v405, %v507
    %vm536 = vcmp.eq.s32.totalorder %v406, %v507
    %vm537 = vcmp.eq.s32.totalorder %v407, %v507
    %vm538 = vcmp.eq.s32.totalorder %v408, %v507
    %vm539 = vcmp.eq.s32.totalorder %v409, %v507
    %vm540 = vcmp.eq.s32.totalorder %v410, %v507
    %vm541 = vcmp.eq.s32.totalorder %v411, %v507
    %vm542 = vcmp.eq.s32.totalorder %v412, %v507
    %vm543 = vcmp.eq.s32.totalorder %v413, %v507
    %vm544 = vcmp.eq.s32.totalorder %v414, %v507
    %vm545 = vcmp.eq.s32.totalorder %v415, %v507
    %vm546 = vcmp.eq.s32.totalorder %v416, %v507
    %vm547 = vcmp.eq.s32.totalorder %v417, %v507
    %vm548 = vcmp.eq.s32.totalorder %v418, %v507
    %vm549 = vcmp.eq.s32.totalorder %v419, %v507
    %vm550 = vcmp.eq.s32.totalorder %v420, %v507
    %vm551 = vcmp.eq.s32.totalorder %v421, %v507
    %vm552 = vcmp.eq.s32.totalorder %v422, %v507
    %vm553 = vcmp.eq.s32.totalorder %v423, %v507
    %vm554 = vcmp.eq.s32.totalorder %v424, %v507
    %vm555 = vcmp.eq.s32.totalorder %v425, %v507
    %vm556 = vcmp.eq.s32.totalorder %v426, %v507
    %vm557 = vcmp.eq.s32.totalorder %v427, %v507
    %vm558 = vcmp.eq.s32.totalorder %v428, %v507
    %vm559 = vcmp.eq.s32.totalorder %v429, %v507
    %vm560 = vcmp.eq.s32.totalorder %v430, %v507
    %vm561 = vcmp.eq.s32.totalorder %v431, %v507
    %vm562 = vcmp.eq.s32.totalorder %v432, %v507
    %vm563 = vcmp.eq.s32.totalorder %v433, %v507
    %vm564 = vcmp.eq.s32.totalorder %v434, %v507
    %vm565 = vcmp.eq.s32.totalorder %v435, %v507
    %vm566 = vcmp.eq.s32.totalorder %v436, %v507
    %vm567 = vcmp.eq.s32.totalorder %v437, %v507
    %vm568 = vcmp.eq.s32.totalorder %v438, %v507
    %vm569 = vcmp.eq.s32.totalorder %v439, %v507
    %vm570 = vcmp.eq.s32.totalorder %v440, %v507
    %vm571 = vcmp.eq.s32.totalorder %v441, %v507
    %vm572 = vcmp.eq.s32.totalorder %v442, %v507
    %vm573 = vcmp.eq.s32.totalorder %v443, %v507
    %vm574 = vcmp.eq.s32.totalorder %v444, %v507
    %vm575 = vcmp.eq.s32.totalorder %v445, %v507
    %vm576 = vcmp.eq.s32.totalorder %v446, %v507
    %vm577 = vcmp.eq.s32.totalorder %v447, %v507
    %vm578 = vcmp.eq.s32.totalorder %v448, %v507
    %vm579 = vcmp.eq.s32.totalorder %v449, %v507
    %vm580 = vcmp.eq.s32.totalorder %v450, %v507
    %vm581 = vcmp.eq.s32.totalorder %v451, %v507
    %vm582 = vcmp.eq.s32.totalorder %v452, %v507
    %vm583 = vcmp.eq.s32.totalorder %v453, %v507
    %vm584 = vcmp.eq.s32.totalorder %v454, %v507
    %vm585 = vcmp.eq.s32.totalorder %v455, %v507
    %vm586 = vcmp.eq.s32.totalorder %v456, %v507
    %vm587 = vcmp.eq.s32.totalorder %v457, %v507
    %vm588 = vcmp.eq.s32.totalorder %v458, %v507
    %vm589 = vcmp.eq.s32.totalorder %v459, %v507
    %vm590 = vcmp.eq.s32.totalorder %v460, %v507
    %vm591 = vcmp.eq.s32.totalorder %v461, %v507
    %vm592 = vcmp.eq.s32.totalorder %v462, %v507
    %vm593 = vcmp.eq.s32.totalorder %v463, %v507
    %vm594 = vcmp.eq.s32.totalorder %v464, %v507
    %vm595 = vcmp.eq.s32.totalorder %v465, %v507
    %vm596 = vcmp.eq.s32.totalorder %v466, %v507
    %vm597 = vcmp.eq.s32.totalorder %v467, %v507
    %vm598 = vcmp.eq.s32.totalorder %v468, %v507
    %vm599 = vcmp.eq.s32.totalorder %v469, %v507
    %vm600 = vcmp.eq.s32.totalorder %v470, %v507
    %vm601 = vcmp.eq.s32.totalorder %v471, %v507
    %vm602 = vcmp.eq.s32.totalorder %v472, %v507
    %vm603 = vcmp.eq.s32.totalorder %v473, %v507
    %vm604 = vcmp.eq.s32.totalorder %v474, %v507
    %vm605 = vcmp.eq.s32.totalorder %v475, %v507
    %vm606 = vcmp.eq.s32.totalorder %v476, %v507
    %vm607 = vcmp.eq.s32.totalorder %v477, %v507
    %vm608 = vcmp.eq.s32.totalorder %v478, %v507
    %vm609 = vcmp.eq.s32.totalorder %v479, %v507
    %vm610 = vcmp.eq.s32.totalorder %v480, %v507
    %vm611 = vcmp.eq.s32.totalorder %v481, %v507
    %vm612 = vcmp.eq.s32.totalorder %v482, %v507
    %vm613 = vcmp.eq.s32.totalorder %v483, %v507
    %vm614 = vcmp.eq.s32.totalorder %v484, %v507
    %vm615 = vcmp.eq.s32.totalorder %v485, %v507
    %vm616 = vcmp.eq.s32.totalorder %v486, %v507
    %vm617 = vcmp.eq.s32.totalorder %v487, %v507
    %vm618 = vcmp.eq.s32.totalorder %v488, %v507
    %vm619 = vcmp.eq.s32.totalorder %v489, %v507
    %vm620 = vcmp.eq.s32.totalorder %v490, %v507
    %vm621 = vcmp.eq.s32.totalorder %v491, %v507
    %vm622 = vcmp.eq.s32.totalorder %v492, %v507
    %vm623 = vcmp.eq.s32.totalorder %v493, %v507
    %vm624 = vcmp.eq.s32.totalorder %v494, %v507
    %vm625 = vcmp.eq.s32.totalorder %v495, %v507
    %vm626 = vcmp.eq.s32.totalorder %v496, %v507
    %vm627 = vcmp.eq.s32.totalorder %v497, %v507
    %vm628 = vcmp.eq.s32.totalorder %v498, %v507
    %vm629 = vcmp.eq.s32.totalorder %v499, %v507
    %vm630 = vcmp.eq.s32.totalorder %v500, %v507
    %vm631 = vcmp.eq.s32.totalorder %v501, %v507
    %vm632 = vcmp.eq.s32.totalorder %v502, %v507
    %vm633 = vcmp.eq.s32.totalorder %v503, %v507
    %vm634 = vcmp.eq.s32.totalorder %v504, %v507
    %vm635 = vcmp.eq.s32.totalorder %v505, %v507
    %v636 = vsel %vm508, 1.0, 0.0
    %v637 = vsel %vm509, 1.0, 0.0
    %v638 = vsel %vm510, 1.0, 0.0
    %v639 = vsel %vm511, 1.0, 0.0
    %v640 = vsel %vm512, 1.0, 0.0
    %v641 = vsel %vm513, 1.0, 0.0
    %v642 = vsel %vm514, 1.0, 0.0
    %v643 = vsel %vm515, 1.0, 0.0
    %v644 = vsel %vm516, 1.0, 0.0
    %v645 = vsel %vm517, 1.0, 0.0
    %v646 = vsel %vm518, 1.0, 0.0
    %v647 = vsel %vm519, 1.0, 0.0
    %v648 = vsel %vm520, 1.0, 0.0
    %v649 = vsel %vm521, 1.0, 0.0
    %v650 = vsel %vm522, 1.0, 0.0
    %v651 = vsel %vm523, 1.0, 0.0
    %v652 = vsel %vm524, 1.0, 0.0
    %v653 = vsel %vm525, 1.0, 0.0
    %v654 = vsel %vm526, 1.0, 0.0
    %v655 = vsel %vm527, 1.0, 0.0
    %v656 = vsel %vm528, 1.0, 0.0
    %v657 = vsel %vm529, 1.0, 0.0
    %v658 = vsel %vm530, 1.0, 0.0
    %v659 = vsel %vm531, 1.0, 0.0
    %v660 = vsel %vm532, 1.0, 0.0
    %v661 = vsel %vm533, 1.0, 0.0
    %v662 = vsel %vm534, 1.0, 0.0
    %v663 = vsel %vm535, 1.0, 0.0
    %v664 = vsel %vm536, 1.0, 0.0
    %v665 = vsel %vm537, 1.0, 0.0
    %v666 = vsel %vm538, 1.0, 0.0
    %v667 = vsel %vm539, 1.0, 0.0
    %v668 = vsel %vm540, 1.0, 0.0
    %v669 = vsel %vm541, 1.0, 0.0
    %v670 = vsel %vm542, 1.0, 0.0
    %v671 = vsel %vm543, 1.0, 0.0
    %v672 = vsel %vm544, 1.0, 0.0
    %v673 = vsel %vm545, 1.0, 0.0
    %v674 = vsel %vm546, 1.0, 0.0
    %v675 = vsel %vm547, 1.0, 0.0
    %v676 = vsel %vm548, 1.0, 0.0
    %v677 = vsel %vm549, 1.0, 0.0
    %v678 = vsel %vm550, 1.0, 0.0
    %v679 = vsel %vm551, 1.0, 0.0
    %v680 = vsel %vm552, 1.0, 0.0
    %v681 = vsel %vm553, 1.0, 0.0
    %v682 = vsel %vm554, 1.0, 0.0
    %v683 = vsel %vm555, 1.0, 0.0
    %v684 = vsel %vm556, 1.0, 0.0
    %v685 = vsel %vm557, 1.0, 0.0
    %v686 = vsel %vm558, 1.0, 0.0
    %v687 = vsel %vm559, 1.0, 0.0
    %v688 = vsel %vm560, 1.0, 0.0
    %v689 = vsel %vm561, 1.0, 0.0
    %v690 = vsel %vm562, 1.0, 0.0
    %v691 = vsel %vm563, 1.0, 0.0
    %v692 = vsel %vm564, 1.0, 0.0
    %v693 = vsel %vm565, 1.0, 0.0
    %v694 = vsel %vm566, 1.0, 0.0
    %v695 = vsel %vm567, 1.0, 0.0
    %v696 = vsel %vm568, 1.0, 0.0
    %v697 = vsel %vm569, 1.0, 0.0
    %v698 = vsel %vm570, 1.0, 0.0
    %v699 = vsel %vm571, 1.0, 0.0
    %v700 = vsel %vm572, 1.0, 0.0
    %v701 = vsel %vm573, 1.0, 0.0
    %v702 = vsel %vm574, 1.0, 0.0
    %v703 = vsel %vm575, 1.0, 0.0
    %v704 = vsel %vm576, 1.0, 0.0
    %v705 = vsel %vm577, 1.0, 0.0
    %v706 = vsel %vm578, 1.0, 0.0
    %v707 = vsel %vm579, 1.0, 0.0
    %v708 = vsel %vm580, 1.0, 0.0
    %v709 = vsel %vm581, 1.0, 0.0
    %v710 = vsel %vm582, 1.0, 0.0
    %v711 = vsel %vm583, 1.0, 0.0
    %v712 = vsel %vm584, 1.0, 0.0
    %v713 = vsel %vm585, 1.0, 0.0
    %v714 = vsel %vm586, 1.0, 0.0
    %v715 = vsel %vm587, 1.0, 0.0
    %v716 = vsel %vm588, 1.0, 0.0
    %v717 = vsel %vm589, 1.0, 0.0
    %v718 = vsel %vm590, 1.0, 0.0
    %v719 = vsel %vm591, 1.0, 0.0
    %v720 = vsel %vm592, 1.0, 0.0
    %v721 = vsel %vm593, 1.0, 0.0
    %v722 = vsel %vm594, 1.0, 0.0
    %v723 = vsel %vm595, 1.0, 0.0
    %v724 = vsel %vm596, 1.0, 0.0
    %v725 = vsel %vm597, 1.0, 0.0
    %v726 = vsel %vm598, 1.0, 0.0
    %v727 = vsel %vm599, 1.0, 0.0
    %v728 = vsel %vm600, 1.0, 0.0
    %v729 = vsel %vm601, 1.0, 0.0
    %v730 = vsel %vm602, 1.0, 0.0
    %v731 = vsel %vm603, 1.0, 0.0
    %v732 = vsel %vm604, 1.0, 0.0
    %v733 = vsel %vm605, 1.0, 0.0
    %v734 = vsel %vm606, 1.0, 0.0
    %v735 = vsel %vm607, 1.0, 0.0
    %v736 = vsel %vm608, 1.0, 0.0
    %v737 = vsel %vm609, 1.0, 0.0
    %v738 = vsel %vm610, 1.0, 0.0
    %v739 = vsel %vm611, 1.0, 0.0
    %v740 = vsel %vm612, 1.0, 0.0
    %v741 = vsel %vm613, 1.0, 0.0
    %v742 = vsel %vm614, 1.0, 0.0
    %v743 = vsel %vm615, 1.0, 0.0
    %v744 = vsel %vm616, 1.0, 0.0
    %v745 = vsel %vm617, 1.0, 0.0
    %v746 = vsel %vm618, 1.0, 0.0
    %v747 = vsel %vm619, 1.0, 0.0
    %v748 = vsel %vm620, 1.0, 0.0
    %v749 = vsel %vm621, 1.0, 0.0
    %v750 = vsel %vm622, 1.0, 0.0
    %v751 = vsel %vm623, 1.0, 0.0
    %v752 = vsel %vm624, 1.0, 0.0
    %v753 = vsel %vm625, 1.0, 0.0
    %v754 = vsel %vm626, 1.0, 0.0
    %v755 = vsel %vm627, 1.0, 0.0
    %v756 = vsel %vm628, 1.0, 0.0
    %v757 = vsel %vm629, 1.0, 0.0
    %v758 = vsel %vm630, 1.0, 0.0
    %v759 = vsel %vm631, 1.0, 0.0
    %v760 = vsel %vm632, 1.0, 0.0
    %v761 = vsel %vm633, 1.0, 0.0
    %v762 = vsel %vm634, 1.0, 0.0
    %v763 = vsel %vm635, 1.0, 0.0
    %v764 = vadd.s32 %v507, 128
    %v765 = vadd.s32 %v507, 256
    %v766 = vadd.s32 %v507, 384
    %v767 = vadd.s32 %v507, 512
    %v768 = vadd.s32 %v507, 640
    %v769 = vadd.s32 %v507, 768
    %v770 = vadd.s32 %v507, 896
    %v771 = vand.u32 %v507, 63
    %v772 = vand.u32 %v764, 63
    %v773 = vand.u32 %v765, 63
    %v774 = vand.u32 %v766, 63
    %v775 = vand.u32 %v767, 63
    %v776 = vand.u32 %v768, 63
    %v777 = vand.u32 %v769, 63
    %v778 = vand.u32 %v770, 63
    %vm779 = vcmp.eq.s32.totalorder %v771, %v250
    %vm780 = vcmp.eq.s32.totalorder %v772, %v250
    %vm781 = vcmp.eq.s32.totalorder %v773, %v250
    %vm782 = vcmp.eq.s32.totalorder %v774, %v250
    %vm783 = vcmp.eq.s32.totalorder %v775, %v250
    %vm784 = vcmp.eq.s32.totalorder %v776, %v250
    %vm785 = vcmp.eq.s32.totalorder %v777, %v250
    %vm786 = vcmp.eq.s32.totalorder %v778, %v250
    %vm787 = vcmp.eq.s32.totalorder %v771, %v251
    %vm788 = vcmp.eq.s32.totalorder %v772, %v251
    %vm789 = vcmp.eq.s32.totalorder %v773, %v251
    %vm790 = vcmp.eq.s32.totalorder %v774, %v251
    %vm791 = vcmp.eq.s32.totalorder %v775, %v251
    %vm792 = vcmp.eq.s32.totalorder %v776, %v251
    %vm793 = vcmp.eq.s32.totalorder %v777, %v251
    %vm794 = vcmp.eq.s32.totalorder %v778, %v251
    %vm795 = vcmp.eq.s32.totalorder %v771, %v252
    %vm796 = vcmp.eq.s32.totalorder %v772, %v252
    %vm797 = vcmp.eq.s32.totalorder %v773, %v252
    %vm798 = vcmp.eq.s32.totalorder %v774, %v252
    %vm799 = vcmp.eq.s32.totalorder %v775, %v252
    %vm800 = vcmp.eq.s32.totalorder %v776, %v252
    %vm801 = vcmp.eq.s32.totalorder %v777, %v252
    %vm802 = vcmp.eq.s32.totalorder %v778, %v252
    %vm803 = vcmp.eq.s32.totalorder %v771, %v253
    %vm804 = vcmp.eq.s32.totalorder %v772, %v253
    %vm805 = vcmp.eq.s32.totalorder %v773, %v253
    %vm806 = vcmp.eq.s32.totalorder %v774, %v253
    %vm807 = vcmp.eq.s32.totalorder %v775, %v253
    %vm808 = vcmp.eq.s32.totalorder %v776, %v253
    %vm809 = vcmp.eq.s32.totalorder %v777, %v253
    %vm810 = vcmp.eq.s32.totalorder %v778, %v253
    %vm811 = vcmp.eq.s32.totalorder %v771, %v254
    %vm812 = vcmp.eq.s32.totalorder %v772, %v254
    %vm813 = vcmp.eq.s32.totalorder %v773, %v254
    %vm814 = vcmp.eq.s32.totalorder %v774, %v254
    %vm815 = vcmp.eq.s32.totalorder %v775, %v254
    %vm816 = vcmp.eq.s32.totalorder %v776, %v254
    %vm817 = vcmp.eq.s32.totalorder %v777, %v254
    %vm818 = vcmp.eq.s32.totalorder %v778, %v254
    %vm819 = vcmp.eq.s32.totalorder %v771, %v255
    %vm820 = vcmp.eq.s32.totalorder %v772, %v255
    %vm821 = vcmp.eq.s32.totalorder %v773, %v255
    %vm822 = vcmp.eq.s32.totalorder %v774, %v255
    %vm823 = vcmp.eq.s32.totalorder %v775, %v255
    %vm824 = vcmp.eq.s32.totalorder %v776, %v255
    %vm825 = vcmp.eq.s32.totalorder %v777, %v255
    %vm826 = vcmp.eq.s32.totalorder %v778, %v255
    %vm827 = vcmp.eq.s32.totalorder %v771, %v256
    %vm828 = vcmp.eq.s32.totalorder %v772, %v256
    %vm829 = vcmp.eq.s32.totalorder %v773, %v256
    %vm830 = vcmp.eq.s32.totalorder %v774, %v256
    %vm831 = vcmp.eq.s32.totalorder %v775, %v256
    %vm832 = vcmp.eq.s32.totalorder %v776, %v256
    %vm833 = vcmp.eq.s32.totalorder %v777, %v256
    %vm834 = vcmp.eq.s32.totalorder %v778, %v256
    %vm835 = vcmp.eq.s32.totalorder %v771, %v257
    %vm836 = vcmp.eq.s32.totalorder %v772, %v257
    %vm837 = vcmp.eq.s32.totalorder %v773, %v257
    %vm838 = vcmp.eq.s32.totalorder %v774, %v257
    %vm839 = vcmp.eq.s32.totalorder %v775, %v257
    %vm840 = vcmp.eq.s32.totalorder %v776, %v257
    %vm841 = vcmp.eq.s32.totalorder %v777, %v257
    %vm842 = vcmp.eq.s32.totalorder %v778, %v257
    %v843 = vsel %vm779, 1.0, 0.0
    %v844 = vsel %vm780, 1.0, 0.0
    %v845 = vsel %vm781, 1.0, 0.0
    %v846 = vsel %vm782, 1.0, 0.0
    %v847 = vsel %vm783, 1.0, 0.0
    %v848 = vsel %vm784, 1.0, 0.0
    %v849 = vsel %vm785, 1.0, 0.0
    %v850 = vsel %vm786, 1.0, 0.0
    %v851 = vsel %vm787, 1.0, 0.0
    %v852 = vsel %vm788, 1.0, 0.0
    %v853 = vsel %vm789, 1.0, 0.0
    %v854 = vsel %vm790, 1.0, 0.0
    %v855 = vsel %vm791, 1.0, 0.0
    %v856 = vsel %vm792, 1.0, 0.0
    %v857 = vsel %vm793, 1.0, 0.0
    %v858 = vsel %vm794, 1.0, 0.0
    %v859 = vsel %vm795, 1.0, 0.0
    %v860 = vsel %vm796, 1.0, 0.0
    %v861 = vsel %vm797, 1.0, 0.0
    %v862 = vsel %vm798, 1.0, 0.0
    %v863 = vsel %vm799, 1.0, 0.0
    %v864 = vsel %vm800, 1.0, 0.0
    %v865 = vsel %vm801, 1.0, 0.0
    %v866 = vsel %vm802, 1.0, 0.0
    %v867 = vsel %vm803, 1.0, 0.0
    %v868 = vsel %vm804, 1.0, 0.0
    %v869 = vsel %vm805, 1.0, 0.0
    %v870 = vsel %vm806, 1.0, 0.0
    %v871 = vsel %vm807, 1.0, 0.0
    %v872 = vsel %vm808, 1.0, 0.0
    %v873 = vsel %vm809, 1.0, 0.0
    %v874 = vsel %vm810, 1.0, 0.0
    %v875 = vsel %vm811, 1.0, 0.0
    %v876 = vsel %vm812, 1.0, 0.0
    %v877 = vsel %vm813, 1.0, 0.0
    %v878 = vsel %vm814, 1.0, 0.0
    %v879 = vsel %vm815, 1.0, 0.0
    %v880 = vsel %vm816, 1.0, 0.0
    %v881 = vsel %vm817, 1.0, 0.0
    %v882 = vsel %vm818, 1.0, 0.0
    %v883 = vsel %vm819, 1.0, 0.0
    %v884 = vsel %vm820, 1.0, 0.0
    %v885 = vsel %vm821, 1.0, 0.0
    %v886 = vsel %vm822, 1.0, 0.0
    %v887 = vsel %vm823, 1.0, 0.0
    %v888 = vsel %vm824, 1.0, 0.0
    %v889 = vsel %vm825, 1.0, 0.0
    %v890 = vsel %vm826, 1.0, 0.0
    %v891 = vsel %vm827, 1.0, 0.0
    %v892 = vsel %vm828, 1.0, 0.0
    %v893 = vsel %vm829, 1.0, 0.0
    %v894 = vsel %vm830, 1.0, 0.0
    %v895 = vsel %vm831, 1.0, 0.0
    %v896 = vsel %vm832, 1.0, 0.0
    %v897 = vsel %vm833, 1.0, 0.0
    %v898 = vsel %vm834, 1.0, 0.0
    %v899 = vsel %vm835, 1.0, 0.0
    %v900 = vsel %vm836, 1.0, 0.0
    %v901 = vsel %vm837, 1.0, 0.0
    %v902 = vsel %vm838, 1.0, 0.0
    %v903 = vsel %vm839, 1.0, 0.0
    %v904 = vsel %vm840, 1.0, 0.0
    %v905 = vsel %vm841, 1.0, 0.0
    %v906 = vsel %vm842, 1.0, 0.0
    %vm907 = vcmask 1041408
    %v908 = vsel %vm907, %v118, 0.0
    %v909 = vrot.slane %v908, 4
    %v910 = vadd.f32 %v908, %v909
    %v911 = vrot.slane %v910, 2
    %v912 = vadd.f32 %v910, %v911
    %v913 = vrot.slane %v912, 1
    %v914 = vadd.f32 %v912, %v913
    %v915 = vsel %vm907, %v120, 0.0
    %v916 = vrot.slane %v915, 4
    %v917 = vadd.f32 %v915, %v916
    %v918 = vrot.slane %v917, 2
    %v919 = vadd.f32 %v917, %v918
    %v920 = vrot.slane %v919, 1
    %v921 = vadd.f32 %v919, %v920
    %v922 = vsel %vm907, %v159, 0.0
    %v923 = vrot.slane %v922, 4
    %v924 = vadd.f32 %v922, %v923
    %v925 = vrot.slane %v924, 2
    %v926 = vadd.f32 %v924, %v925
    %v927 = vrot.slane %v926, 1
    %v928 = vadd.f32 %v926, %v927
    %v929 = vsel %vm907, %v161, 0.0
    %v930 = vrot.slane %v929, 4
    %v931 = vadd.f32 %v929, %v930
    %v932 = vrot.slane %v931, 2
    %v933 = vadd.f32 %v931, %v932
    %v934 = vrot.slane %v933, 1
    %v935 = vadd.f32 %v933, %v934
    %v936 = vsel %vm907, %v200, 0.0
    %v937 = vrot.slane %v936, 4
    %v938 = vadd.f32 %v936, %v937
    %v939 = vrot.slane %v938, 2
    %v940 = vadd.f32 %v938, %v939
    %v941 = vrot.slane %v940, 1
    %v942 = vadd.f32 %v940, %v941
    %v943 = vsel %vm907, %v202, 0.0
    %v944 = vrot.slane %v943, 4
    %v945 = vadd.f32 %v943, %v944
    %v946 = vrot.slane %v945, 2
    %v947 = vadd.f32 %v945, %v946
    %v948 = vrot.slane %v947, 1
    %v949 = vadd.f32 %v947, %v948
    %v950 = vsel %vm907, %v241, 0.0
    %v951 = vrot.slane %v950, 4
    %v952 = vadd.f32 %v950, %v951
    %v953 = vrot.slane %v952, 2
    %v954 = vadd.f32 %v952, %v953
    %v955 = vrot.slane %v954, 1
    %v956 = vadd.f32 %v954, %v955
    %v957 = vsel %vm907, %v243, 0.0
    %v958 = vrot.slane %v957, 4
    %v959 = vadd.f32 %v957, %v958
    %v960 = vrot.slane %v959, 2
    %v961 = vadd.f32 %v959, %v960
    %v962 = vrot.slane %v961, 1
    %v963 = vadd.f32 %v961, %v962
    %v964 = vmul.f32 %v118, %v118
    %v965 = vmul.f32 %v120, %v120
    %v966 = vmul.f32 %v159, %v159
    %v967 = vmul.f32 %v161, %v161
    %v968 = vmul.f32 %v200, %v200
    %v969 = vmul.f32 %v202, %v202
    %v970 = vmul.f32 %v241, %v241
    %v971 = vmul.f32 %v243, %v243
    %v972 = vsel %vm907, %v964, 0.0
    %v973 = vrot.slane %v972, 4
    %v974 = vadd.f32 %v972, %v973
    %v975 = vrot.slane %v974, 2
    %v976 = vadd.f32 %v974, %v975
    %v977 = vrot.slane %v976, 1
    %v978 = vadd.f32 %v976, %v977
    %v979 = vsel %vm907, %v965, 0.0
    %v980 = vrot.slane %v979, 4
    %v981 = vadd.f32 %v979, %v980
    %v982 = vrot.slane %v981, 2
    %v983 = vadd.f32 %v981, %v982
    %v984 = vrot.slane %v983, 1
    %v985 = vadd.f32 %v983, %v984
    %v986 = vsel %vm907, %v966, 0.0
    %v987 = vrot.slane %v986, 4
    %v988 = vadd.f32 %v986, %v987
    %v989 = vrot.slane %v988, 2
    %v990 = vadd.f32 %v988, %v989
    %v991 = vrot.slane %v990, 1
    %v992 = vadd.f32 %v990, %v991
    %v993 = vsel %vm907, %v967, 0.0
    %v994 = vrot.slane %v993, 4
    %v995 = vadd.f32 %v993, %v994
    %v996 = vrot.slane %v995, 2
    %v997 = vadd.f32 %v995, %v996
    %v998 = vrot.slane %v997, 1
    %v999 = vadd.f32 %v997, %v998
    %v1000 = vsel %vm907, %v968, 0.0
    %v1001 = vrot.slane %v1000, 4
    %v1002 = vadd.f32 %v1000, %v1001
    %v1003 = vrot.slane %v1002, 2
    %v1004 = vadd.f32 %v1002, %v1003
    %v1005 = vrot.slane %v1004, 1
    %v1006 = vadd.f32 %v1004, %v1005
    %v1007 = vsel %vm907, %v969, 0.0
    %v1008 = vrot.slane %v1007, 4
    %v1009 = vadd.f32 %v1007, %v1008
    %v1010 = vrot.slane %v1009, 2
    %v1011 = vadd.f32 %v1009, %v1010
    %v1012 = vrot.slane %v1011, 1
    %v1013 = vadd.f32 %v1011, %v1012
    %v1014 = vsel %vm907, %v970, 0.0
    %v1015 = vrot.slane %v1014, 4
    %v1016 = vadd.f32 %v1014, %v1015
    %v1017 = vrot.slane %v1016, 2
    %v1018 = vadd.f32 %v1016, %v1017
    %v1019 = vrot.slane %v1018, 1
    %v1020 = vadd.f32 %v1018, %v1019
    %v1021 = vsel %vm907, %v971, 0.0
    %v1022 = vrot.slane %v1021, 4
    %v1023 = vadd.f32 %v1021, %v1022
    %v1024 = vrot.slane %v1023, 2
    %v1025 = vadd.f32 %v1023, %v1024
    %v1026 = vrot.slane %v1025, 1
    %v1027 = vadd.f32 %v1025, %v1026
    %vm1028 = vcmask 1040384
    %v1029 = vsel %vm1028, %v914, %v978
    %v1030 = vsel %vm1028, %v921, %v985
    %v1031 = vsel %vm1028, %v928, %v992
    %v1032 = vsel %vm1028, %v935, %v999
    %v1033 = vsel %vm1028, %v942, %v1006
    %v1034 = vsel %vm1028, %v949, %v1013
    %v1035 = vsel %vm1028, %v956, %v1020
    %v1036 = vsel %vm1028, %v963, %v1027
    %1037 = vmatprep.subr.mxu0 0.0
    %1038 = vmatpush1.msra.mxu0 %v636
    %1039 = vmatprep.subr.mxu0 0.0
    %1040 = vmatpush1.msra.mxu0 %v637
    %1041 = vmatprep.subr.mxu0 0.0
    %1042 = vmatpush1.msra.mxu0 %v638
    %1043 = vmatprep.subr.mxu0 0.0
    %1044 = vmatpush1.msra.mxu0 %v639
    %1045 = vmatprep.subr.mxu0 0.0
    %1046 = vmatpush1.msra.mxu0 %v640
    %1047 = vmatprep.subr.mxu0 0.0
    %1048 = vmatpush1.msra.mxu0 %v641
    %1049 = vmatprep.subr.mxu0 0.0
    %1050 = vmatpush1.msra.mxu0 %v642
    %1051 = vmatprep.subr.mxu0 0.0
    %1052 = vmatpush1.msra.mxu0 %v643
    %1053 = vmatprep.subr.mxu0 0.0
    %1054 = vmatpush1.msra.mxu0 %v644
    %1055 = vmatprep.subr.mxu0 0.0
    %1056 = vmatpush1.msra.mxu0 %v645
    %1057 = vmatprep.subr.mxu0 0.0
    %1058 = vmatpush1.msra.mxu0 %v646
    %1059 = vmatprep.subr.mxu0 0.0
    %1060 = vmatpush1.msra.mxu0 %v647
    %1061 = vmatprep.subr.mxu0 0.0
    %1062 = vmatpush1.msra.mxu0 %v648
    %1063 = vmatprep.subr.mxu0 0.0
    %1064 = vmatpush1.msra.mxu0 %v649
    %1065 = vmatprep.subr.mxu0 0.0
    %1066 = vmatpush1.msra.mxu0 %v650
    %1067 = vmatprep.subr.mxu0 0.0
    %1068 = vmatpush1.msra.mxu0 %v651
    %1069 = vmatprep.subr.mxu0 0.0
    %1070 = vmatpush1.msra.mxu0 %v652
    %1071 = vmatprep.subr.mxu0 0.0
    %1072 = vmatpush1.msra.mxu0 %v653
    %1073 = vmatprep.subr.mxu0 0.0
    %1074 = vmatpush1.msra.mxu0 %v654
    %1075 = vmatprep.subr.mxu0 0.0
    %1076 = vmatpush1.msra.mxu0 %v655
    %1077 = vmatprep.subr.mxu0 0.0
    %1078 = vmatpush1.msra.mxu0 %v656
    %1079 = vmatprep.subr.mxu0 0.0
    %1080 = vmatpush1.msra.mxu0 %v657
    %1081 = vmatprep.subr.mxu0 0.0
    %1082 = vmatpush1.msra.mxu0 %v658
    %1083 = vmatprep.subr.mxu0 0.0
    %1084 = vmatpush1.msra.mxu0 %v659
    %1085 = vmatprep.subr.mxu0 0.0
    %1086 = vmatpush1.msra.mxu0 %v660
    %1087 = vmatprep.subr.mxu0 0.0
    %1088 = vmatpush1.msra.mxu0 %v661
    %1089 = vmatprep.subr.mxu0 0.0
    %1090 = vmatpush1.msra.mxu0 %v662
    %1091 = vmatprep.subr.mxu0 0.0
    %1092 = vmatpush1.msra.mxu0 %v663
    %1093 = vmatprep.subr.mxu0 0.0
    %1094 = vmatpush1.msra.mxu0 %v664
    %1095 = vmatprep.subr.mxu0 0.0
    %1096 = vmatpush1.msra.mxu0 %v665
    %1097 = vmatprep.subr.mxu0 0.0
    %1098 = vmatpush1.msra.mxu0 %v666
    %1099 = vmatprep.subr.mxu0 0.0
    %1100 = vmatpush1.msra.mxu0 %v667
    %1101 = vmatprep.mubr.f32.mxu0 %v1030
    %1102 = vmatmul.mubr.f32.gmra.mrb[0].mxu0 %v1029
    %v1103 = vpop.f32.mrb[0].mxu0
    %v1104 = vadd.f32 0.0, %v1103
    %v1105 = vpop.f32.mrb[0].mxu0
    %1106 = vdwg.mxu0
    %1107 = vmatprep.subr.mxu0 0.0
    %1108 = vmatpush1.msra.mxu0 %v668
    %1109 = vmatprep.subr.mxu0 0.0
    %1110 = vmatpush1.msra.mxu0 %v669
    %1111 = vmatprep.subr.mxu0 0.0
    %1112 = vmatpush1.msra.mxu0 %v670
    %1113 = vmatprep.subr.mxu0 0.0
    %1114 = vmatpush1.msra.mxu0 %v671
    %1115 = vmatprep.subr.mxu0 0.0
    %1116 = vmatpush1.msra.mxu0 %v672
    %1117 = vmatprep.subr.mxu0 0.0
    %1118 = vmatpush1.msra.mxu0 %v673
    %1119 = vmatprep.subr.mxu0 0.0
    %1120 = vmatpush1.msra.mxu0 %v674
    %1121 = vmatprep.subr.mxu0 0.0
    %1122 = vmatpush1.msra.mxu0 %v675
    %1123 = vmatprep.subr.mxu0 0.0
    %1124 = vmatpush1.msra.mxu0 %v676
    %1125 = vmatprep.subr.mxu0 0.0
    %1126 = vmatpush1.msra.mxu0 %v677
    %1127 = vmatprep.subr.mxu0 0.0
    %1128 = vmatpush1.msra.mxu0 %v678
    %1129 = vmatprep.subr.mxu0 0.0
    %1130 = vmatpush1.msra.mxu0 %v679
    %1131 = vmatprep.subr.mxu0 0.0
    %1132 = vmatpush1.msra.mxu0 %v680
    %1133 = vmatprep.subr.mxu0 0.0
    %1134 = vmatpush1.msra.mxu0 %v681
    %1135 = vmatprep.subr.mxu0 0.0
    %1136 = vmatpush1.msra.mxu0 %v682
    %1137 = vmatprep.subr.mxu0 0.0
    %1138 = vmatpush1.msra.mxu0 %v683
    %1139 = vmatprep.subr.mxu0 0.0
    %1140 = vmatpush1.msra.mxu0 %v684
    %1141 = vmatprep.subr.mxu0 0.0
    %1142 = vmatpush1.msra.mxu0 %v685
    %1143 = vmatprep.subr.mxu0 0.0
    %1144 = vmatpush1.msra.mxu0 %v686
    %1145 = vmatprep.subr.mxu0 0.0
    %1146 = vmatpush1.msra.mxu0 %v687
    %1147 = vmatprep.subr.mxu0 0.0
    %1148 = vmatpush1.msra.mxu0 %v688
    %1149 = vmatprep.subr.mxu0 0.0
    %1150 = vmatpush1.msra.mxu0 %v689
    %1151 = vmatprep.subr.mxu0 0.0
    %1152 = vmatpush1.msra.mxu0 %v690
    %1153 = vmatprep.subr.mxu0 0.0
    %1154 = vmatpush1.msra.mxu0 %v691
    %1155 = vmatprep.subr.mxu0 0.0
    %1156 = vmatpush1.msra.mxu0 %v692
    %1157 = vmatprep.subr.mxu0 0.0
    %1158 = vmatpush1.msra.mxu0 %v693
    %1159 = vmatprep.subr.mxu0 0.0
    %1160 = vmatpush1.msra.mxu0 %v694
    %1161 = vmatprep.subr.mxu0 0.0
    %1162 = vmatpush1.msra.mxu0 %v695
    %1163 = vmatprep.subr.mxu0 0.0
    %1164 = vmatpush1.msra.mxu0 %v696
    %1165 = vmatprep.subr.mxu0 0.0
    %1166 = vmatpush1.msra.mxu0 %v697
    %1167 = vmatprep.subr.mxu0 0.0
    %1168 = vmatpush1.msra.mxu0 %v698
    %1169 = vmatprep.subr.mxu0 0.0
    %1170 = vmatpush1.msra.mxu0 %v699
    %1171 = vmatprep.mubr.f32.mxu0 %v1032
    %1172 = vmatmul.mubr.f32.gmra.mrb[0].mxu0 %v1031
    %v1173 = vpop.f32.mrb[0].mxu0
    %v1174 = vadd.f32 %v1104, %v1173
    %v1175 = vpop.f32.mrb[0].mxu0
    %1176 = vdwg.mxu0
    %1177 = vmatprep.subr.mxu0 0.0
    %1178 = vmatpush1.msra.mxu0 %v700
    %1179 = vmatprep.subr.mxu0 0.0
    %1180 = vmatpush1.msra.mxu0 %v701
    %1181 = vmatprep.subr.mxu0 0.0
    %1182 = vmatpush1.msra.mxu0 %v702
    %1183 = vmatprep.subr.mxu0 0.0
    %1184 = vmatpush1.msra.mxu0 %v703
    %1185 = vmatprep.subr.mxu0 0.0
    %1186 = vmatpush1.msra.mxu0 %v704
    %1187 = vmatprep.subr.mxu0 0.0
    %1188 = vmatpush1.msra.mxu0 %v705
    %1189 = vmatprep.subr.mxu0 0.0
    %1190 = vmatpush1.msra.mxu0 %v706
    %1191 = vmatprep.subr.mxu0 0.0
    %1192 = vmatpush1.msra.mxu0 %v707
    %1193 = vmatprep.subr.mxu0 0.0
    %1194 = vmatpush1.msra.mxu0 %v708
    %1195 = vmatprep.subr.mxu0 0.0
    %1196 = vmatpush1.msra.mxu0 %v709
    %1197 = vmatprep.subr.mxu0 0.0
    %1198 = vmatpush1.msra.mxu0 %v710
    %1199 = vmatprep.subr.mxu0 0.0
    %1200 = vmatpush1.msra.mxu0 %v711
    %1201 = vmatprep.subr.mxu0 0.0
    %1202 = vmatpush1.msra.mxu0 %v712
    %1203 = vmatprep.subr.mxu0 0.0
    %1204 = vmatpush1.msra.mxu0 %v713
    %1205 = vmatprep.subr.mxu0 0.0
    %1206 = vmatpush1.msra.mxu0 %v714
    %1207 = vmatprep.subr.mxu0 0.0
    %1208 = vmatpush1.msra.mxu0 %v715
    %1209 = vmatprep.subr.mxu0 0.0
    %1210 = vmatpush1.msra.mxu0 %v716
    %1211 = vmatprep.subr.mxu0 0.0
    %1212 = vmatpush1.msra.mxu0 %v717
    %1213 = vmatprep.subr.mxu0 0.0
    %1214 = vmatpush1.msra.mxu0 %v718
    %1215 = vmatprep.subr.mxu0 0.0
    %1216 = vmatpush1.msra.mxu0 %v719
    %1217 = vmatprep.subr.mxu0 0.0
    %1218 = vmatpush1.msra.mxu0 %v720
    %1219 = vmatprep.subr.mxu0 0.0
    %1220 = vmatpush1.msra.mxu0 %v721
    %1221 = vmatprep.subr.mxu0 0.0
    %1222 = vmatpush1.msra.mxu0 %v722
    %1223 = vmatprep.subr.mxu0 0.0
    %1224 = vmatpush1.msra.mxu0 %v723
    %1225 = vmatprep.subr.mxu0 0.0
    %1226 = vmatpush1.msra.mxu0 %v724
    %1227 = vmatprep.subr.mxu0 0.0
    %1228 = vmatpush1.msra.mxu0 %v725
    %1229 = vmatprep.subr.mxu0 0.0
    %1230 = vmatpush1.msra.mxu0 %v726
    %1231 = vmatprep.subr.mxu0 0.0
    %1232 = vmatpush1.msra.mxu0 %v727
    %1233 = vmatprep.subr.mxu0 0.0
    %1234 = vmatpush1.msra.mxu0 %v728
    %1235 = vmatprep.subr.mxu0 0.0
    %1236 = vmatpush1.msra.mxu0 %v729
    %1237 = vmatprep.subr.mxu0 0.0
    %1238 = vmatpush1.msra.mxu0 %v730
    %1239 = vmatprep.subr.mxu0 0.0
    %1240 = vmatpush1.msra.mxu0 %v731
    %1241 = vmatprep.mubr.f32.mxu0 %v1034
    %1242 = vmatmul.mubr.f32.gmra.mrb[0].mxu0 %v1033
    %v1243 = vpop.f32.mrb[0].mxu0
    %v1244 = vadd.f32 %v1174, %v1243
    %v1245 = vpop.f32.mrb[0].mxu0
    %1246 = vdwg.mxu0
    %1247 = vmatprep.subr.mxu0 0.0
    %1248 = vmatpush1.msra.mxu0 %v732
    %1249 = vmatprep.subr.mxu0 0.0
    %1250 = vmatpush1.msra.mxu0 %v733
    %1251 = vmatprep.subr.mxu0 0.0
    %1252 = vmatpush1.msra.mxu0 %v734
    %1253 = vmatprep.subr.mxu0 0.0
    %1254 = vmatpush1.msra.mxu0 %v735
    %1255 = vmatprep.subr.mxu0 0.0
    %1256 = vmatpush1.msra.mxu0 %v736
    %1257 = vmatprep.subr.mxu0 0.0
    %1258 = vmatpush1.msra.mxu0 %v737
    %1259 = vmatprep.subr.mxu0 0.0
    %1260 = vmatpush1.msra.mxu0 %v738
    %1261 = vmatprep.subr.mxu0 0.0
    %1262 = vmatpush1.msra.mxu0 %v739
    %1263 = vmatprep.subr.mxu0 0.0
    %1264 = vmatpush1.msra.mxu0 %v740
    %1265 = vmatprep.subr.mxu0 0.0
    %1266 = vmatpush1.msra.mxu0 %v741
    %1267 = vmatprep.subr.mxu0 0.0
    %1268 = vmatpush1.msra.mxu0 %v742
    %1269 = vmatprep.subr.mxu0 0.0
    %1270 = vmatpush1.msra.mxu0 %v743
    %1271 = vmatprep.subr.mxu0 0.0
    %1272 = vmatpush1.msra.mxu0 %v744
    %1273 = vmatprep.subr.mxu0 0.0
    %1274 = vmatpush1.msra.mxu0 %v745
    %1275 = vmatprep.subr.mxu0 0.0
    %1276 = vmatpush1.msra.mxu0 %v746
    %1277 = vmatprep.subr.mxu0 0.0
    %1278 = vmatpush1.msra.mxu0 %v747
    %1279 = vmatprep.subr.mxu0 0.0
    %1280 = vmatpush1.msra.mxu0 %v748
    %1281 = vmatprep.subr.mxu0 0.0
    %1282 = vmatpush1.msra.mxu0 %v749
    %1283 = vmatprep.subr.mxu0 0.0
    %1284 = vmatpush1.msra.mxu0 %v750
    %1285 = vmatprep.subr.mxu0 0.0
    %1286 = vmatpush1.msra.mxu0 %v751
    %1287 = vmatprep.subr.mxu0 0.0
    %1288 = vmatpush1.msra.mxu0 %v752
    %1289 = vmatprep.subr.mxu0 0.0
    %1290 = vmatpush1.msra.mxu0 %v753
    %1291 = vmatprep.subr.mxu0 0.0
    %1292 = vmatpush1.msra.mxu0 %v754
    %1293 = vmatprep.subr.mxu0 0.0
    %1294 = vmatpush1.msra.mxu0 %v755
    %1295 = vmatprep.subr.mxu0 0.0
    %1296 = vmatpush1.msra.mxu0 %v756
    %1297 = vmatprep.subr.mxu0 0.0
    %1298 = vmatpush1.msra.mxu0 %v757
    %1299 = vmatprep.subr.mxu0 0.0
    %1300 = vmatpush1.msra.mxu0 %v758
    %1301 = vmatprep.subr.mxu0 0.0
    %1302 = vmatpush1.msra.mxu0 %v759
    %1303 = vmatprep.subr.mxu0 0.0
    %1304 = vmatpush1.msra.mxu0 %v760
    %1305 = vmatprep.subr.mxu0 0.0
    %1306 = vmatpush1.msra.mxu0 %v761
    %1307 = vmatprep.subr.mxu0 0.0
    %1308 = vmatpush1.msra.mxu0 %v762
    %1309 = vmatprep.subr.mxu0 0.0
    %1310 = vmatpush1.msra.mxu0 %v763
    %1311 = vmatprep.mubr.f32.mxu0 %v1036
    %1312 = vmatmul.mubr.f32.gmra.mrb[0].mxu0 %v1035
    %v1313 = vpop.f32.mrb[0].mxu0
    %v1314 = vadd.f32 %v1244, %v1313
    %v1315 = vpop.f32.mrb[0].mxu0
    %1316 = vdwg.mxu0
    %v1317 = vrcp.pop 32.0
    %v1318 = vmul.f32 %v1314, %v1317
    %v1319 = vmul.f32 %v1318, %v1318
    %v1321 = vrot.slane %v1319, 7
    %v1323 = vsub.f32 %v1318, %v1321
    %v1324 = vmax.f32 %v1323, 0.0
    %v1325 = vadd.f32 %v1324, 1e-05
    %v1326 = vrsqrt.pop %v1325
    %v1329 = vunpack.c.l.s4 1966171168
    %v1330 = vunpack.c.0.s8 %v1329
    %v1331 = vlaneseq
    %v1332 = vshrl.u32 %v1331, 7
    %v1333 = vsub.s32 %v1330, %v1332
    %v1334 = vrot.slane %v1326, %v1333
    %v1335 = vcombine.high %v1334, %v1334
    %v1337 = vunpack.c.l.s4 1966171168
    %v1338 = vunpack.c.0.s8 %v1337
    %v1339 = vlaneseq
    %v1340 = vshrl.u32 %v1339, 7
    %v1341 = vsub.s32 %v1338, %v1340
    %v1342 = vrot.slane %v1335, %v1341
    %v1344 = vmul.f32 %v247, %v1342
    %v1345 = vmul.f32 %v1318, %v1344
    %v1346 = vsub.f32 %v248, %v1345
    %v1348 = vlaneseq
    %v1349 = vshrl.u32 %v1348, 7
    %v1350 = vsub.s32 0, %v1349
    %v1351 = vrot.slane %v1346, %v1350
    %v1353 = vsel %vm1028, %v1344, %v1351
    %vm1354 = vcmask 523264
    %v1356 = vsel %vm1354, %v1353, 0
    %1358 = vmatprep.subr.mxu0 %v844
    %1359 = vmatpush1.msra.mxu0 %v843
    %1360 = vmatprep.subr.mxu0 %v852
    %1361 = vmatpush1.msra.mxu0 %v851
    %1362 = vmatprep.subr.mxu0 %v860
    %1363 = vmatpush1.msra.mxu0 %v859
    %1364 = vmatprep.subr.mxu0 %v868
    %1365 = vmatpush1.msra.mxu0 %v867
    %1366 = vmatprep.subr.mxu0 %v876
    %1367 = vmatpush1.msra.mxu0 %v875
    %1368 = vmatprep.subr.mxu0 %v884
    %1369 = vmatpush1.msra.mxu0 %v883
    %1370 = vmatprep.subr.mxu0 %v892
    %1371 = vmatpush1.msra.mxu0 %v891
    %1372 = vmatprep.subr.mxu0 %v900
    %1373 = vmatpush1.msra.mxu0 %v899
    %1374 = vmatprep.subr.mxu0 0.0
    %1375 = vmatpush1.msra.mxu0 0.0
    %1376 = vmatprep.subr.mxu0 0.0
    %1377 = vmatpush1.msra.mxu0 0.0
    %1378 = vmatprep.subr.mxu0 0.0
    %1379 = vmatpush1.msra.mxu0 0.0
    %1380 = vmatprep.subr.mxu0 0.0
    %1381 = vmatpush1.msra.mxu0 0.0
    %1382 = vmatprep.subr.mxu0 0.0
    %1383 = vmatpush1.msra.mxu0 0.0
    %1384 = vmatprep.subr.mxu0 0.0
    %1385 = vmatpush1.msra.mxu0 0.0
    %1386 = vmatprep.subr.mxu0 0.0
    %1387 = vmatpush1.msra.mxu0 0.0
    %1388 = vmatprep.subr.mxu0 0.0
    %1389 = vmatpush1.msra.mxu0 0.0
    %1390 = vmatprep.subr.mxu0 0.0
    %1391 = vmatpush1.msra.mxu0 0.0
    %1392 = vmatprep.subr.mxu0 0.0
    %1393 = vmatpush1.msra.mxu0 0.0
    %1394 = vmatprep.subr.mxu0 0.0
    %1395 = vmatpush1.msra.mxu0 0.0
    %1396 = vmatprep.subr.mxu0 0.0
    %1397 = vmatpush1.msra.mxu0 0.0
    %1398 = vmatprep.subr.mxu0 0.0
    %1399 = vmatpush1.msra.mxu0 0.0
    %1400 = vmatprep.subr.mxu0 0.0
    %1401 = vmatpush1.msra.mxu0 0.0
    %1402 = vmatprep.subr.mxu0 0.0
    %1403 = vmatpush1.msra.mxu0 0.0
    %1404 = vmatprep.subr.mxu0 0.0
    %1405 = vmatpush1.msra.mxu0 0.0
    %1406 = vmatprep.subr.mxu0 0.0
    %1407 = vmatpush1.msra.mxu0 0.0
    %1408 = vmatprep.subr.mxu0 0.0
    %1409 = vmatpush1.msra.mxu0 0.0
    %1410 = vmatprep.subr.mxu0 0.0
    %1411 = vmatpush1.msra.mxu0 0.0
    %1412 = vmatprep.subr.mxu0 0.0
    %1413 = vmatpush1.msra.mxu0 0.0
    %1414 = vmatprep.subr.mxu0 0.0
    %1415 = vmatpush1.msra.mxu0 0.0
    %1416 = vmatprep.subr.mxu0 0.0
    %1417 = vmatpush1.msra.mxu0 0.0
    %1418 = vmatprep.subr.mxu0 0.0
    %1419 = vmatpush1.msra.mxu0 0.0
    %1420 = vmatprep.subr.mxu0 0.0
    %1421 = vmatpush1.msra.mxu0 0.0
    %1422 = vmatprep.mubr.f32.mxu0 0.0
    %1423 = vmatmul.mubr.f32.gmra.mrb[0].mxu0 %v1356
    %v1424 = vpop.f32.mrb[0].mxu0
    %v1425 = vadd.f32 0.0, %v1424
    %v1426 = vpop.f32.mrb[0].mxu0
    %v1427 = vadd.f32 0.0, %v1426
    %1428 = vdwg.mxu0
    %1429 = vmatprep.subr.mxu0 %v846
    %1430 = vmatpush1.msra.mxu0 %v845
    %1431 = vmatprep.subr.mxu0 %v854
    %1432 = vmatpush1.msra.mxu0 %v853
    %1433 = vmatprep.subr.mxu0 %v862
    %1434 = vmatpush1.msra.mxu0 %v861
    %1435 = vmatprep.subr.mxu0 %v870
    %1436 = vmatpush1.msra.mxu0 %v869
    %1437 = vmatprep.subr.mxu0 %v878
    %1438 = vmatpush1.msra.mxu0 %v877
    %1439 = vmatprep.subr.mxu0 %v886
    %1440 = vmatpush1.msra.mxu0 %v885
    %1441 = vmatprep.subr.mxu0 %v894
    %1442 = vmatpush1.msra.mxu0 %v893
    %1443 = vmatprep.subr.mxu0 %v902
    %1444 = vmatpush1.msra.mxu0 %v901
    %1445 = vmatprep.subr.mxu0 0.0
    %1446 = vmatpush1.msra.mxu0 0.0
    %1447 = vmatprep.subr.mxu0 0.0
    %1448 = vmatpush1.msra.mxu0 0.0
    %1449 = vmatprep.subr.mxu0 0.0
    %1450 = vmatpush1.msra.mxu0 0.0
    %1451 = vmatprep.subr.mxu0 0.0
    %1452 = vmatpush1.msra.mxu0 0.0
    %1453 = vmatprep.subr.mxu0 0.0
    %1454 = vmatpush1.msra.mxu0 0.0
    %1455 = vmatprep.subr.mxu0 0.0
    %1456 = vmatpush1.msra.mxu0 0.0
    %1457 = vmatprep.subr.mxu0 0.0
    %1458 = vmatpush1.msra.mxu0 0.0
    %1459 = vmatprep.subr.mxu0 0.0
    %1460 = vmatpush1.msra.mxu0 0.0
    %1461 = vmatprep.subr.mxu0 0.0
    %1462 = vmatpush1.msra.mxu0 0.0
    %1463 = vmatprep.subr.mxu0 0.0
    %1464 = vmatpush1.msra.mxu0 0.0
    %1465 = vmatprep.subr.mxu0 0.0
    %1466 = vmatpush1.msra.mxu0 0.0
    %1467 = vmatprep.subr.mxu0 0.0
    %1468 = vmatpush1.msra.mxu0 0.0
    %1469 = vmatprep.subr.mxu0 0.0
    %1470 = vmatpush1.msra.mxu0 0.0
    %1471 = vmatprep.subr.mxu0 0.0
    %1472 = vmatpush1.msra.mxu0 0.0
    %1473 = vmatprep.subr.mxu0 0.0
    %1474 = vmatpush1.msra.mxu0 0.0
    %1475 = vmatprep.subr.mxu0 0.0
    %1476 = vmatpush1.msra.mxu0 0.0
    %1477 = vmatprep.subr.mxu0 0.0
    %1478 = vmatpush1.msra.mxu0 0.0
    %1479 = vmatprep.subr.mxu0 0.0
    %1480 = vmatpush1.msra.mxu0 0.0
    %1481 = vmatprep.subr.mxu0 0.0
    %1482 = vmatpush1.msra.mxu0 0.0
    %1483 = vmatprep.subr.mxu0 0.0
    %1484 = vmatpush1.msra.mxu0 0.0
    %1485 = vmatprep.subr.mxu0 0.0
    %1486 = vmatpush1.msra.mxu0 0.0
    %1487 = vmatprep.subr.mxu0 0.0
    %1488 = vmatpush1.msra.mxu0 0.0
    %1489 = vmatprep.subr.mxu0 0.0
    %1490 = vmatpush1.msra.mxu0 0.0
    %1491 = vmatprep.subr.mxu0 0.0
    %1492 = vmatpush1.msra.mxu0 0.0
    %1493 = vmatprep.mubr.f32.mxu0 0.0
    %1494 = vmatmul.mubr.f32.gmra.mrb[0].mxu0 %v1356
    %v1495 = vpop.f32.mrb[0].mxu0
    %v1496 = vadd.f32 0.0, %v1495
    %v1497 = vpop.f32.mrb[0].mxu0
    %v1498 = vadd.f32 0.0, %v1497
    %1499 = vdwg.mxu0
    %1500 = vmatprep.subr.mxu0 %v848
    %1501 = vmatpush1.msra.mxu0 %v847
    %1502 = vmatprep.subr.mxu0 %v856
    %1503 = vmatpush1.msra.mxu0 %v855
    %1504 = vmatprep.subr.mxu0 %v864
    %1505 = vmatpush1.msra.mxu0 %v863
    %1506 = vmatprep.subr.mxu0 %v872
    %1507 = vmatpush1.msra.mxu0 %v871
    %1508 = vmatprep.subr.mxu0 %v880
    %1509 = vmatpush1.msra.mxu0 %v879
    %1510 = vmatprep.subr.mxu0 %v888
    %1511 = vmatpush1.msra.mxu0 %v887
    %1512 = vmatprep.subr.mxu0 %v896
    %1513 = vmatpush1.msra.mxu0 %v895
    %1514 = vmatprep.subr.mxu0 %v904
    %1515 = vmatpush1.msra.mxu0 %v903
    %1516 = vmatprep.subr.mxu0 0.0
    %1517 = vmatpush1.msra.mxu0 0.0
    %1518 = vmatprep.subr.mxu0 0.0
    %1519 = vmatpush1.msra.mxu0 0.0
    %1520 = vmatprep.subr.mxu0 0.0
    %1521 = vmatpush1.msra.mxu0 0.0
    %1522 = vmatprep.subr.mxu0 0.0
    %1523 = vmatpush1.msra.mxu0 0.0
    %1524 = vmatprep.subr.mxu0 0.0
    %1525 = vmatpush1.msra.mxu0 0.0
    %1526 = vmatprep.subr.mxu0 0.0
    %1527 = vmatpush1.msra.mxu0 0.0
    %1528 = vmatprep.subr.mxu0 0.0
    %1529 = vmatpush1.msra.mxu0 0.0
    %1530 = vmatprep.subr.mxu0 0.0
    %1531 = vmatpush1.msra.mxu0 0.0
    %1532 = vmatprep.subr.mxu0 0.0
    %1533 = vmatpush1.msra.mxu0 0.0
    %1534 = vmatprep.subr.mxu0 0.0
    %1535 = vmatpush1.msra.mxu0 0.0
    %1536 = vmatprep.subr.mxu0 0.0
    %1537 = vmatpush1.msra.mxu0 0.0
    %1538 = vmatprep.subr.mxu0 0.0
    %1539 = vmatpush1.msra.mxu0 0.0
    %1540 = vmatprep.subr.mxu0 0.0
    %1541 = vmatpush1.msra.mxu0 0.0
    %1542 = vmatprep.subr.mxu0 0.0
    %1543 = vmatpush1.msra.mxu0 0.0
    %1544 = vmatprep.subr.mxu0 0.0
    %1545 = vmatpush1.msra.mxu0 0.0
    %1546 = vmatprep.subr.mxu0 0.0
    %1547 = vmatpush1.msra.mxu0 0.0
    %1548 = vmatprep.subr.mxu0 0.0
    %1549 = vmatpush1.msra.mxu0 0.0
    %1550 = vmatprep.subr.mxu0 0.0
    %1551 = vmatpush1.msra.mxu0 0.0
    %1552 = vmatprep.subr.mxu0 0.0
    %1553 = vmatpush1.msra.mxu0 0.0
    %1554 = vmatprep.subr.mxu0 0.0
    %1555 = vmatpush1.msra.mxu0 0.0
    %1556 = vmatprep.subr.mxu0 0.0
    %1557 = vmatpush1.msra.mxu0 0.0
    %1558 = vmatprep.subr.mxu0 0.0
    %1559 = vmatpush1.msra.mxu0 0.0
    %1560 = vmatprep.subr.mxu0 0.0
    %1561 = vmatpush1.msra.mxu0 0.0
    %1562 = vmatprep.subr.mxu0 0.0
    %1563 = vmatpush1.msra.mxu0 0.0
    %1564 = vmatprep.mubr.f32.mxu0 0.0
    %1565 = vmatmul.mubr.f32.gmra.mrb[0].mxu0 %v1356
    %v1566 = vpop.f32.mrb[0].mxu0
    %v1567 = vadd.f32 0.0, %v1566
    %v1568 = vpop.f32.mrb[0].mxu0
    %v1569 = vadd.f32 0.0, %v1568
    %1570 = vdwg.mxu0
    %1571 = vmatprep.subr.mxu0 %v850
    %1572 = vmatpush1.msra.mxu0 %v849
    %1573 = vmatprep.subr.mxu0 %v858
    %1574 = vmatpush1.msra.mxu0 %v857
    %1575 = vmatprep.subr.mxu0 %v866
    %1576 = vmatpush1.msra.mxu0 %v865
    %1577 = vmatprep.subr.mxu0 %v874
    %1578 = vmatpush1.msra.mxu0 %v873
    %1579 = vmatprep.subr.mxu0 %v882
    %1580 = vmatpush1.msra.mxu0 %v881
    %1581 = vmatprep.subr.mxu0 %v890
    %1582 = vmatpush1.msra.mxu0 %v889
    %1583 = vmatprep.subr.mxu0 %v898
    %1584 = vmatpush1.msra.mxu0 %v897
    %1585 = vmatprep.subr.mxu0 %v906
    %1586 = vmatpush1.msra.mxu0 %v905
    %1587 = vmatprep.subr.mxu0 0.0
    %1588 = vmatpush1.msra.mxu0 0.0
    %1589 = vmatprep.subr.mxu0 0.0
    %1590 = vmatpush1.msra.mxu0 0.0
    %1591 = vmatprep.subr.mxu0 0.0
    %1592 = vmatpush1.msra.mxu0 0.0
    %1593 = vmatprep.subr.mxu0 0.0
    %1594 = vmatpush1.msra.mxu0 0.0
    %1595 = vmatprep.subr.mxu0 0.0
    %1596 = vmatpush1.msra.mxu0 0.0
    %1597 = vmatprep.subr.mxu0 0.0
    %1598 = vmatpush1.msra.mxu0 0.0
    %1599 = vmatprep.subr.mxu0 0.0
    %1600 = vmatpush1.msra.mxu0 0.0
    %1601 = vmatprep.subr.mxu0 0.0
    %1602 = vmatpush1.msra.mxu0 0.0
    %1603 = vmatprep.subr.mxu0 0.0
    %1604 = vmatpush1.msra.mxu0 0.0
    %1605 = vmatprep.subr.mxu0 0.0
    %1606 = vmatpush1.msra.mxu0 0.0
    %1607 = vmatprep.subr.mxu0 0.0
    %1608 = vmatpush1.msra.mxu0 0.0
    %1609 = vmatprep.subr.mxu0 0.0
    %1610 = vmatpush1.msra.mxu0 0.0
    %1611 = vmatprep.subr.mxu0 0.0
    %1612 = vmatpush1.msra.mxu0 0.0
    %1613 = vmatprep.subr.mxu0 0.0
    %1614 = vmatpush1.msra.mxu0 0.0
    %1615 = vmatprep.subr.mxu0 0.0
    %1616 = vmatpush1.msra.mxu0 0.0
    %1617 = vmatprep.subr.mxu0 0.0
    %1618 = vmatpush1.msra.mxu0 0.0
    %1619 = vmatprep.subr.mxu0 0.0
    %1620 = vmatpush1.msra.mxu0 0.0
    %1621 = vmatprep.subr.mxu0 0.0
    %1622 = vmatpush1.msra.mxu0 0.0
    %1623 = vmatprep.subr.mxu0 0.0
    %1624 = vmatpush1.msra.mxu0 0.0
    %1625 = vmatprep.subr.mxu0 0.0
    %1626 = vmatpush1.msra.mxu0 0.0
    %1627 = vmatprep.subr.mxu0 0.0
    %1628 = vmatpush1.msra.mxu0 0.0
    %1629 = vmatprep.subr.mxu0 0.0
    %1630 = vmatpush1.msra.mxu0 0.0
    %1631 = vmatprep.subr.mxu0 0.0
    %1632 = vmatpush1.msra.mxu0 0.0
    %1633 = vmatprep.subr.mxu0 0.0
    %1634 = vmatpush1.msra.mxu0 0.0
    %1635 = vmatprep.mubr.f32.mxu0 0.0
    %1636 = vmatmul.mubr.f32.gmra.mrb[0].mxu0 %v1356
    %v1637 = vpop.f32.mrb[0].mxu0
    %v1638 = vadd.f32 0.0, %v1637
    %v1639 = vpop.f32.mrb[0].mxu0
    %v1640 = vadd.f32 0.0, %v1639
    %1641 = vdwg.mxu0
    %v1642 = vlaneseq
    %v1643 = vshrl.u32 %v1642, 7
    %v1644 = vsub.s32 0, %v1643
    %v1645 = vrot.slane %v1425, %v1644
    %v1646 = vlaneseq
    %v1647 = vshrl.u32 %v1646, 7
    %v1648 = vsub.s32 0, %v1647
    %v1649 = vrot.slane %v1427, %v1648
    %v1650 = vlaneseq
    %v1651 = vshrl.u32 %v1650, 7
    %v1652 = vsub.s32 0, %v1651
    %v1653 = vrot.slane %v1496, %v1652
    %v1654 = vlaneseq
    %v1655 = vshrl.u32 %v1654, 7
    %v1656 = vsub.s32 0, %v1655
    %v1657 = vrot.slane %v1498, %v1656
    %v1658 = vlaneseq
    %v1659 = vshrl.u32 %v1658, 7
    %v1660 = vsub.s32 0, %v1659
    %v1661 = vrot.slane %v1567, %v1660
    %v1662 = vlaneseq
    %v1663 = vshrl.u32 %v1662, 7
    %v1664 = vsub.s32 0, %v1663
    %v1665 = vrot.slane %v1569, %v1664
    %v1666 = vlaneseq
    %v1667 = vshrl.u32 %v1666, 7
    %v1668 = vsub.s32 0, %v1667
    %v1669 = vrot.slane %v1638, %v1668
    %v1670 = vlaneseq
    %v1671 = vshrl.u32 %v1670, 7
    %v1672 = vsub.s32 0, %v1671
    %v1673 = vrot.slane %v1640, %v1672
    %v1674 = vmul.f32 %v118, %v1645
    %v1675 = vmul.f32 %v120, %v1649
    %v1676 = vmul.f32 %v159, %v1653
    %v1677 = vmul.f32 %v161, %v1657
    %v1678 = vmul.f32 %v200, %v1661
    %v1679 = vmul.f32 %v202, %v1665
    %v1680 = vmul.f32 %v241, %v1669
    %v1681 = vmul.f32 %v243, %v1673
    %v1682 = vlaneseq
    %v1683 = vshrl.u32 %v1682, 7
    %v1684 = vsub.s32 1, %v1683
    %v1685 = vrot.slane %v1425, %v1684
    %v1686 = vlaneseq
    %v1687 = vshrl.u32 %v1686, 7
    %v1688 = vsub.s32 1, %v1687
    %v1689 = vrot.slane %v1427, %v1688
    %v1690 = vlaneseq
    %v1691 = vshrl.u32 %v1690, 7
    %v1692 = vsub.s32 1, %v1691
    %v1693 = vrot.slane %v1496, %v1692
    %v1694 = vlaneseq
    %v1695 = vshrl.u32 %v1694, 7
    %v1696 = vsub.s32 1, %v1695
    %v1697 = vrot.slane %v1498, %v1696
    %v1698 = vlaneseq
    %v1699 = vshrl.u32 %v1698, 7
    %v1700 = vsub.s32 1, %v1699
    %v1701 = vrot.slane %v1567, %v1700
    %v1702 = vlaneseq
    %v1703 = vshrl.u32 %v1702, 7
    %v1704 = vsub.s32 1, %v1703
    %v1705 = vrot.slane %v1569, %v1704
    %v1706 = vlaneseq
    %v1707 = vshrl.u32 %v1706, 7
    %v1708 = vsub.s32 1, %v1707
    %v1709 = vrot.slane %v1638, %v1708
    %v1710 = vlaneseq
    %v1711 = vshrl.u32 %v1710, 7
    %v1712 = vsub.s32 1, %v1711
    %v1713 = vrot.slane %v1640, %v1712
    %v1714 = vadd.f32 %v1674, %v1685
    %v1715 = vadd.f32 %v1675, %v1689
    %v1716 = vadd.f32 %v1676, %v1693
    %v1717 = vadd.f32 %v1677, %v1697
    %v1718 = vadd.f32 %v1678, %v1701
    %v1719 = vadd.f32 %v1679, %v1705
    %v1720 = vadd.f32 %v1680, %v1709
    %v1721 = vadd.f32 %v1681, %v1713
    %v1722 = vmax.f32 %v1714, 0.0
    %v1723 = vmax.f32 %v1715, 0.0
    %v1724 = vmax.f32 %v1716, 0.0
    %v1725 = vmax.f32 %v1717, 0.0
    %v1726 = vmax.f32 %v1718, 0.0
    %v1727 = vmax.f32 %v1719, 0.0
    %v1728 = vmax.f32 %v1720, 0.0
    %v1729 = vmax.f32 %v1721, 0.0
    %v1730 = vpack.c.bf16 %v1722, %v1722
    %v1731 = vpack.c.bf16 %v1723, %v1723
    %v1732 = vpack.c.bf16 %v1724, %v1724
    %v1733 = vpack.c.bf16 %v1725, %v1725
    %v1734 = vpack.c.bf16 %v1726, %v1726
    %v1735 = vpack.c.bf16 %v1727, %v1727
    %v1736 = vpack.c.bf16 %v1728, %v1728
    %v1737 = vpack.c.bf16 %v1729, %v1729
    %v1746 = vcombine.low %v1730, %v1731
    %v1747 = vcombine.low %v1732, %v1733
    %v1748 = vcombine.low %v1734, %v1735
    %v1749 = vcombine.low %v1736, %v1737
    %v1751 = vunpack.c.l.s4 1966171168
    %v1752 = vunpack.c.0.s8 %v1751
    %v1753 = vlaneseq
    %v1754 = vshrl.u32 %v1753, 7
    %v1755 = vsub.s32 %v1752, %v1754
    %v1756 = vrot.slane %v1746, %v1755
    %v1758 = vunpack.c.l.s4 1966171168
    %v1759 = vunpack.c.0.s8 %v1758
    %v1760 = vlaneseq
    %v1761 = vshrl.u32 %v1760, 7
    %v1762 = vsub.s32 %v1759, %v1761
    %v1763 = vrot.slane %v1747, %v1762
    %v1765 = vunpack.c.l.s4 1966171168
    %v1766 = vunpack.c.0.s8 %v1765
    %v1767 = vlaneseq
    %v1768 = vshrl.u32 %v1767, 7
    %v1769 = vsub.s32 %v1766, %v1768
    %v1770 = vrot.slane %v1748, %v1769
    %v1772 = vunpack.c.l.s4 1966171168
    %v1773 = vunpack.c.0.s8 %v1772
    %v1774 = vlaneseq
    %v1775 = vshrl.u32 %v1774, 7
    %v1776 = vsub.s32 %v1773, %v1775
    %v1777 = vrot.slane %v1749, %v1776
    %v1778 = vcombine.low %v1756, %v1763
    %v1779 = vcombine.low %v1770, %v1777
    %v1781 = vunpack.c.l.s4 1966171168
    %v1782 = vunpack.c.0.s8 %v1781
    %v1783 = vlaneseq
    %v1784 = vshrl.u32 %v1783, 7
    %v1785 = vsub.s32 %v1782, %v1784
    %v1786 = vrot.slane %v1778, %v1785
    %v1788 = vunpack.c.l.s4 1966171168
    %v1789 = vunpack.c.0.s8 %v1788
    %v1790 = vlaneseq
    %v1791 = vshrl.u32 %v1790, 7
    %v1792 = vsub.s32 %v1789, %v1791
    %v1793 = vrot.slane %v1779, %v1792
    %v1794 = vcombine.low %v1786, %v1793
    %1796 = vst [vmem:[%s4] sm:$0xff] %v1794
    // Predicated region
    $region22: #{generator_forward.9} parent=1 // pred_check
      _
    $region23: #{generator_forward.9} parent=1 // pred_check_branch
      %1798 = sbr.rel (0) target = $region25
    $region24: #{generator_forward.9} parent=1 // pred_region
      _
    $region25: #{generator_forward.9} parent=1 // pred_fallthru
      _
    // Predicated region
    $region26: #{generator_forward.9} parent=1 // pred_check
      _
    $region27: #{generator_forward.9} parent=1 // pred_check_branch
      %1800 = sbr.rel (0) target = $region29
    $region28: #{generator_forward.9} parent=1 // pred_region
      _
    $region29: #{generator_forward.9} parent=1 // pred_fallthru
      _
    %1801 = vsyncpa [#allocation3], 1

// kernel: generator_forward.12
$region0: #{generator_forward.12}
  #allocation0 [shape = 'u32[]', space=smem, size = 0x4, offset = 0x4, fixed_abs, tag = 'smem constant byte address 0x4 - core index']
  #allocation1 [shape = 'u32[144,128]{1,0:T(1,128)}', space=vmem, size = 0x12000, scoped, tag = 'internal scratch']
  %s0 = inlined_call_operand.vmem [shape: bf16[128,288], index: 0, kind: input, shape index: {}]
  %s1 = inlined_call_operand.hbm [shape: bf16[288,128], index: 1, kind: input, shape index: {}]
  %s2 = inlined_call_operand.vmem [shape: f32[128,128], index: 2, kind: output, shape index: {}]
  %s3 = sld [smem:[#allocation0]]
  $region22: #{generator_forward.12} parent=0
    _
  %s5 = ssub.s32 1, %s3
  %s6 = scalar_select 0, %s5, %s3
  $region1: #{generator_forward.12} parent=0
    #allocation2 [shape = 'u8[73728]{0}', space=vmem, size = 0x12000, scoped, tag = 'input window, operand 1, single buffered']
    #allocation3 [shape = 's32[1]{0}', space=sflag, size = 0x4, scoped, tag = 'scoped memory for generator_forward.12']
    %7 = vsyncpa [#allocation3], 0
    // Predicated region
    $region2: #{generator_forward.12} parent=1 // pred_check
      _
    $region3: #{generator_forward.12} parent=1 // pred_check_branch
      %9 = sbr.rel (0) target = $region5
    $region4: #{generator_forward.12} parent=1 // pred_region
      _
    $region5: #{generator_forward.12} parent=1 // pred_fallthru
      _
    // Predicated region
    $region6: #{generator_forward.12} parent=1 // pred_check
      _
    $region7: #{generator_forward.12} parent=1 // pred_check_branch
      %11 = sbr.rel (0) target = $region9
    $region8: #{generator_forward.12} parent=1 // pred_region
      %s13 = ssub.s32 2304, 2304
      %14 = vsyncadd [#allocation3], %s13
      %s15 = sshll.u32 [#allocation2], 4
      %s16 = int_to_ptr.vmem [resolvable:$true] %s15
      %21 = dma.hbm_to_vmem [thread:$0]  %s1, 2304, %s16, [#allocation3], 64, 64, 4
    $region9: #{generator_forward.12} parent=1 // pred_fallthru
      _
    // Predicated region
    $region10: #{generator_forward.12} parent=1 // pred_check
      _
    $region11: #{generator_forward.12} parent=1 // pred_check_branch
      %23 = sbr.rel (0) target = $region13
    $region12: #{generator_forward.12} parent=1 // pred_region
      %24 = dma.done [#allocation3], 2304
    $region13: #{generator_forward.12} parent=1 // pred_fallthru
      _
    %v26 = vld [vmem:[%s0] sm:$0xff]
    %v27 = vld [vmem:[%s0 + $0x8] sm:$0xf]
    %v28 = vld [vmem:[%s0 + $0xc] sm:$0xff]
    %v29 = vld [vmem:[%s0 + $0x14] sm:$0xf]
    %v30 = vld [vmem:[%s0 + $0x18] sm:$0xff]
    %v31 = vld [vmem:[%s0 + $0x20] sm:$0xf]
    %v32 = vld [vmem:[%s0 + $0x24] sm:$0xff]
    %v33 = vld [vmem:[%s0 + $0x2c] sm:$0xf]
    %v34 = vld [vmem:[%s0 + $0x30] sm:$0xff]
    %v35 = vld [vmem:[%s0 + $0x38] sm:$0xf]
    %v36 = vld [vmem:[%s0 + $0x3c] sm:$0xff]
    %v37 = vld [vmem:[%s0 + $0x44] sm:$0xf]
    %v38 = vld [vmem:[%s0 + $0x48] sm:$0xff]
    %v39 = vld [vmem:[%s0 + $0x50] sm:$0xf]
    %v40 = vld [vmem:[%s0 + $0x54] sm:$0xff]
    %v41 = vld [vmem:[%s0 + $0x5c] sm:$0xf]
    %v42 = vld [vmem:[%s0 + $0x60] sm:$0xff]
    %v43 = vld [vmem:[%s0 + $0x68] sm:$0xf]
    %v44 = vld [vmem:[%s0 + $0x6c] sm:$0xff]
    %v45 = vld [vmem:[%s0 + $0x74] sm:$0xf]
    %v46 = vld [vmem:[%s0 + $0x78] sm:$0xff]
    %v47 = vld [vmem:[%s0 + $0x80] sm:$0xf]
    %v48 = vld [vmem:[%s0 + $0x84] sm:$0xff]
    %v49 = vld [vmem:[%s0 + $0x8c] sm:$0xf]
    %v50 = vld [vmem:[%s0 + $0x90] sm:$0xff]
    %v51 = vld [vmem:[%s0 + $0x98] sm:$0xf]
    %v52 = vld [vmem:[%s0 + $0x9c] sm:$0xff]
    %v53 = vld [vmem:[%s0 + $0xa4] sm:$0xf]
    %v54 = vld [vmem:[%s0 + $0xa8] sm:$0xff]
    %v55 = vld [vmem:[%s0 + $0xb0] sm:$0xf]
    %v56 = vld [vmem:[%s0 + $0xb4] sm:$0xff]
    %v57 = vld [vmem:[%s0 + $0xbc] sm:$0xf]
    %v58 = vld [vmem:[#allocation2] sm:$0xf]
    %v59 = vld [vmem:[#allocation2 + $0x4] sm:$0xf]
    %v60 = vld [vmem:[#allocation2 + $0x8] sm:$0xf]
    %v61 = vld [vmem:[#allocation2 + $0xc] sm:$0xf]
    %v62 = vld [vmem:[#allocation2 + $0x10] sm:$0xf]
    %v63 = vld [vmem:[#allocation2 + $0x14] sm:$0xf]
    %v64 = vld [vmem:[#allocation2 + $0x18] sm:$0xf]
    %v65 = vld [vmem:[#allocation2 + $0x1c] sm:$0xf]
    %v66 = vld [vmem:[#allocation2 + $0x20] sm:$0xf]
    %v67 = vld [vmem:[#allocation2 + $0x24] sm:$0xf]
    %v68 = vld [vmem:[#allocation2 + $0x28] sm:$0xf]
    %v69 = vld [vmem:[#allocation2 + $0x2c] sm:$0xf]
    %v70 = vld [vmem:[#allocation2 + $0x30] sm:$0xf]
    %v71 = vld [vmem:[#allocation2 + $0x34] sm:$0xf]
    %v72 = vld [vmem:[#allocation2 + $0x38] sm:$0xf]
    %v73 = vld [vmem:[#allocation2 + $0x3c] sm:$0xf]
    %v74 = vld [vmem:[#allocation2 + $0x40] sm:$0xf]
    %v75 = vld [vmem:[#allocation2 + $0x44] sm:$0xf]
    %v76 = vld [vmem:[#allocation2 + $0x48] sm:$0xf]
    %v77 = vld [vmem:[#allocation2 + $0x4c] sm:$0xf]
    %v78 = vld [vmem:[#allocation2 + $0x50] sm:$0xf]
    %v79 = vld [vmem:[#allocation2 + $0x54] sm:$0xf]
    %v80 = vld [vmem:[#allocation2 + $0x58] sm:$0xf]
    %v81 = vld [vmem:[#allocation2 + $0x5c] sm:$0xf]
    %v82 = vld [vmem:[#allocation2 + $0x60] sm:$0xf]
    %v83 = vld [vmem:[#allocation2 + $0x64] sm:$0xf]
    %v84 = vld [vmem:[#allocation2 + $0x68] sm:$0xf]
    %v85 = vld [vmem:[#allocation2 + $0x6c] sm:$0xf]
    %v86 = vld [vmem:[#allocation2 + $0x70] sm:$0xf]
    %v87 = vld [vmem:[#allocation2 + $0x74] sm:$0xf]
    %v88 = vld [vmem:[#allocation2 + $0x78] sm:$0xf]
    %v89 = vld [vmem:[#allocation2 + $0x7c] sm:$0xf]
    %v90 = vld [vmem:[#allocation2 + $0x80] sm:$0xf]
    %v91 = vld [vmem:[#allocation2 + $0x84] sm:$0xf]
    %v92 = vld [vmem:[#allocation2 + $0x88] sm:$0xf]
    %v93 = vld [vmem:[#allocation2 + $0x8c] sm:$0xf]
    %v126 = vunpack.c.l.b16 %v26
    %v127 = vunpack.c.h.b16 %v26
    %v128 = vunpack.c.l.b16 %v27
    %v129 = vunpack.c.l.b16 %v28
    %v130 = vunpack.c.h.b16 %v28
    %v131 = vunpack.c.l.b16 %v29
    %v132 = vunpack.c.l.b16 %v30
    %v133 = vunpack.c.h.b16 %v30
    %v134 = vunpack.c.l.b16 %v31
    %v135 = vunpack.c.l.b16 %v32
    %v136 = vunpack.c.h.b16 %v32
    %v137 = vunpack.c.l.b16 %v33
    %v138 = vunpack.c.l.b16 %v34
    %v139 = vunpack.c.h.b16 %v34
    %v140 = vunpack.c.l.b16 %v35
    %v141 = vunpack.c.l.b16 %v36
    %v142 = vunpack.c.h.b16 %v36
    %v143 = vunpack.c.l.b16 %v37
    %v144 = vunpack.c.l.b16 %v38
    %v145 = vunpack.c.h.b16 %v38
    %v146 = vunpack.c.l.b16 %v39
    %v147 = vunpack.c.l.b16 %v40
    %v148 = vunpack.c.h.b16 %v40
    %v149 = vunpack.c.l.b16 %v41
    %v150 = vunpack.c.l.b16 %v42
    %v151 = vunpack.c.h.b16 %v42
    %v152 = vunpack.c.l.b16 %v43
    %v153 = vunpack.c.l.b16 %v44
    %v154 = vunpack.c.h.b16 %v44
    %v155 = vunpack.c.l.b16 %v45
    %v156 = vunpack.c.l.b16 %v46
    %v157 = vunpack.c.h.b16 %v46
    %v158 = vunpack.c.l.b16 %v47
    %v159 = vunpack.c.l.b16 %v48
    %v160 = vunpack.c.h.b16 %v48
    %v161 = vunpack.c.l.b16 %v49
    %v162 = vunpack.c.l.b16 %v50
    %v163 = vunpack.c.h.b16 %v50
    %v164 = vunpack.c.l.b16 %v51
    %v165 = vunpack.c.l.b16 %v52
    %v166 = vunpack.c.h.b16 %v52
    %v167 = vunpack.c.l.b16 %v53
    %v168 = vunpack.c.l.b16 %v54
    %v169 = vunpack.c.h.b16 %v54
    %v170 = vunpack.c.l.b16 %v55
    %v171 = vunpack.c.l.b16 %v56
    %v172 = vunpack.c.h.b16 %v56
    %v173 = vunpack.c.l.b16 %v57
    %v174 = vpack.c.b16 %v129, %v126
    %v175 = vpack.c.b16 %v130, %v127
    %v176 = vpack.c.b16 %v131, %v128
    %v177 = vpack.c.b16 %v135, %v132
    %v178 = vpack.c.b16 %v136, %v133
    %v179 = vpack.c.b16 %v137, %v134
    %v180 = vpack.c.b16 %v141, %v138
    %v181 = vpack.c.b16 %v142, %v139
    %v182 = vpack.c.b16 %v143, %v140
    %v183 = vpack.c.b16 %v147, %v144
    %v184 = vpack.c.b16 %v148, %v145
    %v185 = vpack.c.b16 %v149, %v146
    %v186 = vpack.c.b16 %v153, %v150
    %v187 = vpack.c.b16 %v154, %v151
    %v188 = vpack.c.b16 %v155, %v152
    %v189 = vpack.c.b16 %v159, %v156
    %v190 = vpack.c.b16 %v160, %v157
    %v191 = vpack.c.b16 %v161, %v158
    %v192 = vpack.c.b16 %v165, %v162
    %v193 = vpack.c.b16 %v166, %v163
    %v194 = vpack.c.b16 %v167, %v164
    %v195 = vpack.c.b16 %v171, %v168
    %v196 = vpack.c.b16 %v172, %v169
    %v197 = vpack.c.b16 %v173, %v170
    %v250 = vunpack.c.l.b16 %v58
    %v251 = vunpack.c.l.b16 %v59
    %v252 = vunpack.c.l.b16 %v60
    %v253 = vunpack.c.l.b16 %v61
    %v254 = vunpack.c.l.b16 %v62
    %v255 = vunpack.c.l.b16 %v63
    %v256 = vunpack.c.l.b16 %v64
    %v257 = vunpack.c.l.b16 %v65
    %v258 = vunpack.c.l.b16 %v66
    %v259 = vunpack.c.l.b16 %v67
    %v260 = vunpack.c.l.b16 %v68
    %v261 = vunpack.c.l.b16 %v69
    %v262 = vunpack.c.l.b16 %v70
    %v263 = vunpack.c.l.b16 %v71
    %v264 = vunpack.c.l.b16 %v72
    %v265 = vunpack.c.l.b16 %v73
    %v266 = vunpack.c.l.b16 %v74
    %v267 = vunpack.c.l.b16 %v75
    %v268 = vunpack.c.l.b16 %v76
    %v269 = vunpack.c.l.b16 %v77
    %v270 = vunpack.c.l.b16 %v78
    %v271 = vunpack.c.l.b16 %v79
    %v272 = vunpack.c.l.b16 %v80
    %v273 = vunpack.c.l.b16 %v81
    %v274 = vunpack.c.l.b16 %v82
    %v275 = vunpack.c.l.b16 %v83
    %v276 = vunpack.c.l.b16 %v84
    %v277 = vunpack.c.l.b16 %v85
    %v278 = vunpack.c.l.b16 %v86
    %v279 = vunpack.c.l.b16 %v87
    %v280 = vunpack.c.l.b16 %v88
    %v281 = vunpack.c.l.b16 %v89
    %v282 = vunpack.c.l.b16 %v90
    %v283 = vunpack.c.l.b16 %v91
    %v284 = vunpack.c.l.b16 %v92
    %v285 = vunpack.c.l.b16 %v93
    %v286 = vpack.c.b16 %v251, %v250
    %v287 = vpack.c.b16 %v253, %v252
    %v288 = vpack.c.b16 %v255, %v254
    %v289 = vpack.c.b16 %v257, %v256
    %v290 = vpack.c.b16 %v259, %v258
    %v291 = vpack.c.b16 %v261, %v260
    %v292 = vpack.c.b16 %v263, %v262
    %v293 = vpack.c.b16 %v265, %v264
    %v294 = vpack.c.b16 %v267, %v266
    %v295 = vpack.c.b16 %v269, %v268
    %v296 = vpack.c.b16 %v271, %v270
    %v297 = vpack.c.b16 %v273, %v272
    %v298 = vpack.c.b16 %v275, %v274
    %v299 = vpack.c.b16 %v277, %v276
    %v300 = vpack.c.b16 %v279, %v278
    %v301 = vpack.c.b16 %v281, %v280
    %v302 = vpack.c.b16 %v283, %v282
    %v303 = vpack.c.b16 %v285, %v284
    %vm322 = vcmask 261120
    %v324 = vsel %vm322, %v176, 0
    %v327 = vsel %vm322, %v179, 0
    %v330 = vsel %vm322, %v182, 0
    %v333 = vsel %vm322, %v185, 0
    %v336 = vsel %vm322, %v188, 0
    %v339 = vsel %vm322, %v191, 0
    %v342 = vsel %vm322, %v194, 0
    %v345 = vsel %vm322, %v197, 0
    %347 = vmatprep.subr.bf16.mxu0 0
    %348 = vmatpush1.bf16.msra.mxu0 %v286
    %349 = vmatprep.subr.bf16.mxu0 0
    %350 = vmatpush1.bf16.msra.mxu0 %v287
    %351 = vmatprep.subr.bf16.mxu0 0
    %352 = vmatpush1.bf16.msra.mxu0 %v288
    %353 = vmatprep.subr.bf16.mxu0 0
    %354 = vmatpush1.bf16.msra.mxu0 %v289
    %355 = vmatprep.subr.bf16.mxu0 0
    %356 = vmatpush1.bf16.msra.mxu0 %v290
    %357 = vmatprep.subr.bf16.mxu0 0
    %358 = vmatpush1.bf16.msra.mxu0 %v291
    %359 = vmatprep.subr.bf16.mxu0 0
    %360 = vmatpush1.bf16.msra.mxu0 %v292
    %361 = vmatprep.subr.bf16.mxu0 0
    %362 = vmatpush1.bf16.msra.mxu0 %v293
    %363 = vmatprep.subr.bf16.mxu0 0
    %364 = vmatpush1.bf16.msra.mxu0 %v294
    %365 = vmatprep.subr.bf16.mxu0 0
    %366 = vmatpush1.bf16.msra.mxu0 %v295
    %367 = vmatprep.subr.bf16.mxu0 0
    %368 = vmatpush1.bf16.msra.mxu0 %v296
    %369 = vmatprep.subr.bf16.mxu0 0
    %370 = vmatpush1.bf16.msra.mxu0 %v297
    %371 = vmatprep.subr.bf16.mxu0 0
    %372 = vmatpush1.bf16.msra.mxu0 %v298
    %373 = vmatprep.subr.bf16.mxu0 0
    %374 = vmatpush1.bf16.msra.mxu0 %v299
    %375 = vmatprep.subr.bf16.mxu0 0
    %376 = vmatpush1.bf16.msra.mxu0 %v300
    %377 = vmatprep.subr.bf16.mxu0 0
    %378 = vmatpush1.bf16.msra.mxu0 %v301
    %379 = vmatprep.mubr.bf16.mxu0 %v175
    %380 = vmatmul.mubr.bf16.gmra.mrb[0].mxu0 %v174
    %v381 = vpop.f32.mrb[0].mxu0
    %v382 = vadd.f32 0.0, %v381
    %v383 = vpop.f32.mrb[0].mxu0
    %v384 = vpop.f32.mrb[0].mxu0
    %v385 = vadd.f32 0.0, %v384
    %v386 = vpop.f32.mrb[0].mxu0
    %387 = vmatprep.mubr.bf16.mxu0 %v178
    %388 = vmatmul.mubr.bf16.gmra.mrb[0].mxu0 %v177
    %v389 = vpop.f32.mrb[0].mxu0
    %v390 = vadd.f32 0.0, %v389
    %v391 = vpop.f32.mrb[0].mxu0
    %v392 = vpop.f32.mrb[0].mxu0
    %v393 = vadd.f32 0.0, %v392
    %v394 = vpop.f32.mrb[0].mxu0
    %395 = vmatprep.mubr.bf16.mxu0 %v181
    %396 = vmatmul.mubr.bf16.gmra.mrb[0].mxu0 %v180
    %v397 = vpop.f32.mrb[0].mxu0
    %v398 = vadd.f32 0.0, %v397
    %v399 = vpop.f32.mrb[0].mxu0
    %v400 = vpop.f32.mrb[0].mxu0
    %v401 = vadd.f32 0.0, %v400
    %v402 = vpop.f32.mrb[0].mxu0
    %403 = vmatprep.mubr.bf16.mxu0 %v184
    %404 = vmatmul.mubr.bf16.gmra.mrb[0].mxu0 %v183
    %v405 = vpop.f32.mrb[0].mxu0
    %v406 = vadd.f32 0.0, %v405
    %v407 = vpop.f32.mrb[0].mxu0
    %v408 = vpop.f32.mrb[0].mxu0
    %v409 = vadd.f32 0.0, %v408
    %v410 = vpop.f32.mrb[0].mxu0
    %411 = vmatprep.mubr.bf16.mxu0 %v187
    %412 = vmatmul.mubr.bf16.gmra.mrb[0].mxu0 %v186
    %v413 = vpop.f32.mrb[0].mxu0
    %v414 = vadd.f32 0.0, %v413
    %v415 = vpop.f32.mrb[0].mxu0
    %v416 = vpop.f32.mrb[0].mxu0
    %v417 = vadd.f32 0.0, %v416
    %v418 = vpop.f32.mrb[0].mxu0
    %419 = vmatprep.mubr.bf16.mxu0 %v190
    %420 = vmatmul.mubr.bf16.gmra.mrb[0].mxu0 %v189
    %v421 = vpop.f32.mrb[0].mxu0
    %v422 = vadd.f32 0.0, %v421
    %v423 = vpop.f32.mrb[0].mxu0
    %v424 = vpop.f32.mrb[0].mxu0
    %v425 = vadd.f32 0.0, %v424
    %v426 = vpop.f32.mrb[0].mxu0
    %427 = vmatprep.mubr.bf16.mxu0 %v193
    %428 = vmatmul.mubr.bf16.gmra.mrb[0].mxu0 %v192
    %v429 = vpop.f32.mrb[0].mxu0
    %v430 = vadd.f32 0.0, %v429
    %v431 = vpop.f32.mrb[0].mxu0
    %v432 = vpop.f32.mrb[0].mxu0
    %v433 = vadd.f32 0.0, %v432
    %v434 = vpop.f32.mrb[0].mxu0
    %435 = vmatprep.mubr.bf16.mxu0 %v196
    %436 = vmatmul.mubr.bf16.gmra.mrb[0].mxu0 %v195
    %v437 = vpop.f32.mrb[0].mxu0
    %v438 = vadd.f32 0.0, %v437
    %v439 = vpop.f32.mrb[0].mxu0
    %v440 = vpop.f32.mrb[0].mxu0
    %v441 = vadd.f32 0.0, %v440
    %v442 = vpop.f32.mrb[0].mxu0
    %443 = vdwg.mxu0
    %444 = vmatprep.subr.bf16.mxu0 0
    %445 = vmatpush1.bf16.msra.mxu0 %v302
    %446 = vmatprep.subr.bf16.mxu0 0
    %447 = vmatpush1.bf16.msra.mxu0 %v303
    %448 = vmatprep.subr.bf16.mxu0 0
    %449 = vmatpush1.bf16.msra.mxu0 0
    %450 = vmatprep.subr.bf16.mxu0 0
    %451 = vmatpush1.bf16.msra.mxu0 0
    %452 = vmatprep.subr.bf16.mxu0 0
    %453 = vmatpush1.bf16.msra.mxu0 0
    %454 = vmatprep.subr.bf16.mxu0 0
    %455 = vmatpush1.bf16.msra.mxu0 0
    %456 = vmatprep.subr.bf16.mxu0 0
    %457 = vmatpush1.bf16.msra.mxu0 0
    %458 = vmatprep.subr.bf16.mxu0 0
    %459 = vmatpush1.bf16.msra.mxu0 0
    %460 = vmatprep.subr.bf16.mxu0 0
    %461 = vmatpush1.bf16.msra.mxu0 0
    %462 = vmatprep.subr.bf16.mxu0 0
    %463 = vmatpush1.bf16.msra.mxu0 0
    %464 = vmatprep.subr.bf16.mxu0 0
    %465 = vmatpush1.bf16.msra.mxu0 0
    %466 = vmatprep.subr.bf16.mxu0 0
    %467 = vmatpush1.bf16.msra.mxu0 0
    %468 = vmatprep.subr.bf16.mxu0 0
    %469 = vmatpush1.bf16.msra.mxu0 0
    %470 = vmatprep.subr.bf16.mxu0 0
    %471 = vmatpush1.bf16.msra.mxu0 0
    %472 = vmatprep.subr.bf16.mxu0 0
    %473 = vmatpush1.bf16.msra.mxu0 0
    %474 = vmatprep.subr.bf16.mxu0 0
    %475 = vmatpush1.bf16.msra.mxu0 0
    %476 = vmatprep.mubr.bf16.mxu0 0
    %477 = vmatmul.mubr.bf16.gmra.mrb[0].mxu0 %v324
    %v478 = vpop.f32.mrb[0].mxu0
    %v479 = vadd.f32 %v382, %v478
    %v480 = vpop.f32.mrb[0].mxu0
    %v481 = vpop.f32.mrb[0].mxu0
    %v482 = vadd.f32 %v385, %v481
    %v483 = vpop.f32.mrb[0].mxu0
    %484 = vmatprep.mubr.bf16.mxu0 0
    %485 = vmatmul.mubr.bf16.gmra.mrb[0].mxu0 %v327
    %v486 = vpop.f32.mrb[0].mxu0
    %v487 = vadd.f32 %v390, %v486
    %v488 = vpop.f32.mrb[0].mxu0
    %v489 = vpop.f32.mrb[0].mxu0
    %v490 = vadd.f32 %v393, %v489
    %v491 = vpop.f32.mrb[0].mxu0
    %492 = vmatprep.mubr.bf16.mxu0 0
    %493 = vmatmul.mubr.bf16.gmra.mrb[0].mxu0 %v330
    %v494 = vpop.f32.mrb[0].mxu0
    %v495 = vadd.f32 %v398, %v494
    %v496 = vpop.f32.mrb[0].mxu0
    %v497 = vpop.f32.mrb[0].mxu0
    %v498 = vadd.f32 %v401, %v497
    %v499 = vpop.f32.mrb[0].mxu0
    %500 = vmatprep.mubr.bf16.mxu0 0
    %501 = vmatmul.mubr.bf16.gmra.mrb[0].mxu0 %v333
    %v502 = vpop.f32.mrb[0].mxu0
    %v503 = vadd.f32 %v406, %v502
    %v504 = vpop.f32.mrb[0].mxu0
    %v505 = vpop.f32.mrb[0].mxu0
    %v506 = vadd.f32 %v409, %v505
    %v507 = vpop.f32.mrb[0].mxu0
    %508 = vmatprep.mubr.bf16.mxu0 0
    %509 = vmatmul.mubr.bf16.gmra.mrb[0].mxu0 %v336
    %v510 = vpop.f32.mrb[0].mxu0
    %v511 = vadd.f32 %v414, %v510
    %v512 = vpop.f32.mrb[0].mxu0
    %v513 = vpop.f32.mrb[0].mxu0
    %v514 = vadd.f32 %v417, %v513
    %v515 = vpop.f32.mrb[0].mxu0
    %516 = vmatprep.mubr.bf16.mxu0 0
    %517 = vmatmul.mubr.bf16.gmra.mrb[0].mxu0 %v339
    %v518 = vpop.f32.mrb[0].mxu0
    %v519 = vadd.f32 %v422, %v518
    %v520 = vpop.f32.mrb[0].mxu0
    %v521 = vpop.f32.mrb[0].mxu0
    %v522 = vadd.f32 %v425, %v521
    %v523 = vpop.f32.mrb[0].mxu0
    %524 = vmatprep.mubr.bf16.mxu0 0
    %525 = vmatmul.mubr.bf16.gmra.mrb[0].mxu0 %v342
    %v526 = vpop.f32.mrb[0].mxu0
    %v527 = vadd.f32 %v430, %v526
    %v528 = vpop.f32.mrb[0].mxu0
    %v529 = vpop.f32.mrb[0].mxu0
    %v530 = vadd.f32 %v433, %v529
    %v531 = vpop.f32.mrb[0].mxu0
    %532 = vmatprep.mubr.bf16.mxu0 0
    %533 = vmatmul.mubr.bf16.gmra.mrb[0].mxu0 %v345
    %v534 = vpop.f32.mrb[0].mxu0
    %v535 = vadd.f32 %v438, %v534
    %v536 = vpop.f32.mrb[0].mxu0
    %v537 = vpop.f32.mrb[0].mxu0
    %v538 = vadd.f32 %v441, %v537
    %v539 = vpop.f32.mrb[0].mxu0
    %540 = vdwg.mxu0
    %541 = vst [vmem:[%s2] sm:$0xff] %v479
    %542 = vst [vmem:[%s2 + $0x8] sm:$0xff] %v482
    %543 = vst [vmem:[%s2 + $0x10] sm:$0xff] %v487
    %544 = vst [vmem:[%s2 + $0x18] sm:$0xff] %v490
    %545 = vst [vmem:[%s2 + $0x20] sm:$0xff] %v495
    %546 = vst [vmem:[%s2 + $0x28] sm:$0xff] %v498
    %547 = vst [vmem:[%s2 + $0x30] sm:$0xff] %v503
    %548 = vst [vmem:[%s2 + $0x38] sm:$0xff] %v506
    %549 = vst [vmem:[%s2 + $0x40] sm:$0xff] %v511
    %550 = vst [vmem:[%s2 + $0x48] sm:$0xff] %v514
    %551 = vst [vmem:[%s2 + $0x50] sm:$0xff] %v519
    %552 = vst [vmem:[%s2 + $0x58] sm:$0xff] %v522
    %553 = vst [vmem:[%s2 + $0x60] sm:$0xff] %v527
    %554 = vst [vmem:[%s2 + $0x68] sm:$0xff] %v530
    %555 = vst [vmem:[%s2 + $0x70] sm:$0xff] %v535
    %556 = vst [vmem:[%s2 + $0x78] sm:$0xff] %v538
    // Predicated region
    $region14: #{generator_forward.12} parent=1 // pred_check
      _
    $region15: #{generator_forward.12} parent=1 // pred_check_branch
      %558 = sbr.rel (0) target = $region17
    $region16: #{generator_forward.12} parent=1 // pred_region
      _
    $region17: #{generator_forward.12} parent=1 // pred_fallthru
      _
    // Predicated region
    $region18: #{generator_forward.12} parent=1 // pred_check
      _
    $region19: #{generator_forward.12} parent=1 // pred_check_branch
      %560 = sbr.rel (0) target = $region21
    $region20: #{generator_forward.12} parent=1 // pred_region
      _
    $region21: #{generator_forward.12} parent=1 // pred_fallthru
      _
    %561 = vsyncpa [#allocation3], 1

// kernel: generator_forward.13
$region0: #{generator_forward.13}
  #allocation0 [shape = 'u32[]', space=smem, size = 0x4, offset = 0x4, fixed_abs, tag = 'smem constant byte address 0x4 - core index']
  #allocation1 [shape = 'u32[144,128]{1,0:T(1,128)}', space=vmem, size = 0x12000, scoped, tag = 'internal scratch']
  %s0 = inlined_call_operand.vmem [shape: f32[128,128], index: 0, kind: input, shape index: {}]
  %s1 = inlined_call_operand.hbm [shape: f32[1,32], index: 1, kind: input, shape index: {}]
  %s2 = inlined_call_operand.vmem [shape: f32[1,32], index: 2, kind: input, shape index: {}]
  %s3 = inlined_call_operand.vmem [shape: bf16[128,128], index: 3, kind: output, shape index: {}]
  %s4 = sld [smem:[#allocation0]]
  $region26: #{generator_forward.13} parent=0
    _
  %s6 = ssub.s32 1, %s4
  %s7 = scalar_select 0, %s6, %s4
  $region1: #{generator_forward.13} parent=0
    #allocation2 [shape = 'u8[512]{0}', space=vmem, size = 0x400, scoped, tag = 'input window, operand 1, single buffered']
    #allocation3 [shape = 's32[1]{0}', space=sflag, size = 0x4, scoped, tag = 'scoped memory for generator_forward.13']
    %8 = vsyncpa [#allocation3], 0
    // Predicated region
    $region2: #{generator_forward.13} parent=1 // pred_check
      _
    $region3: #{generator_forward.13} parent=1 // pred_check_branch
      %10 = sbr.rel (0) target = $region5
    $region4: #{generator_forward.13} parent=1 // pred_region
      _
    $region5: #{generator_forward.13} parent=1 // pred_fallthru
      _
    // Predicated region
    $region6: #{generator_forward.13} parent=1 // pred_check
      _
    $region7: #{generator_forward.13} parent=1 // pred_check_branch
      %12 = sbr.rel (0) target = $region9
    $region8: #{generator_forward.13} parent=1 // pred_region
      %s14 = ssub.s32 16, 16
      %15 = vsyncadd [#allocation3], %s14
      %s17 = sshll.u32 [#allocation2], 4
      %s18 = int_to_ptr.vmem [resolvable:$true] %s17
      %20 = dma.hbm_to_vmem [thread:$0]  %s1, 16, %s18, [#allocation3]
    $region9: #{generator_forward.13} parent=1 // pred_fallthru
      _
    // Predicated region
    $region10: #{generator_forward.13} parent=1 // pred_check
      _
    $region11: #{generator_forward.13} parent=1 // pred_check_branch
      %22 = sbr.rel (0) target = $region13
    $region12: #{generator_forward.13} parent=1 // pred_region
      _
    $region13: #{generator_forward.13} parent=1 // pred_fallthru
      _
    // Predicated region
    $region14: #{generator_forward.13} parent=1 // pred_check
      _
    $region15: #{generator_forward.13} parent=1 // pred_check_branch
      %24 = sbr.rel (0) target = $region17
    $region16: #{generator_forward.13} parent=1 // pred_region
      %25 = dma.done [#allocation3], 16
    $region17: #{generator_forward.13} parent=1 // pred_fallthru
      _
    %v26 = vld [vmem:[%s0] sm:$0xff]
    %v27 = vld [vmem:[%s0 + $0x8] sm:$0xff]
    %v28 = vld [vmem:[%s0 + $0x10] sm:$0xff]
    %v29 = vld [vmem:[%s0 + $0x18] sm:$0xff]
    %v30 = vld [vmem:[%s0 + $0x20] sm:$0xff]
    %v31 = vld [vmem:[%s0 + $0x28] sm:$0xff]
    %v32 = vld [vmem:[%s0 + $0x30] sm:$0xff]
    %v33 = vld [vmem:[%s0 + $0x38] sm:$0xff]
    %v34 = vld [vmem:[%s0 + $0x40] sm:$0xff]
    %v35 = vld [vmem:[%s0 + $0x48] sm:$0xff]
    %v36 = vld [vmem:[%s0 + $0x50] sm:$0xff]
    %v37 = vld [vmem:[%s0 + $0x58] sm:$0xff]
    %v38 = vld [vmem:[%s0 + $0x60] sm:$0xff]
    %v39 = vld [vmem:[%s0 + $0x68] sm:$0xff]
    %v40 = vld [vmem:[%s0 + $0x70] sm:$0xff]
    %v41 = vld [vmem:[%s0 + $0x78] sm:$0xff]
    %v42 = vld [vmem:[#allocation2] sm:$0x1]
    %v43 = vld [vmem:[%s2] sm:$0x1]
    %v44 = vlaneseq
    %v45 = vshrl.u32 %v44, 7
    %v46 = vadd.s32 %v45, 8
    %v47 = vadd.s32 %v45, 16
    %v48 = vadd.s32 %v45, 24
    %v49 = vadd.s32 %v45, 32
    %v50 = vadd.s32 %v45, 40
    %v51 = vadd.s32 %v45, 48
    %v52 = vadd.s32 %v45, 56
    %v53 = vadd.s32 %v45, 64
    %v54 = vadd.s32 %v45, 72
    %v55 = vadd.s32 %v45, 80
    %v56 = vadd.s32 %v45, 88
    %v57 = vadd.s32 %v45, 96
    %v58 = vadd.s32 %v45, 104
    %v59 = vadd.s32 %v45, 112
    %v60 = vadd.s32 %v45, 120
    %v61 = vand.u32 %v45, 31
    %v62 = vand.u32 %v46, 31
    %v63 = vand.u32 %v47, 31
    %v64 = vand.u32 %v48, 31
    %v65 = vand.u32 %v49, 31
    %v66 = vand.u32 %v50, 31
    %v67 = vand.u32 %v51, 31
    %v68 = vand.u32 %v52, 31
    %v69 = vand.u32 %v53, 31
    %v70 = vand.u32 %v54, 31
    %v71 = vand.u32 %v55, 31
    %v72 = vand.u32 %v56, 31
    %v73 = vand.u32 %v57, 31
    %v74 = vand.u32 %v58, 31
    %v75 = vand.u32 %v59, 31
    %v76 = vand.u32 %v60, 31
    %v77 = vlaneseq
    %v78 = vand.u32 %v77, 127
    %vm79 = vcmp.eq.s32.totalorder %v61, %v78
    %vm80 = vcmp.eq.s32.totalorder %v62, %v78
    %vm81 = vcmp.eq.s32.totalorder %v63, %v78
    %vm82 = vcmp.eq.s32.totalorder %v64, %v78
    %vm83 = vcmp.eq.s32.totalorder %v65, %v78
    %vm84 = vcmp.eq.s32.totalorder %v66, %v78
    %vm85 = vcmp.eq.s32.totalorder %v67, %v78
    %vm86 = vcmp.eq.s32.totalorder %v68, %v78
    %vm87 = vcmp.eq.s32.totalorder %v69, %v78
    %vm88 = vcmp.eq.s32.totalorder %v70, %v78
    %vm89 = vcmp.eq.s32.totalorder %v71, %v78
    %vm90 = vcmp.eq.s32.totalorder %v72, %v78
    %vm91 = vcmp.eq.s32.totalorder %v73, %v78
    %vm92 = vcmp.eq.s32.totalorder %v74, %v78
    %vm93 = vcmp.eq.s32.totalorder %v75, %v78
    %vm94 = vcmp.eq.s32.totalorder %v76, %v78
    %v95 = vsel %vm79, 1.0, 0.0
    %v96 = vsel %vm80, 1.0, 0.0
    %v97 = vsel %vm81, 1.0, 0.0
    %v98 = vsel %vm82, 1.0, 0.0
    %v99 = vsel %vm83, 1.0, 0.0
    %v100 = vsel %vm84, 1.0, 0.0
    %v101 = vsel %vm85, 1.0, 0.0
    %v102 = vsel %vm86, 1.0, 0.0
    %v103 = vsel %vm87, 1.0, 0.0
    %v104 = vsel %vm88, 1.0, 0.0
    %v105 = vsel %vm89, 1.0, 0.0
    %v106 = vsel %vm90, 1.0, 0.0
    %v107 = vsel %vm91, 1.0, 0.0
    %v108 = vsel %vm92, 1.0, 0.0
    %v109 = vsel %vm93, 1.0, 0.0
    %v110 = vsel %vm94, 1.0, 0.0
    %v111 = vand.u32 %v78, 31
    %vm112 = vcmp.eq.s32.totalorder %v111, %v45
    %vm113 = vcmp.eq.s32.totalorder %v111, %v46
    %vm114 = vcmp.eq.s32.totalorder %v111, %v47
    %vm115 = vcmp.eq.s32.totalorder %v111, %v48
    %v116 = vsel %vm112, 1.0, 0.0
    %v117 = vsel %vm113, 1.0, 0.0
    %v118 = vsel %vm114, 1.0, 0.0
    %v119 = vsel %vm115, 1.0, 0.0
    %v120 = vadd.f32 %v26, %v27
    %v121 = vadd.f32 %v120, %v28
    %v122 = vadd.f32 %v121, %v29
    %v123 = vadd.f32 %v122, %v30
    %v124 = vadd.f32 %v123, %v31
    %v125 = vadd.f32 %v124, %v32
    %v126 = vadd.f32 %v125, %v33
    %v127 = vadd.f32 %v126, %v34
    %v128 = vadd.f32 %v127, %v35
    %v129 = vadd.f32 %v128, %v36
    %v130 = vadd.f32 %v129, %v37
    %v131 = vadd.f32 %v130, %v38
    %v132 = vadd.f32 %v131, %v39
    %v133 = vadd.f32 %v132, %v40
    %v134 = vadd.f32 %v133, %v41
    %v135 = vrot.slane %v134, 4
    %v136 = vadd.f32 %v134, %v135
    %v137 = vrot.slane %v136, 2
    %v138 = vadd.f32 %v136, %v137
    %v139 = vrot.slane %v138, 1
    %v140 = vadd.f32 %v138, %v139
    %v141 = vmul.f32 %v26, %v26
    %v142 = vmul.f32 %v27, %v27
    %v143 = vmul.f32 %v28, %v28
    %v144 = vmul.f32 %v29, %v29
    %v145 = vmul.f32 %v30, %v30
    %v146 = vmul.f32 %v31, %v31
    %v147 = vmul.f32 %v32, %v32
    %v148 = vmul.f32 %v33, %v33
    %v149 = vmul.f32 %v34, %v34
    %v150 = vmul.f32 %v35, %v35
    %v151 = vmul.f32 %v36, %v36
    %v152 = vmul.f32 %v37, %v37
    %v153 = vmul.f32 %v38, %v38
    %v154 = vmul.f32 %v39, %v39
    %v155 = vmul.f32 %v40, %v40
    %v156 = vmul.f32 %v41, %v41
    %v157 = vadd.f32 %v141, %v142
    %v158 = vadd.f32 %v157, %v143
    %v159 = vadd.f32 %v158, %v144
    %v160 = vadd.f32 %v159, %v145
    %v161 = vadd.f32 %v160, %v146
    %v162 = vadd.f32 %v161, %v147
    %v163 = vadd.f32 %v162, %v148
    %v164 = vadd.f32 %v163, %v149
    %v165 = vadd.f32 %v164, %v150
    %v166 = vadd.f32 %v165, %v151
    %v167 = vadd.f32 %v166, %v152
    %v168 = vadd.f32 %v167, %v153
    %v169 = vadd.f32 %v168, %v154
    %v170 = vadd.f32 %v169, %v155
    %v171 = vadd.f32 %v170, %v156
    %v172 = vrot.slane %v171, 4
    %v173 = vadd.f32 %v171, %v172
    %v174 = vrot.slane %v173, 2
    %v175 = vadd.f32 %v173, %v174
    %v176 = vrot.slane %v175, 1
    %v177 = vadd.f32 %v175, %v176
    %vm178 = vcmask 1040384
    %v179 = vsel %vm178, %v140, %v177
    %180 = vmatprep.subr.mxu0 0.0
    %181 = vmatpush1.msra.mxu0 %v95
    %182 = vmatprep.subr.mxu0 0.0
    %183 = vmatpush1.msra.mxu0 %v96
    %184 = vmatprep.subr.mxu0 0.0
    %185 = vmatpush1.msra.mxu0 %v97
    %186 = vmatprep.subr.mxu0 0.0
    %187 = vmatpush1.msra.mxu0 %v98
    %188 = vmatprep.subr.mxu0 0.0
    %189 = vmatpush1.msra.mxu0 %v99
    %190 = vmatprep.subr.mxu0 0.0
    %191 = vmatpush1.msra.mxu0 %v100
    %192 = vmatprep.subr.mxu0 0.0
    %193 = vmatpush1.msra.mxu0 %v101
    %194 = vmatprep.subr.mxu0 0.0
    %195 = vmatpush1.msra.mxu0 %v102
    %196 = vmatprep.subr.mxu0 0.0
    %197 = vmatpush1.msra.mxu0 %v103
    %198 = vmatprep.subr.mxu0 0.0
    %199 = vmatpush1.msra.mxu0 %v104
    %200 = vmatprep.subr.mxu0 0.0
    %201 = vmatpush1.msra.mxu0 %v105
    %202 = vmatprep.subr.mxu0 0.0
    %203 = vmatpush1.msra.mxu0 %v106
    %204 = vmatprep.subr.mxu0 0.0
    %205 = vmatpush1.msra.mxu0 %v107
    %206 = vmatprep.subr.mxu0 0.0
    %207 = vmatpush1.msra.mxu0 %v108
    %208 = vmatprep.subr.mxu0 0.0
    %209 = vmatpush1.msra.mxu0 %v109
    %210 = vmatprep.subr.mxu0 0.0
    %211 = vmatpush1.msra.mxu0 %v110
    %212 = vmatprep.subr.mxu0 0.0
    %213 = vmatpush1.msra.mxu0 0.0
    %214 = vmatprep.subr.mxu0 0.0
    %215 = vmatpush1.msra.mxu0 0.0
    %216 = vmatprep.subr.mxu0 0.0
    %217 = vmatpush1.msra.mxu0 0.0
    %218 = vmatprep.subr.mxu0 0.0
    %219 = vmatpush1.msra.mxu0 0.0
    %220 = vmatprep.subr.mxu0 0.0
    %221 = vmatpush1.msra.mxu0 0.0
    %222 = vmatprep.subr.mxu0 0.0
    %223 = vmatpush1.msra.mxu0 0.0
    %224 = vmatprep.subr.mxu0 0.0
    %225 = vmatpush1.msra.mxu0 0.0
    %226 = vmatprep.subr.mxu0 0.0
    %227 = vmatpush1.msra.mxu0 0.0
    %228 = vmatprep.subr.mxu0 0.0
    %229 = vmatpush1.msra.mxu0 0.0
    %230 = vmatprep.subr.mxu0 0.0
    %231 = vmatpush1.msra.mxu0 0.0
    %232 = vmatprep.subr.mxu0 0.0
    %233 = vmatpush1.msra.mxu0 0.0
    %234 = vmatprep.subr.mxu0 0.0
    %235 = vmatpush1.msra.mxu0 0.0
    %236 = vmatprep.subr.mxu0 0.0
    %237 = vmatpush1.msra.mxu0 0.0
    %238 = vmatprep.subr.mxu0 0.0
    %239 = vmatpush1.msra.mxu0 0.0
    %240 = vmatprep.subr.mxu0 0.0
    %241 = vmatpush1.msra.mxu0 0.0
    %242 = vmatprep.subr.mxu0 0.0
    %243 = vmatpush1.msra.mxu0 0.0
    %244 = vmatprep.mubr.f32.mxu0 0.0
    %245 = vmatmul.mubr.f32.gmra.mrb[0].mxu0 %v179
    %v246 = vpop.f32.mrb[0].mxu0
    %v247 = vadd.f32 0.0, %v246
    %v248 = vpop.f32.mrb[0].mxu0
    %249 = vdwg.mxu0
    %v250 = vrcp.pop 512.0
    %v251 = vmul.f32 %v247, %v250
    %v252 = vmul.f32 %v251, %v251
    %v254 = vrot.slane %v252, 7
    %v256 = vsub.f32 %v251, %v254
    %v257 = vmax.f32 %v256, 0.0
    %v258 = vadd.f32 %v257, 1e-05
    %v259 = vrsqrt.pop %v258
    %v262 = vunpack.c.l.s4 1966171168
    %v263 = vunpack.c.0.s8 %v262
    %v264 = vlaneseq
    %v265 = vshrl.u32 %v264, 7
    %v266 = vsub.s32 %v263, %v265
    %v267 = vrot.slane %v259, %v266
    %v268 = vcombine.high %v267, %v267
    %v270 = vunpack.c.l.s4 1966171168
    %v271 = vunpack.c.0.s8 %v270
    %v272 = vlaneseq
    %v273 = vshrl.u32 %v272, 7
    %v274 = vsub.s32 %v271, %v273
    %v275 = vrot.slane %v268, %v274
    %v277 = vmul.f32 %v42, %v275
    %v278 = vmul.f32 %v251, %v277
    %v279 = vsub.f32 %v43, %v278
    %v281 = vlaneseq
    %v282 = vshrl.u32 %v281, 7
    %v283 = vsub.s32 0, %v282
    %v284 = vrot.slane %v279, %v283
    %v286 = vsel %vm178, %v277, %v284
    %vm287 = vcmask 261120
    %v289 = vsel %vm287, %v286, 0
    %291 = vmatprep.subr.mxu0 0.0
    %292 = vmatpush1.msra.mxu0 %v116
    %293 = vmatprep.subr.mxu0 0.0
    %294 = vmatpush1.msra.mxu0 %v117
    %295 = vmatprep.subr.mxu0 0.0
    %296 = vmatpush1.msra.mxu0 %v118
    %297 = vmatprep.subr.mxu0 0.0
    %298 = vmatpush1.msra.mxu0 %v119
    %299 = vmatprep.subr.mxu0 0.0
    %300 = vmatpush1.msra.mxu0 0.0
    %301 = vmatprep.subr.mxu0 0.0
    %302 = vmatpush1.msra.mxu0 0.0
    %303 = vmatprep.subr.mxu0 0.0
    %304 = vmatpush1.msra.mxu0 0.0
    %305 = vmatprep.subr.mxu0 0.0
    %306 = vmatpush1.msra.mxu0 0.0
    %307 = vmatprep.subr.mxu0 0.0
    %308 = vmatpush1.msra.mxu0 0.0
    %309 = vmatprep.subr.mxu0 0.0
    %310 = vmatpush1.msra.mxu0 0.0
    %311 = vmatprep.subr.mxu0 0.0
    %312 = vmatpush1.msra.mxu0 0.0
    %313 = vmatprep.subr.mxu0 0.0
    %314 = vmatpush1.msra.mxu0 0.0
    %315 = vmatprep.subr.mxu0 0.0
    %316 = vmatpush1.msra.mxu0 0.0
    %317 = vmatprep.subr.mxu0 0.0
    %318 = vmatpush1.msra.mxu0 0.0
    %319 = vmatprep.subr.mxu0 0.0
    %320 = vmatpush1.msra.mxu0 0.0
    %321 = vmatprep.subr.mxu0 0.0
    %322 = vmatpush1.msra.mxu0 0.0
    %323 = vmatprep.subr.mxu0 0.0
    %324 = vmatpush1.msra.mxu0 0.0
    %325 = vmatprep.subr.mxu0 0.0
    %326 = vmatpush1.msra.mxu0 0.0
    %327 = vmatprep.subr.mxu0 0.0
    %328 = vmatpush1.msra.mxu0 0.0
    %329 = vmatprep.subr.mxu0 0.0
    %330 = vmatpush1.msra.mxu0 0.0
    %331 = vmatprep.subr.mxu0 0.0
    %332 = vmatpush1.msra.mxu0 0.0
    %333 = vmatprep.subr.mxu0 0.0
    %334 = vmatpush1.msra.mxu0 0.0
    %335 = vmatprep.subr.mxu0 0.0
    %336 = vmatpush1.msra.mxu0 0.0
    %337 = vmatprep.subr.mxu0 0.0
    %338 = vmatpush1.msra.mxu0 0.0
    %339 = vmatprep.subr.mxu0 0.0
    %340 = vmatpush1.msra.mxu0 0.0
    %341 = vmatprep.subr.mxu0 0.0
    %342 = vmatpush1.msra.mxu0 0.0
    %343 = vmatprep.subr.mxu0 0.0
    %344 = vmatpush1.msra.mxu0 0.0
    %345 = vmatprep.subr.mxu0 0.0
    %346 = vmatpush1.msra.mxu0 0.0
    %347 = vmatprep.subr.mxu0 0.0
    %348 = vmatpush1.msra.mxu0 0.0
    %349 = vmatprep.subr.mxu0 0.0
    %350 = vmatpush1.msra.mxu0 0.0
    %351 = vmatprep.subr.mxu0 0.0
    %352 = vmatpush1.msra.mxu0 0.0
    %353 = vmatprep.subr.mxu0 0.0
    %354 = vmatpush1.msra.mxu0 0.0
    %355 = vmatprep.mubr.f32.mxu0 0.0
    %356 = vmatmul.mubr.f32.gmra.mrb[0].mxu0 %v289
    %v357 = vpop.f32.mrb[0].mxu0
    %v358 = vadd.f32 0.0, %v357
    %v359 = vpop.f32.mrb[0].mxu0
    %360 = vdwg.mxu0
    %v361 = vlaneseq
    %v362 = vshrl.u32 %v361, 7
    %v363 = vsub.s32 0, %v362
    %v364 = vrot.slane %v358, %v363
    %v365 = vmul.f32 %v26, %v364
    %v366 = vmul.f32 %v27, %v364
    %v367 = vmul.f32 %v28, %v364
    %v368 = vmul.f32 %v29, %v364
    %v369 = vmul.f32 %v30, %v364
    %v370 = vmul.f32 %v31, %v364
    %v371 = vmul.f32 %v32, %v364
    %v372 = vmul.f32 %v33, %v364
    %v373 = vmul.f32 %v34, %v364
    %v374 = vmul.f32 %v35, %v364
    %v375 = vmul.f32 %v36, %v364
    %v376 = vmul.f32 %v37, %v364
    %v377 = vmul.f32 %v38, %v364
    %v378 = vmul.f32 %v39, %v364
    %v379 = vmul.f32 %v40, %v364
    %v380 = vmul.f32 %v41, %v364
    %v381 = vlaneseq
    %v382 = vshrl.u32 %v381, 7
    %v383 = vsub.s32 1, %v382
    %v384 = vrot.slane %v358, %v383
    %v385 = vadd.f32 %v365, %v384
    %v386 = vadd.f32 %v366, %v384
    %v387 = vadd.f32 %v367, %v384
    %v388 = vadd.f32 %v368, %v384
    %v389 = vadd.f32 %v369, %v384
    %v390 = vadd.f32 %v370, %v384
    %v391 = vadd.f32 %v371, %v384
    %v392 = vadd.f32 %v372, %v384
    %v393 = vadd.f32 %v373, %v384
    %v394 = vadd.f32 %v374, %v384
    %v395 = vadd.f32 %v375, %v384
    %v396 = vadd.f32 %v376, %v384
    %v397 = vadd.f32 %v377, %v384
    %v398 = vadd.f32 %v378, %v384
    %v399 = vadd.f32 %v379, %v384
    %v400 = vadd.f32 %v380, %v384
    %v401 = vmax.f32 %v385, 0.0
    %v402 = vmax.f32 %v386, 0.0
    %v403 = vmax.f32 %v387, 0.0
    %v404 = vmax.f32 %v388, 0.0
    %v405 = vmax.f32 %v389, 0.0
    %v406 = vmax.f32 %v390, 0.0
    %v407 = vmax.f32 %v391, 0.0
    %v408 = vmax.f32 %v392, 0.0
    %v409 = vmax.f32 %v393, 0.0
    %v410 = vmax.f32 %v394, 0.0
    %v411 = vmax.f32 %v395, 0.0
    %v412 = vmax.f32 %v396, 0.0
    %v413 = vmax.f32 %v397, 0.0
    %v414 = vmax.f32 %v398, 0.0
    %v415 = vmax.f32 %v399, 0.0
    %v416 = vmax.f32 %v400, 0.0
    %v417 = vpack.c.bf16 %v402, %v401
    %v418 = vpack.c.bf16 %v404, %v403
    %v419 = vpack.c.bf16 %v406, %v405
    %v420 = vpack.c.bf16 %v408, %v407
    %v421 = vpack.c.bf16 %v410, %v409
    %v422 = vpack.c.bf16 %v412, %v411
    %v423 = vpack.c.bf16 %v414, %v413
    %v424 = vpack.c.bf16 %v416, %v415
    %v433 = vunpack.c.l.b16 %v417
    %v434 = vunpack.c.h.b16 %v417
    %v435 = vunpack.c.l.b16 %v418
    %v436 = vunpack.c.h.b16 %v418
    %v437 = vunpack.c.l.b16 %v419
    %v438 = vunpack.c.h.b16 %v419
    %v439 = vunpack.c.l.b16 %v420
    %v440 = vunpack.c.h.b16 %v420
    %v441 = vunpack.c.l.b16 %v421
    %v442 = vunpack.c.h.b16 %v421
    %v443 = vunpack.c.l.b16 %v422
    %v444 = vunpack.c.h.b16 %v422
    %v445 = vunpack.c.l.b16 %v423
    %v446 = vunpack.c.h.b16 %v423
    %v447 = vunpack.c.l.b16 %v424
    %v448 = vunpack.c.h.b16 %v424
    %v449 = vpack.c.b16 %v433, %v433
    %v450 = vpack.c.b16 %v434, %v434
    %v451 = vpack.c.b16 %v435, %v435
    %v452 = vpack.c.b16 %v436, %v436
    %v453 = vpack.c.b16 %v437, %v437
    %v454 = vpack.c.b16 %v438, %v438
    %v455 = vpack.c.b16 %v439, %v439
    %v456 = vpack.c.b16 %v440, %v440
    %v457 = vpack.c.b16 %v441, %v441
    %v458 = vpack.c.b16 %v442, %v442
    %v459 = vpack.c.b16 %v443, %v443
    %v460 = vpack.c.b16 %v444, %v444
    %v461 = vpack.c.b16 %v445, %v445
    %v462 = vpack.c.b16 %v446, %v446
    %v463 = vpack.c.b16 %v447, %v447
    %v464 = vpack.c.b16 %v448, %v448
    %481 = vst [vmem:[%s3] sm:$0xf] %v449
    %482 = vst [vmem:[%s3 + $0x4] sm:$0xf] %v450
    %483 = vst [vmem:[%s3 + $0x8] sm:$0xf] %v451
    %484 = vst [vmem:[%s3 + $0xc] sm:$0xf] %v452
    %485 = vst [vmem:[%s3 + $0x10] sm:$0xf] %v453
    %486 = vst [vmem:[%s3 + $0x14] sm:$0xf] %v454
    %487 = vst [vmem:[%s3 + $0x18] sm:$0xf] %v455
    %488 = vst [vmem:[%s3 + $0x1c] sm:$0xf] %v456
    %489 = vst [vmem:[%s3 + $0x20] sm:$0xf] %v457
    %490 = vst [vmem:[%s3 + $0x24] sm:$0xf] %v458
    %491 = vst [vmem:[%s3 + $0x28] sm:$0xf] %v459
    %492 = vst [vmem:[%s3 + $0x2c] sm:$0xf] %v460
    %493 = vst [vmem:[%s3 + $0x30] sm:$0xf] %v461
    %494 = vst [vmem:[%s3 + $0x34] sm:$0xf] %v462
    %495 = vst [vmem:[%s3 + $0x38] sm:$0xf] %v463
    %496 = vst [vmem:[%s3 + $0x3c] sm:$0xf] %v464
    // Predicated region
    $region18: #{generator_forward.13} parent=1 // pred_check
      _
    $region19: #{generator_forward.13} parent=1 // pred_check_branch
      %498 = sbr.rel (0) target = $region21
    $region20: #{generator_forward.13} parent=1 // pred_region
      _
    $region21: #{generator_forward.13} parent=1 // pred_fallthru
      _
    // Predicated region
    $region22: #{generator_forward.13} parent=1 // pred_check
      _
    $region23: #{generator_forward.13} parent=1 // pred_check_branch
      %500 = sbr.rel (0) target = $region25
    $region24: #{generator_forward.13} parent=1 // pred_region
      _
    $region25: #{generator_forward.13} parent=1 // pred_fallthru
      _
    %501 = vsyncpa [#allocation3], 1

// kernel: generator_forward.14
$region0: #{generator_forward.14}
  #allocation0 [shape = 'u32[]', space=smem, size = 0x4, offset = 0x4, fixed_abs, tag = 'smem constant byte address 0x4 - core index']
  #allocation1 [shape = 'u32[144,128]{1,0:T(1,128)}', space=vmem, size = 0x12000, scoped, tag = 'internal scratch']
  %s0 = inlined_call_operand.vmem [shape: bf16[512,288], index: 0, kind: input, shape index: {}]
  %s1 = inlined_call_operand.vmem [shape: bf16[288,128], index: 1, kind: input, shape index: {}]
  %s2 = inlined_call_operand.vmem [shape: f32[512,128], index: 2, kind: output, shape index: {}]
  %s3 = sld [smem:[#allocation0]]
  $region41: #{generator_forward.14} parent=0
    _
  %s5 = ssub.s32 1, %s3
  %s6 = scalar_select 0, %s5, %s3
  loop: start=0, step=1, limit=4
  $region2: #{generator_forward.14} parent=0 // loop_pre_header
    _
  $region3: #{generator_forward.14} parent=0 // loop_header
    %s8 = sphi 0, %s12
    %p9 = scmp.ge.s32.totalorder %s8, 4
    %s18 = sphi 0, %s20
    %s21 = sphi 0, %s18
    %s22 = sphi 0, %s21
    %s38 = sphi 0, %s22
    %s42 = sphi 0, %s42
    %s44 = sphi 0, %s42
    %s45 = sphi 0, %s44
    %s59 = sphi 0, %s45
    %s65 = sphi 0, %s67
    %s68 = sphi 0, %s65
    %s69 = sphi 0, %s68
    %s85 = sphi 0, %s69
  $region4: #{generator_forward.14} parent=0 // loop_header_branch
    %11 = sbr.rel (%p9) target = $region8
  $region5: #{generator_forward.14} parent=0 // loop_body
    %s13 = ssub.s32 %s8, 1
    %s14 = ssub.s32 %s8, 2
    %s15 = sadd.s32 %s8, 1
    %s16 = ssub.s32 %s8, %s15
    %p17 = scmp.eq.s32.totalorder %s16, 0
    %s19 = sadd.s32 %s18, 1
    %s20 = scalar_select %p17, %s18, %s19
    %p23 = pneg %p17
    %p24 = scmp.eq.s32.totalorder %s8, 1
    %p25 = por %p23, %p24
    %p26 = scmp.ne.s32.totalorder %s18, %s21
    %p27 = scmp.eq.s32.totalorder %s8, 0
    %p28 = por %p26, %p27
    %p29 = scmp.ne.s32.totalorder %s18, %s21
    %p30 = scmp.eq.s32.totalorder %s13, 1
    %p31 = por %p29, %p30
    %p32 = scmp.ne.s32.totalorder %s21, %s22
    %p33 = scmp.eq.s32.totalorder %s13, 0
    %p34 = por %p32, %p33
    %p35 = scmp.ne.s32.totalorder %s21, %s22
    %p36 = scmp.eq.s32.totalorder %s14, 1
    %p37 = por %p35, %p36
    %p39 = scmp.ne.s32.totalorder %s22, %s38
    %p40 = scmp.eq.s32.totalorder %s14, 0
    %p41 = por %p39, %p40
    %s43 = sadd.s32 %s42, 1
    %p46 = scmp.eq.s32.totalorder %s8, 1
    %p47 = scmp.ne.s32.totalorder %s42, %s44
    %p48 = scmp.eq.s32.totalorder %s8, 0
    %p49 = por %p47, %p48
    %p50 = scmp.ne.s32.totalorder %s42, %s44
    %p51 = scmp.eq.s32.totalorder %s13, 1
    %p52 = por %p50, %p51
    %p53 = scmp.ne.s32.totalorder %s44, %s45
    %p54 = scmp.eq.s32.totalorder %s13, 0
    %p55 = por %p53, %p54
    %p56 = scmp.ne.s32.totalorder %s44, %s45
    %p57 = scmp.eq.s32.totalorder %s14, 1
    %p58 = por %p56, %p57
    %p60 = scmp.ne.s32.totalorder %s45, %s59
    %p61 = scmp.eq.s32.totalorder %s14, 0
    %p62 = por %p60, %p61
    %s63 = ssub.s32 %s8, %s15
    %p64 = scmp.eq.s32.totalorder %s63, 0
    %s66 = sadd.s32 %s65, 1
    %s67 = scalar_select %p64, %s65, %s66
    %p70 = pneg %p64
    %p71 = scmp.eq.s32.totalorder %s8, 1
    %p72 = por %p70, %p71
    %p73 = scmp.ne.s32.totalorder %s65, %s68
    %p74 = scmp.eq.s32.totalorder %s8, 0
    %p75 = por %p73, %p74
    %p76 = scmp.ne.s32.totalorder %s65, %s68
    %p77 = scmp.eq.s32.totalorder %s13, 1
    %p78 = por %p76, %p77
    %p79 = scmp.ne.s32.totalorder %s68, %s69
    %p80 = scmp.eq.s32.totalorder %s13, 0
    %p81 = por %p79, %p80
    %p82 = scmp.ne.s32.totalorder %s68, %s69
    %p83 = scmp.eq.s32.totalorder %s14, 1
    %p84 = por %p82, %p83
    %p86 = scmp.ne.s32.totalorder %s69, %s85
    %p87 = scmp.eq.s32.totalorder %s14, 0
    %p88 = por %p86, %p87
    %p89 = scmp.le.s32.totalorder 1, %s8
    %p90 = scmp.lt.s32.totalorder %s8, 3
    %p91 = pnand %p89, %p90
    %p92 = pneg %p91
    // Predicated region
    $region9: #{generator_forward.14} parent=5 // pred_check
      _
    $region10: #{generator_forward.14} parent=5 // pred_check_branch
      %94 = sbr.rel (%p91) target = $region12
    $region11: #{generator_forward.14} parent=5 // pred_region
      %s95 = ssub.s32 %s8, 1
      // Predicated region
      $region13: #{generator_forward.14} parent=11 // pred_check
        %p96 = pneg %p55
      $region14: #{generator_forward.14} parent=11 // pred_check_branch
        %98 = sbr.rel (%p96) target = $region16
      $region15: #{generator_forward.14} parent=11 // pred_region
        _
      $region16: #{generator_forward.14} parent=11 // pred_fallthru
        _
    $region12: #{generator_forward.14} parent=5 // pred_fallthru
      _
    %p99 = scmp.lt.s32.totalorder %s8, 2
    // Predicated region
    $region17: #{generator_forward.14} parent=5 // pred_check
      %p100 = pneg %p99
    $region18: #{generator_forward.14} parent=5 // pred_check_branch
      %102 = sbr.rel (%p100) target = $region20
    $region19: #{generator_forward.14} parent=5 // pred_region
      // Predicated region
      $region21: #{generator_forward.14} parent=19 // pred_check
        %p103 = pneg %p28
      $region22: #{generator_forward.14} parent=19 // pred_check_branch
        %105 = sbr.rel (%p103) target = $region24
      $region23: #{generator_forward.14} parent=19 // pred_region
        %s106 = smul.u32 32, %s8
        %p107 = scmp.lt.s32.totalorder %s106, 63
        %s108 = scalar_select %p107, %s106, 63
        %s109 = smul.addr %s108, 3
        %s110 = smul.addr %s109, 4
        %s111 = scalar_lea.vmem %s0, %s110
        %s112 = smul.u32 32, %s8
      $region24: #{generator_forward.14} parent=19 // pred_fallthru
        _
    $region20: #{generator_forward.14} parent=5 // pred_fallthru
      _
    %p113 = scmp.le.s32.totalorder 1, %s8
    %p114 = scmp.lt.s32.totalorder %s8, 3
    %p115 = pnand %p113, %p114
    %p116 = pneg %p115
    // Predicated region
    $region25: #{generator_forward.14} parent=5 // pred_check
      _
    $region26: #{generator_forward.14} parent=5 // pred_check_branch
      %118 = sbr.rel (%p115) target = $region28
    $region27: #{generator_forward.14} parent=5 // pred_region
      %s119 = ssub.s32 %s8, 1
      %s120 = smul.u32 32, %s13
      %p121 = scmp.lt.s32.totalorder %s120, 63
      %s122 = scalar_select %p121, %s120, 63
      %s123 = smul.addr %s122, 3
      %s124 = smul.addr %s123, 4
      %s125 = scalar_lea.vmem %s0, %s124
      %p126 = pneg %p34
      %p127 = pneg %p31
      %p128 = pneg %p55
      %p129 = pneg %p52
      %p130 = pneg %p81
      %p131 = pneg %p78
      %s132 = smul.u32 32, %s13
      %p133 = scmp.lt.s32.totalorder %s132, 63
      %s134 = scalar_select %p133, %s132, 63
      %s135 = smul.addr %s134, 8
      %s136 = scalar_lea.vmem %s2, %s135
      %s137 = smul.u32 32, %s13
      %p138 = scmp.lt.s32.totalorder %s137, 63
      %s139 = scalar_select %p138, %s137, 63
      %s140 = smul.addr %s139, 3
      %s141 = smul.addr %s140, 4
      %s142 = scalar_lea.vmem %s0, %s141
      %s143 = smul.u32 32, %s13
      %s144 = smul.u32 32, %s13
      %p145 = scmp.lt.s32.totalorder %s144, 63
      %s146 = scalar_select %p145, %s144, 63
      %s147 = smul.addr %s146, 8
      %s148 = scalar_lea.vmem %s2, %s147
      %s149 = smul.u32 32, %s13
      %v151 = vld [vmem:[%s142] sm:$0xff]
      %v152 = vld [vmem:[%s142 + $0x8] sm:$0xf]
      %v153 = vld [vmem:[%s142 + $0xc] sm:$0xff]
      %v154 = vld [vmem:[%s142 + $0x14] sm:$0xf]
      %v155 = vld [vmem:[%s142 + $0x18] sm:$0xff]
      %v156 = vld [vmem:[%s142 + $0x20] sm:$0xf]
      %v157 = vld [vmem:[%s142 + $0x24] sm:$0xff]
      %v158 = vld [vmem:[%s142 + $0x2c] sm:$0xf]
      %v159 = vld [vmem:[%s142 + $0x30] sm:$0xff]
      %v160 = vld [vmem:[%s142 + $0x38] sm:$0xf]
      %v161 = vld [vmem:[%s142 + $0x3c] sm:$0xff]
      %v162 = vld [vmem:[%s142 + $0x44] sm:$0xf]
      %v163 = vld [vmem:[%s142 + $0x48] sm:$0xff]
      %v164 = vld [vmem:[%s142 + $0x50] sm:$0xf]
      %v165 = vld [vmem:[%s142 + $0x54] sm:$0xff]
      %v166 = vld [vmem:[%s142 + $0x5c] sm:$0xf]
      %v167 = vld [vmem:[%s142 + $0x60] sm:$0xff]
      %v168 = vld [vmem:[%s142 + $0x68] sm:$0xf]
      %v169 = vld [vmem:[%s142 + $0x6c] sm:$0xff]
      %v170 = vld [vmem:[%s142 + $0x74] sm:$0xf]
      %v171 = vld [vmem:[%s142 + $0x78] sm:$0xff]
      %v172 = vld [vmem:[%s142 + $0x80] sm:$0xf]
      %v173 = vld [vmem:[%s142 + $0x84] sm:$0xff]
      %v174 = vld [vmem:[%s142 + $0x8c] sm:$0xf]
      %v175 = vld [vmem:[%s142 + $0x90] sm:$0xff]
      %v176 = vld [vmem:[%s142 + $0x98] sm:$0xf]
      %v177 = vld [vmem:[%s142 + $0x9c] sm:$0xff]
      %v178 = vld [vmem:[%s142 + $0xa4] sm:$0xf]
      %v179 = vld [vmem:[%s142 + $0xa8] sm:$0xff]
      %v180 = vld [vmem:[%s142 + $0xb0] sm:$0xf]
      %v181 = vld [vmem:[%s142 + $0xb4] sm:$0xff]
      %v182 = vld [vmem:[%s142 + $0xbc] sm:$0xf]
      %v183 = vld [vmem:[%s142 + $0xc0] sm:$0xff]
      %v184 = vld [vmem:[%s142 + $0xc8] sm:$0xf]
      %v185 = vld [vmem:[%s142 + $0xcc] sm:$0xff]
      %v186 = vld [vmem:[%s142 + $0xd4] sm:$0xf]
      %v187 = vld [vmem:[%s142 + $0xd8] sm:$0xff]
      %v188 = vld [vmem:[%s142 + $0xe0] sm:$0xf]
      %v189 = vld [vmem:[%s142 + $0xe4] sm:$0xff]
      %v190 = vld [vmem:[%s142 + $0xec] sm:$0xf]
      %v191 = vld [vmem:[%s142 + $0xf0] sm:$0xff]
      %v192 = vld [vmem:[%s142 + $0xf8] sm:$0xf]
      %v193 = vld [vmem:[%s142 + $0xfc] sm:$0xff]
      %v194 = vld [vmem:[%s142 + $0x104] sm:$0xf]
      %v195 = vld [vmem:[%s142 + $0x108] sm:$0xff]
      %v196 = vld [vmem:[%s142 + $0x110] sm:$0xf]
      %v197 = vld [vmem:[%s142 + $0x114] sm:$0xff]
      %v198 = vld [vmem:[%s142 + $0x11c] sm:$0xf]
      %v199 = vld [vmem:[%s142 + $0x120] sm:$0xff]
      %v200 = vld [vmem:[%s142 + $0x128] sm:$0xf]
      %v201 = vld [vmem:[%s142 + $0x12c] sm:$0xff]
      %v202 = vld [vmem:[%s142 + $0x134] sm:$0xf]
      %v203 = vld [vmem:[%s142 + $0x138] sm:$0xff]
      %v204 = vld [vmem:[%s142 + $0x140] sm:$0xf]
      %v205 = vld [vmem:[%s142 + $0x144] sm:$0xff]
      %v206 = vld [vmem:[%s142 + $0x14c] sm:$0xf]
      %v207 = vld [vmem:[%s142 + $0x150] sm:$0xff]
      %v208 = vld [vmem:[%s142 + $0x158] sm:$0xf]
      %v209 = vld [vmem:[%s142 + $0x15c] sm:$0xff]
      %v210 = vld [vmem:[%s142 + $0x164] sm:$0xf]
      %v211 = vld [vmem:[%s142 + $0x168] sm:$0xff]
      %v212 = vld [vmem:[%s142 + $0x170] sm:$0xf]
      %v213 = vld [vmem:[%s142 + $0x174] sm:$0xff]
      %v214 = vld [vmem:[%s142 + $0x17c] sm:$0xf]
      %v215 = vld [vmem:[%s1] sm:$0xf]
      %v216 = vld [vmem:[%s1 + $0x4] sm:$0xf]
      %v217 = vld [vmem:[%s1 + $0x8] sm:$0xf]
      %v218 = vld [vmem:[%s1 + $0xc] sm:$0xf]
      %v219 = vld [vmem:[%s1 + $0x10] sm:$0xf]
      %v220 = vld [vmem:[%s1 + $0x14] sm:$0xf]
      %v221 = vld [vmem:[%s1 + $0x18] sm:$0xf]
      %v222 = vld [vmem:[%s1 + $0x1c] sm:$0xf]
      %v223 = vld [vmem:[%s1 + $0x20] sm:$0xf]
      %v224 = vld [vmem:[%s1 + $0x24] sm:$0xf]
      %v225 = vld [vmem:[%s1 + $0x28] sm:$0xf]
      %v226 = vld [vmem:[%s1 + $0x2c] sm:$0xf]
      %v227 = vld [vmem:[%s1 + $0x30] sm:$0xf]
      %v228 = vld [vmem:[%s1 + $0x34] sm:$0xf]
      %v229 = vld [vmem:[%s1 + $0x38] sm:$0xf]
      %v230 = vld [vmem:[%s1 + $0x3c] sm:$0xf]
      %v231 = vld [vmem:[%s1 + $0x40] sm:$0xf]
      %v232 = vld [vmem:[%s1 + $0x44] sm:$0xf]
      %v233 = vld [vmem:[%s1 + $0x48] sm:$0xf]
      %v234 = vld [vmem:[%s1 + $0x4c] sm:$0xf]
      %v235 = vld [vmem:[%s1 + $0x50] sm:$0xf]
      %v236 = vld [vmem:[%s1 + $0x54] sm:$0xf]
      %v237 = vld [vmem:[%s1 + $0x58] sm:$0xf]
      %v238 = vld [vmem:[%s1 + $0x5c] sm:$0xf]
      %v239 = vld [vmem:[%s1 + $0x60] sm:$0xf]
      %v240 = vld [vmem:[%s1 + $0x64] sm:$0xf]
      %v241 = vld [vmem:[%s1 + $0x68] sm:$0xf]
      %v242 = vld [vmem:[%s1 + $0x6c] sm:$0xf]
      %v243 = vld [vmem:[%s1 + $0x70] sm:$0xf]
      %v244 = vld [vmem:[%s1 + $0x74] sm:$0xf]
      %v245 = vld [vmem:[%s1 + $0x78] sm:$0xf]
      %v246 = vld [vmem:[%s1 + $0x7c] sm:$0xf]
      %v247 = vld [vmem:[%s1 + $0x80] sm:$0xf]
      %v248 = vld [vmem:[%s1 + $0x84] sm:$0xf]
      %v249 = vld [vmem:[%s1 + $0x88] sm:$0xf]
      %v250 = vld [vmem:[%s1 + $0x8c] sm:$0xf]
      %v315 = vunpack.c.l.b16 %v151
      %v316 = vunpack.c.h.b16 %v151
      %v317 = vunpack.c.l.b16 %v152
      %v318 = vunpack.c.l.b16 %v153
      %v319 = vunpack.c.h.b16 %v153
      %v320 = vunpack.c.l.b16 %v154
      %v321 = vunpack.c.l.b16 %v155
      %v322 = vunpack.c.h.b16 %v155
      %v323 = vunpack.c.l.b16 %v156
      %v324 = vunpack.c.l.b16 %v157
      %v325 = vunpack.c.h.b16 %v157
      %v326 = vunpack.c.l.b16 %v158
      %v327 = vunpack.c.l.b16 %v159
      %v328 = vunpack.c.h.b16 %v159
      %v329 = vunpack.c.l.b16 %v160
      %v330 = vunpack.c.l.b16 %v161
      %v331 = vunpack.c.h.b16 %v161
      %v332 = vunpack.c.l.b16 %v162
      %v333 = vunpack.c.l.b16 %v163
      %v334 = vunpack.c.h.b16 %v163
      %v335 = vunpack.c.l.b16 %v164
      %v336 = vunpack.c.l.b16 %v165
      %v337 = vunpack.c.h.b16 %v165
      %v338 = vunpack.c.l.b16 %v166
      %v339 = vunpack.c.l.b16 %v167
      %v340 = vunpack.c.h.b16 %v167
      %v341 = vunpack.c.l.b16 %v168
      %v342 = vunpack.c.l.b16 %v169
      %v343 = vunpack.c.h.b16 %v169
      %v344 = vunpack.c.l.b16 %v170
      %v345 = vunpack.c.l.b16 %v171
      %v346 = vunpack.c.h.b16 %v171
      %v347 = vunpack.c.l.b16 %v172
      %v348 = vunpack.c.l.b16 %v173
      %v349 = vunpack.c.h.b16 %v173
      %v350 = vunpack.c.l.b16 %v174
      %v351 = vunpack.c.l.b16 %v175
      %v352 = vunpack.c.h.b16 %v175
      %v353 = vunpack.c.l.b16 %v176
      %v354 = vunpack.c.l.b16 %v177
      %v355 = vunpack.c.h.b16 %v177
      %v356 = vunpack.c.l.b16 %v178
      %v357 = vunpack.c.l.b16 %v179
      %v358 = vunpack.c.h.b16 %v179
      %v359 = vunpack.c.l.b16 %v180
      %v360 = vunpack.c.l.b16 %v181
      %v361 = vunpack.c.h.b16 %v181
      %v362 = vunpack.c.l.b16 %v182
      %v363 = vunpack.c.l.b16 %v183
      %v364 = vunpack.c.h.b16 %v183
      %v365 = vunpack.c.l.b16 %v184
      %v366 = vunpack.c.l.b16 %v185
      %v367 = vunpack.c.h.b16 %v185
      %v368 = vunpack.c.l.b16 %v186
      %v369 = vunpack.c.l.b16 %v187
      %v370 = vunpack.c.h.b16 %v187
      %v371 = vunpack.c.l.b16 %v188
      %v372 = vunpack.c.l.b16 %v189
      %v373 = vunpack.c.h.b16 %v189
      %v374 = vunpack.c.l.b16 %v190
      %v375 = vunpack.c.l.b16 %v191
      %v376 = vunpack.c.h.b16 %v191
      %v377 = vunpack.c.l.b16 %v192
      %v378 = vunpack.c.l.b16 %v193
      %v379 = vunpack.c.h.b16 %v193
      %v380 = vunpack.c.l.b16 %v194
      %v381 = vunpack.c.l.b16 %v195
      %v382 = vunpack.c.h.b16 %v195
      %v383 = vunpack.c.l.b16 %v196
      %v384 = vunpack.c.l.b16 %v197
      %v385 = vunpack.c.h.b16 %v197
      %v386 = vunpack.c.l.b16 %v198
      %v387 = vunpack.c.l.b16 %v199
      %v388 = vunpack.c.h.b16 %v199
      %v389 = vunpack.c.l.b16 %v200
      %v390 = vunpack.c.l.b16 %v201
      %v391 = vunpack.c.h.b16 %v201
      %v392 = vunpack.c.l.b16 %v202
      %v393 = vunpack.c.l.b16 %v203
      %v394 = vunpack.c.h.b16 %v203
      %v395 = vunpack.c.l.b16 %v204
      %v396 = vunpack.c.l.b16 %v205
      %v397 = vunpack.c.h.b16 %v205
      %v398 = vunpack.c.l.b16 %v206
      %v399 = vunpack.c.l.b16 %v207
      %v400 = vunpack.c.h.b16 %v207
      %v401 = vunpack.c.l.b16 %v208
      %v402 = vunpack.c.l.b16 %v209
      %v403 = vunpack.c.h.b16 %v209
      %v404 = vunpack.c.l.b16 %v210
      %v405 = vunpack.c.l.b16 %v211
      %v406 = vunpack.c.h.b16 %v211
      %v407 = vunpack.c.l.b16 %v212
      %v408 = vunpack.c.l.b16 %v213
      %v409 = vunpack.c.h.b16 %v213
      %v410 = vunpack.c.l.b16 %v214
      %v411 = vpack.c.b16 %v318, %v315
      %v412 = vpack.c.b16 %v319, %v316
      %v413 = vpack.c.b16 %v320, %v317
      %v414 = vpack.c.b16 %v324, %v321
      %v415 = vpack.c.b16 %v325, %v322
      %v416 = vpack.c.b16 %v326, %v323
      %v417 = vpack.c.b16 %v330, %v327
      %v418 = vpack.c.b16 %v331, %v328
      %v419 = vpack.c.b16 %v332, %v329
      %v420 = vpack.c.b16 %v336, %v333
      %v421 = vpack.c.b16 %v337, %v334
      %v422 = vpack.c.b16 %v338, %v335
      %v423 = vpack.c.b16 %v342, %v339
      %v424 = vpack.c.b16 %v343, %v340
      %v425 = vpack.c.b16 %v344, %v341
      %v426 = vpack.c.b16 %v348, %v345
      %v427 = vpack.c.b16 %v349, %v346
      %v428 = vpack.c.b16 %v350, %v347
      %v429 = vpack.c.b16 %v354, %v351
      %v430 = vpack.c.b16 %v355, %v352
      %v431 = vpack.c.b16 %v356, %v353
      %v432 = vpack.c.b16 %v360, %v357
      %v433 = vpack.c.b16 %v361, %v358
      %v434 = vpack.c.b16 %v362, %v359
      %v435 = vpack.c.b16 %v366, %v363
      %v436 = vpack.c.b16 %v367, %v364
      %v437 = vpack.c.b16 %v368, %v365
      %v438 = vpack.c.b16 %v372, %v369
      %v439 = vpack.c.b16 %v373, %v370
      %v440 = vpack.c.b16 %v374, %v371
      %v441 = vpack.c.b16 %v378, %v375
      %v442 = vpack.c.b16 %v379, %v376
      %v443 = vpack.c.b16 %v380, %v377
      %v444 = vpack.c.b16 %v384, %v381
      %v445 = vpack.c.b16 %v385, %v382
      %v446 = vpack.c.b16 %v386, %v383
      %v447 = vpack.c.b16 %v390, %v387
      %v448 = vpack.c.b16 %v391, %v388
      %v449 = vpack.c.b16 %v392, %v389
      %v450 = vpack.c.b16 %v396, %v393
      %v451 = vpack.c.b16 %v397, %v394
      %v452 = vpack.c.b16 %v398, %v395
      %v453 = vpack.c.b16 %v402, %v399
      %v454 = vpack.c.b16 %v403, %v400
      %v455 = vpack.c.b16 %v404, %v401
      %v456 = vpack.c.b16 %v408, %v405
      %v457 = vpack.c.b16 %v409, %v406
      %v458 = vpack.c.b16 %v410, %v407
      %v527 = vunpack.c.l.b16 %v215
      %v528 = vunpack.c.l.b16 %v216
      %v529 = vunpack.c.l.b16 %v217
      %v530 = vunpack.c.l.b16 %v218
      %v531 = vunpack.c.l.b16 %v219
      %v532 = vunpack.c.l.b16 %v220
      %v533 = vunpack.c.l.b16 %v221
      %v534 = vunpack.c.l.b16 %v222
      %v535 = vunpack.c.l.b16 %v223
      %v536 = vunpack.c.l.b16 %v224
      %v537 = vunpack.c.l.b16 %v225
      %v538 = vunpack.c.l.b16 %v226
      %v539 = vunpack.c.l.b16 %v227
      %v540 = vunpack.c.l.b16 %v228
      %v541 = vunpack.c.l.b16 %v229
      %v542 = vunpack.c.l.b16 %v230
      %v543 = vunpack.c.l.b16 %v231
      %v544 = vunpack.c.l.b16 %v232
      %v545 = vunpack.c.l.b16 %v233
      %v546 = vunpack.c.l.b16 %v234
      %v547 = vunpack.c.l.b16 %v235
      %v548 = vunpack.c.l.b16 %v236
      %v549 = vunpack.c.l.b16 %v237
      %v550 = vunpack.c.l.b16 %v238
      %v551 = vunpack.c.l.b16 %v239
      %v552 = vunpack.c.l.b16 %v240
      %v553 = vunpack.c.l.b16 %v241
      %v554 = vunpack.c.l.b16 %v242
      %v555 = vunpack.c.l.b16 %v243
      %v556 = vunpack.c.l.b16 %v244
      %v557 = vunpack.c.l.b16 %v245
      %v558 = vunpack.c.l.b16 %v246
      %v559 = vunpack.c.l.b16 %v247
      %v560 = vunpack.c.l.b16 %v248
      %v561 = vunpack.c.l.b16 %v249
      %v562 = vunpack.c.l.b16 %v250
      %v563 = vpack.c.b16 %v528, %v527
      %v564 = vpack.c.b16 %v530, %v529
      %v565 = vpack.c.b16 %v532, %v531
      %v566 = vpack.c.b16 %v534, %v533
      %v567 = vpack.c.b16 %v536, %v535
      %v568 = vpack.c.b16 %v538, %v537
      %v569 = vpack.c.b16 %v540, %v539
      %v570 = vpack.c.b16 %v542, %v541
      %v571 = vpack.c.b16 %v544, %v543
      %v572 = vpack.c.b16 %v546, %v545
      %v573 = vpack.c.b16 %v548, %v547
      %v574 = vpack.c.b16 %v550, %v549
      %v575 = vpack.c.b16 %v552, %v551
      %v576 = vpack.c.b16 %v554, %v553
      %v577 = vpack.c.b16 %v556, %v555
      %v578 = vpack.c.b16 %v558, %v557
      %v579 = vpack.c.b16 %v560, %v559
      %v580 = vpack.c.b16 %v562, %v561
      %vm599 = vcmask 261120
      %v601 = vsel %vm599, %v413, 0
      %v604 = vsel %vm599, %v416, 0
      %v607 = vsel %vm599, %v419, 0
      %v610 = vsel %vm599, %v422, 0
      %v613 = vsel %vm599, %v425, 0
      %v616 = vsel %vm599, %v428, 0
      %v619 = vsel %vm599, %v431, 0
      %v622 = vsel %vm599, %v434, 0
      %v625 = vsel %vm599, %v437, 0
      %v628 = vsel %vm599, %v440, 0
      %v631 = vsel %vm599, %v443, 0
      %v634 = vsel %vm599, %v446, 0
      %v637 = vsel %vm599, %v449, 0
      %v640 = vsel %vm599, %v452, 0
      %v643 = vsel %vm599, %v455, 0
      %v646 = vsel %vm599, %v458, 0
      %648 = vmatprep.subr.bf16.mxu0 0
      %649 = vmatpush1.bf16.msra.mxu0 %v563
      %650 = vmatprep.subr.bf16.mxu0 0
      %651 = vmatpush1.bf16.msra.mxu0 %v564
      %652 = vmatprep.subr.bf16.mxu0 0
      %653 = vmatpush1.bf16.msra.mxu0 %v565
      %654 = vmatprep.subr.bf16.mxu0 0
      %655 = vmatpush1.bf16.msra.mxu0 %v566
      %656 = vmatprep.subr.bf16.mxu0 0
      %657 = vmatpush1.bf16.msra.mxu0 %v567
      %658 = vmatprep.subr.bf16.mxu0 0
      %659 = vmatpush1.bf16.msra.mxu0 %v568
      %660 = vmatprep.subr.bf16.mxu0 0
      %661 = vmatpush1.bf16.msra.mxu0 %v569
      %662 = vmatprep.subr.bf16.mxu0 0
      %663 = vmatpush1.bf16.msra.mxu0 %v570
      %664 = vmatprep.subr.bf16.mxu0 0
      %665 = vmatpush1.bf16.msra.mxu0 %v571
      %666 = vmatprep.subr.bf16.mxu0 0
      %667 = vmatpush1.bf16.msra.mxu0 %v572
      %668 = vmatprep.subr.bf16.mxu0 0
      %669 = vmatpush1.bf16.msra.mxu0 %v573
      %670 = vmatprep.subr.bf16.mxu0 0
      %671 = vmatpush1.bf16.msra.mxu0 %v574
      %672 = vmatprep.subr.bf16.mxu0 0
      %673 = vmatpush1.bf16.msra.mxu0 %v575
      %674 = vmatprep.subr.bf16.mxu0 0
      %675 = vmatpush1.bf16.msra.mxu0 %v576
      %676 = vmatprep.subr.bf16.mxu0 0
      %677 = vmatpush1.bf16.msra.mxu0 %v577
      %678 = vmatprep.subr.bf16.mxu0 0
      %679 = vmatpush1.bf16.msra.mxu0 %v578
      %680 = vmatprep.mubr.bf16.mxu0 %v412
      %681 = vmatmul.mubr.bf16.gmra.mrb[0].mxu0 %v411
      %v682 = vpop.f32.mrb[0].mxu0
      %v683 = vadd.f32 0.0, %v682
      %v684 = vpop.f32.mrb[0].mxu0
      %v685 = vpop.f32.mrb[0].mxu0
      %v686 = vadd.f32 0.0, %v685
      %v687 = vpop.f32.mrb[0].mxu0
      %688 = vmatprep.mubr.bf16.mxu0 %v415
      %689 = vmatmul.mubr.bf16.gmra.mrb[0].mxu0 %v414
      %v690 = vpop.f32.mrb[0].mxu0
      %v691 = vadd.f32 0.0, %v690
      %v692 = vpop.f32.mrb[0].mxu0
      %v693 = vpop.f32.mrb[0].mxu0
      %v694 = vadd.f32 0.0, %v693
      %v695 = vpop.f32.mrb[0].mxu0
      %696 = vmatprep.mubr.bf16.mxu0 %v418
      %697 = vmatmul.mubr.bf16.gmra.mrb[0].mxu0 %v417
      %v698 = vpop.f32.mrb[0].mxu0
      %v699 = vadd.f32 0.0, %v698
      %v700 = vpop.f32.mrb[0].mxu0
      %v701 = vpop.f32.mrb[0].mxu0
      %v702 = vadd.f32 0.0, %v701
      %v703 = vpop.f32.mrb[0].mxu0
      %704 = vmatprep.mubr.bf16.mxu0 %v421
      %705 = vmatmul.mubr.bf16.gmra.mrb[0].mxu0 %v420
      %v706 = vpop.f32.mrb[0].mxu0
      %v707 = vadd.f32 0.0, %v706
      %v708 = vpop.f32.mrb[0].mxu0
      %v709 = vpop.f32.mrb[0].mxu0
      %v710 = vadd.f32 0.0, %v709
      %v711 = vpop.f32.mrb[0].mxu0
      %712 = vmatprep.mubr.bf16.mxu0 %v424
      %713 = vmatmul.mubr.bf16.gmra.mrb[0].mxu0 %v423
      %v714 = vpop.f32.mrb[0].mxu0
      %v715 = vadd.f32 0.0, %v714
      %v716 = vpop.f32.mrb[0].mxu0
      %v717 = vpop.f32.mrb[0].mxu0
      %v718 = vadd.f32 0.0, %v717
      %v719 = vpop.f32.mrb[0].mxu0
      %720 = vmatprep.mubr.bf16.mxu0 %v427
      %721 = vmatmul.mubr.bf16.gmra.mrb[0].mxu0 %v426
      %v722 = vpop.f32.mrb[0].mxu0
      %v723 = vadd.f32 0.0, %v722
      %v724 = vpop.f32.mrb[0].mxu0
      %v725 = vpop.f32.mrb[0].mxu0
      %v726 = vadd.f32 0.0, %v725
      %v727 = vpop.f32.mrb[0].mxu0
      %728 = vmatprep.mubr.bf16.mxu0 %v430
      %729 = vmatmul.mubr.bf16.gmra.mrb[0].mxu0 %v429
      %v730 = vpop.f32.mrb[0].mxu0
      %v731 = vadd.f32 0.0, %v730
      %v732 = vpop.f32.mrb[0].mxu0
      %v733 = vpop.f32.mrb[0].mxu0
      %v734 = vadd.f32 0.0, %v733
      %v735 = vpop.f32.mrb[0].mxu0
      %736 = vmatprep.mubr.bf16.mxu0 %v433
      %737 = vmatmul.mubr.bf16.gmra.mrb[0].mxu0 %v432
      %v738 = vpop.f32.mrb[0].mxu0
      %v739 = vadd.f32 0.0, %v738
      %v740 = vpop.f32.mrb[0].mxu0
      %v741 = vpop.f32.mrb[0].mxu0
      %v742 = vadd.f32 0.0, %v741
      %v743 = vpop.f32.mrb[0].mxu0
      %744 = vmatprep.mubr.bf16.mxu0 %v436
      %745 = vmatmul.mubr.bf16.gmra.mrb[0].mxu0 %v435
      %v746 = vpop.f32.mrb[0].mxu0
      %v747 = vadd.f32 0.0, %v746
      %v748 = vpop.f32.mrb[0].mxu0
      %v749 = vpop.f32.mrb[0].mxu0
      %v750 = vadd.f32 0.0, %v749
      %v751 = vpop.f32.mrb[0].mxu0
      %752 = vmatprep.mubr.bf16.mxu0 %v439
      %753 = vmatmul.mubr.bf16.gmra.mrb[0].mxu0 %v438
      %v754 = vpop.f32.mrb[0].mxu0
      %v755 = vadd.f32 0.0, %v754
      %v756 = vpop.f32.mrb[0].mxu0
      %v757 = vpop.f32.mrb[0].mxu0
      %v758 = vadd.f32 0.0, %v757
      %v759 = vpop.f32.mrb[0].mxu0
      %760 = vmatprep.mubr.bf16.mxu0 %v442
      %761 = vmatmul.mubr.bf16.gmra.mrb[0].mxu0 %v441
      %v762 = vpop.f32.mrb[0].mxu0
      %v763 = vadd.f32 0.0, %v762
      %v764 = vpop.f32.mrb[0].mxu0
      %v765 = vpop.f32.mrb[0].mxu0
      %v766 = vadd.f32 0.0, %v765
      %v767 = vpop.f32.mrb[0].mxu0
      %768 = vmatprep.mubr.bf16.mxu0 %v445
      %769 = vmatmul.mubr.bf16.gmra.mrb[0].mxu0 %v444
      %v770 = vpop.f32.mrb[0].mxu0
      %v771 = vadd.f32 0.0, %v770
      %v772 = vpop.f32.mrb[0].mxu0
      %v773 = vpop.f32.mrb[0].mxu0
      %v774 = vadd.f32 0.0, %v773
      %v775 = vpop.f32.mrb[0].mxu0
      %776 = vmatprep.mubr.bf16.mxu0 %v448
      %777 = vmatmul.mubr.bf16.gmra.mrb[0].mxu0 %v447
      %v778 = vpop.f32.mrb[0].mxu0
      %v779 = vadd.f32 0.0, %v778
      %v780 = vpop.f32.mrb[0].mxu0
      %v781 = vpop.f32.mrb[0].mxu0
      %v782 = vadd.f32 0.0, %v781
      %v783 = vpop.f32.mrb[0].mxu0
      %784 = vmatprep.mubr.bf16.mxu0 %v451
      %785 = vmatmul.mubr.bf16.gmra.mrb[0].mxu0 %v450
      %v786 = vpop.f32.mrb[0].mxu0
      %v787 = vadd.f32 0.0, %v786
      %v788 = vpop.f32.mrb[0].mxu0
      %v789 = vpop.f32.mrb[0].mxu0
      %v790 = vadd.f32 0.0, %v789
      %v791 = vpop.f32.mrb[0].mxu0
      %792 = vmatprep.mubr.bf16.mxu0 %v454
      %793 = vmatmul.mubr.bf16.gmra.mrb[0].mxu0 %v453
      %v794 = vpop.f32.mrb[0].mxu0
      %v795 = vadd.f32 0.0, %v794
      %v796 = vpop.f32.mrb[0].mxu0
      %v797 = vpop.f32.mrb[0].mxu0
      %v798 = vadd.f32 0.0, %v797
      %v799 = vpop.f32.mrb[0].mxu0
      %800 = vmatprep.mubr.bf16.mxu0 %v457
      %801 = vmatmul.mubr.bf16.gmra.mrb[0].mxu0 %v456
      %v802 = vpop.f32.mrb[0].mxu0
      %v803 = vadd.f32 0.0, %v802
      %v804 = vpop.f32.mrb[0].mxu0
      %v805 = vpop.f32.mrb[0].mxu0
      %v806 = vadd.f32 0.0, %v805
      %v807 = vpop.f32.mrb[0].mxu0
      %808 = vdwg.mxu0
      %809 = vmatprep.subr.bf16.mxu0 0
      %810 = vmatpush1.bf16.msra.mxu0 %v579
      %811 = vmatprep.subr.bf16.mxu0 0
      %812 = vmatpush1.bf16.msra.mxu0 %v580
      %813 = vmatprep.subr.bf16.mxu0 0
      %814 = vmatpush1.bf16.msra.mxu0 0
      %815 = vmatprep.subr.bf16.mxu0 0
      %816 = vmatpush1.bf16.msra.mxu0 0
      %817 = vmatprep.subr.bf16.mxu0 0
      %818 = vmatpush1.bf16.msra.mxu0 0
      %819 = vmatprep.subr.bf16.mxu0 0
      %820 = vmatpush1.bf16.msra.mxu0 0
      %821 = vmatprep.subr.bf16.mxu0 0
      %822 = vmatpush1.bf16.msra.mxu0 0
      %823 = vmatprep.subr.bf16.mxu0 0
      %824 = vmatpush1.bf16.msra.mxu0 0
      %825 = vmatprep.subr.bf16.mxu0 0
      %826 = vmatpush1.bf16.msra.mxu0 0
      %827 = vmatprep.subr.bf16.mxu0 0
      %828 = vmatpush1.bf16.msra.mxu0 0
      %829 = vmatprep.subr.bf16.mxu0 0
      %830 = vmatpush1.bf16.msra.mxu0 0
      %831 = vmatprep.subr.bf16.mxu0 0
      %832 = vmatpush1.bf16.msra.mxu0 0
      %833 = vmatprep.subr.bf16.mxu0 0
      %834 = vmatpush1.bf16.msra.mxu0 0
      %835 = vmatprep.subr.bf16.mxu0 0
      %836 = vmatpush1.bf16.msra.mxu0 0
      %837 = vmatprep.subr.bf16.mxu0 0
      %838 = vmatpush1.bf16.msra.mxu0 0
      %839 = vmatprep.subr.bf16.mxu0 0
      %840 = vmatpush1.bf16.msra.mxu0 0
      %841 = vmatprep.mubr.bf16.mxu0 0
      %842 = vmatmul.mubr.bf16.gmra.mrb[0].mxu0 %v601
      %v843 = vpop.f32.mrb[0].mxu0
      %v844 = vadd.f32 %v683, %v843
      %v845 = vpop.f32.mrb[0].mxu0
      %v846 = vpop.f32.mrb[0].mxu0
      %v847 = vadd.f32 %v686, %v846
      %v848 = vpop.f32.mrb[0].mxu0
      %849 = vmatprep.mubr.bf16.mxu0 0
      %850 = vmatmul.mubr.bf16.gmra.mrb[0].mxu0 %v604
      %v851 = vpop.f32.mrb[0].mxu0
      %v852 = vadd.f32 %v691, %v851
      %v853 = vpop.f32.mrb[0].mxu0
      %v854 = vpop.f32.mrb[0].mxu0
      %v855 = vadd.f32 %v694, %v854
      %v856 = vpop.f32.mrb[0].mxu0
      %857 = vmatprep.mubr.bf16.mxu0 0
      %858 = vmatmul.mubr.bf16.gmra.mrb[0].mxu0 %v607
      %v859 = vpop.f32.mrb[0].mxu0
      %v860 = vadd.f32 %v699, %v859
      %v861 = vpop.f32.mrb[0].mxu0
      %v862 = vpop.f32.mrb[0].mxu0
      %v863 = vadd.f32 %v702, %v862
      %v864 = vpop.f32.mrb[0].mxu0
      %865 = vmatprep.mubr.bf16.mxu0 0
      %866 = vmatmul.mubr.bf16.gmra.mrb[0].mxu0 %v610
      %v867 = vpop.f32.mrb[0].mxu0
      %v868 = vadd.f32 %v707, %v867
      %v869 = vpop.f32.mrb[0].mxu0
      %v870 = vpop.f32.mrb[0].mxu0
      %v871 = vadd.f32 %v710, %v870
      %v872 = vpop.f32.mrb[0].mxu0
      %873 = vmatprep.mubr.bf16.mxu0 0
      %874 = vmatmul.mubr.bf16.gmra.mrb[0].mxu0 %v613
      %v875 = vpop.f32.mrb[0].mxu0
      %v876 = vadd.f32 %v715, %v875
      %v877 = vpop.f32.mrb[0].mxu0
      %v878 = vpop.f32.mrb[0].mxu0
      %v879 = vadd.f32 %v718, %v878
      %v880 = vpop.f32.mrb[0].mxu0
      %881 = vmatprep.mubr.bf16.mxu0 0
      %882 = vmatmul.mubr.bf16.gmra.mrb[0].mxu0 %v616
      %v883 = vpop.f32.mrb[0].mxu0
      %v884 = vadd.f32 %v723, %v883
      %v885 = vpop.f32.mrb[0].mxu0
      %v886 = vpop.f32.mrb[0].mxu0
      %v887 = vadd.f32 %v726, %v886
      %v888 = vpop.f32.mrb[0].mxu0
      %889 = vmatprep.mubr.bf16.mxu0 0
      %890 = vmatmul.mubr.bf16.gmra.mrb[0].mxu0 %v619
      %v891 = vpop.f32.mrb[0].mxu0
      %v892 = vadd.f32 %v731, %v891
      %v893 = vpop.f32.mrb[0].mxu0
      %v894 = vpop.f32.mrb[0].mxu0
      %v895 = vadd.f32 %v734, %v894
      %v896 = vpop.f32.mrb[0].mxu0
      %897 = vmatprep.mubr.bf16.mxu0 0
      %898 = vmatmul.mubr.bf16.gmra.mrb[0].mxu0 %v622
      %v899 = vpop.f32.mrb[0].mxu0
      %v900 = vadd.f32 %v739, %v899
      %v901 = vpop.f32.mrb[0].mxu0
      %v902 = vpop.f32.mrb[0].mxu0
      %v903 = vadd.f32 %v742, %v902
      %v904 = vpop.f32.mrb[0].mxu0
      %905 = vmatprep.mubr.bf16.mxu0 0
      %906 = vmatmul.mubr.bf16.gmra.mrb[0].mxu0 %v625
      %v907 = vpop.f32.mrb[0].mxu0
      %v908 = vadd.f32 %v747, %v907
      %v909 = vpop.f32.mrb[0].mxu0
      %v910 = vpop.f32.mrb[0].mxu0
      %v911 = vadd.f32 %v750, %v910
      %v912 = vpop.f32.mrb[0].mxu0
      %913 = vmatprep.mubr.bf16.mxu0 0
      %914 = vmatmul.mubr.bf16.gmra.mrb[0].mxu0 %v628
      %v915 = vpop.f32.mrb[0].mxu0
      %v916 = vadd.f32 %v755, %v915
      %v917 = vpop.f32.mrb[0].mxu0
      %v918 = vpop.f32.mrb[0].mxu0
      %v919 = vadd.f32 %v758, %v918
      %v920 = vpop.f32.mrb[0].mxu0
      %921 = vmatprep.mubr.bf16.mxu0 0
      %922 = vmatmul.mubr.bf16.gmra.mrb[0].mxu0 %v631
      %v923 = vpop.f32.mrb[0].mxu0
      %v924 = vadd.f32 %v763, %v923
      %v925 = vpop.f32.mrb[0].mxu0
      %v926 = vpop.f32.mrb[0].mxu0
      %v927 = vadd.f32 %v766, %v926
      %v928 = vpop.f32.mrb[0].mxu0
      %929 = vmatprep.mubr.bf16.mxu0 0
      %930 = vmatmul.mubr.bf16.gmra.mrb[0].mxu0 %v634
      %v931 = vpop.f32.mrb[0].mxu0
      %v932 = vadd.f32 %v771, %v931
      %v933 = vpop.f32.mrb[0].mxu0
      %v934 = vpop.f32.mrb[0].mxu0
      %v935 = vadd.f32 %v774, %v934
      %v936 = vpop.f32.mrb[0].mxu0
      %937 = vmatprep.mubr.bf16.mxu0 0
      %938 = vmatmul.mubr.bf16.gmra.mrb[0].mxu0 %v637
      %v939 = vpop.f32.mrb[0].mxu0
      %v940 = vadd.f32 %v779, %v939
      %v941 = vpop.f32.mrb[0].mxu0
      %v942 = vpop.f32.mrb[0].mxu0
      %v943 = vadd.f32 %v782, %v942
      %v944 = vpop.f32.mrb[0].mxu0
      %945 = vmatprep.mubr.bf16.mxu0 0
      %946 = vmatmul.mubr.bf16.gmra.mrb[0].mxu0 %v640
      %v947 = vpop.f32.mrb[0].mxu0
      %v948 = vadd.f32 %v787, %v947
      %v949 = vpop.f32.mrb[0].mxu0
      %v950 = vpop.f32.mrb[0].mxu0
      %v951 = vadd.f32 %v790, %v950
      %v952 = vpop.f32.mrb[0].mxu0
      %953 = vmatprep.mubr.bf16.mxu0 0
      %954 = vmatmul.mubr.bf16.gmra.mrb[0].mxu0 %v643
      %v955 = vpop.f32.mrb[0].mxu0
      %v956 = vadd.f32 %v795, %v955
      %v957 = vpop.f32.mrb[0].mxu0
      %v958 = vpop.f32.mrb[0].mxu0
      %v959 = vadd.f32 %v798, %v958
      %v960 = vpop.f32.mrb[0].mxu0
      %961 = vmatprep.mubr.bf16.mxu0 0
      %962 = vmatmul.mubr.bf16.gmra.mrb[0].mxu0 %v646
      %v963 = vpop.f32.mrb[0].mxu0
      %v964 = vadd.f32 %v803, %v963
      %v965 = vpop.f32.mrb[0].mxu0
      %v966 = vpop.f32.mrb[0].mxu0
      %v967 = vadd.f32 %v806, %v966
      %v968 = vpop.f32.mrb[0].mxu0
      %969 = vdwg.mxu0
      %970 = vst [vmem:[%s148] sm:$0xff] %v844
      %971 = vst [vmem:[%s148 + $0x8] sm:$0xff] %v847
      %972 = vst [vmem:[%s148 + $0x10] sm:$0xff] %v852
      %973 = vst [vmem:[%s148 + $0x18] sm:$0xff] %v855
      %974 = vst [vmem:[%s148 + $0x20] sm:$0xff] %v860
      %975 = vst [vmem:[%s148 + $0x28] sm:$0xff] %v863
      %976 = vst [vmem:[%s148 + $0x30] sm:$0xff] %v868
      %977 = vst [vmem:[%s148 + $0x38] sm:$0xff] %v871
      %978 = vst [vmem:[%s148 + $0x40] sm:$0xff] %v876
      %979 = vst [vmem:[%s148 + $0x48] sm:$0xff] %v879
      %980 = vst [vmem:[%s148 + $0x50] sm:$0xff] %v884
      %981 = vst [vmem:[%s148 + $0x58] sm:$0xff] %v887
      %982 = vst [vmem:[%s148 + $0x60] sm:$0xff] %v892
      %983 = vst [vmem:[%s148 + $0x68] sm:$0xff] %v895
      %984 = vst [vmem:[%s148 + $0x70] sm:$0xff] %v900
      %985 = vst [vmem:[%s148 + $0x78] sm:$0xff] %v903
      %986 = vst [vmem:[%s148 + $0x80] sm:$0xff] %v908
      %987 = vst [vmem:[%s148 + $0x88] sm:$0xff] %v911
      %988 = vst [vmem:[%s148 + $0x90] sm:$0xff] %v916
      %989 = vst [vmem:[%s148 + $0x98] sm:$0xff] %v919
      %990 = vst [vmem:[%s148 + $0xa0] sm:$0xff] %v924
      %991 = vst [vmem:[%s148 + $0xa8] sm:$0xff] %v927
      %992 = vst [vmem:[%s148 + $0xb0] sm:$0xff] %v932
      %993 = vst [vmem:[%s148 + $0xb8] sm:$0xff] %v935
      %994 = vst [vmem:[%s148 + $0xc0] sm:$0xff] %v940
      %995 = vst [vmem:[%s148 + $0xc8] sm:$0xff] %v943
      %996 = vst [vmem:[%s148 + $0xd0] sm:$0xff] %v948
      %997 = vst [vmem:[%s148 + $0xd8] sm:$0xff] %v951
      %998 = vst [vmem:[%s148 + $0xe0] sm:$0xff] %v956
      %999 = vst [vmem:[%s148 + $0xe8] sm:$0xff] %v959
      %1000 = vst [vmem:[%s148 + $0xf0] sm:$0xff] %v964
      %1001 = vst [vmem:[%s148 + $0xf8] sm:$0xff] %v967
      %s1002 = smul.u32 32, %s13
      %p1003 = scmp.lt.s32.totalorder %s1002, 63
      %s1004 = scalar_select %p1003, %s1002, 63
      %s1005 = smul.addr %s1004, 8
      %s1006 = scalar_lea.vmem %s2, %s1005
      // Predicated region
      $region29: #{generator_forward.14} parent=27 // pred_check
        %p1007 = pneg %p78
      $region30: #{generator_forward.14} parent=27 // pred_check_branch
        %1009 = sbr.rel (%p1007) target = $region32
      $region31: #{generator_forward.14} parent=27 // pred_region
        %s1010 = smul.u32 32, %s13
      $region32: #{generator_forward.14} parent=27 // pred_fallthru
        _
    $region28: #{generator_forward.14} parent=5 // pred_fallthru
      _
    %p1011 = scmp.le.s32.totalorder 2, %s8
    // Predicated region
    $region33: #{generator_forward.14} parent=5 // pred_check
      %p1012 = pneg %p1011
    $region34: #{generator_forward.14} parent=5 // pred_check_branch
      %1014 = sbr.rel (%p1012) target = $region36
    $region35: #{generator_forward.14} parent=5 // pred_region
      %s1015 = ssub.s32 %s8, 2
      // Predicated region
      $region37: #{generator_forward.14} parent=35 // pred_check
        %p1016 = pneg %p84
      $region38: #{generator_forward.14} parent=35 // pred_check_branch
        %1018 = sbr.rel (%p1016) target = $region40
      $region39: #{generator_forward.14} parent=35 // pred_region
        %s1019 = smul.u32 32, %s14
        %p1020 = scmp.lt.s32.totalorder %s1019, 63
        %s1021 = scalar_select %p1020, %s1019, 63
        %s1022 = smul.addr %s1021, 8
        %s1023 = scalar_lea.vmem %s2, %s1022
      $region40: #{generator_forward.14} parent=35 // pred_fallthru
        _
    $region36: #{generator_forward.14} parent=5 // pred_fallthru
      _
  $region6: #{generator_forward.14} parent=0 // loop_footer
    %s12 = sadd.s32 1, %s8
  $region7: #{generator_forward.14} parent=0 // loop_footer_branch
    %7 = sbr.rel target = $region3
  $region8: #{generator_forward.14} parent=0 // loop_exit
    _

// kernel: generator_forward.15
$region0: #{generator_forward.15}
  #allocation0 [shape = 'u32[]', space=smem, size = 0x4, offset = 0x4, fixed_abs, tag = 'smem constant byte address 0x4 - core index']
  #allocation1 [shape = 'u32[144,128]{1,0:T(1,128)}', space=vmem, size = 0x12000, scoped, tag = 'internal scratch']
  %s0 = inlined_call_operand.vmem [shape: f32[512,128], index: 0, kind: input, shape index: {}]
  %s1 = inlined_call_operand.vmem [shape: f32[1,32], index: 1, kind: input, shape index: {}]
  %s2 = inlined_call_operand.vmem [shape: f32[1,32], index: 2, kind: input, shape index: {}]
  %s3 = inlined_call_operand.vmem [shape: bf16[512,128], index: 3, kind: output, shape index: {}]
  %s4 = sld [smem:[#allocation0]]
  $region22: #{generator_forward.15} parent=0
    _
  %s6 = ssub.s32 1, %s4
  %s7 = scalar_select 0, %s6, %s4
  // Predicated region
  $region2: #{generator_forward.15} parent=0 // pred_check
    _
  $region3: #{generator_forward.15} parent=0 // pred_check_branch
    %9 = sbr.rel (0) target = $region5
  $region4: #{generator_forward.15} parent=0 // pred_region
    _
  $region5: #{generator_forward.15} parent=0 // pred_fallthru
    _
  // Predicated region
  $region6: #{generator_forward.15} parent=0 // pred_check
    _
  $region7: #{generator_forward.15} parent=0 // pred_check_branch
    %11 = sbr.rel (0) target = $region9
  $region8: #{generator_forward.15} parent=0 // pred_region
    _
  $region9: #{generator_forward.15} parent=0 // pred_fallthru
    _
  // Predicated region
  $region10: #{generator_forward.15} parent=0 // pred_check
    _
  $region11: #{generator_forward.15} parent=0 // pred_check_branch
    %13 = sbr.rel (0) target = $region13
  $region12: #{generator_forward.15} parent=0 // pred_region
    _
  $region13: #{generator_forward.15} parent=0 // pred_fallthru
    _
  %v14 = vld [vmem:[%s0] sm:$0xff]
  %v15 = vld [vmem:[%s0 + $0x8] sm:$0xff]
  %v16 = vld [vmem:[%s0 + $0x10] sm:$0xff]
  %v17 = vld [vmem:[%s0 + $0x18] sm:$0xff]
  %v18 = vld [vmem:[%s0 + $0x20] sm:$0xff]
  %v19 = vld [vmem:[%s0 + $0x28] sm:$0xff]
  %v20 = vld [vmem:[%s0 + $0x30] sm:$0xff]
  %v21 = vld [vmem:[%s0 + $0x38] sm:$0xff]
  %v22 = vld [vmem:[%s0 + $0x40] sm:$0xff]
  %v23 = vld [vmem:[%s0 + $0x48] sm:$0xff]
  %v24 = vld [vmem:[%s0 + $0x50] sm:$0xff]
  %v25 = vld [vmem:[%s0 + $0x58] sm:$0xff]
  %v26 = vld [vmem:[%s0 + $0x60] sm:$0xff]
  %v27 = vld [vmem:[%s0 + $0x68] sm:$0xff]
  %v28 = vld [vmem:[%s0 + $0x70] sm:$0xff]
  %v29 = vld [vmem:[%s0 + $0x78] sm:$0xff]
  %v30 = vld [vmem:[%s0 + $0x80] sm:$0xff]
  %v31 = vld [vmem:[%s0 + $0x88] sm:$0xff]
  %v32 = vld [vmem:[%s0 + $0x90] sm:$0xff]
  %v33 = vld [vmem:[%s0 + $0x98] sm:$0xff]
  %v34 = vld [vmem:[%s0 + $0xa0] sm:$0xff]
  %v35 = vld [vmem:[%s0 + $0xa8] sm:$0xff]
  %v36 = vld [vmem:[%s0 + $0xb0] sm:$0xff]
  %v37 = vld [vmem:[%s0 + $0xb8] sm:$0xff]
  %v38 = vld [vmem:[%s0 + $0xc0] sm:$0xff]
  %v39 = vld [vmem:[%s0 + $0xc8] sm:$0xff]
  %v40 = vld [vmem:[%s0 + $0xd0] sm:$0xff]
  %v41 = vld [vmem:[%s0 + $0xd8] sm:$0xff]
  %v42 = vld [vmem:[%s0 + $0xe0] sm:$0xff]
  %v43 = vld [vmem:[%s0 + $0xe8] sm:$0xff]
  %v44 = vld [vmem:[%s0 + $0xf0] sm:$0xff]
  %v45 = vld [vmem:[%s0 + $0xf8] sm:$0xff]
  %v46 = vld [vmem:[%s0 + $0x100] sm:$0xff]
  %v47 = vld [vmem:[%s0 + $0x108] sm:$0xff]
  %v48 = vld [vmem:[%s0 + $0x110] sm:$0xff]
  %v49 = vld [vmem:[%s0 + $0x118] sm:$0xff]
  %v50 = vld [vmem:[%s0 + $0x120] sm:$0xff]
  %v51 = vld [vmem:[%s0 + $0x128] sm:$0xff]
  %v52 = vld [vmem:[%s0 + $0x130] sm:$0xff]
  %v53 = vld [vmem:[%s0 + $0x138] sm:$0xff]
  %v54 = vld [vmem:[%s0 + $0x140] sm:$0xff]
  %v55 = vld [vmem:[%s0 + $0x148] sm:$0xff]
  %v56 = vld [vmem:[%s0 + $0x150] sm:$0xff]
  %v57 = vld [vmem:[%s0 + $0x158] sm:$0xff]
  %v58 = vld [vmem:[%s0 + $0x160] sm:$0xff]
  %v59 = vld [vmem:[%s0 + $0x168] sm:$0xff]
  %v60 = vld [vmem:[%s0 + $0x170] sm:$0xff]
  %v61 = vld [vmem:[%s0 + $0x178] sm:$0xff]
  %v62 = vld [vmem:[%s0 + $0x180] sm:$0xff]
  %v63 = vld [vmem:[%s0 + $0x188] sm:$0xff]
  %v64 = vld [vmem:[%s0 + $0x190] sm:$0xff]
  %v65 = vld [vmem:[%s0 + $0x198] sm:$0xff]
  %v66 = vld [vmem:[%s0 + $0x1a0] sm:$0xff]
  %v67 = vld [vmem:[%s0 + $0x1a8] sm:$0xff]
  %v68 = vld [vmem:[%s0 + $0x1b0] sm:$0xff]
  %v69 = vld [vmem:[%s0 + $0x1b8] sm:$0xff]
  %v70 = vld [vmem:[%s0 + $0x1c0] sm:$0xff]
  %v71 = vld [vmem:[%s0 + $0x1c8] sm:$0xff]
  %v72 = vld [vmem:[%s0 + $0x1d0] sm:$0xff]
  %v73 = vld [vmem:[%s0 + $0x1d8] sm:$0xff]
  %v74 = vld [vmem:[%s0 + $0x1e0] sm:$0xff]
  %v75 = vld [vmem:[%s0 + $0x1e8] sm:$0xff]
  %v76 = vld [vmem:[%s0 + $0x1f0] sm:$0xff]
  %v77 = vld [vmem:[%s0 + $0x1f8] sm:$0xff]
  %v78 = vld [vmem:[%s1] sm:$0x1]
  %v79 = vld [vmem:[%s2] sm:$0x1]
  %v80 = vlaneseq
  %v81 = vshrl.u32 %v80, 7
  %v82 = vadd.s32 %v81, 8
  %v83 = vadd.s32 %v81, 16
  %v84 = vadd.s32 %v81, 24
  %v85 = vadd.s32 %v81, 32
  %v86 = vadd.s32 %v81, 40
  %v87 = vadd.s32 %v81, 48
  %v88 = vadd.s32 %v81, 56
  %v89 = vadd.s32 %v81, 64
  %v90 = vadd.s32 %v81, 72
  %v91 = vadd.s32 %v81, 80
  %v92 = vadd.s32 %v81, 88
  %v93 = vadd.s32 %v81, 96
  %v94 = vadd.s32 %v81, 104
  %v95 = vadd.s32 %v81, 112
  %v96 = vadd.s32 %v81, 120
  %v97 = vand.u32 %v81, 31
  %v98 = vand.u32 %v82, 31
  %v99 = vand.u32 %v83, 31
  %v100 = vand.u32 %v84, 31
  %v101 = vand.u32 %v85, 31
  %v102 = vand.u32 %v86, 31
  %v103 = vand.u32 %v87, 31
  %v104 = vand.u32 %v88, 31
  %v105 = vand.u32 %v89, 31
  %v106 = vand.u32 %v90, 31
  %v107 = vand.u32 %v91, 31
  %v108 = vand.u32 %v92, 31
  %v109 = vand.u32 %v93, 31
  %v110 = vand.u32 %v94, 31
  %v111 = vand.u32 %v95, 31
  %v112 = vand.u32 %v96, 31
  %v113 = vlaneseq
  %v114 = vand.u32 %v113, 127
  %vm115 = vcmp.eq.s32.totalorder %v97, %v114
  %vm116 = vcmp.eq.s32.totalorder %v98, %v114
  %vm117 = vcmp.eq.s32.totalorder %v99, %v114
  %vm118 = vcmp.eq.s32.totalorder %v100, %v114
  %vm119 = vcmp.eq.s32.totalorder %v101, %v114
  %vm120 = vcmp.eq.s32.totalorder %v102, %v114
  %vm121 = vcmp.eq.s32.totalorder %v103, %v114
  %vm122 = vcmp.eq.s32.totalorder %v104, %v114
  %vm123 = vcmp.eq.s32.totalorder %v105, %v114
  %vm124 = vcmp.eq.s32.totalorder %v106, %v114
  %vm125 = vcmp.eq.s32.totalorder %v107, %v114
  %vm126 = vcmp.eq.s32.totalorder %v108, %v114
  %vm127 = vcmp.eq.s32.totalorder %v109, %v114
  %vm128 = vcmp.eq.s32.totalorder %v110, %v114
  %vm129 = vcmp.eq.s32.totalorder %v111, %v114
  %vm130 = vcmp.eq.s32.totalorder %v112, %v114
  %v131 = vsel %vm115, 1.0, 0.0
  %v132 = vsel %vm116, 1.0, 0.0
  %v133 = vsel %vm117, 1.0, 0.0
  %v134 = vsel %vm118, 1.0, 0.0
  %v135 = vsel %vm119, 1.0, 0.0
  %v136 = vsel %vm120, 1.0, 0.0
  %v137 = vsel %vm121, 1.0, 0.0
  %v138 = vsel %vm122, 1.0, 0.0
  %v139 = vsel %vm123, 1.0, 0.0
  %v140 = vsel %vm124, 1.0, 0.0
  %v141 = vsel %vm125, 1.0, 0.0
  %v142 = vsel %vm126, 1.0, 0.0
  %v143 = vsel %vm127, 1.0, 0.0
  %v144 = vsel %vm128, 1.0, 0.0
  %v145 = vsel %vm129, 1.0, 0.0
  %v146 = vsel %vm130, 1.0, 0.0
  %v147 = vand.u32 %v114, 31
  %vm148 = vcmp.eq.s32.totalorder %v147, %v81
  %vm149 = vcmp.eq.s32.totalorder %v147, %v82
  %vm150 = vcmp.eq.s32.totalorder %v147, %v83
  %vm151 = vcmp.eq.s32.totalorder %v147, %v84
  %v152 = vsel %vm148, 1.0, 0.0
  %v153 = vsel %vm149, 1.0, 0.0
  %v154 = vsel %vm150, 1.0, 0.0
  %v155 = vsel %vm151, 1.0, 0.0
  %v156 = vadd.f32 %v14, %v15
  %v157 = vadd.f32 %v156, %v16
  %v158 = vadd.f32 %v157, %v17
  %v159 = vadd.f32 %v158, %v18
  %v160 = vadd.f32 %v159, %v19
  %v161 = vadd.f32 %v160, %v20
  %v162 = vadd.f32 %v161, %v21
  %v163 = vadd.f32 %v162, %v22
  %v164 = vadd.f32 %v163, %v23
  %v165 = vadd.f32 %v164, %v24
  %v166 = vadd.f32 %v165, %v25
  %v167 = vadd.f32 %v166, %v26
  %v168 = vadd.f32 %v167, %v27
  %v169 = vadd.f32 %v168, %v28
  %v170 = vadd.f32 %v169, %v29
  %v171 = vadd.f32 %v170, %v30
  %v172 = vadd.f32 %v171, %v31
  %v173 = vadd.f32 %v172, %v32
  %v174 = vadd.f32 %v173, %v33
  %v175 = vadd.f32 %v174, %v34
  %v176 = vadd.f32 %v175, %v35
  %v177 = vadd.f32 %v176, %v36
  %v178 = vadd.f32 %v177, %v37
  %v179 = vadd.f32 %v178, %v38
  %v180 = vadd.f32 %v179, %v39
  %v181 = vadd.f32 %v180, %v40
  %v182 = vadd.f32 %v181, %v41
  %v183 = vadd.f32 %v182, %v42
  %v184 = vadd.f32 %v183, %v43
  %v185 = vadd.f32 %v184, %v44
  %v186 = vadd.f32 %v185, %v45
  %v187 = vadd.f32 %v186, %v46
  %v188 = vadd.f32 %v187, %v47
  %v189 = vadd.f32 %v188, %v48
  %v190 = vadd.f32 %v189, %v49
  %v191 = vadd.f32 %v190, %v50
  %v192 = vadd.f32 %v191, %v51
  %v193 = vadd.f32 %v192, %v52
  %v194 = vadd.f32 %v193, %v53
  %v195 = vadd.f32 %v194, %v54
  %v196 = vadd.f32 %v195, %v55
  %v197 = vadd.f32 %v196, %v56
  %v198 = vadd.f32 %v197, %v57
  %v199 = vadd.f32 %v198, %v58
  %v200 = vadd.f32 %v199, %v59
  %v201 = vadd.f32 %v200, %v60
  %v202 = vadd.f32 %v201, %v61
  %v203 = vadd.f32 %v202, %v62
  %v204 = vadd.f32 %v203, %v63
  %v205 = vadd.f32 %v204, %v64
  %v206 = vadd.f32 %v205, %v65
  %v207 = vadd.f32 %v206, %v66
  %v208 = vadd.f32 %v207, %v67
  %v209 = vadd.f32 %v208, %v68
  %v210 = vadd.f32 %v209, %v69
  %v211 = vadd.f32 %v210, %v70
  %v212 = vadd.f32 %v211, %v71
  %v213 = vadd.f32 %v212, %v72
  %v214 = vadd.f32 %v213, %v73
  %v215 = vadd.f32 %v214, %v74
  %v216 = vadd.f32 %v215, %v75
  %v217 = vadd.f32 %v216, %v76
  %v218 = vadd.f32 %v217, %v77
  %v219 = vrot.slane %v218, 4
  %v220 = vadd.f32 %v218, %v219
  %v221 = vrot.slane %v220, 2
  %v222 = vadd.f32 %v220, %v221
  %v223 = vrot.slane %v222, 1
  %v224 = vadd.f32 %v222, %v223
  %v225 = vmul.f32 %v14, %v14
  %v226 = vmul.f32 %v15, %v15
  %v227 = vmul.f32 %v16, %v16
  %v228 = vmul.f32 %v17, %v17
  %v229 = vmul.f32 %v18, %v18
  %v230 = vmul.f32 %v19, %v19
  %v231 = vmul.f32 %v20, %v20
  %v232 = vmul.f32 %v21, %v21
  %v233 = vmul.f32 %v22, %v22
  %v234 = vmul.f32 %v23, %v23
  %v235 = vmul.f32 %v24, %v24
  %v236 = vmul.f32 %v25, %v25
  %v237 = vmul.f32 %v26, %v26
  %v238 = vmul.f32 %v27, %v27
  %v239 = vmul.f32 %v28, %v28
  %v240 = vmul.f32 %v29, %v29
  %v241 = vmul.f32 %v30, %v30
  %v242 = vmul.f32 %v31, %v31
  %v243 = vmul.f32 %v32, %v32
  %v244 = vmul.f32 %v33, %v33
  %v245 = vmul.f32 %v34, %v34
  %v246 = vmul.f32 %v35, %v35
  %v247 = vmul.f32 %v36, %v36
  %v248 = vmul.f32 %v37, %v37
  %v249 = vmul.f32 %v38, %v38
  %v250 = vmul.f32 %v39, %v39
  %v251 = vmul.f32 %v40, %v40
  %v252 = vmul.f32 %v41, %v41
  %v253 = vmul.f32 %v42, %v42
  %v254 = vmul.f32 %v43, %v43
  %v255 = vmul.f32 %v44, %v44
  %v256 = vmul.f32 %v45, %v45
  %v257 = vmul.f32 %v46, %v46
  %v258 = vmul.f32 %v47, %v47
  %v259 = vmul.f32 %v48, %v48
  %v260 = vmul.f32 %v49, %v49
  %v261 = vmul.f32 %v50, %v50
  %v262 = vmul.f32 %v51, %v51
  %v263 = vmul.f32 %v52, %v52
  %v264 = vmul.f32 %v53, %v53
  %v265 = vmul.f32 %v54, %v54
  %v266 = vmul.f32 %v55, %v55
  %v267 = vmul.f32 %v56, %v56
  %v268 = vmul.f32 %v57, %v57
  %v269 = vmul.f32 %v58, %v58
  %v270 = vmul.f32 %v59, %v59
  %v271 = vmul.f32 %v60, %v60
  %v272 = vmul.f32 %v61, %v61
  %v273 = vmul.f32 %v62, %v62
  %v274 = vmul.f32 %v63, %v63
  %v275 = vmul.f32 %v64, %v64
  %v276 = vmul.f32 %v65, %v65
  %v277 = vmul.f32 %v66, %v66
  %v278 = vmul.f32 %v67, %v67
  %v279 = vmul.f32 %v68, %v68
  %v280 = vmul.f32 %v69, %v69
  %v281 = vmul.f32 %v70, %v70
  %v282 = vmul.f32 %v71, %v71
  %v283 = vmul.f32 %v72, %v72
  %v284 = vmul.f32 %v73, %v73
  %v285 = vmul.f32 %v74, %v74
  %v286 = vmul.f32 %v75, %v75
  %v287 = vmul.f32 %v76, %v76
  %v288 = vmul.f32 %v77, %v77
  %v289 = vadd.f32 %v225, %v226
  %v290 = vadd.f32 %v289, %v227
  %v291 = vadd.f32 %v290, %v228
  %v292 = vadd.f32 %v291, %v229
  %v293 = vadd.f32 %v292, %v230
  %v294 = vadd.f32 %v293, %v231
  %v295 = vadd.f32 %v294, %v232
  %v296 = vadd.f32 %v295, %v233
  %v297 = vadd.f32 %v296, %v234
  %v298 = vadd.f32 %v297, %v235
  %v299 = vadd.f32 %v298, %v236
  %v300 = vadd.f32 %v299, %v237
  %v301 = vadd.f32 %v300, %v238
  %v302 = vadd.f32 %v301, %v239
  %v303 = vadd.f32 %v302, %v240
  %v304 = vadd.f32 %v303, %v241
  %v305 = vadd.f32 %v304, %v242
  %v306 = vadd.f32 %v305, %v243
  %v307 = vadd.f32 %v306, %v244
  %v308 = vadd.f32 %v307, %v245
  %v309 = vadd.f32 %v308, %v246
  %v310 = vadd.f32 %v309, %v247
  %v311 = vadd.f32 %v310, %v248
  %v312 = vadd.f32 %v311, %v249
  %v313 = vadd.f32 %v312, %v250
  %v314 = vadd.f32 %v313, %v251
  %v315 = vadd.f32 %v314, %v252
  %v316 = vadd.f32 %v315, %v253
  %v317 = vadd.f32 %v316, %v254
  %v318 = vadd.f32 %v317, %v255
  %v319 = vadd.f32 %v318, %v256
  %v320 = vadd.f32 %v319, %v257
  %v321 = vadd.f32 %v320, %v258
  %v322 = vadd.f32 %v321, %v259
  %v323 = vadd.f32 %v322, %v260
  %v324 = vadd.f32 %v323, %v261
  %v325 = vadd.f32 %v324, %v262
  %v326 = vadd.f32 %v325, %v263
  %v327 = vadd.f32 %v326, %v264
  %v328 = vadd.f32 %v327, %v265
  %v329 = vadd.f32 %v328, %v266
  %v330 = vadd.f32 %v329, %v267
  %v331 = vadd.f32 %v330, %v268
  %v332 = vadd.f32 %v331, %v269
  %v333 = vadd.f32 %v332, %v270
  %v334 = vadd.f32 %v333, %v271
  %v335 = vadd.f32 %v334, %v272
  %v336 = vadd.f32 %v335, %v273
  %v337 = vadd.f32 %v336, %v274
  %v338 = vadd.f32 %v337, %v275
  %v339 = vadd.f32 %v338, %v276
  %v340 = vadd.f32 %v339, %v277
  %v341 = vadd.f32 %v340, %v278
  %v342 = vadd.f32 %v341, %v279
  %v343 = vadd.f32 %v342, %v280
  %v344 = vadd.f32 %v343, %v281
  %v345 = vadd.f32 %v344, %v282
  %v346 = vadd.f32 %v345, %v283
  %v347 = vadd.f32 %v346, %v284
  %v348 = vadd.f32 %v347, %v285
  %v349 = vadd.f32 %v348, %v286
  %v350 = vadd.f32 %v349, %v287
  %v351 = vadd.f32 %v350, %v288
  %v352 = vrot.slane %v351, 4
  %v353 = vadd.f32 %v351, %v352
  %v354 = vrot.slane %v353, 2
  %v355 = vadd.f32 %v353, %v354
  %v356 = vrot.slane %v355, 1
  %v357 = vadd.f32 %v355, %v356
  %vm358 = vcmask 1040384
  %v359 = vsel %vm358, %v224, %v357
  %360 = vmatprep.subr.mxu0 0.0
  %361 = vmatpush1.msra.mxu0 %v131
  %362 = vmatprep.subr.mxu0 0.0
  %363 = vmatpush1.msra.mxu0 %v132
  %364 = vmatprep.subr.mxu0 0.0
  %365 = vmatpush1.msra.mxu0 %v133
  %366 = vmatprep.subr.mxu0 0.0
  %367 = vmatpush1.msra.mxu0 %v134
  %368 = vmatprep.subr.mxu0 0.0
  %369 = vmatpush1.msra.mxu0 %v135
  %370 = vmatprep.subr.mxu0 0.0
  %371 = vmatpush1.msra.mxu0 %v136
  %372 = vmatprep.subr.mxu0 0.0
  %373 = vmatpush1.msra.mxu0 %v137
  %374 = vmatprep.subr.mxu0 0.0
  %375 = vmatpush1.msra.mxu0 %v138
  %376 = vmatprep.subr.mxu0 0.0
  %377 = vmatpush1.msra.mxu0 %v139
  %378 = vmatprep.subr.mxu0 0.0
  %379 = vmatpush1.msra.mxu0 %v140
  %380 = vmatprep.subr.mxu0 0.0
  %381 = vmatpush1.msra.mxu0 %v141
  %382 = vmatprep.subr.mxu0 0.0
  %383 = vmatpush1.msra.mxu0 %v142
  %384 = vmatprep.subr.mxu0 0.0
  %385 = vmatpush1.msra.mxu0 %v143
  %386 = vmatprep.subr.mxu0 0.0
  %387 = vmatpush1.msra.mxu0 %v144
  %388 = vmatprep.subr.mxu0 0.0
  %389 = vmatpush1.msra.mxu0 %v145
  %390 = vmatprep.subr.mxu0 0.0
  %391 = vmatpush1.msra.mxu0 %v146
  %392 = vmatprep.subr.mxu0 0.0
  %393 = vmatpush1.msra.mxu0 0.0
  %394 = vmatprep.subr.mxu0 0.0
  %395 = vmatpush1.msra.mxu0 0.0
  %396 = vmatprep.subr.mxu0 0.0
  %397 = vmatpush1.msra.mxu0 0.0
  %398 = vmatprep.subr.mxu0 0.0
  %399 = vmatpush1.msra.mxu0 0.0
  %400 = vmatprep.subr.mxu0 0.0
  %401 = vmatpush1.msra.mxu0 0.0
  %402 = vmatprep.subr.mxu0 0.0
  %403 = vmatpush1.msra.mxu0 0.0
  %404 = vmatprep.subr.mxu0 0.0
  %405 = vmatpush1.msra.mxu0 0.0
  %406 = vmatprep.subr.mxu0 0.0
  %407 = vmatpush1.msra.mxu0 0.0
  %408 = vmatprep.subr.mxu0 0.0
  %409 = vmatpush1.msra.mxu0 0.0
  %410 = vmatprep.subr.mxu0 0.0
  %411 = vmatpush1.msra.mxu0 0.0
  %412 = vmatprep.subr.mxu0 0.0
  %413 = vmatpush1.msra.mxu0 0.0
  %414 = vmatprep.subr.mxu0 0.0
  %415 = vmatpush1.msra.mxu0 0.0
  %416 = vmatprep.subr.mxu0 0.0
  %417 = vmatpush1.msra.mxu0 0.0
  %418 = vmatprep.subr.mxu0 0.0
  %419 = vmatpush1.msra.mxu0 0.0
  %420 = vmatprep.subr.mxu0 0.0
  %421 = vmatpush1.msra.mxu0 0.0
  %422 = vmatprep.subr.mxu0 0.0
  %423 = vmatpush1.msra.mxu0 0.0
  %424 = vmatprep.mubr.f32.mxu0 0.0
  %425 = vmatmul.mubr.f32.gmra.mrb[0].mxu0 %v359
  %v426 = vpop.f32.mrb[0].mxu0
  %v427 = vadd.f32 0.0, %v426
  %v428 = vpop.f32.mrb[0].mxu0
  %429 = vdwg.mxu0
  %v430 = vrcp.pop 2048.0
  %v431 = vmul.f32 %v427, %v430
  %v432 = vmul.f32 %v431, %v431
  %v434 = vrot.slane %v432, 7
  %v436 = vsub.f32 %v431, %v434
  %v437 = vmax.f32 %v436, 0.0
  %v438 = vadd.f32 %v437, 1e-05
  %v439 = vrsqrt.pop %v438
  %v442 = vunpack.c.l.s4 1966171168
  %v443 = vunpack.c.0.s8 %v442
  %v444 = vlaneseq
  %v445 = vshrl.u32 %v444, 7
  %v446 = vsub.s32 %v443, %v445
  %v447 = vrot.slane %v439, %v446
  %v448 = vcombine.high %v447, %v447
  %v450 = vunpack.c.l.s4 1966171168
  %v451 = vunpack.c.0.s8 %v450
  %v452 = vlaneseq
  %v453 = vshrl.u32 %v452, 7
  %v454 = vsub.s32 %v451, %v453
  %v455 = vrot.slane %v448, %v454
  %v457 = vmul.f32 %v78, %v455
  %v458 = vmul.f32 %v431, %v457
  %v459 = vsub.f32 %v79, %v458
  %v461 = vlaneseq
  %v462 = vshrl.u32 %v461, 7
  %v463 = vsub.s32 0, %v462
  %v464 = vrot.slane %v459, %v463
  %v466 = vsel %vm358, %v457, %v464
  %vm467 = vcmask 261120
  %v469 = vsel %vm467, %v466, 0
  %471 = vmatprep.subr.mxu0 0.0
  %472 = vmatpush1.msra.mxu0 %v152
  %473 = vmatprep.subr.mxu0 0.0
  %474 = vmatpush1.msra.mxu0 %v153
  %475 = vmatprep.subr.mxu0 0.0
  %476 = vmatpush1.msra.mxu0 %v154
  %477 = vmatprep.subr.mxu0 0.0
  %478 = vmatpush1.msra.mxu0 %v155
  %479 = vmatprep.subr.mxu0 0.0
  %480 = vmatpush1.msra.mxu0 0.0
  %481 = vmatprep.subr.mxu0 0.0
  %482 = vmatpush1.msra.mxu0 0.0
  %483 = vmatprep.subr.mxu0 0.0
  %484 = vmatpush1.msra.mxu0 0.0
  %485 = vmatprep.subr.mxu0 0.0
  %486 = vmatpush1.msra.mxu0 0.0
  %487 = vmatprep.subr.mxu0 0.0
  %488 = vmatpush1.msra.mxu0 0.0
  %489 = vmatprep.subr.mxu0 0.0
  %490 = vmatpush1.msra.mxu0 0.0
  %491 = vmatprep.subr.mxu0 0.0
  %492 = vmatpush1.msra.mxu0 0.0
  %493 = vmatprep.subr.mxu0 0.0
  %494 = vmatpush1.msra.mxu0 0.0
  %495 = vmatprep.subr.mxu0 0.0
  %496 = vmatpush1.msra.mxu0 0.0
  %497 = vmatprep.subr.mxu0 0.0
  %498 = vmatpush1.msra.mxu0 0.0
  %499 = vmatprep.subr.mxu0 0.0
  %500 = vmatpush1.msra.mxu0 0.0
  %501 = vmatprep.subr.mxu0 0.0
  %502 = vmatpush1.msra.mxu0 0.0
  %503 = vmatprep.subr.mxu0 0.0
  %504 = vmatpush1.msra.mxu0 0.0
  %505 = vmatprep.subr.mxu0 0.0
  %506 = vmatpush1.msra.mxu0 0.0
  %507 = vmatprep.subr.mxu0 0.0
  %508 = vmatpush1.msra.mxu0 0.0
  %509 = vmatprep.subr.mxu0 0.0
  %510 = vmatpush1.msra.mxu0 0.0
  %511 = vmatprep.subr.mxu0 0.0
  %512 = vmatpush1.msra.mxu0 0.0
  %513 = vmatprep.subr.mxu0 0.0
  %514 = vmatpush1.msra.mxu0 0.0
  %515 = vmatprep.subr.mxu0 0.0
  %516 = vmatpush1.msra.mxu0 0.0
  %517 = vmatprep.subr.mxu0 0.0
  %518 = vmatpush1.msra.mxu0 0.0
  %519 = vmatprep.subr.mxu0 0.0
  %520 = vmatpush1.msra.mxu0 0.0
  %521 = vmatprep.subr.mxu0 0.0
  %522 = vmatpush1.msra.mxu0 0.0
  %523 = vmatprep.subr.mxu0 0.0
  %524 = vmatpush1.msra.mxu0 0.0
  %525 = vmatprep.subr.mxu0 0.0
  %526 = vmatpush1.msra.mxu0 0.0
  %527 = vmatprep.subr.mxu0 0.0
  %528 = vmatpush1.msra.mxu0 0.0
  %529 = vmatprep.subr.mxu0 0.0
  %530 = vmatpush1.msra.mxu0 0.0
  %531 = vmatprep.subr.mxu0 0.0
  %532 = vmatpush1.msra.mxu0 0.0
  %533 = vmatprep.subr.mxu0 0.0
  %534 = vmatpush1.msra.mxu0 0.0
  %535 = vmatprep.mubr.f32.mxu0 0.0
  %536 = vmatmul.mubr.f32.gmra.mrb[0].mxu0 %v469
  %v537 = vpop.f32.mrb[0].mxu0
  %v538 = vadd.f32 0.0, %v537
  %v539 = vpop.f32.mrb[0].mxu0
  %540 = vdwg.mxu0
  %v541 = vlaneseq
  %v542 = vshrl.u32 %v541, 7
  %v543 = vsub.s32 0, %v542
  %v544 = vrot.slane %v538, %v543
  %v545 = vmul.f32 %v14, %v544
  %v546 = vmul.f32 %v15, %v544
  %v547 = vmul.f32 %v16, %v544
  %v548 = vmul.f32 %v17, %v544
  %v549 = vmul.f32 %v18, %v544
  %v550 = vmul.f32 %v19, %v544
  %v551 = vmul.f32 %v20, %v544
  %v552 = vmul.f32 %v21, %v544
  %v553 = vmul.f32 %v22, %v544
  %v554 = vmul.f32 %v23, %v544
  %v555 = vmul.f32 %v24, %v544
  %v556 = vmul.f32 %v25, %v544
  %v557 = vmul.f32 %v26, %v544
  %v558 = vmul.f32 %v27, %v544
  %v559 = vmul.f32 %v28, %v544
  %v560 = vmul.f32 %v29, %v544
  %v561 = vmul.f32 %v30, %v544
  %v562 = vmul.f32 %v31, %v544
  %v563 = vmul.f32 %v32, %v544
  %v564 = vmul.f32 %v33, %v544
  %v565 = vmul.f32 %v34, %v544
  %v566 = vmul.f32 %v35, %v544
  %v567 = vmul.f32 %v36, %v544
  %v568 = vmul.f32 %v37, %v544
  %v569 = vmul.f32 %v38, %v544
  %v570 = vmul.f32 %v39, %v544
  %v571 = vmul.f32 %v40, %v544
  %v572 = vmul.f32 %v41, %v544
  %v573 = vmul.f32 %v42, %v544
  %v574 = vmul.f32 %v43, %v544
  %v575 = vmul.f32 %v44, %v544
  %v576 = vmul.f32 %v45, %v544
  %v577 = vmul.f32 %v46, %v544
  %v578 = vmul.f32 %v47, %v544
  %v579 = vmul.f32 %v48, %v544
  %v580 = vmul.f32 %v49, %v544
  %v581 = vmul.f32 %v50, %v544
  %v582 = vmul.f32 %v51, %v544
  %v583 = vmul.f32 %v52, %v544
  %v584 = vmul.f32 %v53, %v544
  %v585 = vmul.f32 %v54, %v544
  %v586 = vmul.f32 %v55, %v544
  %v587 = vmul.f32 %v56, %v544
  %v588 = vmul.f32 %v57, %v544
  %v589 = vmul.f32 %v58, %v544
  %v590 = vmul.f32 %v59, %v544
  %v591 = vmul.f32 %v60, %v544
  %v592 = vmul.f32 %v61, %v544
  %v593 = vmul.f32 %v62, %v544
  %v594 = vmul.f32 %v63, %v544
  %v595 = vmul.f32 %v64, %v544
  %v596 = vmul.f32 %v65, %v544
  %v597 = vmul.f32 %v66, %v544
  %v598 = vmul.f32 %v67, %v544
  %v599 = vmul.f32 %v68, %v544
  %v600 = vmul.f32 %v69, %v544
  %v601 = vmul.f32 %v70, %v544
  %v602 = vmul.f32 %v71, %v544
  %v603 = vmul.f32 %v72, %v544
  %v604 = vmul.f32 %v73, %v544
  %v605 = vmul.f32 %v74, %v544
  %v606 = vmul.f32 %v75, %v544
  %v607 = vmul.f32 %v76, %v544
  %v608 = vmul.f32 %v77, %v544
  %v609 = vlaneseq
  %v610 = vshrl.u32 %v609, 7
  %v611 = vsub.s32 1, %v610
  %v612 = vrot.slane %v538, %v611
  %v613 = vadd.f32 %v545, %v612
  %v614 = vadd.f32 %v546, %v612
  %v615 = vadd.f32 %v547, %v612
  %v616 = vadd.f32 %v548, %v612
  %v617 = vadd.f32 %v549, %v612
  %v618 = vadd.f32 %v550, %v612
  %v619 = vadd.f32 %v551, %v612
  %v620 = vadd.f32 %v552, %v612
  %v621 = vadd.f32 %v553, %v612
  %v622 = vadd.f32 %v554, %v612
  %v623 = vadd.f32 %v555, %v612
  %v624 = vadd.f32 %v556, %v612
  %v625 = vadd.f32 %v557, %v612
  %v626 = vadd.f32 %v558, %v612
  %v627 = vadd.f32 %v559, %v612
  %v628 = vadd.f32 %v560, %v612
  %v629 = vadd.f32 %v561, %v612
  %v630 = vadd.f32 %v562, %v612
  %v631 = vadd.f32 %v563, %v612
  %v632 = vadd.f32 %v564, %v612
  %v633 = vadd.f32 %v565, %v612
  %v634 = vadd.f32 %v566, %v612
  %v635 = vadd.f32 %v567, %v612
  %v636 = vadd.f32 %v568, %v612
  %v637 = vadd.f32 %v569, %v612
  %v638 = vadd.f32 %v570, %v612
  %v639 = vadd.f32 %v571, %v612
  %v640 = vadd.f32 %v572, %v612
  %v641 = vadd.f32 %v573, %v612
  %v642 = vadd.f32 %v574, %v612
  %v643 = vadd.f32 %v575, %v612
  %v644 = vadd.f32 %v576, %v612
  %v645 = vadd.f32 %v577, %v612
  %v646 = vadd.f32 %v578, %v612
  %v647 = vadd.f32 %v579, %v612
  %v648 = vadd.f32 %v580, %v612
  %v649 = vadd.f32 %v581, %v612
  %v650 = vadd.f32 %v582, %v612
  %v651 = vadd.f32 %v583, %v612
  %v652 = vadd.f32 %v584, %v612
  %v653 = vadd.f32 %v585, %v612
  %v654 = vadd.f32 %v586, %v612
  %v655 = vadd.f32 %v587, %v612
  %v656 = vadd.f32 %v588, %v612
  %v657 = vadd.f32 %v589, %v612
  %v658 = vadd.f32 %v590, %v612
  %v659 = vadd.f32 %v591, %v612
  %v660 = vadd.f32 %v592, %v612
  %v661 = vadd.f32 %v593, %v612
  %v662 = vadd.f32 %v594, %v612
  %v663 = vadd.f32 %v595, %v612
  %v664 = vadd.f32 %v596, %v612
  %v665 = vadd.f32 %v597, %v612
  %v666 = vadd.f32 %v598, %v612
  %v667 = vadd.f32 %v599, %v612
  %v668 = vadd.f32 %v600, %v612
  %v669 = vadd.f32 %v601, %v612
  %v670 = vadd.f32 %v602, %v612
  %v671 = vadd.f32 %v603, %v612
  %v672 = vadd.f32 %v604, %v612
  %v673 = vadd.f32 %v605, %v612
  %v674 = vadd.f32 %v606, %v612
  %v675 = vadd.f32 %v607, %v612
  %v676 = vadd.f32 %v608, %v612
  %v677 = vmax.f32 %v613, 0.0
  %v678 = vmax.f32 %v614, 0.0
  %v679 = vmax.f32 %v615, 0.0
  %v680 = vmax.f32 %v616, 0.0
  %v681 = vmax.f32 %v617, 0.0
  %v682 = vmax.f32 %v618, 0.0
  %v683 = vmax.f32 %v619, 0.0
  %v684 = vmax.f32 %v620, 0.0
  %v685 = vmax.f32 %v621, 0.0
  %v686 = vmax.f32 %v622, 0.0
  %v687 = vmax.f32 %v623, 0.0
  %v688 = vmax.f32 %v624, 0.0
  %v689 = vmax.f32 %v625, 0.0
  %v690 = vmax.f32 %v626, 0.0
  %v691 = vmax.f32 %v627, 0.0
  %v692 = vmax.f32 %v628, 0.0
  %v693 = vmax.f32 %v629, 0.0
  %v694 = vmax.f32 %v630, 0.0
  %v695 = vmax.f32 %v631, 0.0
  %v696 = vmax.f32 %v632, 0.0
  %v697 = vmax.f32 %v633, 0.0
  %v698 = vmax.f32 %v634, 0.0
  %v699 = vmax.f32 %v635, 0.0
  %v700 = vmax.f32 %v636, 0.0
  %v701 = vmax.f32 %v637, 0.0
  %v702 = vmax.f32 %v638, 0.0
  %v703 = vmax.f32 %v639, 0.0
  %v704 = vmax.f32 %v640, 0.0
  %v705 = vmax.f32 %v641, 0.0
  %v706 = vmax.f32 %v642, 0.0
  %v707 = vmax.f32 %v643, 0.0
  %v708 = vmax.f32 %v644, 0.0
  %v709 = vmax.f32 %v645, 0.0
  %v710 = vmax.f32 %v646, 0.0
  %v711 = vmax.f32 %v647, 0.0
  %v712 = vmax.f32 %v648, 0.0
  %v713 = vmax.f32 %v649, 0.0
  %v714 = vmax.f32 %v650, 0.0
  %v715 = vmax.f32 %v651, 0.0
  %v716 = vmax.f32 %v652, 0.0
  %v717 = vmax.f32 %v653, 0.0
  %v718 = vmax.f32 %v654, 0.0
  %v719 = vmax.f32 %v655, 0.0
  %v720 = vmax.f32 %v656, 0.0
  %v721 = vmax.f32 %v657, 0.0
  %v722 = vmax.f32 %v658, 0.0
  %v723 = vmax.f32 %v659, 0.0
  %v724 = vmax.f32 %v660, 0.0
  %v725 = vmax.f32 %v661, 0.0
  %v726 = vmax.f32 %v662, 0.0
  %v727 = vmax.f32 %v663, 0.0
  %v728 = vmax.f32 %v664, 0.0
  %v729 = vmax.f32 %v665, 0.0
  %v730 = vmax.f32 %v666, 0.0
  %v731 = vmax.f32 %v667, 0.0
  %v732 = vmax.f32 %v668, 0.0
  %v733 = vmax.f32 %v669, 0.0
  %v734 = vmax.f32 %v670, 0.0
  %v735 = vmax.f32 %v671, 0.0
  %v736 = vmax.f32 %v672, 0.0
  %v737 = vmax.f32 %v673, 0.0
  %v738 = vmax.f32 %v674, 0.0
  %v739 = vmax.f32 %v675, 0.0
  %v740 = vmax.f32 %v676, 0.0
  %v741 = vpack.c.bf16 %v678, %v677
  %v742 = vpack.c.bf16 %v680, %v679
  %v743 = vpack.c.bf16 %v682, %v681
  %v744 = vpack.c.bf16 %v684, %v683
  %v745 = vpack.c.bf16 %v686, %v685
  %v746 = vpack.c.bf16 %v688, %v687
  %v747 = vpack.c.bf16 %v690, %v689
  %v748 = vpack.c.bf16 %v692, %v691
  %v749 = vpack.c.bf16 %v694, %v693
  %v750 = vpack.c.bf16 %v696, %v695
  %v751 = vpack.c.bf16 %v698, %v697
  %v752 = vpack.c.bf16 %v700, %v699
  %v753 = vpack.c.bf16 %v702, %v701
  %v754 = vpack.c.bf16 %v704, %v703
  %v755 = vpack.c.bf16 %v706, %v705
  %v756 = vpack.c.bf16 %v708, %v707
  %v757 = vpack.c.bf16 %v710, %v709
  %v758 = vpack.c.bf16 %v712, %v711
  %v759 = vpack.c.bf16 %v714, %v713
  %v760 = vpack.c.bf16 %v716, %v715
  %v761 = vpack.c.bf16 %v718, %v717
  %v762 = vpack.c.bf16 %v720, %v719
  %v763 = vpack.c.bf16 %v722, %v721
  %v764 = vpack.c.bf16 %v724, %v723
  %v765 = vpack.c.bf16 %v726, %v725
  %v766 = vpack.c.bf16 %v728, %v727
  %v767 = vpack.c.bf16 %v730, %v729
  %v768 = vpack.c.bf16 %v732, %v731
  %v769 = vpack.c.bf16 %v734, %v733
  %v770 = vpack.c.bf16 %v736, %v735
  %v771 = vpack.c.bf16 %v738, %v737
  %v772 = vpack.c.bf16 %v740, %v739
  %v805 = vunpack.c.l.b16 %v741
  %v806 = vunpack.c.h.b16 %v741
  %v807 = vunpack.c.l.b16 %v742
  %v808 = vunpack.c.h.b16 %v742
  %v809 = vunpack.c.l.b16 %v743
  %v810 = vunpack.c.h.b16 %v743
  %v811 = vunpack.c.l.b16 %v744
  %v812 = vunpack.c.h.b16 %v744
  %v813 = vunpack.c.l.b16 %v745
  %v814 = vunpack.c.h.b16 %v745
  %v815 = vunpack.c.l.b16 %v746
  %v816 = vunpack.c.h.b16 %v746
  %v817 = vunpack.c.l.b16 %v747
  %v818 = vunpack.c.h.b16 %v747
  %v819 = vunpack.c.l.b16 %v748
  %v820 = vunpack.c.h.b16 %v748
  %v821 = vunpack.c.l.b16 %v749
  %v822 = vunpack.c.h.b16 %v749
  %v823 = vunpack.c.l.b16 %v750
  %v824 = vunpack.c.h.b16 %v750
  %v825 = vunpack.c.l.b16 %v751
  %v826 = vunpack.c.h.b16 %v751
  %v827 = vunpack.c.l.b16 %v752
  %v828 = vunpack.c.h.b16 %v752
  %v829 = vunpack.c.l.b16 %v753
  %v830 = vunpack.c.h.b16 %v753
  %v831 = vunpack.c.l.b16 %v754
  %v832 = vunpack.c.h.b16 %v754
  %v833 = vunpack.c.l.b16 %v755
  %v834 = vunpack.c.h.b16 %v755
  %v835 = vunpack.c.l.b16 %v756
  %v836 = vunpack.c.h.b16 %v756
  %v837 = vunpack.c.l.b16 %v757
  %v838 = vunpack.c.h.b16 %v757
  %v839 = vunpack.c.l.b16 %v758
  %v840 = vunpack.c.h.b16 %v758
  %v841 = vunpack.c.l.b16 %v759
  %v842 = vunpack.c.h.b16 %v759
  %v843 = vunpack.c.l.b16 %v760
  %v844 = vunpack.c.h.b16 %v760
  %v845 = vunpack.c.l.b16 %v761
  %v846 = vunpack.c.h.b16 %v761
  %v847 = vunpack.c.l.b16 %v762
  %v848 = vunpack.c.h.b16 %v762
  %v849 = vunpack.c.l.b16 %v763
  %v850 = vunpack.c.h.b16 %v763
  %v851 = vunpack.c.l.b16 %v764
  %v852 = vunpack.c.h.b16 %v764
  %v853 = vunpack.c.l.b16 %v765
  %v854 = vunpack.c.h.b16 %v765
  %v855 = vunpack.c.l.b16 %v766
  %v856 = vunpack.c.h.b16 %v766
  %v857 = vunpack.c.l.b16 %v767
  %v858 = vunpack.c.h.b16 %v767
  %v859 = vunpack.c.l.b16 %v768
  %v860 = vunpack.c.h.b16 %v768
  %v861 = vunpack.c.l.b16 %v769
  %v862 = vunpack.c.h.b16 %v769
  %v863 = vunpack.c.l.b16 %v770
  %v864 = vunpack.c.h.b16 %v770
  %v865 = vunpack.c.l.b16 %v771
  %v866 = vunpack.c.h.b16 %v771
  %v867 = vunpack.c.l.b16 %v772
  %v868 = vunpack.c.h.b16 %v772
  %v869 = vpack.c.b16 %v805, %v805
  %v870 = vpack.c.b16 %v806, %v806
  %v871 = vpack.c.b16 %v807, %v807
  %v872 = vpack.c.b16 %v808, %v808
  %v873 = vpack.c.b16 %v809, %v809
  %v874 = vpack.c.b16 %v810, %v810
  %v875 = vpack.c.b16 %v811, %v811
  %v876 = vpack.c.b16 %v812, %v812
  %v877 = vpack.c.b16 %v813, %v813
  %v878 = vpack.c.b16 %v814, %v814
  %v879 = vpack.c.b16 %v815, %v815
  %v880 = vpack.c.b16 %v816, %v816
  %v881 = vpack.c.b16 %v817, %v817
  %v882 = vpack.c.b16 %v818, %v818
  %v883 = vpack.c.b16 %v819, %v819
  %v884 = vpack.c.b16 %v820, %v820
  %v885 = vpack.c.b16 %v821, %v821
  %v886 = vpack.c.b16 %v822, %v822
  %v887 = vpack.c.b16 %v823, %v823
  %v888 = vpack.c.b16 %v824, %v824
  %v889 = vpack.c.b16 %v825, %v825
  %v890 = vpack.c.b16 %v826, %v826
  %v891 = vpack.c.b16 %v827, %v827
  %v892 = vpack.c.b16 %v828, %v828
  %v893 = vpack.c.b16 %v829, %v829
  %v894 = vpack.c.b16 %v830, %v830
  %v895 = vpack.c.b16 %v831, %v831
  %v896 = vpack.c.b16 %v832, %v832
  %v897 = vpack.c.b16 %v833, %v833
  %v898 = vpack.c.b16 %v834, %v834
  %v899 = vpack.c.b16 %v835, %v835
  %v900 = vpack.c.b16 %v836, %v836
  %v901 = vpack.c.b16 %v837, %v837
  %v902 = vpack.c.b16 %v838, %v838
  %v903 = vpack.c.b16 %v839, %v839
  %v904 = vpack.c.b16 %v840, %v840
  %v905 = vpack.c.b16 %v841, %v841
  %v906 = vpack.c.b16 %v842, %v842
  %v907 = vpack.c.b16 %v843, %v843
  %v908 = vpack.c.b16 %v844, %v844
  %v909 = vpack.c.b16 %v845, %v845
  %v910 = vpack.c.b16 %v846, %v846
  %v911 = vpack.c.b16 %v847, %v847
  %v912 = vpack.c.b16 %v848, %v848
  %v913 = vpack.c.b16 %v849, %v849
  %v914 = vpack.c.b16 %v850, %v850
  %v915 = vpack.c.b16 %v851, %v851
  %v916 = vpack.c.b16 %v852, %v852
  %v917 = vpack.c.b16 %v853, %v853
  %v918 = vpack.c.b16 %v854, %v854
  %v919 = vpack.c.b16 %v855, %v855
  %v920 = vpack.c.b16 %v856, %v856
  %v921 = vpack.c.b16 %v857, %v857
  %v922 = vpack.c.b16 %v858, %v858
  %v923 = vpack.c.b16 %v859, %v859
  %v924 = vpack.c.b16 %v860, %v860
  %v925 = vpack.c.b16 %v861, %v861
  %v926 = vpack.c.b16 %v862, %v862
  %v927 = vpack.c.b16 %v863, %v863
  %v928 = vpack.c.b16 %v864, %v864
  %v929 = vpack.c.b16 %v865, %v865
  %v930 = vpack.c.b16 %v866, %v866
  %v931 = vpack.c.b16 %v867, %v867
  %v932 = vpack.c.b16 %v868, %v868
  %997 = vst [vmem:[%s3] sm:$0xf] %v869
  %998 = vst [vmem:[%s3 + $0x4] sm:$0xf] %v870
  %999 = vst [vmem:[%s3 + $0x8] sm:$0xf] %v871
  %1000 = vst [vmem:[%s3 + $0xc] sm:$0xf] %v872
  %1001 = vst [vmem:[%s3 + $0x10] sm:$0xf] %v873
  %1002 = vst [vmem:[%s3 + $0x14] sm:$0xf] %v874
  %1003 = vst [vmem:[%s3 + $0x18] sm:$0xf] %v875
  %1004 = vst [vmem:[%s3 + $0x1c] sm:$0xf] %v876
  %1005 = vst [vmem:[%s3 + $0x20] sm:$0xf] %v877
  %1006 = vst [vmem:[%s3 + $0x24] sm:$0xf] %v878
  %1007 = vst [vmem:[%s3 + $0x28] sm:$0xf] %v879
  %1008 = vst [vmem:[%s3 + $0x2c] sm:$0xf] %v880
  %1009 = vst [vmem:[%s3 + $0x30] sm:$0xf] %v881
  %1010 = vst [vmem:[%s3 + $0x34] sm:$0xf] %v882
  %1011 = vst [vmem:[%s3 + $0x38] sm:$0xf] %v883
  %1012 = vst [vmem:[%s3 + $0x3c] sm:$0xf] %v884
  %1013 = vst [vmem:[%s3 + $0x40] sm:$0xf] %v885
  %1014 = vst [vmem:[%s3 + $0x44] sm:$0xf] %v886
  %1015 = vst [vmem:[%s3 + $0x48] sm:$0xf] %v887
  %1016 = vst [vmem:[%s3 + $0x4c] sm:$0xf] %v888
  %1017 = vst [vmem:[%s3 + $0x50] sm:$0xf] %v889
  %1018 = vst [vmem:[%s3 + $0x54] sm:$0xf] %v890
  %1019 = vst [vmem:[%s3 + $0x58] sm:$0xf] %v891
  %1020 = vst [vmem:[%s3 + $0x5c] sm:$0xf] %v892
  %1021 = vst [vmem:[%s3 + $0x60] sm:$0xf] %v893
  %1022 = vst [vmem:[%s3 + $0x64] sm:$0xf] %v894
  %1023 = vst [vmem:[%s3 + $0x68] sm:$0xf] %v895
  %1024 = vst [vmem:[%s3 + $0x6c] sm:$0xf] %v896
  %1025 = vst [vmem:[%s3 + $0x70] sm:$0xf] %v897
  %1026 = vst [vmem:[%s3 + $0x74] sm:$0xf] %v898
  %1027 = vst [vmem:[%s3 + $0x78] sm:$0xf] %v899
  %1028 = vst [vmem:[%s3 + $0x7c] sm:$0xf] %v900
  %1029 = vst [vmem:[%s3 + $0x80] sm:$0xf] %v901
  %1030 = vst [vmem:[%s3 + $0x84] sm:$0xf] %v902
  %1031 = vst [vmem:[%s3 + $0x88] sm:$0xf] %v903
  %1032 = vst [vmem:[%s3 + $0x8c] sm:$0xf] %v904
  %1033 = vst [vmem:[%s3 + $0x90] sm:$0xf] %v905
  %1034 = vst [vmem:[%s3 + $0x94] sm:$0xf] %v906
  %1035 = vst [vmem:[%s3 + $0x98] sm:$0xf] %v907
  %1036 = vst [vmem:[%s3 + $0x9c] sm:$0xf] %v908
  %1037 = vst [vmem:[%s3 + $0xa0] sm:$0xf] %v909
  %1038 = vst [vmem:[%s3 + $0xa4] sm:$0xf] %v910
  %1039 = vst [vmem:[%s3 + $0xa8] sm:$0xf] %v911
  %1040 = vst [vmem:[%s3 + $0xac] sm:$0xf] %v912
  %1041 = vst [vmem:[%s3 + $0xb0] sm:$0xf] %v913
  %1042 = vst [vmem:[%s3 + $0xb4] sm:$0xf] %v914
  %1043 = vst [vmem:[%s3 + $0xb8] sm:$0xf] %v915
  %1044 = vst [vmem:[%s3 + $0xbc] sm:$0xf] %v916
  %1045 = vst [vmem:[%s3 + $0xc0] sm:$0xf] %v917
  %1046 = vst [vmem:[%s3 + $0xc4] sm:$0xf] %v918
  %1047 = vst [vmem:[%s3 + $0xc8] sm:$0xf] %v919
  %1048 = vst [vmem:[%s3 + $0xcc] sm:$0xf] %v920
  %1049 = vst [vmem:[%s3 + $0xd0] sm:$0xf] %v921
  %1050 = vst [vmem:[%s3 + $0xd4] sm:$0xf] %v922
  %1051 = vst [vmem:[%s3 + $0xd8] sm:$0xf] %v923
  %1052 = vst [vmem:[%s3 + $0xdc] sm:$0xf] %v924
  %1053 = vst [vmem:[%s3 + $0xe0] sm:$0xf] %v925
  %1054 = vst [vmem:[%s3 + $0xe4] sm:$0xf] %v926
  %1055 = vst [vmem:[%s3 + $0xe8] sm:$0xf] %v927
  %1056 = vst [vmem:[%s3 + $0xec] sm:$0xf] %v928
  %1057 = vst [vmem:[%s3 + $0xf0] sm:$0xf] %v929
  %1058 = vst [vmem:[%s3 + $0xf4] sm:$0xf] %v930
  %1059 = vst [vmem:[%s3 + $0xf8] sm:$0xf] %v931
  %1060 = vst [vmem:[%s3 + $0xfc] sm:$0xf] %v932
  // Predicated region
  $region14: #{generator_forward.15} parent=0 // pred_check
    _
  $region15: #{generator_forward.15} parent=0 // pred_check_branch
    %1062 = sbr.rel (0) target = $region17
  $region16: #{generator_forward.15} parent=0 // pred_region
    _
  $region17: #{generator_forward.15} parent=0 // pred_fallthru
    _
  // Predicated region
  $region18: #{generator_forward.15} parent=0 // pred_check
    _
  $region19: #{generator_forward.15} parent=0 // pred_check_branch
    %1064 = sbr.rel (0) target = $region21
  $region20: #{generator_forward.15} parent=0 // pred_region
    _
  $region21: #{generator_forward.15} parent=0 // pred_fallthru
    _

// kernel: generator_forward.17
$region0: #{generator_forward.17}
  #allocation0 [shape = 'u32[]', space=smem, size = 0x4, offset = 0x4, fixed_abs, tag = 'smem constant byte address 0x4 - core index']
  #allocation1 [shape = 'u32[144,128]{1,0:T(1,128)}', space=vmem, size = 0x12000, scoped, tag = 'internal scratch']
  %s0 = inlined_call_operand.vmem [shape: f32[2048,128], index: 0, kind: input, shape index: {}]
  %s1 = inlined_call_operand.vmem [shape: f32[2048,128], index: 1, kind: output, shape index: {}]
  %s2 = sld [smem:[#allocation0]]
  $region37: #{generator_forward.17} parent=0
    _
  %s4 = ssub.s32 1, %s2
  %s5 = scalar_select 0, %s4, %s2
  loop: start=0, step=1, limit=4
  $region2: #{generator_forward.17} parent=0 // loop_pre_header
    _
  $region3: #{generator_forward.17} parent=0 // loop_header
    %s7 = sphi 0, %s11
    %p8 = scmp.ge.s32.totalorder %s7, 4
    %s17 = sphi 0, %s19
    %s20 = sphi 0, %s17
    %s21 = sphi 0, %s20
    %s37 = sphi 0, %s21
    %s43 = sphi 0, %s45
    %s46 = sphi 0, %s43
    %s47 = sphi 0, %s46
    %s63 = sphi 0, %s47
  $region4: #{generator_forward.17} parent=0 // loop_header_branch
    %10 = sbr.rel (%p8) target = $region8
  $region5: #{generator_forward.17} parent=0 // loop_body
    %s12 = ssub.s32 %s7, 1
    %s13 = ssub.s32 %s7, 2
    %s14 = sadd.s32 %s7, 1
    %s15 = ssub.s32 %s7, %s14
    %p16 = scmp.eq.s32.totalorder %s15, 0
    %s18 = sadd.s32 %s17, 1
    %s19 = scalar_select %p16, %s17, %s18
    %p22 = pneg %p16
    %p23 = scmp.eq.s32.totalorder %s7, 1
    %p24 = por %p22, %p23
    %p25 = scmp.ne.s32.totalorder %s17, %s20
    %p26 = scmp.eq.s32.totalorder %s7, 0
    %p27 = por %p25, %p26
    %p28 = scmp.ne.s32.totalorder %s17, %s20
    %p29 = scmp.eq.s32.totalorder %s12, 1
    %p30 = por %p28, %p29
    %p31 = scmp.ne.s32.totalorder %s20, %s21
    %p32 = scmp.eq.s32.totalorder %s12, 0
    %p33 = por %p31, %p32
    %p34 = scmp.ne.s32.totalorder %s20, %s21
    %p35 = scmp.eq.s32.totalorder %s13, 1
    %p36 = por %p34, %p35
    %p38 = scmp.ne.s32.totalorder %s21, %s37
    %p39 = scmp.eq.s32.totalorder %s13, 0
    %p40 = por %p38, %p39
    %s41 = ssub.s32 %s7, %s14
    %p42 = scmp.eq.s32.totalorder %s41, 0
    %s44 = sadd.s32 %s43, 1
    %s45 = scalar_select %p42, %s43, %s44
    %p48 = pneg %p42
    %p49 = scmp.eq.s32.totalorder %s7, 1
    %p50 = por %p48, %p49
    %p51 = scmp.ne.s32.totalorder %s43, %s46
    %p52 = scmp.eq.s32.totalorder %s7, 0
    %p53 = por %p51, %p52
    %p54 = scmp.ne.s32.totalorder %s43, %s46
    %p55 = scmp.eq.s32.totalorder %s12, 1
    %p56 = por %p54, %p55
    %p57 = scmp.ne.s32.totalorder %s46, %s47
    %p58 = scmp.eq.s32.totalorder %s12, 0
    %p59 = por %p57, %p58
    %p60 = scmp.ne.s32.totalorder %s46, %s47
    %p61 = scmp.eq.s32.totalorder %s13, 1
    %p62 = por %p60, %p61
    %p64 = scmp.ne.s32.totalorder %s47, %s63
    %p65 = scmp.eq.s32.totalorder %s13, 0
    %p66 = por %p64, %p65
    %p67 = scmp.le.s32.totalorder 1, %s7
    %p68 = scmp.lt.s32.totalorder %s7, 3
    %p69 = pnand %p67, %p68
    %p70 = pneg %p69
    // Predicated region
    $region9: #{generator_forward.17} parent=5 // pred_check
      _
    $region10: #{generator_forward.17} parent=5 // pred_check_branch
      %72 = sbr.rel (%p69) target = $region12
    $region11: #{generator_forward.17} parent=5 // pred_region
      %s73 = ssub.s32 %s7, 1
    $region12: #{generator_forward.17} parent=5 // pred_fallthru
      _
    %p74 = scmp.lt.s32.totalorder %s7, 2
    // Predicated region
    $region13: #{generator_forward.17} parent=5 // pred_check
      %p75 = pneg %p74
    $region14: #{generator_forward.17} parent=5 // pred_check_branch
      %77 = sbr.rel (%p75) target = $region16
    $region15: #{generator_forward.17} parent=5 // pred_region
      // Predicated region
      $region17: #{generator_forward.17} parent=15 // pred_check
        %p78 = pneg %p27
      $region18: #{generator_forward.17} parent=15 // pred_check_branch
        %80 = sbr.rel (%p78) target = $region20
      $region19: #{generator_forward.17} parent=15 // pred_region
        %s81 = smul.u32 128, %s7
        %p82 = scmp.lt.s32.totalorder %s81, 255
        %s83 = scalar_select %p82, %s81, 255
        %s84 = smul.addr %s83, 8
        %s85 = scalar_lea.vmem %s0, %s84
        %s86 = smul.u32 128, %s7
      $region20: #{generator_forward.17} parent=15 // pred_fallthru
        _
    $region16: #{generator_forward.17} parent=5 // pred_fallthru
      _
    %p87 = scmp.le.s32.totalorder 1, %s7
    %p88 = scmp.lt.s32.totalorder %s7, 3
    %p89 = pnand %p87, %p88
    %p90 = pneg %p89
    // Predicated region
    $region21: #{generator_forward.17} parent=5 // pred_check
      _
    $region22: #{generator_forward.17} parent=5 // pred_check_branch
      %92 = sbr.rel (%p89) target = $region24
    $region23: #{generator_forward.17} parent=5 // pred_region
      %s93 = ssub.s32 %s7, 1
      %s94 = smul.u32 128, %s12
      %p95 = scmp.lt.s32.totalorder %s94, 255
      %s96 = scalar_select %p95, %s94, 255
      %s97 = smul.addr %s96, 8
      %s98 = scalar_lea.vmem %s0, %s97
      %p99 = pneg %p33
      %p100 = pneg %p30
      %p101 = pneg %p59
      %p102 = pneg %p56
      %s103 = smul.u32 128, %s12
      %p104 = scmp.lt.s32.totalorder %s103, 255
      %s105 = scalar_select %p104, %s103, 255
      %s106 = smul.addr %s105, 8
      %s107 = scalar_lea.vmem %s1, %s106
      %s108 = smul.u32 128, %s12
      %p109 = scmp.lt.s32.totalorder %s108, 255
      %s110 = scalar_select %p109, %s108, 255
      %s111 = smul.addr %s110, 8
      %s112 = scalar_lea.vmem %s0, %s111
      %s113 = smul.u32 128, %s12
      %s114 = smul.u32 128, %s12
      %p115 = scmp.lt.s32.totalorder %s114, 255
      %s116 = scalar_select %p115, %s114, 255
      %s117 = smul.addr %s116, 8
      %s118 = scalar_lea.vmem %s1, %s117
      %s119 = smul.u32 128, %s12
      %v120 = vld [vmem:[%s112] sm:$0xff]
      %v121 = vld [vmem:[%s112 + $0x8] sm:$0xff]
      %v122 = vld [vmem:[%s112 + $0x10] sm:$0xff]
      %v123 = vld [vmem:[%s112 + $0x18] sm:$0xff]
      %v124 = vld [vmem:[%s112 + $0x20] sm:$0xff]
      %v125 = vld [vmem:[%s112 + $0x28] sm:$0xff]
      %v126 = vld [vmem:[%s112 + $0x30] sm:$0xff]
      %v127 = vld [vmem:[%s112 + $0x38] sm:$0xff]
      %v128 = vld [vmem:[%s112 + $0x40] sm:$0xff]
      %v129 = vld [vmem:[%s112 + $0x48] sm:$0xff]
      %v130 = vld [vmem:[%s112 + $0x50] sm:$0xff]
      %v131 = vld [vmem:[%s112 + $0x58] sm:$0xff]
      %v132 = vld [vmem:[%s112 + $0x60] sm:$0xff]
      %v133 = vld [vmem:[%s112 + $0x68] sm:$0xff]
      %v134 = vld [vmem:[%s112 + $0x70] sm:$0xff]
      %v135 = vld [vmem:[%s112 + $0x78] sm:$0xff]
      %v136 = vld [vmem:[%s112 + $0x80] sm:$0xff]
      %v137 = vld [vmem:[%s112 + $0x88] sm:$0xff]
      %v138 = vld [vmem:[%s112 + $0x90] sm:$0xff]
      %v139 = vld [vmem:[%s112 + $0x98] sm:$0xff]
      %v140 = vld [vmem:[%s112 + $0xa0] sm:$0xff]
      %v141 = vld [vmem:[%s112 + $0xa8] sm:$0xff]
      %v142 = vld [vmem:[%s112 + $0xb0] sm:$0xff]
      %v143 = vld [vmem:[%s112 + $0xb8] sm:$0xff]
      %v144 = vld [vmem:[%s112 + $0xc0] sm:$0xff]
      %v145 = vld [vmem:[%s112 + $0xc8] sm:$0xff]
      %v146 = vld [vmem:[%s112 + $0xd0] sm:$0xff]
      %v147 = vld [vmem:[%s112 + $0xd8] sm:$0xff]
      %v148 = vld [vmem:[%s112 + $0xe0] sm:$0xff]
      %v149 = vld [vmem:[%s112 + $0xe8] sm:$0xff]
      %v150 = vld [vmem:[%s112 + $0xf0] sm:$0xff]
      %v151 = vld [vmem:[%s112 + $0xf8] sm:$0xff]
      %v152 = vld [vmem:[%s112 + $0x100] sm:$0xff]
      %v153 = vld [vmem:[%s112 + $0x108] sm:$0xff]
      %v154 = vld [vmem:[%s112 + $0x110] sm:$0xff]
      %v155 = vld [vmem:[%s112 + $0x118] sm:$0xff]
      %v156 = vld [vmem:[%s112 + $0x120] sm:$0xff]
      %v157 = vld [vmem:[%s112 + $0x128] sm:$0xff]
      %v158 = vld [vmem:[%s112 + $0x130] sm:$0xff]
      %v159 = vld [vmem:[%s112 + $0x138] sm:$0xff]
      %v160 = vld [vmem:[%s112 + $0x140] sm:$0xff]
      %v161 = vld [vmem:[%s112 + $0x148] sm:$0xff]
      %v162 = vld [vmem:[%s112 + $0x150] sm:$0xff]
      %v163 = vld [vmem:[%s112 + $0x158] sm:$0xff]
      %v164 = vld [vmem:[%s112 + $0x160] sm:$0xff]
      %v165 = vld [vmem:[%s112 + $0x168] sm:$0xff]
      %v166 = vld [vmem:[%s112 + $0x170] sm:$0xff]
      %v167 = vld [vmem:[%s112 + $0x178] sm:$0xff]
      %v168 = vld [vmem:[%s112 + $0x180] sm:$0xff]
      %v169 = vld [vmem:[%s112 + $0x188] sm:$0xff]
      %v170 = vld [vmem:[%s112 + $0x190] sm:$0xff]
      %v171 = vld [vmem:[%s112 + $0x198] sm:$0xff]
      %v172 = vld [vmem:[%s112 + $0x1a0] sm:$0xff]
      %v173 = vld [vmem:[%s112 + $0x1a8] sm:$0xff]
      %v174 = vld [vmem:[%s112 + $0x1b0] sm:$0xff]
      %v175 = vld [vmem:[%s112 + $0x1b8] sm:$0xff]
      %v176 = vld [vmem:[%s112 + $0x1c0] sm:$0xff]
      %v177 = vld [vmem:[%s112 + $0x1c8] sm:$0xff]
      %v178 = vld [vmem:[%s112 + $0x1d0] sm:$0xff]
      %v179 = vld [vmem:[%s112 + $0x1d8] sm:$0xff]
      %v180 = vld [vmem:[%s112 + $0x1e0] sm:$0xff]
      %v181 = vld [vmem:[%s112 + $0x1e8] sm:$0xff]
      %v182 = vld [vmem:[%s112 + $0x1f0] sm:$0xff]
      %v183 = vld [vmem:[%s112 + $0x1f8] sm:$0xff]
      %v184 = vld [vmem:[%s112 + $0x200] sm:$0xff]
      %v185 = vld [vmem:[%s112 + $0x208] sm:$0xff]
      %v186 = vld [vmem:[%s112 + $0x210] sm:$0xff]
      %v187 = vld [vmem:[%s112 + $0x218] sm:$0xff]
      %v188 = vld [vmem:[%s112 + $0x220] sm:$0xff]
      %v189 = vld [vmem:[%s112 + $0x228] sm:$0xff]
      %v190 = vld [vmem:[%s112 + $0x230] sm:$0xff]
      %v191 = vld [vmem:[%s112 + $0x238] sm:$0xff]
      %v192 = vld [vmem:[%s112 + $0x240] sm:$0xff]
      %v193 = vld [vmem:[%s112 + $0x248] sm:$0xff]
      %v194 = vld [vmem:[%s112 + $0x250] sm:$0xff]
      %v195 = vld [vmem:[%s112 + $0x258] sm:$0xff]
      %v196 = vld [vmem:[%s112 + $0x260] sm:$0xff]
      %v197 = vld [vmem:[%s112 + $0x268] sm:$0xff]
      %v198 = vld [vmem:[%s112 + $0x270] sm:$0xff]
      %v199 = vld [vmem:[%s112 + $0x278] sm:$0xff]
      %v200 = vld [vmem:[%s112 + $0x280] sm:$0xff]
      %v201 = vld [vmem:[%s112 + $0x288] sm:$0xff]
      %v202 = vld [vmem:[%s112 + $0x290] sm:$0xff]
      %v203 = vld [vmem:[%s112 + $0x298] sm:$0xff]
      %v204 = vld [vmem:[%s112 + $0x2a0] sm:$0xff]
      %v205 = vld [vmem:[%s112 + $0x2a8] sm:$0xff]
      %v206 = vld [vmem:[%s112 + $0x2b0] sm:$0xff]
      %v207 = vld [vmem:[%s112 + $0x2b8] sm:$0xff]
      %v208 = vld [vmem:[%s112 + $0x2c0] sm:$0xff]
      %v209 = vld [vmem:[%s112 + $0x2c8] sm:$0xff]
      %v210 = vld [vmem:[%s112 + $0x2d0] sm:$0xff]
      %v211 = vld [vmem:[%s112 + $0x2d8] sm:$0xff]
      %v212 = vld [vmem:[%s112 + $0x2e0] sm:$0xff]
      %v213 = vld [vmem:[%s112 + $0x2e8] sm:$0xff]
      %v214 = vld [vmem:[%s112 + $0x2f0] sm:$0xff]
      %v215 = vld [vmem:[%s112 + $0x2f8] sm:$0xff]
      %v216 = vld [vmem:[%s112 + $0x300] sm:$0xff]
      %v217 = vld [vmem:[%s112 + $0x308] sm:$0xff]
      %v218 = vld [vmem:[%s112 + $0x310] sm:$0xff]
      %v219 = vld [vmem:[%s112 + $0x318] sm:$0xff]
      %v220 = vld [vmem:[%s112 + $0x320] sm:$0xff]
      %v221 = vld [vmem:[%s112 + $0x328] sm:$0xff]
      %v222 = vld [vmem:[%s112 + $0x330] sm:$0xff]
      %v223 = vld [vmem:[%s112 + $0x338] sm:$0xff]
      %v224 = vld [vmem:[%s112 + $0x340] sm:$0xff]
      %v225 = vld [vmem:[%s112 + $0x348] sm:$0xff]
      %v226 = vld [vmem:[%s112 + $0x350] sm:$0xff]
      %v227 = vld [vmem:[%s112 + $0x358] sm:$0xff]
      %v228 = vld [vmem:[%s112 + $0x360] sm:$0xff]
      %v229 = vld [vmem:[%s112 + $0x368] sm:$0xff]
      %v230 = vld [vmem:[%s112 + $0x370] sm:$0xff]
      %v231 = vld [vmem:[%s112 + $0x378] sm:$0xff]
      %v232 = vld [vmem:[%s112 + $0x380] sm:$0xff]
      %v233 = vld [vmem:[%s112 + $0x388] sm:$0xff]
      %v234 = vld [vmem:[%s112 + $0x390] sm:$0xff]
      %v235 = vld [vmem:[%s112 + $0x398] sm:$0xff]
      %v236 = vld [vmem:[%s112 + $0x3a0] sm:$0xff]
      %v237 = vld [vmem:[%s112 + $0x3a8] sm:$0xff]
      %v238 = vld [vmem:[%s112 + $0x3b0] sm:$0xff]
      %v239 = vld [vmem:[%s112 + $0x3b8] sm:$0xff]
      %v240 = vld [vmem:[%s112 + $0x3c0] sm:$0xff]
      %v241 = vld [vmem:[%s112 + $0x3c8] sm:$0xff]
      %v242 = vld [vmem:[%s112 + $0x3d0] sm:$0xff]
      %v243 = vld [vmem:[%s112 + $0x3d8] sm:$0xff]
      %v244 = vld [vmem:[%s112 + $0x3e0] sm:$0xff]
      %v245 = vld [vmem:[%s112 + $0x3e8] sm:$0xff]
      %v246 = vld [vmem:[%s112 + $0x3f0] sm:$0xff]
      %v247 = vld [vmem:[%s112 + $0x3f8] sm:$0xff]
      %v248 = vtanh.pop %v120
      %v249 = vtanh.pop %v121
      %v250 = vtanh.pop %v122
      %v251 = vtanh.pop %v123
      %v252 = vtanh.pop %v124
      %v253 = vtanh.pop %v125
      %v254 = vtanh.pop %v126
      %v255 = vtanh.pop %v127
      %v256 = vtanh.pop %v128
      %v257 = vtanh.pop %v129
      %v258 = vtanh.pop %v130
      %v259 = vtanh.pop %v131
      %v260 = vtanh.pop %v132
      %v261 = vtanh.pop %v133
      %v262 = vtanh.pop %v134
      %v263 = vtanh.pop %v135
      %v264 = vtanh.pop %v136
      %v265 = vtanh.pop %v137
      %v266 = vtanh.pop %v138
      %v267 = vtanh.pop %v139
      %v268 = vtanh.pop %v140
      %v269 = vtanh.pop %v141
      %v270 = vtanh.pop %v142
      %v271 = vtanh.pop %v143
      %v272 = vtanh.pop %v144
      %v273 = vtanh.pop %v145
      %v274 = vtanh.pop %v146
      %v275 = vtanh.pop %v147
      %v276 = vtanh.pop %v148
      %v277 = vtanh.pop %v149
      %v278 = vtanh.pop %v150
      %v279 = vtanh.pop %v151
      %v280 = vtanh.pop %v152
      %v281 = vtanh.pop %v153
      %v282 = vtanh.pop %v154
      %v283 = vtanh.pop %v155
      %v284 = vtanh.pop %v156
      %v285 = vtanh.pop %v157
      %v286 = vtanh.pop %v158
      %v287 = vtanh.pop %v159
      %v288 = vtanh.pop %v160
      %v289 = vtanh.pop %v161
      %v290 = vtanh.pop %v162
      %v291 = vtanh.pop %v163
      %v292 = vtanh.pop %v164
      %v293 = vtanh.pop %v165
      %v294 = vtanh.pop %v166
      %v295 = vtanh.pop %v167
      %v296 = vtanh.pop %v168
      %v297 = vtanh.pop %v169
      %v298 = vtanh.pop %v170
      %v299 = vtanh.pop %v171
      %v300 = vtanh.pop %v172
      %v301 = vtanh.pop %v173
      %v302 = vtanh.pop %v174
      %v303 = vtanh.pop %v175
      %v304 = vtanh.pop %v176
      %v305 = vtanh.pop %v177
      %v306 = vtanh.pop %v178
      %v307 = vtanh.pop %v179
      %v308 = vtanh.pop %v180
      %v309 = vtanh.pop %v181
      %v310 = vtanh.pop %v182
      %v311 = vtanh.pop %v183
      %v312 = vtanh.pop %v184
      %v313 = vtanh.pop %v185
      %v314 = vtanh.pop %v186
      %v315 = vtanh.pop %v187
      %v316 = vtanh.pop %v188
      %v317 = vtanh.pop %v189
      %v318 = vtanh.pop %v190
      %v319 = vtanh.pop %v191
      %v320 = vtanh.pop %v192
      %v321 = vtanh.pop %v193
      %v322 = vtanh.pop %v194
      %v323 = vtanh.pop %v195
      %v324 = vtanh.pop %v196
      %v325 = vtanh.pop %v197
      %v326 = vtanh.pop %v198
      %v327 = vtanh.pop %v199
      %v328 = vtanh.pop %v200
      %v329 = vtanh.pop %v201
      %v330 = vtanh.pop %v202
      %v331 = vtanh.pop %v203
      %v332 = vtanh.pop %v204
      %v333 = vtanh.pop %v205
      %v334 = vtanh.pop %v206
      %v335 = vtanh.pop %v207
      %v336 = vtanh.pop %v208
      %v337 = vtanh.pop %v209
      %v338 = vtanh.pop %v210
      %v339 = vtanh.pop %v211
      %v340 = vtanh.pop %v212
      %v341 = vtanh.pop %v213
      %v342 = vtanh.pop %v214
      %v343 = vtanh.pop %v215
      %v344 = vtanh.pop %v216
      %v345 = vtanh.pop %v217
      %v346 = vtanh.pop %v218
      %v347 = vtanh.pop %v219
      %v348 = vtanh.pop %v220
      %v349 = vtanh.pop %v221
      %v350 = vtanh.pop %v222
      %v351 = vtanh.pop %v223
      %v352 = vtanh.pop %v224
      %v353 = vtanh.pop %v225
      %v354 = vtanh.pop %v226
      %v355 = vtanh.pop %v227
      %v356 = vtanh.pop %v228
      %v357 = vtanh.pop %v229
      %v358 = vtanh.pop %v230
      %v359 = vtanh.pop %v231
      %v360 = vtanh.pop %v232
      %v361 = vtanh.pop %v233
      %v362 = vtanh.pop %v234
      %v363 = vtanh.pop %v235
      %v364 = vtanh.pop %v236
      %v365 = vtanh.pop %v237
      %v366 = vtanh.pop %v238
      %v367 = vtanh.pop %v239
      %v368 = vtanh.pop %v240
      %v369 = vtanh.pop %v241
      %v370 = vtanh.pop %v242
      %v371 = vtanh.pop %v243
      %v372 = vtanh.pop %v244
      %v373 = vtanh.pop %v245
      %v374 = vtanh.pop %v246
      %v375 = vtanh.pop %v247
      %376 = vst [vmem:[%s118] sm:$0xff] %v248
      %377 = vst [vmem:[%s118 + $0x8] sm:$0xff] %v249
      %378 = vst [vmem:[%s118 + $0x10] sm:$0xff] %v250
      %379 = vst [vmem:[%s118 + $0x18] sm:$0xff] %v251
      %380 = vst [vmem:[%s118 + $0x20] sm:$0xff] %v252
      %381 = vst [vmem:[%s118 + $0x28] sm:$0xff] %v253
      %382 = vst [vmem:[%s118 + $0x30] sm:$0xff] %v254
      %383 = vst [vmem:[%s118 + $0x38] sm:$0xff] %v255
      %384 = vst [vmem:[%s118 + $0x40] sm:$0xff] %v256
      %385 = vst [vmem:[%s118 + $0x48] sm:$0xff] %v257
      %386 = vst [vmem:[%s118 + $0x50] sm:$0xff] %v258
      %387 = vst [vmem:[%s118 + $0x58] sm:$0xff] %v259
      %388 = vst [vmem:[%s118 + $0x60] sm:$0xff] %v260
      %389 = vst [vmem:[%s118 + $0x68] sm:$0xff] %v261
      %390 = vst [vmem:[%s118 + $0x70] sm:$0xff] %v262
      %391 = vst [vmem:[%s118 + $0x78] sm:$0xff] %v263
      %392 = vst [vmem:[%s118 + $0x80] sm:$0xff] %v264
      %393 = vst [vmem:[%s118 + $0x88] sm:$0xff] %v265
      %394 = vst [vmem:[%s118 + $0x90] sm:$0xff] %v266
      %395 = vst [vmem:[%s118 + $0x98] sm:$0xff] %v267
      %396 = vst [vmem:[%s118 + $0xa0] sm:$0xff] %v268
      %397 = vst [vmem:[%s118 + $0xa8] sm:$0xff] %v269
      %398 = vst [vmem:[%s118 + $0xb0] sm:$0xff] %v270
      %399 = vst [vmem:[%s118 + $0xb8] sm:$0xff] %v271
      %400 = vst [vmem:[%s118 + $0xc0] sm:$0xff] %v272
      %401 = vst [vmem:[%s118 + $0xc8] sm:$0xff] %v273
      %402 = vst [vmem:[%s118 + $0xd0] sm:$0xff] %v274
      %403 = vst [vmem:[%s118 + $0xd8] sm:$0xff] %v275
      %404 = vst [vmem:[%s118 + $0xe0] sm:$0xff] %v276
      %405 = vst [vmem:[%s118 + $0xe8] sm:$0xff] %v277
      %406 = vst [vmem:[%s118 + $0xf0] sm:$0xff] %v278
      %407 = vst [vmem:[%s118 + $0xf8] sm:$0xff] %v279
      %408 = vst [vmem:[%s118 + $0x100] sm:$0xff] %v280
      %409 = vst [vmem:[%s118 + $0x108] sm:$0xff] %v281
      %410 = vst [vmem:[%s118 + $0x110] sm:$0xff] %v282
      %411 = vst [vmem:[%s118 + $0x118] sm:$0xff] %v283
      %412 = vst [vmem:[%s118 + $0x120] sm:$0xff] %v284
      %413 = vst [vmem:[%s118 + $0x128] sm:$0xff] %v285
      %414 = vst [vmem:[%s118 + $0x130] sm:$0xff] %v286
      %415 = vst [vmem:[%s118 + $0x138] sm:$0xff] %v287
      %416 = vst [vmem:[%s118 + $0x140] sm:$0xff] %v288
      %417 = vst [vmem:[%s118 + $0x148] sm:$0xff] %v289
      %418 = vst [vmem:[%s118 + $0x150] sm:$0xff] %v290
      %419 = vst [vmem:[%s118 + $0x158] sm:$0xff] %v291
      %420 = vst [vmem:[%s118 + $0x160] sm:$0xff] %v292
      %421 = vst [vmem:[%s118 + $0x168] sm:$0xff] %v293
      %422 = vst [vmem:[%s118 + $0x170] sm:$0xff] %v294
      %423 = vst [vmem:[%s118 + $0x178] sm:$0xff] %v295
      %424 = vst [vmem:[%s118 + $0x180] sm:$0xff] %v296
      %425 = vst [vmem:[%s118 + $0x188] sm:$0xff] %v297
      %426 = vst [vmem:[%s118 + $0x190] sm:$0xff] %v298
      %427 = vst [vmem:[%s118 + $0x198] sm:$0xff] %v299
      %428 = vst [vmem:[%s118 + $0x1a0] sm:$0xff] %v300
      %429 = vst [vmem:[%s118 + $0x1a8] sm:$0xff] %v301
      %430 = vst [vmem:[%s118 + $0x1b0] sm:$0xff] %v302
      %431 = vst [vmem:[%s118 + $0x1b8] sm:$0xff] %v303
      %432 = vst [vmem:[%s118 + $0x1c0] sm:$0xff] %v304
      %433 = vst [vmem:[%s118 + $0x1c8] sm:$0xff] %v305
      %434 = vst [vmem:[%s118 + $0x1d0] sm:$0xff] %v306
      %435 = vst [vmem:[%s118 + $0x1d8] sm:$0xff] %v307
      %436 = vst [vmem:[%s118 + $0x1e0] sm:$0xff] %v308
      %437 = vst [vmem:[%s118 + $0x1e8] sm:$0xff] %v309
      %438 = vst [vmem:[%s118 + $0x1f0] sm:$0xff] %v310
      %439 = vst [vmem:[%s118 + $0x1f8] sm:$0xff] %v311
      %440 = vst [vmem:[%s118 + $0x200] sm:$0xff] %v312
      %441 = vst [vmem:[%s118 + $0x208] sm:$0xff] %v313
      %442 = vst [vmem:[%s118 + $0x210] sm:$0xff] %v314
      %443 = vst [vmem:[%s118 + $0x218] sm:$0xff] %v315
      %444 = vst [vmem:[%s118 + $0x220] sm:$0xff] %v316
      %445 = vst [vmem:[%s118 + $0x228] sm:$0xff] %v317
      %446 = vst [vmem:[%s118 + $0x230] sm:$0xff] %v318
      %447 = vst [vmem:[%s118 + $0x238] sm:$0xff] %v319
      %448 = vst [vmem:[%s118 + $0x240] sm:$0xff] %v320
      %449 = vst [vmem:[%s118 + $0x248] sm:$0xff] %v321
      %450 = vst [vmem:[%s118 + $0x250] sm:$0xff] %v322
      %451 = vst [vmem:[%s118 + $0x258] sm:$0xff] %v323
      %452 = vst [vmem:[%s118 + $0x260] sm:$0xff] %v324
      %453 = vst [vmem:[%s118 + $0x268] sm:$0xff] %v325
      %454 = vst [vmem:[%s118 + $0x270] sm:$0xff] %v326
      %455 = vst [vmem:[%s118 + $0x278] sm:$0xff] %v327
      %456 = vst [vmem:[%s118 + $0x280] sm:$0xff] %v328
      %457 = vst [vmem:[%s118 + $0x288] sm:$0xff] %v329
      %458 = vst [vmem:[%s118 + $0x290] sm:$0xff] %v330
      %459 = vst [vmem:[%s118 + $0x298] sm:$0xff] %v331
      %460 = vst [vmem:[%s118 + $0x2a0] sm:$0xff] %v332
      %461 = vst [vmem:[%s118 + $0x2a8] sm:$0xff] %v333
      %462 = vst [vmem:[%s118 + $0x2b0] sm:$0xff] %v334
      %463 = vst [vmem:[%s118 + $0x2b8] sm:$0xff] %v335
      %464 = vst [vmem:[%s118 + $0x2c0] sm:$0xff] %v336
      %465 = vst [vmem:[%s118 + $0x2c8] sm:$0xff] %v337
      %466 = vst [vmem:[%s118 + $0x2d0] sm:$0xff] %v338
      %467 = vst [vmem:[%s118 + $0x2d8] sm:$0xff] %v339
      %468 = vst [vmem:[%s118 + $0x2e0] sm:$0xff] %v340
      %469 = vst [vmem:[%s118 + $0x2e8] sm:$0xff] %v341
      %470 = vst [vmem:[%s118 + $0x2f0] sm:$0xff] %v342
      %471 = vst [vmem:[%s118 + $0x2f8] sm:$0xff] %v343
      %472 = vst [vmem:[%s118 + $0x300] sm:$0xff] %v344
      %473 = vst [vmem:[%s118 + $0x308] sm:$0xff] %v345
      %474 = vst [vmem:[%s118 + $0x310] sm:$0xff] %v346
      %475 = vst [vmem:[%s118 + $0x318] sm:$0xff] %v347
      %476 = vst [vmem:[%s118 + $0x320] sm:$0xff] %v348
      %477 = vst [vmem:[%s118 + $0x328] sm:$0xff] %v349
      %478 = vst [vmem:[%s118 + $0x330] sm:$0xff] %v350
      %479 = vst [vmem:[%s118 + $0x338] sm:$0xff] %v351
      %480 = vst [vmem:[%s118 + $0x340] sm:$0xff] %v352
      %481 = vst [vmem:[%s118 + $0x348] sm:$0xff] %v353
      %482 = vst [vmem:[%s118 + $0x350] sm:$0xff] %v354
      %483 = vst [vmem:[%s118 + $0x358] sm:$0xff] %v355
      %484 = vst [vmem:[%s118 + $0x360] sm:$0xff] %v356
      %485 = vst [vmem:[%s118 + $0x368] sm:$0xff] %v357
      %486 = vst [vmem:[%s118 + $0x370] sm:$0xff] %v358
      %487 = vst [vmem:[%s118 + $0x378] sm:$0xff] %v359
      %488 = vst [vmem:[%s118 + $0x380] sm:$0xff] %v360
      %489 = vst [vmem:[%s118 + $0x388] sm:$0xff] %v361
      %490 = vst [vmem:[%s118 + $0x390] sm:$0xff] %v362
      %491 = vst [vmem:[%s118 + $0x398] sm:$0xff] %v363
      %492 = vst [vmem:[%s118 + $0x3a0] sm:$0xff] %v364
      %493 = vst [vmem:[%s118 + $0x3a8] sm:$0xff] %v365
      %494 = vst [vmem:[%s118 + $0x3b0] sm:$0xff] %v366
      %495 = vst [vmem:[%s118 + $0x3b8] sm:$0xff] %v367
      %496 = vst [vmem:[%s118 + $0x3c0] sm:$0xff] %v368
      %497 = vst [vmem:[%s118 + $0x3c8] sm:$0xff] %v369
      %498 = vst [vmem:[%s118 + $0x3d0] sm:$0xff] %v370
      %499 = vst [vmem:[%s118 + $0x3d8] sm:$0xff] %v371
      %500 = vst [vmem:[%s118 + $0x3e0] sm:$0xff] %v372
      %501 = vst [vmem:[%s118 + $0x3e8] sm:$0xff] %v373
      %502 = vst [vmem:[%s118 + $0x3f0] sm:$0xff] %v374
      %503 = vst [vmem:[%s118 + $0x3f8] sm:$0xff] %v375
      %s504 = smul.u32 128, %s12
      %p505 = scmp.lt.s32.totalorder %s504, 255
      %s506 = scalar_select %p505, %s504, 255
      %s507 = smul.addr %s506, 8
      %s508 = scalar_lea.vmem %s1, %s507
      // Predicated region
      $region25: #{generator_forward.17} parent=23 // pred_check
        %p509 = pneg %p56
      $region26: #{generator_forward.17} parent=23 // pred_check_branch
        %511 = sbr.rel (%p509) target = $region28
      $region27: #{generator_forward.17} parent=23 // pred_region
        %s512 = smul.u32 128, %s12
      $region28: #{generator_forward.17} parent=23 // pred_fallthru
        _
    $region24: #{generator_forward.17} parent=5 // pred_fallthru
      _
    %p513 = scmp.le.s32.totalorder 2, %s7
    // Predicated region
    $region29: #{generator_forward.17} parent=5 // pred_check
      %p514 = pneg %p513
    $region30: #{generator_forward.17} parent=5 // pred_check_branch
      %516 = sbr.rel (%p514) target = $region32
    $region31: #{generator_forward.17} parent=5 // pred_region
      %s517 = ssub.s32 %s7, 2
      // Predicated region
      $region33: #{generator_forward.17} parent=31 // pred_check
        %p518 = pneg %p62
      $region34: #{generator_forward.17} parent=31 // pred_check_branch
        %520 = sbr.rel (%p518) target = $region36
      $region35: #{generator_forward.17} parent=31 // pred_region
        %s521 = smul.u32 128, %s13
        %p522 = scmp.lt.s32.totalorder %s521, 255
        %s523 = scalar_select %p522, %s521, 255
        %s524 = smul.addr %s523, 8
        %s525 = scalar_lea.vmem %s1, %s524
      $region36: #{generator_forward.17} parent=31 // pred_fallthru
        _
    $region32: #{generator_forward.17} parent=5 // pred_fallthru
      _
  $region6: #{generator_forward.17} parent=0 // loop_footer
    %s11 = sadd.s32 1, %s7
  $region7: #{generator_forward.17} parent=0 // loop_footer_branch
    %6 = sbr.rel target = $region3
  $region8: #{generator_forward.17} parent=0 // loop_exit
    _

// kernel: generator_forward.16
$region0: #{generator_forward.16}
  #allocation0 [shape = 'u32[]', space=smem, size = 0x4, offset = 0x4, fixed_abs, tag = 'smem constant byte address 0x4 - core index']
  #allocation1 [shape = 'u32[144,128]{1,0:T(1,128)}', space=vmem, size = 0x12000, scoped, tag = 'internal scratch']
  %s0 = inlined_call_operand.vmem [shape: bf16[2048,288], index: 0, kind: input, shape index: {}]
  %s1 = inlined_call_operand.vmem [shape: bf16[288,128], index: 1, kind: input, shape index: {}]
  %s2 = inlined_call_operand.vmem [shape: f32[2048,128], index: 2, kind: output, shape index: {}]
  %s3 = sld [smem:[#allocation0]]
  $region41: #{generator_forward.16} parent=0
    _
  %s5 = ssub.s32 1, %s3
  %s6 = scalar_select 0, %s5, %s3
  loop: start=0, step=1, limit=4
  $region2: #{generator_forward.16} parent=0 // loop_pre_header
    _
  $region3: #{generator_forward.16} parent=0 // loop_header
    %s8 = sphi 0, %s12
    %p9 = scmp.ge.s32.totalorder %s8, 4
    %s18 = sphi 0, %s20
    %s21 = sphi 0, %s18
    %s22 = sphi 0, %s21
    %s38 = sphi 0, %s22
    %s42 = sphi 0, %s42
    %s44 = sphi 0, %s42
    %s45 = sphi 0, %s44
    %s59 = sphi 0, %s45
    %s65 = sphi 0, %s67
    %s68 = sphi 0, %s65
    %s69 = sphi 0, %s68
    %s85 = sphi 0, %s69
  $region4: #{generator_forward.16} parent=0 // loop_header_branch
    %11 = sbr.rel (%p9) target = $region8
  $region5: #{generator_forward.16} parent=0 // loop_body
    %s13 = ssub.s32 %s8, 1
    %s14 = ssub.s32 %s8, 2
    %s15 = sadd.s32 %s8, 1
    %s16 = ssub.s32 %s8, %s15
    %p17 = scmp.eq.s32.totalorder %s16, 0
    %s19 = sadd.s32 %s18, 1
    %s20 = scalar_select %p17, %s18, %s19
    %p23 = pneg %p17
    %p24 = scmp.eq.s32.totalorder %s8, 1
    %p25 = por %p23, %p24
    %p26 = scmp.ne.s32.totalorder %s18, %s21
    %p27 = scmp.eq.s32.totalorder %s8, 0
    %p28 = por %p26, %p27
    %p29 = scmp.ne.s32.totalorder %s18, %s21
    %p30 = scmp.eq.s32.totalorder %s13, 1
    %p31 = por %p29, %p30
    %p32 = scmp.ne.s32.totalorder %s21, %s22
    %p33 = scmp.eq.s32.totalorder %s13, 0
    %p34 = por %p32, %p33
    %p35 = scmp.ne.s32.totalorder %s21, %s22
    %p36 = scmp.eq.s32.totalorder %s14, 1
    %p37 = por %p35, %p36
    %p39 = scmp.ne.s32.totalorder %s22, %s38
    %p40 = scmp.eq.s32.totalorder %s14, 0
    %p41 = por %p39, %p40
    %s43 = sadd.s32 %s42, 1
    %p46 = scmp.eq.s32.totalorder %s8, 1
    %p47 = scmp.ne.s32.totalorder %s42, %s44
    %p48 = scmp.eq.s32.totalorder %s8, 0
    %p49 = por %p47, %p48
    %p50 = scmp.ne.s32.totalorder %s42, %s44
    %p51 = scmp.eq.s32.totalorder %s13, 1
    %p52 = por %p50, %p51
    %p53 = scmp.ne.s32.totalorder %s44, %s45
    %p54 = scmp.eq.s32.totalorder %s13, 0
    %p55 = por %p53, %p54
    %p56 = scmp.ne.s32.totalorder %s44, %s45
    %p57 = scmp.eq.s32.totalorder %s14, 1
    %p58 = por %p56, %p57
    %p60 = scmp.ne.s32.totalorder %s45, %s59
    %p61 = scmp.eq.s32.totalorder %s14, 0
    %p62 = por %p60, %p61
    %s63 = ssub.s32 %s8, %s15
    %p64 = scmp.eq.s32.totalorder %s63, 0
    %s66 = sadd.s32 %s65, 1
    %s67 = scalar_select %p64, %s65, %s66
    %p70 = pneg %p64
    %p71 = scmp.eq.s32.totalorder %s8, 1
    %p72 = por %p70, %p71
    %p73 = scmp.ne.s32.totalorder %s65, %s68
    %p74 = scmp.eq.s32.totalorder %s8, 0
    %p75 = por %p73, %p74
    %p76 = scmp.ne.s32.totalorder %s65, %s68
    %p77 = scmp.eq.s32.totalorder %s13, 1
    %p78 = por %p76, %p77
    %p79 = scmp.ne.s32.totalorder %s68, %s69
    %p80 = scmp.eq.s32.totalorder %s13, 0
    %p81 = por %p79, %p80
    %p82 = scmp.ne.s32.totalorder %s68, %s69
    %p83 = scmp.eq.s32.totalorder %s14, 1
    %p84 = por %p82, %p83
    %p86 = scmp.ne.s32.totalorder %s69, %s85
    %p87 = scmp.eq.s32.totalorder %s14, 0
    %p88 = por %p86, %p87
    %p89 = scmp.le.s32.totalorder 1, %s8
    %p90 = scmp.lt.s32.totalorder %s8, 3
    %p91 = pnand %p89, %p90
    %p92 = pneg %p91
    // Predicated region
    $region9: #{generator_forward.16} parent=5 // pred_check
      _
    $region10: #{generator_forward.16} parent=5 // pred_check_branch
      %94 = sbr.rel (%p91) target = $region12
    $region11: #{generator_forward.16} parent=5 // pred_region
      %s95 = ssub.s32 %s8, 1
      // Predicated region
      $region13: #{generator_forward.16} parent=11 // pred_check
        %p96 = pneg %p55
      $region14: #{generator_forward.16} parent=11 // pred_check_branch
        %98 = sbr.rel (%p96) target = $region16
      $region15: #{generator_forward.16} parent=11 // pred_region
        _
      $region16: #{generator_forward.16} parent=11 // pred_fallthru
        _
    $region12: #{generator_forward.16} parent=5 // pred_fallthru
      _
    %p99 = scmp.lt.s32.totalorder %s8, 2
    // Predicated region
    $region17: #{generator_forward.16} parent=5 // pred_check
      %p100 = pneg %p99
    $region18: #{generator_forward.16} parent=5 // pred_check_branch
      %102 = sbr.rel (%p100) target = $region20
    $region19: #{generator_forward.16} parent=5 // pred_region
      // Predicated region
      $region21: #{generator_forward.16} parent=19 // pred_check
        %p103 = pneg %p28
      $region22: #{generator_forward.16} parent=19 // pred_check_branch
        %105 = sbr.rel (%p103) target = $region24
      $region23: #{generator_forward.16} parent=19 // pred_region
        %s106 = smul.u32 128, %s8
        %p107 = scmp.lt.s32.totalorder %s106, 255
        %s108 = scalar_select %p107, %s106, 255
        %s109 = smul.addr %s108, 3
        %s110 = smul.addr %s109, 4
        %s111 = scalar_lea.vmem %s0, %s110
        %s112 = smul.u32 128, %s8
      $region24: #{generator_forward.16} parent=19 // pred_fallthru
        _
    $region20: #{generator_forward.16} parent=5 // pred_fallthru
      _
    %p113 = scmp.le.s32.totalorder 1, %s8
    %p114 = scmp.lt.s32.totalorder %s8, 3
    %p115 = pnand %p113, %p114
    %p116 = pneg %p115
    // Predicated region
    $region25: #{generator_forward.16} parent=5 // pred_check
      _
    $region26: #{generator_forward.16} parent=5 // pred_check_branch
      %118 = sbr.rel (%p115) target = $region28
    $region27: #{generator_forward.16} parent=5 // pred_region
      %s119 = ssub.s32 %s8, 1
      %s120 = smul.u32 128, %s13
      %p121 = scmp.lt.s32.totalorder %s120, 255
      %s122 = scalar_select %p121, %s120, 255
      %s123 = smul.addr %s122, 3
      %s124 = smul.addr %s123, 4
      %s125 = scalar_lea.vmem %s0, %s124
      %p126 = pneg %p34
      %p127 = pneg %p31
      %p128 = pneg %p55
      %p129 = pneg %p52
      %p130 = pneg %p81
      %p131 = pneg %p78
      %s132 = smul.u32 128, %s13
      %p133 = scmp.lt.s32.totalorder %s132, 255
      %s134 = scalar_select %p133, %s132, 255
      %s135 = smul.addr %s134, 8
      %s136 = scalar_lea.vmem %s2, %s135
      %s137 = smul.u32 128, %s13
      %p138 = scmp.lt.s32.totalorder %s137, 255
      %s139 = scalar_select %p138, %s137, 255
      %s140 = smul.addr %s139, 3
      %s141 = smul.addr %s140, 4
      %s142 = scalar_lea.vmem %s0, %s141
      %s143 = smul.u32 128, %s13
      %s144 = smul.u32 128, %s13
      %p145 = scmp.lt.s32.totalorder %s144, 255
      %s146 = scalar_select %p145, %s144, 255
      %s147 = smul.addr %s146, 8
      %s148 = scalar_lea.vmem %s2, %s147
      %s149 = smul.u32 128, %s13
      %v151 = vld [vmem:[%s142] sm:$0xff]
      %v152 = vld [vmem:[%s142 + $0x8] sm:$0xf]
      %v153 = vld [vmem:[%s142 + $0xc] sm:$0xff]
      %v154 = vld [vmem:[%s142 + $0x14] sm:$0xf]
      %v155 = vld [vmem:[%s142 + $0x18] sm:$0xff]
      %v156 = vld [vmem:[%s142 + $0x20] sm:$0xf]
      %v157 = vld [vmem:[%s142 + $0x24] sm:$0xff]
      %v158 = vld [vmem:[%s142 + $0x2c] sm:$0xf]
      %v159 = vld [vmem:[%s142 + $0x30] sm:$0xff]
      %v160 = vld [vmem:[%s142 + $0x38] sm:$0xf]
      %v161 = vld [vmem:[%s142 + $0x3c] sm:$0xff]
      %v162 = vld [vmem:[%s142 + $0x44] sm:$0xf]
      %v163 = vld [vmem:[%s142 + $0x48] sm:$0xff]
      %v164 = vld [vmem:[%s142 + $0x50] sm:$0xf]
      %v165 = vld [vmem:[%s142 + $0x54] sm:$0xff]
      %v166 = vld [vmem:[%s142 + $0x5c] sm:$0xf]
      %v167 = vld [vmem:[%s142 + $0x60] sm:$0xff]
      %v168 = vld [vmem:[%s142 + $0x68] sm:$0xf]
      %v169 = vld [vmem:[%s142 + $0x6c] sm:$0xff]
      %v170 = vld [vmem:[%s142 + $0x74] sm:$0xf]
      %v171 = vld [vmem:[%s142 + $0x78] sm:$0xff]
      %v172 = vld [vmem:[%s142 + $0x80] sm:$0xf]
      %v173 = vld [vmem:[%s142 + $0x84] sm:$0xff]
      %v174 = vld [vmem:[%s142 + $0x8c] sm:$0xf]
      %v175 = vld [vmem:[%s142 + $0x90] sm:$0xff]
      %v176 = vld [vmem:[%s142 + $0x98] sm:$0xf]
      %v177 = vld [vmem:[%s142 + $0x9c] sm:$0xff]
      %v178 = vld [vmem:[%s142 + $0xa4] sm:$0xf]
      %v179 = vld [vmem:[%s142 + $0xa8] sm:$0xff]
      %v180 = vld [vmem:[%s142 + $0xb0] sm:$0xf]
      %v181 = vld [vmem:[%s142 + $0xb4] sm:$0xff]
      %v182 = vld [vmem:[%s142 + $0xbc] sm:$0xf]
      %v183 = vld [vmem:[%s142 + $0xc0] sm:$0xff]
      %v184 = vld [vmem:[%s142 + $0xc8] sm:$0xf]
      %v185 = vld [vmem:[%s142 + $0xcc] sm:$0xff]
      %v186 = vld [vmem:[%s142 + $0xd4] sm:$0xf]
      %v187 = vld [vmem:[%s142 + $0xd8] sm:$0xff]
      %v188 = vld [vmem:[%s142 + $0xe0] sm:$0xf]
      %v189 = vld [vmem:[%s142 + $0xe4] sm:$0xff]
      %v190 = vld [vmem:[%s142 + $0xec] sm:$0xf]
      %v191 = vld [vmem:[%s142 + $0xf0] sm:$0xff]
      %v192 = vld [vmem:[%s142 + $0xf8] sm:$0xf]
      %v193 = vld [vmem:[%s142 + $0xfc] sm:$0xff]
      %v194 = vld [vmem:[%s142 + $0x104] sm:$0xf]
      %v195 = vld [vmem:[%s142 + $0x108] sm:$0xff]
      %v196 = vld [vmem:[%s142 + $0x110] sm:$0xf]
      %v197 = vld [vmem:[%s142 + $0x114] sm:$0xff]
      %v198 = vld [vmem:[%s142 + $0x11c] sm:$0xf]
      %v199 = vld [vmem:[%s142 + $0x120] sm:$0xff]
      %v200 = vld [vmem:[%s142 + $0x128] sm:$0xf]
      %v201 = vld [vmem:[%s142 + $0x12c] sm:$0xff]
      %v202 = vld [vmem:[%s142 + $0x134] sm:$0xf]
      %v203 = vld [vmem:[%s142 + $0x138] sm:$0xff]
      %v204 = vld [vmem:[%s142 + $0x140] sm:$0xf]
      %v205 = vld [vmem:[%s142 + $0x144] sm:$0xff]
      %v206 = vld [vmem:[%s142 + $0x14c] sm:$0xf]
      %v207 = vld [vmem:[%s142 + $0x150] sm:$0xff]
      %v208 = vld [vmem:[%s142 + $0x158] sm:$0xf]
      %v209 = vld [vmem:[%s142 + $0x15c] sm:$0xff]
      %v210 = vld [vmem:[%s142 + $0x164] sm:$0xf]
      %v211 = vld [vmem:[%s142 + $0x168] sm:$0xff]
      %v212 = vld [vmem:[%s142 + $0x170] sm:$0xf]
      %v213 = vld [vmem:[%s142 + $0x174] sm:$0xff]
      %v214 = vld [vmem:[%s142 + $0x17c] sm:$0xf]
      %v215 = vld [vmem:[%s142 + $0x180] sm:$0xff]
      %v216 = vld [vmem:[%s142 + $0x188] sm:$0xf]
      %v217 = vld [vmem:[%s142 + $0x18c] sm:$0xff]
      %v218 = vld [vmem:[%s142 + $0x194] sm:$0xf]
      %v219 = vld [vmem:[%s142 + $0x198] sm:$0xff]
      %v220 = vld [vmem:[%s142 + $0x1a0] sm:$0xf]
      %v221 = vld [vmem:[%s142 + $0x1a4] sm:$0xff]
      %v222 = vld [vmem:[%s142 + $0x1ac] sm:$0xf]
      %v223 = vld [vmem:[%s142 + $0x1b0] sm:$0xff]
      %v224 = vld [vmem:[%s142 + $0x1b8] sm:$0xf]
      %v225 = vld [vmem:[%s142 + $0x1bc] sm:$0xff]
      %v226 = vld [vmem:[%s142 + $0x1c4] sm:$0xf]
      %v227 = vld [vmem:[%s142 + $0x1c8] sm:$0xff]
      %v228 = vld [vmem:[%s142 + $0x1d0] sm:$0xf]
      %v229 = vld [vmem:[%s142 + $0x1d4] sm:$0xff]
      %v230 = vld [vmem:[%s142 + $0x1dc] sm:$0xf]
      %v231 = vld [vmem:[%s142 + $0x1e0] sm:$0xff]
      %v232 = vld [vmem:[%s142 + $0x1e8] sm:$0xf]
      %v233 = vld [vmem:[%s142 + $0x1ec] sm:$0xff]
      %v234 = vld [vmem:[%s142 + $0x1f4] sm:$0xf]
      %v235 = vld [vmem:[%s142 + $0x1f8] sm:$0xff]
      %v236 = vld [vmem:[%s142 + $0x200] sm:$0xf]
      %v237 = vld [vmem:[%s142 + $0x204] sm:$0xff]
      %v238 = vld [vmem:[%s142 + $0x20c] sm:$0xf]
      %v239 = vld [vmem:[%s142 + $0x210] sm:$0xff]
      %v240 = vld [vmem:[%s142 + $0x218] sm:$0xf]
      %v241 = vld [vmem:[%s142 + $0x21c] sm:$0xff]
      %v242 = vld [vmem:[%s142 + $0x224] sm:$0xf]
      %v243 = vld [vmem:[%s142 + $0x228] sm:$0xff]
      %v244 = vld [vmem:[%s142 + $0x230] sm:$0xf]
      %v245 = vld [vmem:[%s142 + $0x234] sm:$0xff]
      %v246 = vld [vmem:[%s142 + $0x23c] sm:$0xf]
      %v247 = vld [vmem:[%s142 + $0x240] sm:$0xff]
      %v248 = vld [vmem:[%s142 + $0x248] sm:$0xf]
      %v249 = vld [vmem:[%s142 + $0x24c] sm:$0xff]
      %v250 = vld [vmem:[%s142 + $0x254] sm:$0xf]
      %v251 = vld [vmem:[%s142 + $0x258] sm:$0xff]
      %v252 = vld [vmem:[%s142 + $0x260] sm:$0xf]
      %v253 = vld [vmem:[%s142 + $0x264] sm:$0xff]
      %v254 = vld [vmem:[%s142 + $0x26c] sm:$0xf]
      %v255 = vld [vmem:[%s142 + $0x270] sm:$0xff]
      %v256 = vld [vmem:[%s142 + $0x278] sm:$0xf]
      %v257 = vld [vmem:[%s142 + $0x27c] sm:$0xff]
      %v258 = vld [vmem:[%s142 + $0x284] sm:$0xf]
      %v259 = vld [vmem:[%s142 + $0x288] sm:$0xff]
      %v260 = vld [vmem:[%s142 + $0x290] sm:$0xf]
      %v261 = vld [vmem:[%s142 + $0x294] sm:$0xff]
      %v262 = vld [vmem:[%s142 + $0x29c] sm:$0xf]
      %v263 = vld [vmem:[%s142 + $0x2a0] sm:$0xff]
      %v264 = vld [vmem:[%s142 + $0x2a8] sm:$0xf]
      %v265 = vld [vmem:[%s142 + $0x2ac] sm:$0xff]
      %v266 = vld [vmem:[%s142 + $0x2b4] sm:$0xf]
      %v267 = vld [vmem:[%s142 + $0x2b8] sm:$0xff]
      %v268 = vld [vmem:[%s142 + $0x2c0] sm:$0xf]
      %v269 = vld [vmem:[%s142 + $0x2c4] sm:$0xff]
      %v270 = vld [vmem:[%s142 + $0x2cc] sm:$0xf]
      %v271 = vld [vmem:[%s142 + $0x2d0] sm:$0xff]
      %v272 = vld [vmem:[%s142 + $0x2d8] sm:$0xf]
      %v273 = vld [vmem:[%s142 + $0x2dc] sm:$0xff]
      %v274 = vld [vmem:[%s142 + $0x2e4] sm:$0xf]
      %v275 = vld [vmem:[%s142 + $0x2e8] sm:$0xff]
      %v276 = vld [vmem:[%s142 + $0x2f0] sm:$0xf]
      %v277 = vld [vmem:[%s142 + $0x2f4] sm:$0xff]
      %v278 = vld [vmem:[%s142 + $0x2fc] sm:$0xf]
      %v279 = vld [vmem:[%s142 + $0x300] sm:$0xff]
      %v280 = vld [vmem:[%s142 + $0x308] sm:$0xf]
      %v281 = vld [vmem:[%s142 + $0x30c] sm:$0xff]
      %v282 = vld [vmem:[%s142 + $0x314] sm:$0xf]
      %v283 = vld [vmem:[%s142 + $0x318] sm:$0xff]
      %v284 = vld [vmem:[%s142 + $0x320] sm:$0xf]
      %v285 = vld [vmem:[%s142 + $0x324] sm:$0xff]
      %v286 = vld [vmem:[%s142 + $0x32c] sm:$0xf]
      %v287 = vld [vmem:[%s142 + $0x330] sm:$0xff]
      %v288 = vld [vmem:[%s142 + $0x338] sm:$0xf]
      %v289 = vld [vmem:[%s142 + $0x33c] sm:$0xff]
      %v290 = vld [vmem:[%s142 + $0x344] sm:$0xf]
      %v291 = vld [vmem:[%s142 + $0x348] sm:$0xff]
      %v292 = vld [vmem:[%s142 + $0x350] sm:$0xf]
      %v293 = vld [vmem:[%s142 + $0x354] sm:$0xff]
      %v294 = vld [vmem:[%s142 + $0x35c] sm:$0xf]
      %v295 = vld [vmem:[%s142 + $0x360] sm:$0xff]
      %v296 = vld [vmem:[%s142 + $0x368] sm:$0xf]
      %v297 = vld [vmem:[%s142 + $0x36c] sm:$0xff]
      %v298 = vld [vmem:[%s142 + $0x374] sm:$0xf]
      %v299 = vld [vmem:[%s142 + $0x378] sm:$0xff]
      %v300 = vld [vmem:[%s142 + $0x380] sm:$0xf]
      %v301 = vld [vmem:[%s142 + $0x384] sm:$0xff]
      %v302 = vld [vmem:[%s142 + $0x38c] sm:$0xf]
      %v303 = vld [vmem:[%s142 + $0x390] sm:$0xff]
      %v304 = vld [vmem:[%s142 + $0x398] sm:$0xf]
      %v305 = vld [vmem:[%s142 + $0x39c] sm:$0xff]
      %v306 = vld [vmem:[%s142 + $0x3a4] sm:$0xf]
      %v307 = vld [vmem:[%s142 + $0x3a8] sm:$0xff]
      %v308 = vld [vmem:[%s142 + $0x3b0] sm:$0xf]
      %v309 = vld [vmem:[%s142 + $0x3b4] sm:$0xff]
      %v310 = vld [vmem:[%s142 + $0x3bc] sm:$0xf]
      %v311 = vld [vmem:[%s142 + $0x3c0] sm:$0xff]
      %v312 = vld [vmem:[%s142 + $0x3c8] sm:$0xf]
      %v313 = vld [vmem:[%s142 + $0x3cc] sm:$0xff]
      %v314 = vld [vmem:[%s142 + $0x3d4] sm:$0xf]
      %v315 = vld [vmem:[%s142 + $0x3d8] sm:$0xff]
      %v316 = vld [vmem:[%s142 + $0x3e0] sm:$0xf]
      %v317 = vld [vmem:[%s142 + $0x3e4] sm:$0xff]
      %v318 = vld [vmem:[%s142 + $0x3ec] sm:$0xf]
      %v319 = vld [vmem:[%s142 + $0x3f0] sm:$0xff]
      %v320 = vld [vmem:[%s142 + $0x3f8] sm:$0xf]
      %v321 = vld [vmem:[%s142 + $0x3fc] sm:$0xff]
      %v322 = vld [vmem:[%s142 + $0x404] sm:$0xf]
      %v323 = vld [vmem:[%s142 + $0x408] sm:$0xff]
      %v324 = vld [vmem:[%s142 + $0x410] sm:$0xf]
      %v325 = vld [vmem:[%s142 + $0x414] sm:$0xff]
      %v326 = vld [vmem:[%s142 + $0x41c] sm:$0xf]
      %v327 = vld [vmem:[%s142 + $0x420] sm:$0xff]
      %v328 = vld [vmem:[%s142 + $0x428] sm:$0xf]
      %v329 = vld [vmem:[%s142 + $0x42c] sm:$0xff]
      %v330 = vld [vmem:[%s142 + $0x434] sm:$0xf]
      %v331 = vld [vmem:[%s142 + $0x438] sm:$0xff]
      %v332 = vld [vmem:[%s142 + $0x440] sm:$0xf]
      %v333 = vld [vmem:[%s142 + $0x444] sm:$0xff]
      %v334 = vld [vmem:[%s142 + $0x44c] sm:$0xf]
      %v335 = vld [vmem:[%s142 + $0x450] sm:$0xff]
      %v336 = vld [vmem:[%s142 + $0x458] sm:$0xf]
      %v337 = vld [vmem:[%s142 + $0x45c] sm:$0xff]
      %v338 = vld [vmem:[%s142 + $0x464] sm:$0xf]
      %v339 = vld [vmem:[%s142 + $0x468] sm:$0xff]
      %v340 = vld [vmem:[%s142 + $0x470] sm:$0xf]
      %v341 = vld [vmem:[%s142 + $0x474] sm:$0xff]
      %v342 = vld [vmem:[%s142 + $0x47c] sm:$0xf]
      %v343 = vld [vmem:[%s142 + $0x480] sm:$0xff]
      %v344 = vld [vmem:[%s142 + $0x488] sm:$0xf]
      %v345 = vld [vmem:[%s142 + $0x48c] sm:$0xff]
      %v346 = vld [vmem:[%s142 + $0x494] sm:$0xf]
      %v347 = vld [vmem:[%s142 + $0x498] sm:$0xff]
      %v348 = vld [vmem:[%s142 + $0x4a0] sm:$0xf]
      %v349 = vld [vmem:[%s142 + $0x4a4] sm:$0xff]
      %v350 = vld [vmem:[%s142 + $0x4ac] sm:$0xf]
      %v351 = vld [vmem:[%s142 + $0x4b0] sm:$0xff]
      %v352 = vld [vmem:[%s142 + $0x4b8] sm:$0xf]
      %v353 = vld [vmem:[%s142 + $0x4bc] sm:$0xff]
      %v354 = vld [vmem:[%s142 + $0x4c4] sm:$0xf]
      %v355 = vld [vmem:[%s142 + $0x4c8] sm:$0xff]
      %v356 = vld [vmem:[%s142 + $0x4d0] sm:$0xf]
      %v357 = vld [vmem:[%s142 + $0x4d4] sm:$0xff]
      %v358 = vld [vmem:[%s142 + $0x4dc] sm:$0xf]
      %v359 = vld [vmem:[%s142 + $0x4e0] sm:$0xff]
      %v360 = vld [vmem:[%s142 + $0x4e8] sm:$0xf]
      %v361 = vld [vmem:[%s142 + $0x4ec] sm:$0xff]
      %v362 = vld [vmem:[%s142 + $0x4f4] sm:$0xf]
      %v363 = vld [vmem:[%s142 + $0x4f8] sm:$0xff]
      %v364 = vld [vmem:[%s142 + $0x500] sm:$0xf]
      %v365 = vld [vmem:[%s142 + $0x504] sm:$0xff]
      %v366 = vld [vmem:[%s142 + $0x50c] sm:$0xf]
      %v367 = vld [vmem:[%s142 + $0x510] sm:$0xff]
      %v368 = vld [vmem:[%s142 + $0x518] sm:$0xf]
      %v369 = vld [vmem:[%s142 + $0x51c] sm:$0xff]
      %v370 = vld [vmem:[%s142 + $0x524] sm:$0xf]
      %v371 = vld [vmem:[%s142 + $0x528] sm:$0xff]
      %v372 = vld [vmem:[%s142 + $0x530] sm:$0xf]
      %v373 = vld [vmem:[%s142 + $0x534] sm:$0xff]
      %v374 = vld [vmem:[%s142 + $0x53c] sm:$0xf]
      %v375 = vld [vmem:[%s142 + $0x540] sm:$0xff]
      %v376 = vld [vmem:[%s142 + $0x548] sm:$0xf]
      %v377 = vld [vmem:[%s142 + $0x54c] sm:$0xff]
      %v378 = vld [vmem:[%s142 + $0x554] sm:$0xf]
      %v379 = vld [vmem:[%s142 + $0x558] sm:$0xff]
      %v380 = vld [vmem:[%s142 + $0x560] sm:$0xf]
      %v381 = vld [vmem:[%s142 + $0x564] sm:$0xff]
      %v382 = vld [vmem:[%s142 + $0x56c] sm:$0xf]
      %v383 = vld [vmem:[%s142 + $0x570] sm:$0xff]
      %v384 = vld [vmem:[%s142 + $0x578] sm:$0xf]
      %v385 = vld [vmem:[%s142 + $0x57c] sm:$0xff]
      %v386 = vld [vmem:[%s142 + $0x584] sm:$0xf]
      %v387 = vld [vmem:[%s142 + $0x588] sm:$0xff]
      %v388 = vld [vmem:[%s142 + $0x590] sm:$0xf]
      %v389 = vld [vmem:[%s142 + $0x594] sm:$0xff]
      %v390 = vld [vmem:[%s142 + $0x59c] sm:$0xf]
      %v391 = vld [vmem:[%s142 + $0x5a0] sm:$0xff]
      %v392 = vld [vmem:[%s142 + $0x5a8] sm:$0xf]
      %v393 = vld [vmem:[%s142 + $0x5ac] sm:$0xff]
      %v394 = vld [vmem:[%s142 + $0x5b4] sm:$0xf]
      %v395 = vld [vmem:[%s142 + $0x5b8] sm:$0xff]
      %v396 = vld [vmem:[%s142 + $0x5c0] sm:$0xf]
      %v397 = vld [vmem:[%s142 + $0x5c4] sm:$0xff]
      %v398 = vld [vmem:[%s142 + $0x5cc] sm:$0xf]
      %v399 = vld [vmem:[%s142 + $0x5d0] sm:$0xff]
      %v400 = vld [vmem:[%s142 + $0x5d8] sm:$0xf]
      %v401 = vld [vmem:[%s142 + $0x5dc] sm:$0xff]
      %v402 = vld [vmem:[%s142 + $0x5e4] sm:$0xf]
      %v403 = vld [vmem:[%s142 + $0x5e8] sm:$0xff]
      %v404 = vld [vmem:[%s142 + $0x5f0] sm:$0xf]
      %v405 = vld [vmem:[%s142 + $0x5f4] sm:$0xff]
      %v406 = vld [vmem:[%s142 + $0x5fc] sm:$0xf]
      %v407 = vld [vmem:[%s1] sm:$0xf]
      %v408 = vld [vmem:[%s1 + $0x4] sm:$0xf]
      %v409 = vld [vmem:[%s1 + $0x8] sm:$0xf]
      %v410 = vld [vmem:[%s1 + $0xc] sm:$0xf]
      %v411 = vld [vmem:[%s1 + $0x10] sm:$0xf]
      %v412 = vld [vmem:[%s1 + $0x14] sm:$0xf]
      %v413 = vld [vmem:[%s1 + $0x18] sm:$0xf]
      %v414 = vld [vmem:[%s1 + $0x1c] sm:$0xf]
      %v415 = vld [vmem:[%s1 + $0x20] sm:$0xf]
      %v416 = vld [vmem:[%s1 + $0x24] sm:$0xf]
      %v417 = vld [vmem:[%s1 + $0x28] sm:$0xf]
      %v418 = vld [vmem:[%s1 + $0x2c] sm:$0xf]
      %v419 = vld [vmem:[%s1 + $0x30] sm:$0xf]
      %v420 = vld [vmem:[%s1 + $0x34] sm:$0xf]
      %v421 = vld [vmem:[%s1 + $0x38] sm:$0xf]
      %v422 = vld [vmem:[%s1 + $0x3c] sm:$0xf]
      %v423 = vld [vmem:[%s1 + $0x40] sm:$0xf]
      %v424 = vld [vmem:[%s1 + $0x44] sm:$0xf]
      %v425 = vld [vmem:[%s1 + $0x48] sm:$0xf]
      %v426 = vld [vmem:[%s1 + $0x4c] sm:$0xf]
      %v427 = vld [vmem:[%s1 + $0x50] sm:$0xf]
      %v428 = vld [vmem:[%s1 + $0x54] sm:$0xf]
      %v429 = vld [vmem:[%s1 + $0x58] sm:$0xf]
      %v430 = vld [vmem:[%s1 + $0x5c] sm:$0xf]
      %v431 = vld [vmem:[%s1 + $0x60] sm:$0xf]
      %v432 = vld [vmem:[%s1 + $0x64] sm:$0xf]
      %v433 = vld [vmem:[%s1 + $0x68] sm:$0xf]
      %v434 = vld [vmem:[%s1 + $0x6c] sm:$0xf]
      %v435 = vld [vmem:[%s1 + $0x70] sm:$0xf]
      %v436 = vld [vmem:[%s1 + $0x74] sm:$0xf]
      %v437 = vld [vmem:[%s1 + $0x78] sm:$0xf]
      %v438 = vld [vmem:[%s1 + $0x7c] sm:$0xf]
      %v439 = vld [vmem:[%s1 + $0x80] sm:$0xf]
      %v440 = vld [vmem:[%s1 + $0x84] sm:$0xf]
      %v441 = vld [vmem:[%s1 + $0x88] sm:$0xf]
      %v442 = vld [vmem:[%s1 + $0x8c] sm:$0xf]
      %v699 = vunpack.c.l.b16 %v151
      %v700 = vunpack.c.h.b16 %v151
      %v701 = vunpack.c.l.b16 %v152
      %v702 = vunpack.c.l.b16 %v153
      %v703 = vunpack.c.h.b16 %v153
      %v704 = vunpack.c.l.b16 %v154
      %v705 = vunpack.c.l.b16 %v155
      %v706 = vunpack.c.h.b16 %v155
      %v707 = vunpack.c.l.b16 %v156
      %v708 = vunpack.c.l.b16 %v157
      %v709 = vunpack.c.h.b16 %v157
      %v710 = vunpack.c.l.b16 %v158
      %v711 = vunpack.c.l.b16 %v159
      %v712 = vunpack.c.h.b16 %v159
      %v713 = vunpack.c.l.b16 %v160
      %v714 = vunpack.c.l.b16 %v161
      %v715 = vunpack.c.h.b16 %v161
      %v716 = vunpack.c.l.b16 %v162
      %v717 = vunpack.c.l.b16 %v163
      %v718 = vunpack.c.h.b16 %v163
      %v719 = vunpack.c.l.b16 %v164
      %v720 = vunpack.c.l.b16 %v165
      %v721 = vunpack.c.h.b16 %v165
      %v722 = vunpack.c.l.b16 %v166
      %v723 = vunpack.c.l.b16 %v167
      %v724 = vunpack.c.h.b16 %v167
      %v725 = vunpack.c.l.b16 %v168
      %v726 = vunpack.c.l.b16 %v169
      %v727 = vunpack.c.h.b16 %v169
      %v728 = vunpack.c.l.b16 %v170
      %v729 = vunpack.c.l.b16 %v171
      %v730 = vunpack.c.h.b16 %v171
      %v731 = vunpack.c.l.b16 %v172
      %v732 = vunpack.c.l.b16 %v173
      %v733 = vunpack.c.h.b16 %v173
      %v734 = vunpack.c.l.b16 %v174
      %v735 = vunpack.c.l.b16 %v175
      %v736 = vunpack.c.h.b16 %v175
      %v737 = vunpack.c.l.b16 %v176
      %v738 = vunpack.c.l.b16 %v177
      %v739 = vunpack.c.h.b16 %v177
      %v740 = vunpack.c.l.b16 %v178
      %v741 = vunpack.c.l.b16 %v179
      %v742 = vunpack.c.h.b16 %v179
      %v743 = vunpack.c.l.b16 %v180
      %v744 = vunpack.c.l.b16 %v181
      %v745 = vunpack.c.h.b16 %v181
      %v746 = vunpack.c.l.b16 %v182
      %v747 = vunpack.c.l.b16 %v183
      %v748 = vunpack.c.h.b16 %v183
      %v749 = vunpack.c.l.b16 %v184
      %v750 = vunpack.c.l.b16 %v185
      %v751 = vunpack.c.h.b16 %v185
      %v752 = vunpack.c.l.b16 %v186
      %v753 = vunpack.c.l.b16 %v187
      %v754 = vunpack.c.h.b16 %v187
      %v755 = vunpack.c.l.b16 %v188
      %v756 = vunpack.c.l.b16 %v189
      %v757 = vunpack.c.h.b16 %v189
      %v758 = vunpack.c.l.b16 %v190
      %v759 = vunpack.c.l.b16 %v191
      %v760 = vunpack.c.h.b16 %v191
      %v761 = vunpack.c.l.b16 %v192
      %v762 = vunpack.c.l.b16 %v193
      %v763 = vunpack.c.h.b16 %v193
      %v764 = vunpack.c.l.b16 %v194
      %v765 = vunpack.c.l.b16 %v195
      %v766 = vunpack.c.h.b16 %v195
      %v767 = vunpack.c.l.b16 %v196
      %v768 = vunpack.c.l.b16 %v197
      %v769 = vunpack.c.h.b16 %v197
      %v770 = vunpack.c.l.b16 %v198
      %v771 = vunpack.c.l.b16 %v199
      %v772 = vunpack.c.h.b16 %v199
      %v773 = vunpack.c.l.b16 %v200
      %v774 = vunpack.c.l.b16 %v201
      %v775 = vunpack.c.h.b16 %v201
      %v776 = vunpack.c.l.b16 %v202
      %v777 = vunpack.c.l.b16 %v203
      %v778 = vunpack.c.h.b16 %v203
      %v779 = vunpack.c.l.b16 %v204
      %v780 = vunpack.c.l.b16 %v205
      %v781 = vunpack.c.h.b16 %v205
      %v782 = vunpack.c.l.b16 %v206
      %v783 = vunpack.c.l.b16 %v207
      %v784 = vunpack.c.h.b16 %v207
      %v785 = vunpack.c.l.b16 %v208
      %v786 = vunpack.c.l.b16 %v209
      %v787 = vunpack.c.h.b16 %v209
      %v788 = vunpack.c.l.b16 %v210
      %v789 = vunpack.c.l.b16 %v211
      %v790 = vunpack.c.h.b16 %v211
      %v791 = vunpack.c.l.b16 %v212
      %v792 = vunpack.c.l.b16 %v213
      %v793 = vunpack.c.h.b16 %v213
      %v794 = vunpack.c.l.b16 %v214
      %v795 = vunpack.c.l.b16 %v215
      %v796 = vunpack.c.h.b16 %v215
      %v797 = vunpack.c.l.b16 %v216
      %v798 = vunpack.c.l.b16 %v217
      %v799 = vunpack.c.h.b16 %v217
      %v800 = vunpack.c.l.b16 %v218
      %v801 = vunpack.c.l.b16 %v219
      %v802 = vunpack.c.h.b16 %v219
      %v803 = vunpack.c.l.b16 %v220
      %v804 = vunpack.c.l.b16 %v221
      %v805 = vunpack.c.h.b16 %v221
      %v806 = vunpack.c.l.b16 %v222
      %v807 = vunpack.c.l.b16 %v223
      %v808 = vunpack.c.h.b16 %v223
      %v809 = vunpack.c.l.b16 %v224
      %v810 = vunpack.c.l.b16 %v225
      %v811 = vunpack.c.h.b16 %v225
      %v812 = vunpack.c.l.b16 %v226
      %v813 = vunpack.c.l.b16 %v227
      %v814 = vunpack.c.h.b16 %v227
      %v815 = vunpack.c.l.b16 %v228
      %v816 = vunpack.c.l.b16 %v229
      %v817 = vunpack.c.h.b16 %v229
      %v818 = vunpack.c.l.b16 %v230
      %v819 = vunpack.c.l.b16 %v231
      %v820 = vunpack.c.h.b16 %v231
      %v821 = vunpack.c.l.b16 %v232
      %v822 = vunpack.c.l.b16 %v233
      %v823 = vunpack.c.h.b16 %v233
      %v824 = vunpack.c.l.b16 %v234
      %v825 = vunpack.c.l.b16 %v235
      %v826 = vunpack.c.h.b16 %v235
      %v827 = vunpack.c.l.b16 %v236
      %v828 = vunpack.c.l.b16 %v237
      %v829 = vunpack.c.h.b16 %v237
      %v830 = vunpack.c.l.b16 %v238
      %v831 = vunpack.c.l.b16 %v239
      %v832 = vunpack.c.h.b16 %v239
      %v833 = vunpack.c.l.b16 %v240
      %v834 = vunpack.c.l.b16 %v241
      %v835 = vunpack.c.h.b16 %v241
      %v836 = vunpack.c.l.b16 %v242
      %v837 = vunpack.c.l.b16 %v243
      %v838 = vunpack.c.h.b16 %v243
      %v839 = vunpack.c.l.b16 %v244
      %v840 = vunpack.c.l.b16 %v245
      %v841 = vunpack.c.h.b16 %v245
      %v842 = vunpack.c.l.b16 %v246
      %v843 = vunpack.c.l.b16 %v247
      %v844 = vunpack.c.h.b16 %v247
      %v845 = vunpack.c.l.b16 %v248
      %v846 = vunpack.c.l.b16 %v249
      %v847 = vunpack.c.h.b16 %v249
      %v848 = vunpack.c.l.b16 %v250
      %v849 = vunpack.c.l.b16 %v251
      %v850 = vunpack.c.h.b16 %v251
      %v851 = vunpack.c.l.b16 %v252
      %v852 = vunpack.c.l.b16 %v253
      %v853 = vunpack.c.h.b16 %v253
      %v854 = vunpack.c.l.b16 %v254
      %v855 = vunpack.c.l.b16 %v255
      %v856 = vunpack.c.h.b16 %v255
      %v857 = vunpack.c.l.b16 %v256
      %v858 = vunpack.c.l.b16 %v257
      %v859 = vunpack.c.h.b16 %v257
      %v860 = vunpack.c.l.b16 %v258
      %v861 = vunpack.c.l.b16 %v259
      %v862 = vunpack.c.h.b16 %v259
      %v863 = vunpack.c.l.b16 %v260
      %v864 = vunpack.c.l.b16 %v261
      %v865 = vunpack.c.h.b16 %v261
      %v866 = vunpack.c.l.b16 %v262
      %v867 = vunpack.c.l.b16 %v263
      %v868 = vunpack.c.h.b16 %v263
      %v869 = vunpack.c.l.b16 %v264
      %v870 = vunpack.c.l.b16 %v265
      %v871 = vunpack.c.h.b16 %v265
      %v872 = vunpack.c.l.b16 %v266
      %v873 = vunpack.c.l.b16 %v267
      %v874 = vunpack.c.h.b16 %v267
      %v875 = vunpack.c.l.b16 %v268
      %v876 = vunpack.c.l.b16 %v269
      %v877 = vunpack.c.h.b16 %v269
      %v878 = vunpack.c.l.b16 %v270
      %v879 = vunpack.c.l.b16 %v271
      %v880 = vunpack.c.h.b16 %v271
      %v881 = vunpack.c.l.b16 %v272
      %v882 = vunpack.c.l.b16 %v273
      %v883 = vunpack.c.h.b16 %v273
      %v884 = vunpack.c.l.b16 %v274
      %v885 = vunpack.c.l.b16 %v275
      %v886 = vunpack.c.h.b16 %v275
      %v887 = vunpack.c.l.b16 %v276
      %v888 = vunpack.c.l.b16 %v277
      %v889 = vunpack.c.h.b16 %v277
      %v890 = vunpack.c.l.b16 %v278
      %v891 = vunpack.c.l.b16 %v279
      %v892 = vunpack.c.h.b16 %v279
      %v893 = vunpack.c.l.b16 %v280
      %v894 = vunpack.c.l.b16 %v281
      %v895 = vunpack.c.h.b16 %v281
      %v896 = vunpack.c.l.b16 %v282
      %v897 = vunpack.c.l.b16 %v283
      %v898 = vunpack.c.h.b16 %v283
      %v899 = vunpack.c.l.b16 %v284
      %v900 = vunpack.c.l.b16 %v285
      %v901 = vunpack.c.h.b16 %v285
      %v902 = vunpack.c.l.b16 %v286
      %v903 = vunpack.c.l.b16 %v287
      %v904 = vunpack.c.h.b16 %v287
      %v905 = vunpack.c.l.b16 %v288
      %v906 = vunpack.c.l.b16 %v289
      %v907 = vunpack.c.h.b16 %v289
      %v908 = vunpack.c.l.b16 %v290
      %v909 = vunpack.c.l.b16 %v291
      %v910 = vunpack.c.h.b16 %v291
      %v911 = vunpack.c.l.b16 %v292
      %v912 = vunpack.c.l.b16 %v293
      %v913 = vunpack.c.h.b16 %v293
      %v914 = vunpack.c.l.b16 %v294
      %v915 = vunpack.c.l.b16 %v295
      %v916 = vunpack.c.h.b16 %v295
      %v917 = vunpack.c.l.b16 %v296
      %v918 = vunpack.c.l.b16 %v297
      %v919 = vunpack.c.h.b16 %v297
      %v920 = vunpack.c.l.b16 %v298
      %v921 = vunpack.c.l.b16 %v299
      %v922 = vunpack.c.h.b16 %v299
      %v923 = vunpack.c.l.b16 %v300
      %v924 = vunpack.c.l.b16 %v301
      %v925 = vunpack.c.h.b16 %v301
      %v926 = vunpack.c.l.b16 %v302
      %v927 = vunpack.c.l.b16 %v303
      %v928 = vunpack.c.h.b16 %v303
      %v929 = vunpack.c.l.b16 %v304
      %v930 = vunpack.c.l.b16 %v305
      %v931 = vunpack.c.h.b16 %v305
      %v932 = vunpack.c.l.b16 %v306
      %v933 = vunpack.c.l.b16 %v307
      %v934 = vunpack.c.h.b16 %v307
      %v935 = vunpack.c.l.b16 %v308
      %v936 = vunpack.c.l.b16 %v309
      %v937 = vunpack.c.h.b16 %v309
      %v938 = vunpack.c.l.b16 %v310
      %v939 = vunpack.c.l.b16 %v311
      %v940 = vunpack.c.h.b16 %v311
      %v941 = vunpack.c.l.b16 %v312
      %v942 = vunpack.c.l.b16 %v313
      %v943 = vunpack.c.h.b16 %v313
      %v944 = vunpack.c.l.b16 %v314
      %v945 = vunpack.c.l.b16 %v315
      %v946 = vunpack.c.h.b16 %v315
      %v947 = vunpack.c.l.b16 %v316
      %v948 = vunpack.c.l.b16 %v317
      %v949 = vunpack.c.h.b16 %v317
      %v950 = vunpack.c.l.b16 %v318
      %v951 = vunpack.c.l.b16 %v319
      %v952 = vunpack.c.h.b16 %v319
      %v953 = vunpack.c.l.b16 %v320
      %v954 = vunpack.c.l.b16 %v321
      %v955 = vunpack.c.h.b16 %v321
      %v956 = vunpack.c.l.b16 %v322
      %v957 = vunpack.c.l.b16 %v323
      %v958 = vunpack.c.h.b16 %v323
      %v959 = vunpack.c.l.b16 %v324
      %v960 = vunpack.c.l.b16 %v325
      %v961 = vunpack.c.h.b16 %v325
      %v962 = vunpack.c.l.b16 %v326
      %v963 = vunpack.c.l.b16 %v327
      %v964 = vunpack.c.h.b16 %v327
      %v965 = vunpack.c.l.b16 %v328
      %v966 = vunpack.c.l.b16 %v329
      %v967 = vunpack.c.h.b16 %v329
      %v968 = vunpack.c.l.b16 %v330
      %v969 = vunpack.c.l.b16 %v331
      %v970 = vunpack.c.h.b16 %v331
      %v971 = vunpack.c.l.b16 %v332
      %v972 = vunpack.c.l.b16 %v333
      %v973 = vunpack.c.h.b16 %v333
      %v974 = vunpack.c.l.b16 %v334
      %v975 = vunpack.c.l.b16 %v335
      %v976 = vunpack.c.h.b16 %v335
      %v977 = vunpack.c.l.b16 %v336
      %v978 = vunpack.c.l.b16 %v337
      %v979 = vunpack.c.h.b16 %v337
      %v980 = vunpack.c.l.b16 %v338
      %v981 = vunpack.c.l.b16 %v339
      %v982 = vunpack.c.h.b16 %v339
      %v983 = vunpack.c.l.b16 %v340
      %v984 = vunpack.c.l.b16 %v341
      %v985 = vunpack.c.h.b16 %v341
      %v986 = vunpack.c.l.b16 %v342
      %v987 = vunpack.c.l.b16 %v343
      %v988 = vunpack.c.h.b16 %v343
      %v989 = vunpack.c.l.b16 %v344
      %v990 = vunpack.c.l.b16 %v345
      %v991 = vunpack.c.h.b16 %v345
      %v992 = vunpack.c.l.b16 %v346
      %v993 = vunpack.c.l.b16 %v347
      %v994 = vunpack.c.h.b16 %v347
      %v995 = vunpack.c.l.b16 %v348
      %v996 = vunpack.c.l.b16 %v349
      %v997 = vunpack.c.h.b16 %v349
      %v998 = vunpack.c.l.b16 %v350
      %v999 = vunpack.c.l.b16 %v351
      %v1000 = vunpack.c.h.b16 %v351
      %v1001 = vunpack.c.l.b16 %v352
      %v1002 = vunpack.c.l.b16 %v353
      %v1003 = vunpack.c.h.b16 %v353
      %v1004 = vunpack.c.l.b16 %v354
      %v1005 = vunpack.c.l.b16 %v355
      %v1006 = vunpack.c.h.b16 %v355
      %v1007 = vunpack.c.l.b16 %v356
      %v1008 = vunpack.c.l.b16 %v357
      %v1009 = vunpack.c.h.b16 %v357
      %v1010 = vunpack.c.l.b16 %v358
      %v1011 = vunpack.c.l.b16 %v359
      %v1012 = vunpack.c.h.b16 %v359
      %v1013 = vunpack.c.l.b16 %v360
      %v1014 = vunpack.c.l.b16 %v361
      %v1015 = vunpack.c.h.b16 %v361
      %v1016 = vunpack.c.l.b16 %v362
      %v1017 = vunpack.c.l.b16 %v363
      %v1018 = vunpack.c.h.b16 %v363
      %v1019 = vunpack.c.l.b16 %v364
      %v1020 = vunpack.c.l.b16 %v365
      %v1021 = vunpack.c.h.b16 %v365
      %v1022 = vunpack.c.l.b16 %v366
      %v1023 = vunpack.c.l.b16 %v367
      %v1024 = vunpack.c.h.b16 %v367
      %v1025 = vunpack.c.l.b16 %v368
      %v1026 = vunpack.c.l.b16 %v369
      %v1027 = vunpack.c.h.b16 %v369
      %v1028 = vunpack.c.l.b16 %v370
      %v1029 = vunpack.c.l.b16 %v371
      %v1030 = vunpack.c.h.b16 %v371
      %v1031 = vunpack.c.l.b16 %v372
      %v1032 = vunpack.c.l.b16 %v373
      %v1033 = vunpack.c.h.b16 %v373
      %v1034 = vunpack.c.l.b16 %v374
      %v1035 = vunpack.c.l.b16 %v375
      %v1036 = vunpack.c.h.b16 %v375
      %v1037 = vunpack.c.l.b16 %v376
      %v1038 = vunpack.c.l.b16 %v377
      %v1039 = vunpack.c.h.b16 %v377
      %v1040 = vunpack.c.l.b16 %v378
      %v1041 = vunpack.c.l.b16 %v379
      %v1042 = vunpack.c.h.b16 %v379
      %v1043 = vunpack.c.l.b16 %v380
      %v1044 = vunpack.c.l.b16 %v381
      %v1045 = vunpack.c.h.b16 %v381
      %v1046 = vunpack.c.l.b16 %v382
      %v1047 = vunpack.c.l.b16 %v383
      %v1048 = vunpack.c.h.b16 %v383
      %v1049 = vunpack.c.l.b16 %v384
      %v1050 = vunpack.c.l.b16 %v385
      %v1051 = vunpack.c.h.b16 %v385
      %v1052 = vunpack.c.l.b16 %v386
      %v1053 = vunpack.c.l.b16 %v387
      %v1054 = vunpack.c.h.b16 %v387
      %v1055 = vunpack.c.l.b16 %v388
      %v1056 = vunpack.c.l.b16 %v389
      %v1057 = vunpack.c.h.b16 %v389
      %v1058 = vunpack.c.l.b16 %v390
      %v1059 = vunpack.c.l.b16 %v391
      %v1060 = vunpack.c.h.b16 %v391
      %v1061 = vunpack.c.l.b16 %v392
      %v1062 = vunpack.c.l.b16 %v393
      %v1063 = vunpack.c.h.b16 %v393
      %v1064 = vunpack.c.l.b16 %v394
      %v1065 = vunpack.c.l.b16 %v395
      %v1066 = vunpack.c.h.b16 %v395
      %v1067 = vunpack.c.l.b16 %v396
      %v1068 = vunpack.c.l.b16 %v397
      %v1069 = vunpack.c.h.b16 %v397
      %v1070 = vunpack.c.l.b16 %v398
      %v1071 = vunpack.c.l.b16 %v399
      %v1072 = vunpack.c.h.b16 %v399
      %v1073 = vunpack.c.l.b16 %v400
      %v1074 = vunpack.c.l.b16 %v401
      %v1075 = vunpack.c.h.b16 %v401
      %v1076 = vunpack.c.l.b16 %v402
      %v1077 = vunpack.c.l.b16 %v403
      %v1078 = vunpack.c.h.b16 %v403
      %v1079 = vunpack.c.l.b16 %v404
      %v1080 = vunpack.c.l.b16 %v405
      %v1081 = vunpack.c.h.b16 %v405
      %v1082 = vunpack.c.l.b16 %v406
      %v1083 = vpack.c.b16 %v702, %v699
      %v1084 = vpack.c.b16 %v703, %v700
      %v1085 = vpack.c.b16 %v704, %v701
      %v1086 = vpack.c.b16 %v708, %v705
      %v1087 = vpack.c.b16 %v709, %v706
      %v1088 = vpack.c.b16 %v710, %v707
      %v1089 = vpack.c.b16 %v714, %v711
      %v1090 = vpack.c.b16 %v715, %v712
      %v1091 = vpack.c.b16 %v716, %v713
      %v1092 = vpack.c.b16 %v720, %v717
      %v1093 = vpack.c.b16 %v721, %v718
      %v1094 = vpack.c.b16 %v722, %v719
      %v1095 = vpack.c.b16 %v726, %v723
      %v1096 = vpack.c.b16 %v727, %v724
      %v1097 = vpack.c.b16 %v728, %v725
      %v1098 = vpack.c.b16 %v732, %v729
      %v1099 = vpack.c.b16 %v733, %v730
      %v1100 = vpack.c.b16 %v734, %v731
      %v1101 = vpack.c.b16 %v738, %v735
      %v1102 = vpack.c.b16 %v739, %v736
      %v1103 = vpack.c.b16 %v740, %v737
      %v1104 = vpack.c.b16 %v744, %v741
      %v1105 = vpack.c.b16 %v745, %v742
      %v1106 = vpack.c.b16 %v746, %v743
      %v1107 = vpack.c.b16 %v750, %v747
      %v1108 = vpack.c.b16 %v751, %v748
      %v1109 = vpack.c.b16 %v752, %v749
      %v1110 = vpack.c.b16 %v756, %v753
      %v1111 = vpack.c.b16 %v757, %v754
      %v1112 = vpack.c.b16 %v758, %v755
      %v1113 = vpack.c.b16 %v762, %v759
      %v1114 = vpack.c.b16 %v763, %v760
      %v1115 = vpack.c.b16 %v764, %v761
      %v1116 = vpack.c.b16 %v768, %v765
      %v1117 = vpack.c.b16 %v769, %v766
      %v1118 = vpack.c.b16 %v770, %v767
      %v1119 = vpack.c.b16 %v774, %v771
      %v1120 = vpack.c.b16 %v775, %v772
      %v1121 = vpack.c.b16 %v776, %v773
      %v1122 = vpack.c.b16 %v780, %v777
      %v1123 = vpack.c.b16 %v781, %v778
      %v1124 = vpack.c.b16 %v782, %v779
      %v1125 = vpack.c.b16 %v786, %v783
      %v1126 = vpack.c.b16 %v787, %v784
      %v1127 = vpack.c.b16 %v788, %v785
      %v1128 = vpack.c.b16 %v792, %v789
      %v1129 = vpack.c.b16 %v793, %v790
      %v1130 = vpack.c.b16 %v794, %v791
      %v1131 = vpack.c.b16 %v798, %v795
      %v1132 = vpack.c.b16 %v799, %v796
      %v1133 = vpack.c.b16 %v800, %v797
      %v1134 = vpack.c.b16 %v804, %v801
      %v1135 = vpack.c.b16 %v805, %v802
      %v1136 = vpack.c.b16 %v806, %v803
      %v1137 = vpack.c.b16 %v810, %v807
      %v1138 = vpack.c.b16 %v811, %v808
      %v1139 = vpack.c.b16 %v812, %v809
      %v1140 = vpack.c.b16 %v816, %v813
      %v1141 = vpack.c.b16 %v817, %v814
      %v1142 = vpack.c.b16 %v818, %v815
      %v1143 = vpack.c.b16 %v822, %v819
      %v1144 = vpack.c.b16 %v823, %v820
      %v1145 = vpack.c.b16 %v824, %v821
      %v1146 = vpack.c.b16 %v828, %v825
      %v1147 = vpack.c.b16 %v829, %v826
      %v1148 = vpack.c.b16 %v830, %v827
      %v1149 = vpack.c.b16 %v834, %v831
      %v1150 = vpack.c.b16 %v835, %v832
      %v1151 = vpack.c.b16 %v836, %v833
      %v1152 = vpack.c.b16 %v840, %v837
      %v1153 = vpack.c.b16 %v841, %v838
      %v1154 = vpack.c.b16 %v842, %v839
      %v1155 = vpack.c.b16 %v846, %v843
      %v1156 = vpack.c.b16 %v847, %v844
      %v1157 = vpack.c.b16 %v848, %v845
      %v1158 = vpack.c.b16 %v852, %v849
      %v1159 = vpack.c.b16 %v853, %v850
      %v1160 = vpack.c.b16 %v854, %v851
      %v1161 = vpack.c.b16 %v858, %v855
      %v1162 = vpack.c.b16 %v859, %v856
      %v1163 = vpack.c.b16 %v860, %v857
      %v1164 = vpack.c.b16 %v864, %v861
      %v1165 = vpack.c.b16 %v865, %v862
      %v1166 = vpack.c.b16 %v866, %v863
      %v1167 = vpack.c.b16 %v870, %v867
      %v1168 = vpack.c.b16 %v871, %v868
      %v1169 = vpack.c.b16 %v872, %v869
      %v1170 = vpack.c.b16 %v876, %v873
      %v1171 = vpack.c.b16 %v877, %v874
      %v1172 = vpack.c.b16 %v878, %v875
      %v1173 = vpack.c.b16 %v882, %v879
      %v1174 = vpack.c.b16 %v883, %v880
      %v1175 = vpack.c.b16 %v884, %v881
      %v1176 = vpack.c.b16 %v888, %v885
      %v1177 = vpack.c.b16 %v889, %v886
      %v1178 = vpack.c.b16 %v890, %v887
      %v1179 = vpack.c.b16 %v894, %v891
      %v1180 = vpack.c.b16 %v895, %v892
      %v1181 = vpack.c.b16 %v896, %v893
      %v1182 = vpack.c.b16 %v900, %v897
      %v1183 = vpack.c.b16 %v901, %v898
      %v1184 = vpack.c.b16 %v902, %v899
      %v1185 = vpack.c.b16 %v906, %v903
      %v1186 = vpack.c.b16 %v907, %v904
      %v1187 = vpack.c.b16 %v908, %v905
      %v1188 = vpack.c.b16 %v912, %v909
      %v1189 = vpack.c.b16 %v913, %v910
      %v1190 = vpack.c.b16 %v914, %v911
      %v1191 = vpack.c.b16 %v918, %v915
      %v1192 = vpack.c.b16 %v919, %v916
      %v1193 = vpack.c.b16 %v920, %v917
      %v1194 = vpack.c.b16 %v924, %v921
      %v1195 = vpack.c.b16 %v925, %v922
      %v1196 = vpack.c.b16 %v926, %v923
      %v1197 = vpack.c.b16 %v930, %v927
      %v1198 = vpack.c.b16 %v931, %v928
      %v1199 = vpack.c.b16 %v932, %v929
      %v1200 = vpack.c.b16 %v936, %v933
      %v1201 = vpack.c.b16 %v937, %v934
      %v1202 = vpack.c.b16 %v938, %v935
      %v1203 = vpack.c.b16 %v942, %v939
      %v1204 = vpack.c.b16 %v943, %v940
      %v1205 = vpack.c.b16 %v944, %v941
      %v1206 = vpack.c.b16 %v948, %v945
      %v1207 = vpack.c.b16 %v949, %v946
      %v1208 = vpack.c.b16 %v950, %v947
      %v1209 = vpack.c.b16 %v954, %v951
      %v1210 = vpack.c.b16 %v955, %v952
      %v1211 = vpack.c.b16 %v956, %v953
      %v1212 = vpack.c.b16 %v960, %v957
      %v1213 = vpack.c.b16 %v961, %v958
      %v1214 = vpack.c.b16 %v962, %v959
      %v1215 = vpack.c.b16 %v966, %v963
      %v1216 = vpack.c.b16 %v967, %v964
      %v1217 = vpack.c.b16 %v968, %v965
      %v1218 = vpack.c.b16 %v972, %v969
      %v1219 = vpack.c.b16 %v973, %v970
      %v1220 = vpack.c.b16 %v974, %v971
      %v1221 = vpack.c.b16 %v978, %v975
      %v1222 = vpack.c.b16 %v979, %v976
      %v1223 = vpack.c.b16 %v980, %v977
      %v1224 = vpack.c.b16 %v984, %v981
      %v1225 = vpack.c.b16 %v985, %v982
      %v1226 = vpack.c.b16 %v986, %v983
      %v1227 = vpack.c.b16 %v990, %v987
      %v1228 = vpack.c.b16 %v991, %v988
      %v1229 = vpack.c.b16 %v992, %v989
      %v1230 = vpack.c.b16 %v996, %v993
      %v1231 = vpack.c.b16 %v997, %v994
      %v1232 = vpack.c.b16 %v998, %v995
      %v1233 = vpack.c.b16 %v1002, %v999
      %v1234 = vpack.c.b16 %v1003, %v1000
      %v1235 = vpack.c.b16 %v1004, %v1001
      %v1236 = vpack.c.b16 %v1008, %v1005
      %v1237 = vpack.c.b16 %v1009, %v1006
      %v1238 = vpack.c.b16 %v1010, %v1007
      %v1239 = vpack.c.b16 %v1014, %v1011
      %v1240 = vpack.c.b16 %v1015, %v1012
      %v1241 = vpack.c.b16 %v1016, %v1013
      %v1242 = vpack.c.b16 %v1020, %v1017
      %v1243 = vpack.c.b16 %v1021, %v1018
      %v1244 = vpack.c.b16 %v1022, %v1019
      %v1245 = vpack.c.b16 %v1026, %v1023
      %v1246 = vpack.c.b16 %v1027, %v1024
      %v1247 = vpack.c.b16 %v1028, %v1025
      %v1248 = vpack.c.b16 %v1032, %v1029
      %v1249 = vpack.c.b16 %v1033, %v1030
      %v1250 = vpack.c.b16 %v1034, %v1031
      %v1251 = vpack.c.b16 %v1038, %v1035
      %v1252 = vpack.c.b16 %v1039, %v1036
      %v1253 = vpack.c.b16 %v1040, %v1037
      %v1254 = vpack.c.b16 %v1044, %v1041
      %v1255 = vpack.c.b16 %v1045, %v1042
      %v1256 = vpack.c.b16 %v1046, %v1043
      %v1257 = vpack.c.b16 %v1050, %v1047
      %v1258 = vpack.c.b16 %v1051, %v1048
      %v1259 = vpack.c.b16 %v1052, %v1049
      %v1260 = vpack.c.b16 %v1056, %v1053
      %v1261 = vpack.c.b16 %v1057, %v1054
      %v1262 = vpack.c.b16 %v1058, %v1055
      %v1263 = vpack.c.b16 %v1062, %v1059
      %v1264 = vpack.c.b16 %v1063, %v1060
      %v1265 = vpack.c.b16 %v1064, %v1061
      %v1266 = vpack.c.b16 %v1068, %v1065
      %v1267 = vpack.c.b16 %v1069, %v1066
      %v1268 = vpack.c.b16 %v1070, %v1067
      %v1269 = vpack.c.b16 %v1074, %v1071
      %v1270 = vpack.c.b16 %v1075, %v1072
      %v1271 = vpack.c.b16 %v1076, %v1073
      %v1272 = vpack.c.b16 %v1080, %v1077
      %v1273 = vpack.c.b16 %v1081, %v1078
      %v1274 = vpack.c.b16 %v1082, %v1079
      %v1439 = vunpack.c.l.b16 %v407
      %v1440 = vunpack.c.l.b16 %v408
      %v1441 = vunpack.c.l.b16 %v409
      %v1442 = vunpack.c.l.b16 %v410
      %v1443 = vunpack.c.l.b16 %v411
      %v1444 = vunpack.c.l.b16 %v412
      %v1445 = vunpack.c.l.b16 %v413
      %v1446 = vunpack.c.l.b16 %v414
      %v1447 = vunpack.c.l.b16 %v415
      %v1448 = vunpack.c.l.b16 %v416
      %v1449 = vunpack.c.l.b16 %v417
      %v1450 = vunpack.c.l.b16 %v418
      %v1451 = vunpack.c.l.b16 %v419
      %v1452 = vunpack.c.l.b16 %v420
      %v1453 = vunpack.c.l.b16 %v421
      %v1454 = vunpack.c.l.b16 %v422
      %v1455 = vunpack.c.l.b16 %v423
      %v1456 = vunpack.c.l.b16 %v424
      %v1457 = vunpack.c.l.b16 %v425
      %v1458 = vunpack.c.l.b16 %v426
      %v1459 = vunpack.c.l.b16 %v427
      %v1460 = vunpack.c.l.b16 %v428
      %v1461 = vunpack.c.l.b16 %v429
      %v1462 = vunpack.c.l.b16 %v430
      %v1463 = vunpack.c.l.b16 %v431
      %v1464 = vunpack.c.l.b16 %v432
      %v1465 = vunpack.c.l.b16 %v433
      %v1466 = vunpack.c.l.b16 %v434
      %v1467 = vunpack.c.l.b16 %v435
      %v1468 = vunpack.c.l.b16 %v436
      %v1469 = vunpack.c.l.b16 %v437
      %v1470 = vunpack.c.l.b16 %v438
      %v1471 = vunpack.c.l.b16 %v439
      %v1472 = vunpack.c.l.b16 %v440
      %v1473 = vunpack.c.l.b16 %v441
      %v1474 = vunpack.c.l.b16 %v442
      %v1475 = vpack.c.b16 %v1440, %v1439
      %v1476 = vpack.c.b16 %v1442, %v1441
      %v1477 = vpack.c.b16 %v1444, %v1443
      %v1478 = vpack.c.b16 %v1446, %v1445
      %v1479 = vpack.c.b16 %v1448, %v1447
      %v1480 = vpack.c.b16 %v1450, %v1449
      %v1481 = vpack.c.b16 %v1452, %v1451
      %v1482 = vpack.c.b16 %v1454, %v1453
      %v1483 = vpack.c.b16 %v1456, %v1455
      %v1484 = vpack.c.b16 %v1458, %v1457
      %v1485 = vpack.c.b16 %v1460, %v1459
      %v1486 = vpack.c.b16 %v1462, %v1461
      %v1487 = vpack.c.b16 %v1464, %v1463
      %v1488 = vpack.c.b16 %v1466, %v1465
      %v1489 = vpack.c.b16 %v1468, %v1467
      %v1490 = vpack.c.b16 %v1470, %v1469
      %v1491 = vpack.c.b16 %v1472, %v1471
      %v1492 = vpack.c.b16 %v1474, %v1473
      %vm1511 = vcmask 261120
      %v1513 = vsel %vm1511, %v1085, 0
      %v1516 = vsel %vm1511, %v1088, 0
      %v1519 = vsel %vm1511, %v1091, 0
      %v1522 = vsel %vm1511, %v1094, 0
      %v1525 = vsel %vm1511, %v1097, 0
      %v1528 = vsel %vm1511, %v1100, 0
      %v1531 = vsel %vm1511, %v1103, 0
      %v1534 = vsel %vm1511, %v1106, 0
      %v1537 = vsel %vm1511, %v1109, 0
      %v1540 = vsel %vm1511, %v1112, 0
      %v1543 = vsel %vm1511, %v1115, 0
      %v1546 = vsel %vm1511, %v1118, 0
      %v1549 = vsel %vm1511, %v1121, 0
      %v1552 = vsel %vm1511, %v1124, 0
      %v1555 = vsel %vm1511, %v1127, 0
      %v1558 = vsel %vm1511, %v1130, 0
      %v1561 = vsel %vm1511, %v1133, 0
      %v1564 = vsel %vm1511, %v1136, 0
      %v1567 = vsel %vm1511, %v1139, 0
      %v1570 = vsel %vm1511, %v1142, 0
      %v1573 = vsel %vm1511, %v1145, 0
      %v1576 = vsel %vm1511, %v1148, 0
      %v1579 = vsel %vm1511, %v1151, 0
      %v1582 = vsel %vm1511, %v1154, 0
      %v1585 = vsel %vm1511, %v1157, 0
      %v1588 = vsel %vm1511, %v1160, 0
      %v1591 = vsel %vm1511, %v1163, 0
      %v1594 = vsel %vm1511, %v1166, 0
      %v1597 = vsel %vm1511, %v1169, 0
      %v1600 = vsel %vm1511, %v1172, 0
      %v1603 = vsel %vm1511, %v1175, 0
      %v1606 = vsel %vm1511, %v1178, 0
      %v1609 = vsel %vm1511, %v1181, 0
      %v1612 = vsel %vm1511, %v1184, 0
      %v1615 = vsel %vm1511, %v1187, 0
      %v1618 = vsel %vm1511, %v1190, 0
      %v1621 = vsel %vm1511, %v1193, 0
      %v1624 = vsel %vm1511, %v1196, 0
      %v1627 = vsel %vm1511, %v1199, 0
      %v1630 = vsel %vm1511, %v1202, 0
      %v1633 = vsel %vm1511, %v1205, 0
      %v1636 = vsel %vm1511, %v1208, 0
      %v1639 = vsel %vm1511, %v1211, 0
      %v1642 = vsel %vm1511, %v1214, 0
      %v1645 = vsel %vm1511, %v1217, 0
      %v1648 = vsel %vm1511, %v1220, 0
      %v1651 = vsel %vm1511, %v1223, 0
      %v1654 = vsel %vm1511, %v1226, 0
      %v1657 = vsel %vm1511, %v1229, 0
      %v1660 = vsel %vm1511, %v1232, 0
      %v1663 = vsel %vm1511, %v1235, 0
      %v1666 = vsel %vm1511, %v1238, 0
      %v1669 = vsel %vm1511, %v1241, 0
      %v1672 = vsel %vm1511, %v1244, 0
      %v1675 = vsel %vm1511, %v1247, 0
      %v1678 = vsel %vm1511, %v1250, 0
      %v1681 = vsel %vm1511, %v1253, 0
      %v1684 = vsel %vm1511, %v1256, 0
      %v1687 = vsel %vm1511, %v1259, 0
      %v1690 = vsel %vm1511, %v1262, 0
      %v1693 = vsel %vm1511, %v1265, 0
      %v1696 = vsel %vm1511, %v1268, 0
      %v1699 = vsel %vm1511, %v1271, 0
      %v1702 = vsel %vm1511, %v1274, 0
      %1704 = vmatprep.subr.bf16.mxu0 0
      %1705 = vmatpush1.bf16.msra.mxu0 %v1475
      %1706 = vmatprep.subr.bf16.mxu0 0
      %1707 = vmatpush1.bf16.msra.mxu0 %v1476
      %1708 = vmatprep.subr.bf16.mxu0 0
      %1709 = vmatpush1.bf16.msra.mxu0 %v1477
      %1710 = vmatprep.subr.bf16.mxu0 0
      %1711 = vmatpush1.bf16.msra.mxu0 %v1478
      %1712 = vmatprep.subr.bf16.mxu0 0
      %1713 = vmatpush1.bf16.msra.mxu0 %v1479
      %1714 = vmatprep.subr.bf16.mxu0 0
      %1715 = vmatpush1.bf16.msra.mxu0 %v1480
      %1716 = vmatprep.subr.bf16.mxu0 0
      %1717 = vmatpush1.bf16.msra.mxu0 %v1481
      %1718 = vmatprep.subr.bf16.mxu0 0
      %1719 = vmatpush1.bf16.msra.mxu0 %v1482
      %1720 = vmatprep.subr.bf16.mxu0 0
      %1721 = vmatpush1.bf16.msra.mxu0 %v1483
      %1722 = vmatprep.subr.bf16.mxu0 0
      %1723 = vmatpush1.bf16.msra.mxu0 %v1484
      %1724 = vmatprep.subr.bf16.mxu0 0
      %1725 = vmatpush1.bf16.msra.mxu0 %v1485
      %1726 = vmatprep.subr.bf16.mxu0 0
      %1727 = vmatpush1.bf16.msra.mxu0 %v1486
      %1728 = vmatprep.subr.bf16.mxu0 0
      %1729 = vmatpush1.bf16.msra.mxu0 %v1487
      %1730 = vmatprep.subr.bf16.mxu0 0
      %1731 = vmatpush1.bf16.msra.mxu0 %v1488
      %1732 = vmatprep.subr.bf16.mxu0 0
      %1733 = vmatpush1.bf16.msra.mxu0 %v1489
      %1734 = vmatprep.subr.bf16.mxu0 0
      %1735 = vmatpush1.bf16.msra.mxu0 %v1490
      %1736 = vmatprep.mubr.bf16.mxu0 %v1084
      %1737 = vmatmul.mubr.bf16.gmra.mrb[0].mxu0 %v1083
      %v1738 = vpop.f32.mrb[0].mxu0
      %v1739 = vadd.f32 0.0, %v1738
      %v1740 = vpop.f32.mrb[0].mxu0
      %v1741 = vpop.f32.mrb[0].mxu0
      %v1742 = vadd.f32 0.0, %v1741
      %v1743 = vpop.f32.mrb[0].mxu0
      %1744 = vmatprep.mubr.bf16.mxu0 %v1087
      %1745 = vmatmul.mubr.bf16.gmra.mrb[0].mxu0 %v1086
      %v1746 = vpop.f32.mrb[0].mxu0
      %v1747 = vadd.f32 0.0, %v1746
      %v1748 = vpop.f32.mrb[0].mxu0
      %v1749 = vpop.f32.mrb[0].mxu0
      %v1750 = vadd.f32 0.0, %v1749
      %v1751 = vpop.f32.mrb[0].mxu0
      %1752 = vmatprep.mubr.bf16.mxu0 %v1090
      %1753 = vmatmul.mubr.bf16.gmra.mrb[0].mxu0 %v1089
      %v1754 = vpop.f32.mrb[0].mxu0
      %v1755 = vadd.f32 0.0, %v1754
      %v1756 = vpop.f32.mrb[0].mxu0
      %v1757 = vpop.f32.mrb[0].mxu0
      %v1758 = vadd.f32 0.0, %v1757
      %v1759 = vpop.f32.mrb[0].mxu0
      %1760 = vmatprep.mubr.bf16.mxu0 %v1093
      %1761 = vmatmul.mubr.bf16.gmra.mrb[0].mxu0 %v1092
      %v1762 = vpop.f32.mrb[0].mxu0
      %v1763 = vadd.f32 0.0, %v1762
      %v1764 = vpop.f32.mrb[0].mxu0
      %v1765 = vpop.f32.mrb[0].mxu0
      %v1766 = vadd.f32 0.0, %v1765
      %v1767 = vpop.f32.mrb[0].mxu0
      %1768 = vmatprep.mubr.bf16.mxu0 %v1096
      %1769 = vmatmul.mubr.bf16.gmra.mrb[0].mxu0 %v1095
      %v1770 = vpop.f32.mrb[0].mxu0
      %v1771 = vadd.f32 0.0, %v1770
      %v1772 = vpop.f32.mrb[0].mxu0
      %v1773 = vpop.f32.mrb[0].mxu0
      %v1774 = vadd.f32 0.0, %v1773
      %v1775 = vpop.f32.mrb[0].mxu0
      %1776 = vmatprep.mubr.bf16.mxu0 %v1099
      %1777 = vmatmul.mubr.bf16.gmra.mrb[0].mxu0 %v1098
      %v1778 = vpop.f32.mrb[0].mxu0
      %v1779 = vadd.f32 0.0, %v1778
      %v1780 = vpop.f32.mrb[0].mxu0
      %v1781 = vpop.f32.mrb[0].mxu0
      %v1782 = vadd.f32 0.0, %v1781
      %v1783 = vpop.f32.mrb[0].mxu0
      %1784 = vmatprep.mubr.bf16.mxu0 %v1102
      %1785 = vmatmul.mubr.bf16.gmra.mrb[0].mxu0 %v1101
      %v1786 = vpop.f32.mrb[0].mxu0
      %v1787 = vadd.f32 0.0, %v1786
      %v1788 = vpop.f32.mrb[0].mxu0
      %v1789 = vpop.f32.mrb[0].mxu0
      %v1790 = vadd.f32 0.0, %v1789
      %v1791 = vpop.f32.mrb[0].mxu0
      %1792 = vmatprep.mubr.bf16.mxu0 %v1105
      %1793 = vmatmul.mubr.bf16.gmra.mrb[0].mxu0 %v1104
      %v1794 = vpop.f32.mrb[0].mxu0
      %v1795 = vadd.f32 0.0, %v1794
      %v1796 = vpop.f32.mrb[0].mxu0
      %v1797 = vpop.f32.mrb[0].mxu0
      %v1798 = vadd.f32 0.0, %v1797
      %v1799 = vpop.f32.mrb[0].mxu0
      %1800 = vmatprep.mubr.bf16.mxu0 %v1108
      %1801 = vmatmul.mubr.bf16.gmra.mrb[0].mxu0 %v1107
      %v1802 = vpop.f32.mrb[0].mxu0
      %v1803 = vadd.f32 0.0, %v1802
      %v1804 = vpop.f32.mrb[0].mxu0
      %v1805 = vpop.f32.mrb[0].mxu0
      %v1806 = vadd.f32 0.0, %v1805
      %v1807 = vpop.f32.mrb[0].mxu0
      %1808 = vmatprep.mubr.bf16.mxu0 %v1111
      %1809 = vmatmul.mubr.bf16.gmra.mrb[0].mxu0 %v1110
      %v1810 = vpop.f32.mrb[0].mxu0
      %v1811 = vadd.f32 0.0, %v1810
      %v1812 = vpop.f32.mrb[0].mxu0
      %v1813 = vpop.f32.mrb[0].mxu0
      %v1814 = vadd.f32 0.0, %v1813
      %v1815 = vpop.f32.mrb[0].mxu0
      %1816 = vmatprep.mubr.bf16.mxu0 %v1114
      %1817 = vmatmul.mubr.bf16.gmra.mrb[0].mxu0 %v1113
      %v1818 = vpop.f32.mrb[0].mxu0
      %v1819 = vadd.f32 0.0, %v1818
      %v1820 = vpop.f32.mrb[0].mxu0
      %v1821 = vpop.f32.mrb[0].mxu0
      %v1822 = vadd.f32 0.0, %v1821
      %v1823 = vpop.f32.mrb[0].mxu0
      %1824 = vmatprep.mubr.bf16.mxu0 %v1117
      %1825 = vmatmul.mubr.bf16.gmra.mrb[0].mxu0 %v1116
      %v1826 = vpop.f32.mrb[0].mxu0
      %v1827 = vadd.f32 0.0, %v1826
      %v1828 = vpop.f32.mrb[0].mxu0
      %v1829 = vpop.f32.mrb[0].mxu0
      %v1830 = vadd.f32 0.0, %v1829
      %v1831 = vpop.f32.mrb[0].mxu0
      %1832 = vmatprep.mubr.bf16.mxu0 %v1120
      %1833 = vmatmul.mubr.bf16.gmra.mrb[0].mxu0 %v1119
      %v1834 = vpop.f32.mrb[0].mxu0
      %v1835 = vadd.f32 0.0, %v1834
      %v1836 = vpop.f32.mrb[0].mxu0
      %v1837 = vpop.f32.mrb[0].mxu0
      %v1838 = vadd.f32 0.0, %v1837
      %v1839 = vpop.f32.mrb[0].mxu0
      %1840 = vmatprep.mubr.bf16.mxu0 %v1123
      %1841 = vmatmul.mubr.bf16.gmra.mrb[0].mxu0 %v1122
      %v1842 = vpop.f32.mrb[0].mxu0
      %v1843 = vadd.f32 0.0, %v1842
      %v1844 = vpop.f32.mrb[0].mxu0
      %v1845 = vpop.f32.mrb[0].mxu0
      %v1846 = vadd.f32 0.0, %v1845
      %v1847 = vpop.f32.mrb[0].mxu0
      %1848 = vmatprep.mubr.bf16.mxu0 %v1126
      %1849 = vmatmul.mubr.bf16.gmra.mrb[0].mxu0 %v1125
      %v1850 = vpop.f32.mrb[0].mxu0
      %v1851 = vadd.f32 0.0, %v1850
      %v1852 = vpop.f32.mrb[0].mxu0
      %v1853 = vpop.f32.mrb[0].mxu0
      %v1854 = vadd.f32 0.0, %v1853
      %v1855 = vpop.f32.mrb[0].mxu0
      %1856 = vmatprep.mubr.bf16.mxu0 %v1129
      %1857 = vmatmul.mubr.bf16.gmra.mrb[0].mxu0 %v1128
      %v1858 = vpop.f32.mrb[0].mxu0
      %v1859 = vadd.f32 0.0, %v1858
      %v1860 = vpop.f32.mrb[0].mxu0
      %v1861 = vpop.f32.mrb[0].mxu0
      %v1862 = vadd.f32 0.0, %v1861
      %v1863 = vpop.f32.mrb[0].mxu0
      %1864 = vmatprep.mubr.bf16.mxu0 %v1132
      %1865 = vmatmul.mubr.bf16.gmra.mrb[0].mxu0 %v1131
      %v1866 = vpop.f32.mrb[0].mxu0
      %v1867 = vadd.f32 0.0, %v1866
      %v1868 = vpop.f32.mrb[0].mxu0
      %v1869 = vpop.f32.mrb[0].mxu0
      %v1870 = vadd.f32 0.0, %v1869
      %v1871 = vpop.f32.mrb[0].mxu0
      %1872 = vmatprep.mubr.bf16.mxu0 %v1135
      %1873 = vmatmul.mubr.bf16.gmra.mrb[0].mxu0 %v1134
      %v1874 = vpop.f32.mrb[0].mxu0
      %v1875 = vadd.f32 0.0, %v1874
      %v1876 = vpop.f32.mrb[0].mxu0
      %v1877 = vpop.f32.mrb[0].mxu0
      %v1878 = vadd.f32 0.0, %v1877
      %v1879 = vpop.f32.mrb[0].mxu0
      %1880 = vmatprep.mubr.bf16.mxu0 %v1138
      %1881 = vmatmul.mubr.bf16.gmra.mrb[0].mxu0 %v1137
      %v1882 = vpop.f32.mrb[0].mxu0
      %v1883 = vadd.f32 0.0, %v1882
      %v1884 = vpop.f32.mrb[0].mxu0
      %v1885 = vpop.f32.mrb[0].mxu0
      %v1886 = vadd.f32 0.0, %v1885
      %v1887 = vpop.f32.mrb[0].mxu0
      %1888 = vmatprep.mubr.bf16.mxu0 %v1141
      %1889 = vmatmul.mubr.bf16.gmra.mrb[0].mxu0 %v1140
      %v1890 = vpop.f32.mrb[0].mxu0
      %v1891 = vadd.f32 0.0, %v1890
      %v1892 = vpop.f32.mrb[0].mxu0
      %v1893 = vpop.f32.mrb[0].mxu0
      %v1894 = vadd.f32 0.0, %v1893
      %v1895 = vpop.f32.mrb[0].mxu0
      %1896 = vmatprep.mubr.bf16.mxu0 %v1144
      %1897 = vmatmul.mubr.bf16.gmra.mrb[0].mxu0 %v1143
      %v1898 = vpop.f32.mrb[0].mxu0
      %v1899 = vadd.f32 0.0, %v1898
      %v1900 = vpop.f32.mrb[0].mxu0
      %v1901 = vpop.f32.mrb[0].mxu0
      %v1902 = vadd.f32 0.0, %v1901
      %v1903 = vpop.f32.mrb[0].mxu0
      %1904 = vmatprep.mubr.bf16.mxu0 %v1147
      %1905 = vmatmul.mubr.bf16.gmra.mrb[0].mxu0 %v1146
      %v1906 = vpop.f32.mrb[0].mxu0
      %v1907 = vadd.f32 0.0, %v1906
      %v1908 = vpop.f32.mrb[0].mxu0
      %v1909 = vpop.f32.mrb[0].mxu0
      %v1910 = vadd.f32 0.0, %v1909
      %v1911 = vpop.f32.mrb[0].mxu0
      %1912 = vmatprep.mubr.bf16.mxu0 %v1150
      %1913 = vmatmul.mubr.bf16.gmra.mrb[0].mxu0 %v1149
      %v1914 = vpop.f32.mrb[0].mxu0
      %v1915 = vadd.f32 0.0, %v1914
      %v1916 = vpop.f32.mrb[0].mxu0
      %v1917 = vpop.f32.mrb[0].mxu0
      %v1918 = vadd.f32 0.0, %v1917
      %v1919 = vpop.f32.mrb[0].mxu0
      %1920 = vmatprep.mubr.bf16.mxu0 %v1153
      %1921 = vmatmul.mubr.bf16.gmra.mrb[0].mxu0 %v1152
      %v1922 = vpop.f32.mrb[0].mxu0
      %v1923 = vadd.f32 0.0, %v1922
      %v1924 = vpop.f32.mrb[0].mxu0
      %v1925 = vpop.f32.mrb[0].mxu0
      %v1926 = vadd.f32 0.0, %v1925
      %v1927 = vpop.f32.mrb[0].mxu0
      %1928 = vmatprep.mubr.bf16.mxu0 %v1156
      %1929 = vmatmul.mubr.bf16.gmra.mrb[0].mxu0 %v1155
      %v1930 = vpop.f32.mrb[0].mxu0
      %v1931 = vadd.f32 0.0, %v1930
      %v1932 = vpop.f32.mrb[0].mxu0
      %v1933 = vpop.f32.mrb[0].mxu0
      %v1934 = vadd.f32 0.0, %v1933
      %v1935 = vpop.f32.mrb[0].mxu0
      %1936 = vmatprep.mubr.bf16.mxu0 %v1159
      %1937 = vmatmul.mubr.bf16.gmra.mrb[0].mxu0 %v1158
      %v1938 = vpop.f32.mrb[0].mxu0
      %v1939 = vadd.f32 0.0, %v1938
      %v1940 = vpop.f32.mrb[0].mxu0
      %v1941 = vpop.f32.mrb[0].mxu0
      %v1942 = vadd.f32 0.0, %v1941
      %v1943 = vpop.f32.mrb[0].mxu0
      %1944 = vmatprep.mubr.bf16.mxu0 %v1162
      %1945 = vmatmul.mubr.bf16.gmra.mrb[0].mxu0 %v1161
      %v1946 = vpop.f32.mrb[0].mxu0
      %v1947 = vadd.f32 0.0, %v1946
      %v1948 = vpop.f32.mrb[0].mxu0
      %v1949 = vpop.f32.mrb[0].mxu0
      %v1950 = vadd.f32 0.0, %v1949
      %v1951 = vpop.f32.mrb[0].mxu0
      %1952 = vmatprep.mubr.bf16.mxu0 %v1165
      %1953 = vmatmul.mubr.bf16.gmra.mrb[0].mxu0 %v1164
      %v1954 = vpop.f32.mrb[0].mxu0
      %v1955 = vadd.f32 0.0, %v1954
      %v1956 = vpop.f32.mrb[0].mxu0
      %v1957 = vpop.f32.mrb[0].mxu0
      %v1958 = vadd.f32 0.0, %v1957
      %v1959 = vpop.f32.mrb[0].mxu0
      %1960 = vmatprep.mubr.bf16.mxu0 %v1168
      %1961 = vmatmul.mubr.bf16.gmra.mrb[0].mxu0 %v1167
      %v1962 = vpop.f32.mrb[0].mxu0
      %v1963 = vadd.f32 0.0, %v1962
      %v1964 = vpop.f32.mrb[0].mxu0
      %v1965 = vpop.f32.mrb[0].mxu0
      %v1966 = vadd.f32 0.0, %v1965
      %v1967 = vpop.f32.mrb[0].mxu0
      %1968 = vmatprep.mubr.bf16.mxu0 %v1171
      %1969 = vmatmul.mubr.bf16.gmra.mrb[0].mxu0 %v1170
      %v1970 = vpop.f32.mrb[0].mxu0
      %v1971 = vadd.f32 0.0, %v1970
      %v1972 = vpop.f32.mrb[0].mxu0
      %v1973 = vpop.f32.mrb[0].mxu0
      %v1974 = vadd.f32 0.0, %v1973
      %v1975 = vpop.f32.mrb[0].mxu0
      %1976 = vmatprep.mubr.bf16.mxu0 %v1174
      %1977 = vmatmul.mubr.bf16.gmra.mrb[0].mxu0 %v1173
      %v1978 = vpop.f32.mrb[0].mxu0
      %v1979 = vadd.f32 0.0, %v1978
      %v1980 = vpop.f32.mrb[0].mxu0
      %v1981 = vpop.f32.mrb[0].mxu0
      %v1982 = vadd.f32 0.0, %v1981
      %v1983 = vpop.f32.mrb[0].mxu0
      %1984 = vmatprep.mubr.bf16.mxu0 %v1177
      %1985 = vmatmul.mubr.bf16.gmra.mrb[0].mxu0 %v1176
      %v1986 = vpop.f32.mrb[0].mxu0
      %v1987 = vadd.f32 0.0, %v1986
      %v1988 = vpop.f32.mrb[0].mxu0
      %v1989 = vpop.f32.mrb[0].mxu0
      %v1990 = vadd.f32 0.0, %v1989
      %v1991 = vpop.f32.mrb[0].mxu0
      %1992 = vmatprep.mubr.bf16.mxu0 %v1180
      %1993 = vmatmul.mubr.bf16.gmra.mrb[0].mxu0 %v1179
      %v1994 = vpop.f32.mrb[0].mxu0
      %v1995 = vadd.f32 0.0, %v1994
      %v1996 = vpop.f32.mrb[0].mxu0
      %v1997 = vpop.f32.mrb[0].mxu0
      %v1998 = vadd.f32 0.0, %v1997
      %v1999 = vpop.f32.mrb[0].mxu0
      %2000 = vmatprep.mubr.bf16.mxu0 %v1183
      %2001 = vmatmul.mubr.bf16.gmra.mrb[0].mxu0 %v1182
      %v2002 = vpop.f32.mrb[0].mxu0
      %v2003 = vadd.f32 0.0, %v2002
      %v2004 = vpop.f32.mrb[0].mxu0
      %v2005 = vpop.f32.mrb[0].mxu0
      %v2006 = vadd.f32 0.0, %v2005
      %v2007 = vpop.f32.mrb[0].mxu0
      %2008 = vmatprep.mubr.bf16.mxu0 %v1186
      %2009 = vmatmul.mubr.bf16.gmra.mrb[0].mxu0 %v1185
      %v2010 = vpop.f32.mrb[0].mxu0
      %v2011 = vadd.f32 0.0, %v2010
      %v2012 = vpop.f32.mrb[0].mxu0
      %v2013 = vpop.f32.mrb[0].mxu0
      %v2014 = vadd.f32 0.0, %v2013
      %v2015 = vpop.f32.mrb[0].mxu0
      %2016 = vmatprep.mubr.bf16.mxu0 %v1189
      %2017 = vmatmul.mubr.bf16.gmra.mrb[0].mxu0 %v1188
      %v2018 = vpop.f32.mrb[0].mxu0
      %v2019 = vadd.f32 0.0, %v2018
      %v2020 = vpop.f32.mrb[0].mxu0
      %v2021 = vpop.f32.mrb[0].mxu0
      %v2022 = vadd.f32 0.0, %v2021
      %v2023 = vpop.f32.mrb[0].mxu0
      %2024 = vmatprep.mubr.bf16.mxu0 %v1192
      %2025 = vmatmul.mubr.bf16.gmra.mrb[0].mxu0 %v1191
      %v2026 = vpop.f32.mrb[0].mxu0
      %v2027 = vadd.f32 0.0, %v2026
      %v2028 = vpop.f32.mrb[0].mxu0
      %v2029 = vpop.f32.mrb[0].mxu0
      %v2030 = vadd.f32 0.0, %v2029
      %v2031 = vpop.f32.mrb[0].mxu0
      %2032 = vmatprep.mubr.bf16.mxu0 %v1195
      %2033 = vmatmul.mubr.bf16.gmra.mrb[0].mxu0 %v1194
      %v2034 = vpop.f32.mrb[0].mxu0
      %v2035 = vadd.f32 0.0, %v2034
      %v2036 = vpop.f32.mrb[0].mxu0
      %v2037 = vpop.f32.mrb[0].mxu0
      %v2038 = vadd.f32 0.0, %v2037
      %v2039 = vpop.f32.mrb[0].mxu0
      %2040 = vmatprep.mubr.bf16.mxu0 %v1198
      %2041 = vmatmul.mubr.bf16.gmra.mrb[0].mxu0 %v1197
      %v2042 = vpop.f32.mrb[0].mxu0
      %v2043 = vadd.f32 0.0, %v2042
      %v2044 = vpop.f32.mrb[0].mxu0
      %v2045 = vpop.f32.mrb[0].mxu0
      %v2046 = vadd.f32 0.0, %v2045
      %v2047 = vpop.f32.mrb[0].mxu0
      %2048 = vmatprep.mubr.bf16.mxu0 %v1201
      %2049 = vmatmul.mubr.bf16.gmra.mrb[0].mxu0 %v1200
      %v2050 = vpop.f32.mrb[0].mxu0
      %v2051 = vadd.f32 0.0, %v2050
      %v2052 = vpop.f32.mrb[0].mxu0
      %v2053 = vpop.f32.mrb[0].mxu0
      %v2054 = vadd.f32 0.0, %v2053
      %v2055 = vpop.f32.mrb[0].mxu0
      %2056 = vmatprep.mubr.bf16.mxu0 %v1204
      %2057 = vmatmul.mubr.bf16.gmra.mrb[0].mxu0 %v1203
      %v2058 = vpop.f32.mrb[0].mxu0
      %v2059 = vadd.f32 0.0, %v2058
      %v2060 = vpop.f32.mrb[0].mxu0
      %v2061 = vpop.f32.mrb[0].mxu0
      %v2062 = vadd.f32 0.0, %v2061
      %v2063 = vpop.f32.mrb[0].mxu0
      %2064 = vmatprep.mubr.bf16.mxu0 %v1207
      %2065 = vmatmul.mubr.bf16.gmra.mrb[0].mxu0 %v1206
      %v2066 = vpop.f32.mrb[0].mxu0
      %v2067 = vadd.f32 0.0, %v2066
      %v2068 = vpop.f32.mrb[0].mxu0
      %v2069 = vpop.f32.mrb[0].mxu0
      %v2070 = vadd.f32 0.0, %v2069
      %v2071 = vpop.f32.mrb[0].mxu0
      %2072 = vmatprep.mubr.bf16.mxu0 %v1210
      %2073 = vmatmul.mubr.bf16.gmra.mrb[0].mxu0 %v1209
      %v2074 = vpop.f32.mrb[0].mxu0
      %v2075 = vadd.f32 0.0, %v2074
      %v2076 = vpop.f32.mrb[0].mxu0
      %v2077 = vpop.f32.mrb[0].mxu0
      %v2078 = vadd.f32 0.0, %v2077
      %v2079 = vpop.f32.mrb[0].mxu0
      %2080 = vmatprep.mubr.bf16.mxu0 %v1213
      %2081 = vmatmul.mubr.bf16.gmra.mrb[0].mxu0 %v1212
      %v2082 = vpop.f32.mrb[0].mxu0
      %v2083 = vadd.f32 0.0, %v2082
      %v2084 = vpop.f32.mrb[0].mxu0
      %v2085 = vpop.f32.mrb[0].mxu0
      %v2086 = vadd.f32 0.0, %v2085
      %v2087 = vpop.f32.mrb[0].mxu0
      %2088 = vmatprep.mubr.bf16.mxu0 %v1216
      %2089 = vmatmul.mubr.bf16.gmra.mrb[0].mxu0 %v1215
      %v2090 = vpop.f32.mrb[0].mxu0
      %v2091 = vadd.f32 0.0, %v2090
      %v2092 = vpop.f32.mrb[0].mxu0
      %v2093 = vpop.f32.mrb[0].mxu0
      %v2094 = vadd.f32 0.0, %v2093
      %v2095 = vpop.f32.mrb[0].mxu0
      %2096 = vmatprep.mubr.bf16.mxu0 %v1219
      %2097 = vmatmul.mubr.bf16.gmra.mrb[0].mxu0 %v1218
      %v2098 = vpop.f32.mrb[0].mxu0
      %v2099 = vadd.f32 0.0, %v2098
      %v2100 = vpop.f32.mrb[0].mxu0
      %v2101 = vpop.f32.mrb[0].mxu0
      %v2102 = vadd.f32 0.0, %v2101
      %v2103 = vpop.f32.mrb[0].mxu0
      %2104 = vmatprep.mubr.bf16.mxu0 %v1222
      %2105 = vmatmul.mubr.bf16.gmra.mrb[0].mxu0 %v1221
      %v2106 = vpop.f32.mrb[0].mxu0
      %v2107 = vadd.f32 0.0, %v2106
      %v2108 = vpop.f32.mrb[0].mxu0
      %v2109 = vpop.f32.mrb[0].mxu0
      %v2110 = vadd.f32 0.0, %v2109
      %v2111 = vpop.f32.mrb[0].mxu0
      %2112 = vmatprep.mubr.bf16.mxu0 %v1225
      %2113 = vmatmul.mubr.bf16.gmra.mrb[0].mxu0 %v1224
      %v2114 = vpop.f32.mrb[0].mxu0
      %v2115 = vadd.f32 0.0, %v2114
      %v2116 = vpop.f32.mrb[0].mxu0
      %v2117 = vpop.f32.mrb[0].mxu0
      %v2118 = vadd.f32 0.0, %v2117
      %v2119 = vpop.f32.mrb[0].mxu0
      %2120 = vmatprep.mubr.bf16.mxu0 %v1228
      %2121 = vmatmul.mubr.bf16.gmra.mrb[0].mxu0 %v1227
      %v2122 = vpop.f32.mrb[0].mxu0
      %v2123 = vadd.f32 0.0, %v2122
      %v2124 = vpop.f32.mrb[0].mxu0
      %v2125 = vpop.f32.mrb[0].mxu0
      %v2126 = vadd.f32 0.0, %v2125
      %v2127 = vpop.f32.mrb[0].mxu0
      %2128 = vmatprep.mubr.bf16.mxu0 %v1231
      %2129 = vmatmul.mubr.bf16.gmra.mrb[0].mxu0 %v1230
      %v2130 = vpop.f32.mrb[0].mxu0
      %v2131 = vadd.f32 0.0, %v2130
      %v2132 = vpop.f32.mrb[0].mxu0
      %v2133 = vpop.f32.mrb[0].mxu0
      %v2134 = vadd.f32 0.0, %v2133
      %v2135 = vpop.f32.mrb[0].mxu0
      %2136 = vmatprep.mubr.bf16.mxu0 %v1234
      %2137 = vmatmul.mubr.bf16.gmra.mrb[0].mxu0 %v1233
      %v2138 = vpop.f32.mrb[0].mxu0
      %v2139 = vadd.f32 0.0, %v2138
      %v2140 = vpop.f32.mrb[0].mxu0
      %v2141 = vpop.f32.mrb[0].mxu0
      %v2142 = vadd.f32 0.0, %v2141
      %v2143 = vpop.f32.mrb[0].mxu0
      %2144 = vmatprep.mubr.bf16.mxu0 %v1237
      %2145 = vmatmul.mubr.bf16.gmra.mrb[0].mxu0 %v1236
      %v2146 = vpop.f32.mrb[0].mxu0
      %v2147 = vadd.f32 0.0, %v2146
      %v2148 = vpop.f32.mrb[0].mxu0
      %v2149 = vpop.f32.mrb[0].mxu0
      %v2150 = vadd.f32 0.0, %v2149
      %v2151 = vpop.f32.mrb[0].mxu0
      %2152 = vmatprep.mubr.bf16.mxu0 %v1240
      %2153 = vmatmul.mubr.bf16.gmra.mrb[0].mxu0 %v1239
      %v2154 = vpop.f32.mrb[0].mxu0
      %v2155 = vadd.f32 0.0, %v2154
      %v2156 = vpop.f32.mrb[0].mxu0
      %v2157 = vpop.f32.mrb[0].mxu0
      %v2158 = vadd.f32 0.0, %v2157
      %v2159 = vpop.f32.mrb[0].mxu0
      %2160 = vmatprep.mubr.bf16.mxu0 %v1243
      %2161 = vmatmul.mubr.bf16.gmra.mrb[0].mxu0 %v1242
      %v2162 = vpop.f32.mrb[0].mxu0
      %v2163 = vadd.f32 0.0, %v2162
      %v2164 = vpop.f32.mrb[0].mxu0
      %v2165 = vpop.f32.mrb[0].mxu0
      %v2166 = vadd.f32 0.0, %v2165
      %v2167 = vpop.f32.mrb[0].mxu0
      %2168 = vmatprep.mubr.bf16.mxu0 %v1246
      %2169 = vmatmul.mubr.bf16.gmra.mrb[0].mxu0 %v1245
      %v2170 = vpop.f32.mrb[0].mxu0
      %v2171 = vadd.f32 0.0, %v2170
      %v2172 = vpop.f32.mrb[0].mxu0
      %v2173 = vpop.f32.mrb[0].mxu0
      %v2174 = vadd.f32 0.0, %v2173
      %v2175 = vpop.f32.mrb[0].mxu0
      %2176 = vmatprep.mubr.bf16.mxu0 %v1249
      %2177 = vmatmul.mubr.bf16.gmra.mrb[0].mxu0 %v1248
      %v2178 = vpop.f32.mrb[0].mxu0
      %v2179 = vadd.f32 0.0, %v2178
      %v2180 = vpop.f32.mrb[0].mxu0
      %v2181 = vpop.f32.mrb[0].mxu0
      %v2182 = vadd.f32 0.0, %v2181
      %v2183 = vpop.f32.mrb[0].mxu0
      %2184 = vmatprep.mubr.bf16.mxu0 %v1252
      %2185 = vmatmul.mubr.bf16.gmra.mrb[0].mxu0 %v1251
      %v2186 = vpop.f32.mrb[0].mxu0
      %v2187 = vadd.f32 0.0, %v2186
      %v2188 = vpop.f32.mrb[0].mxu0
      %v2189 = vpop.f32.mrb[0].mxu0
      %v2190 = vadd.f32 0.0, %v2189
      %v2191 = vpop.f32.mrb[0].mxu0
      %2192 = vmatprep.mubr.bf16.mxu0 %v1255
      %2193 = vmatmul.mubr.bf16.gmra.mrb[0].mxu0 %v1254
      %v2194 = vpop.f32.mrb[0].mxu0
      %v2195 = vadd.f32 0.0, %v2194
      %v2196 = vpop.f32.mrb[0].mxu0
      %v2197 = vpop.f32.mrb[0].mxu0
      %v2198 = vadd.f32 0.0, %v2197
      %v2199 = vpop.f32.mrb[0].mxu0
      %2200 = vmatprep.mubr.bf16.mxu0 %v1258
      %2201 = vmatmul.mubr.bf16.gmra.mrb[0].mxu0 %v1257
      %v2202 = vpop.f32.mrb[0].mxu0
      %v2203 = vadd.f32 0.0, %v2202
      %v2204 = vpop.f32.mrb[0].mxu0
      %v2205 = vpop.f32.mrb[0].mxu0
      %v2206 = vadd.f32 0.0, %v2205
      %v2207 = vpop.f32.mrb[0].mxu0
      %2208 = vmatprep.mubr.bf16.mxu0 %v1261
      %2209 = vmatmul.mubr.bf16.gmra.mrb[0].mxu0 %v1260
      %v2210 = vpop.f32.mrb[0].mxu0
      %v2211 = vadd.f32 0.0, %v2210
      %v2212 = vpop.f32.mrb[0].mxu0
      %v2213 = vpop.f32.mrb[0].mxu0
      %v2214 = vadd.f32 0.0, %v2213
      %v2215 = vpop.f32.mrb[0].mxu0
      %2216 = vmatprep.mubr.bf16.mxu0 %v1264
      %2217 = vmatmul.mubr.bf16.gmra.mrb[0].mxu0 %v1263
      %v2218 = vpop.f32.mrb[0].mxu0
      %v2219 = vadd.f32 0.0, %v2218
      %v2220 = vpop.f32.mrb[0].mxu0
      %v2221 = vpop.f32.mrb[0].mxu0
      %v2222 = vadd.f32 0.0, %v2221
      %v2223 = vpop.f32.mrb[0].mxu0
      %2224 = vmatprep.mubr.bf16.mxu0 %v1267
      %2225 = vmatmul.mubr.bf16.gmra.mrb[0].mxu0 %v1266
      %v2226 = vpop.f32.mrb[0].mxu0
      %v2227 = vadd.f32 0.0, %v2226
      %v2228 = vpop.f32.mrb[0].mxu0
      %v2229 = vpop.f32.mrb[0].mxu0
      %v2230 = vadd.f32 0.0, %v2229
      %v2231 = vpop.f32.mrb[0].mxu0
      %2232 = vmatprep.mubr.bf16.mxu0 %v1270
      %2233 = vmatmul.mubr.bf16.gmra.mrb[0].mxu0 %v1269
      %v2234 = vpop.f32.mrb[0].mxu0
      %v2235 = vadd.f32 0.0, %v2234
      %v2236 = vpop.f32.mrb[0].mxu0
      %v2237 = vpop.f32.mrb[0].mxu0
      %v2238 = vadd.f32 0.0, %v2237
      %v2239 = vpop.f32.mrb[0].mxu0
      %2240 = vmatprep.mubr.bf16.mxu0 %v1273
      %2241 = vmatmul.mubr.bf16.gmra.mrb[0].mxu0 %v1272
      %v2242 = vpop.f32.mrb[0].mxu0
      %v2243 = vadd.f32 0.0, %v2242
      %v2244 = vpop.f32.mrb[0].mxu0
      %v2245 = vpop.f32.mrb[0].mxu0
      %v2246 = vadd.f32 0.0, %v2245
      %v2247 = vpop.f32.mrb[0].mxu0
      %2248 = vdwg.mxu0
      %2249 = vmatprep.subr.bf16.mxu0 0
      %2250 = vmatpush1.bf16.msra.mxu0 %v1491
      %2251 = vmatprep.subr.bf16.mxu0 0
      %2252 = vmatpush1.bf16.msra.mxu0 %v1492
      %2253 = vmatprep.subr.bf16.mxu0 0
      %2254 = vmatpush1.bf16.msra.mxu0 0
      %2255 = vmatprep.subr.bf16.mxu0 0
      %2256 = vmatpush1.bf16.msra.mxu0 0
      %2257 = vmatprep.subr.bf16.mxu0 0
      %2258 = vmatpush1.bf16.msra.mxu0 0
      %2259 = vmatprep.subr.bf16.mxu0 0
      %2260 = vmatpush1.bf16.msra.mxu0 0
      %2261 = vmatprep.subr.bf16.mxu0 0
      %2262 = vmatpush1.bf16.msra.mxu0 0
      %2263 = vmatprep.subr.bf16.mxu0 0
      %2264 = vmatpush1.bf16.msra.mxu0 0
      %2265 = vmatprep.subr.bf16.mxu0 0
      %2266 = vmatpush1.bf16.msra.mxu0 0
      %2267 = vmatprep.subr.bf16.mxu0 0
      %2268 = vmatpush1.bf16.msra.mxu0 0
      %2269 = vmatprep.subr.bf16.mxu0 0
      %2270 = vmatpush1.bf16.msra.mxu0 0
      %2271 = vmatprep.subr.bf16.mxu0 0
      %2272 = vmatpush1.bf16.msra.mxu0 0
      %2273 = vmatprep.subr.bf16.mxu0 0
      %2274 = vmatpush1.bf16.msra.mxu0 0
      %2275 = vmatprep.subr.bf16.mxu0 0
      %2276 = vmatpush1.bf16.msra.mxu0 0
      %2277 = vmatprep.subr.bf16.mxu0 0
      %2278 = vmatpush1.bf16.msra.mxu0 0
      %2279 = vmatprep.subr.bf16.mxu0 0
      %2280 = vmatpush1.bf16.msra.mxu0 0
      %2281 = vmatprep.mubr.bf16.mxu0 0
      %2282 = vmatmul.mubr.bf16.gmra.mrb[0].mxu0 %v1513
      %v2283 = vpop.f32.mrb[0].mxu0
      %v2284 = vadd.f32 %v1739, %v2283
      %v2285 = vpop.f32.mrb[0].mxu0
      %v2286 = vpop.f32.mrb[0].mxu0
      %v2287 = vadd.f32 %v1742, %v2286
      %v2288 = vpop.f32.mrb[0].mxu0
      %2289 = vmatprep.mubr.bf16.mxu0 0
      %2290 = vmatmul.mubr.bf16.gmra.mrb[0].mxu0 %v1516
      %v2291 = vpop.f32.mrb[0].mxu0
      %v2292 = vadd.f32 %v1747, %v2291
      %v2293 = vpop.f32.mrb[0].mxu0
      %v2294 = vpop.f32.mrb[0].mxu0
      %v2295 = vadd.f32 %v1750, %v2294
      %v2296 = vpop.f32.mrb[0].mxu0
      %2297 = vmatprep.mubr.bf16.mxu0 0
      %2298 = vmatmul.mubr.bf16.gmra.mrb[0].mxu0 %v1519
      %v2299 = vpop.f32.mrb[0].mxu0
      %v2300 = vadd.f32 %v1755, %v2299
      %v2301 = vpop.f32.mrb[0].mxu0
      %v2302 = vpop.f32.mrb[0].mxu0
      %v2303 = vadd.f32 %v1758, %v2302
      %v2304 = vpop.f32.mrb[0].mxu0
      %2305 = vmatprep.mubr.bf16.mxu0 0
      %2306 = vmatmul.mubr.bf16.gmra.mrb[0].mxu0 %v1522
      %v2307 = vpop.f32.mrb[0].mxu0
      %v2308 = vadd.f32 %v1763, %v2307
      %v2309 = vpop.f32.mrb[0].mxu0
      %v2310 = vpop.f32.mrb[0].mxu0
      %v2311 = vadd.f32 %v1766, %v2310
      %v2312 = vpop.f32.mrb[0].mxu0
      %2313 = vmatprep.mubr.bf16.mxu0 0
      %2314 = vmatmul.mubr.bf16.gmra.mrb[0].mxu0 %v1525
      %v2315 = vpop.f32.mrb[0].mxu0
      %v2316 = vadd.f32 %v1771, %v2315
      %v2317 = vpop.f32.mrb[0].mxu0
      %v2318 = vpop.f32.mrb[0].mxu0
      %v2319 = vadd.f32 %v1774, %v2318
      %v2320 = vpop.f32.mrb[0].mxu0
      %2321 = vmatprep.mubr.bf16.mxu0 0
      %2322 = vmatmul.mubr.bf16.gmra.mrb[0].mxu0 %v1528
      %v2323 = vpop.f32.mrb[0].mxu0
      %v2324 = vadd.f32 %v1779, %v2323
      %v2325 = vpop.f32.mrb[0].mxu0
      %v2326 = vpop.f32.mrb[0].mxu0
      %v2327 = vadd.f32 %v1782, %v2326
      %v2328 = vpop.f32.mrb[0].mxu0
      %2329 = vmatprep.mubr.bf16.mxu0 0
      %2330 = vmatmul.mubr.bf16.gmra.mrb[0].mxu0 %v1531
      %v2331 = vpop.f32.mrb[0].mxu0
      %v2332 = vadd.f32 %v1787, %v2331
      %v2333 = vpop.f32.mrb[0].mxu0
      %v2334 = vpop.f32.mrb[0].mxu0
      %v2335 = vadd.f32 %v1790, %v2334
      %v2336 = vpop.f32.mrb[0].mxu0
      %2337 = vmatprep.mubr.bf16.mxu0 0
      %2338 = vmatmul.mubr.bf16.gmra.mrb[0].mxu0 %v1534
      %v2339 = vpop.f32.mrb[0].mxu0
      %v2340 = vadd.f32 %v1795, %v2339
      %v2341 = vpop.f32.mrb[0].mxu0
      %v2342 = vpop.f32.mrb[0].mxu0
      %v2343 = vadd.f32 %v1798, %v2342
      %v2344 = vpop.f32.mrb[0].mxu0
      %2345 = vmatprep.mubr.bf16.mxu0 0
      %2346 = vmatmul.mubr.bf16.gmra.mrb[0].mxu0 %v1537
      %v2347 = vpop.f32.mrb[0].mxu0
      %v2348 = vadd.f32 %v1803, %v2347
      %v2349 = vpop.f32.mrb[0].mxu0
      %v2350 = vpop.f32.mrb[0].mxu0
      %v2351 = vadd.f32 %v1806, %v2350
      %v2352 = vpop.f32.mrb[0].mxu0
      %2353 = vmatprep.mubr.bf16.mxu0 0
      %2354 = vmatmul.mubr.bf16.gmra.mrb[0].mxu0 %v1540
      %v2355 = vpop.f32.mrb[0].mxu0
      %v2356 = vadd.f32 %v1811, %v2355
      %v2357 = vpop.f32.mrb[0].mxu0
      %v2358 = vpop.f32.mrb[0].mxu0
      %v2359 = vadd.f32 %v1814, %v2358
      %v2360 = vpop.f32.mrb[0].mxu0
      %2361 = vmatprep.mubr.bf16.mxu0 0
      %2362 = vmatmul.mubr.bf16.gmra.mrb[0].mxu0 %v1543
      %v2363 = vpop.f32.mrb[0].mxu0
      %v2364 = vadd.f32 %v1819, %v2363
      %v2365 = vpop.f32.mrb[0].mxu0
      %v2366 = vpop.f32.mrb[0].mxu0
      %v2367 = vadd.f32 %v1822, %v2366
      %v2368 = vpop.f32.mrb[0].mxu0
      %2369 = vmatprep.mubr.bf16.mxu0 0
      %2370 = vmatmul.mubr.bf16.gmra.mrb[0].mxu0 %v1546
      %v2371 = vpop.f32.mrb[0].mxu0
      %v2372 = vadd.f32 %v1827, %v2371
      %v2373 = vpop.f32.mrb[0].mxu0
      %v2374 = vpop.f32.mrb[0].mxu0
      %v2375 = vadd.f32 %v1830, %v2374
      %v2376 = vpop.f32.mrb[0].mxu0
      %2377 = vmatprep.mubr.bf16.mxu0 0
      %2378 = vmatmul.mubr.bf16.gmra.mrb[0].mxu0 %v1549
      %v2379 = vpop.f32.mrb[0].mxu0
      %v2380 = vadd.f32 %v1835, %v2379
      %v2381 = vpop.f32.mrb[0].mxu0
      %v2382 = vpop.f32.mrb[0].mxu0
      %v2383 = vadd.f32 %v1838, %v2382
      %v2384 = vpop.f32.mrb[0].mxu0
      %2385 = vmatprep.mubr.bf16.mxu0 0
      %2386 = vmatmul.mubr.bf16.gmra.mrb[0].mxu0 %v1552
      %v2387 = vpop.f32.mrb[0].mxu0
      %v2388 = vadd.f32 %v1843, %v2387
      %v2389 = vpop.f32.mrb[0].mxu0
      %v2390 = vpop.f32.mrb[0].mxu0
      %v2391 = vadd.f32 %v1846, %v2390
      %v2392 = vpop.f32.mrb[0].mxu0
      %2393 = vmatprep.mubr.bf16.mxu0 0
      %2394 = vmatmul.mubr.bf16.gmra.mrb[0].mxu0 %v1555
      %v2395 = vpop.f32.mrb[0].mxu0
      %v2396 = vadd.f32 %v1851, %v2395
      %v2397 = vpop.f32.mrb[0].mxu0
      %v2398 = vpop.f32.mrb[0].mxu0
      %v2399 = vadd.f32 %v1854, %v2398
      %v2400 = vpop.f32.mrb[0].mxu0
      %2401 = vmatprep.mubr.bf16.mxu0 0
      %2402 = vmatmul.mubr.bf16.gmra.mrb[0].mxu0 %v1558
      %v2403 = vpop.f32.mrb[0].mxu0
      %v2404 = vadd.f32 %v1859, %v2403
      %v2405 = vpop.f32.mrb[0].mxu0
      %v2406 = vpop.f32.mrb[0].mxu0
      %v2407 = vadd.f32 %v1862, %v2406
      %v2408 = vpop.f32.mrb[0].mxu0
      %2409 = vmatprep.mubr.bf16.mxu0 0
      %2410 = vmatmul.mubr.bf16.gmra.mrb[0].mxu0 %v1561
      %v2411 = vpop.f32.mrb[0].mxu0
      %v2412 = vadd.f32 %v1867, %v2411
      %v2413 = vpop.f32.mrb[0].mxu0
      %v2414 = vpop.f32.mrb[0].mxu0
      %v2415 = vadd.f32 %v1870, %v2414
      %v2416 = vpop.f32.mrb[0].mxu0
      %2417 = vmatprep.mubr.bf16.mxu0 0
      %2418 = vmatmul.mubr.bf16.gmra.mrb[0].mxu0 %v1564
      %v2419 = vpop.f32.mrb[0].mxu0
      %v2420 = vadd.f32 %v1875, %v2419
      %v2421 = vpop.f32.mrb[0].mxu0
      %v2422 = vpop.f32.mrb[0].mxu0
      %v2423 = vadd.f32 %v1878, %v2422
      %v2424 = vpop.f32.mrb[0].mxu0
      %2425 = vmatprep.mubr.bf16.mxu0 0
      %2426 = vmatmul.mubr.bf16.gmra.mrb[0].mxu0 %v1567
      %v2427 = vpop.f32.mrb[0].mxu0
      %v2428 = vadd.f32 %v1883, %v2427
      %v2429 = vpop.f32.mrb[0].mxu0
      %v2430 = vpop.f32.mrb[0].mxu0
      %v2431 = vadd.f32 %v1886, %v2430
      %v2432 = vpop.f32.mrb[0].mxu0
      %2433 = vmatprep.mubr.bf16.mxu0 0
      %2434 = vmatmul.mubr.bf16.gmra.mrb[0].mxu0 %v1570
      %v2435 = vpop.f32.mrb[0].mxu0
      %v2436 = vadd.f32 %v1891, %v2435
      %v2437 = vpop.f32.mrb[0].mxu0
      %v2438 = vpop.f32.mrb[0].mxu0
      %v2439 = vadd.f32 %v1894, %v2438
      %v2440 = vpop.f32.mrb[0].mxu0
      %2441 = vmatprep.mubr.bf16.mxu0 0
      %2442 = vmatmul.mubr.bf16.gmra.mrb[0].mxu0 %v1573
      %v2443 = vpop.f32.mrb[0].mxu0
      %v2444 = vadd.f32 %v1899, %v2443
      %v2445 = vpop.f32.mrb[0].mxu0
      %v2446 = vpop.f32.mrb[0].mxu0
      %v2447 = vadd.f32 %v1902, %v2446
      %v2448 = vpop.f32.mrb[0].mxu0
      %2449 = vmatprep.mubr.bf16.mxu0 0
      %2450 = vmatmul.mubr.bf16.gmra.mrb[0].mxu0 %v1576
      %v2451 = vpop.f32.mrb[0].mxu0
      %v2452 = vadd.f32 %v1907, %v2451
      %v2453 = vpop.f32.mrb[0].mxu0
      %v2454 = vpop.f32.mrb[0].mxu0
      %v2455 = vadd.f32 %v1910, %v2454
      %v2456 = vpop.f32.mrb[0].mxu0
      %2457 = vmatprep.mubr.bf16.mxu0 0
      %2458 = vmatmul.mubr.bf16.gmra.mrb[0].mxu0 %v1579
      %v2459 = vpop.f32.mrb[0].mxu0
      %v2460 = vadd.f32 %v1915, %v2459
      %v2461 = vpop.f32.mrb[0].mxu0
      %v2462 = vpop.f32.mrb[0].mxu0
      %v2463 = vadd.f32 %v1918, %v2462
      %v2464 = vpop.f32.mrb[0].mxu0
      %2465 = vmatprep.mubr.bf16.mxu0 0
      %2466 = vmatmul.mubr.bf16.gmra.mrb[0].mxu0 %v1582
      %v2467 = vpop.f32.mrb[0].mxu0
      %v2468 = vadd.f32 %v1923, %v2467
      %v2469 = vpop.f32.mrb[0].mxu0
      %v2470 = vpop.f32.mrb[0].mxu0
      %v2471 = vadd.f32 %v1926, %v2470
      %v2472 = vpop.f32.mrb[0].mxu0
      %2473 = vmatprep.mubr.bf16.mxu0 0
      %2474 = vmatmul.mubr.bf16.gmra.mrb[0].mxu0 %v1585
      %v2475 = vpop.f32.mrb[0].mxu0
      %v2476 = vadd.f32 %v1931, %v2475
      %v2477 = vpop.f32.mrb[0].mxu0
      %v2478 = vpop.f32.mrb[0].mxu0
      %v2479 = vadd.f32 %v1934, %v2478
      %v2480 = vpop.f32.mrb[0].mxu0
      %2481 = vmatprep.mubr.bf16.mxu0 0
      %2482 = vmatmul.mubr.bf16.gmra.mrb[0].mxu0 %v1588
      %v2483 = vpop.f32.mrb[0].mxu0
      %v2484 = vadd.f32 %v1939, %v2483
      %v2485 = vpop.f32.mrb[0].mxu0
      %v2486 = vpop.f32.mrb[0].mxu0
      %v2487 = vadd.f32 %v1942, %v2486
      %v2488 = vpop.f32.mrb[0].mxu0
      %2489 = vmatprep.mubr.bf16.mxu0 0
      %2490 = vmatmul.mubr.bf16.gmra.mrb[0].mxu0 %v1591
      %v2491 = vpop.f32.mrb[0].mxu0
      %v2492 = vadd.f32 %v1947, %v2491
      %v2493 = vpop.f32.mrb[0].mxu0
      %v2494 = vpop.f32.mrb[0].mxu0
      %v2495 = vadd.f32 %v1950, %v2494
      %v2496 = vpop.f32.mrb[0].mxu0
      %2497 = vmatprep.mubr.bf16.mxu0 0
      %2498 = vmatmul.mubr.bf16.gmra.mrb[0].mxu0 %v1594
      %v2499 = vpop.f32.mrb[0].mxu0
      %v2500 = vadd.f32 %v1955, %v2499
      %v2501 = vpop.f32.mrb[0].mxu0
      %v2502 = vpop.f32.mrb[0].mxu0
      %v2503 = vadd.f32 %v1958, %v2502
      %v2504 = vpop.f32.mrb[0].mxu0
      %2505 = vmatprep.mubr.bf16.mxu0 0
      %2506 = vmatmul.mubr.bf16.gmra.mrb[0].mxu0 %v1597
      %v2507 = vpop.f32.mrb[0].mxu0
      %v2508 = vadd.f32 %v1963, %v2507
      %v2509 = vpop.f32.mrb[0].mxu0
      %v2510 = vpop.f32.mrb[0].mxu0
      %v2511 = vadd.f32 %v1966, %v2510
      %v2512 = vpop.f32.mrb[0].mxu0
      %2513 = vmatprep.mubr.bf16.mxu0 0
      %2514 = vmatmul.mubr.bf16.gmra.mrb[0].mxu0 %v1600
      %v2515 = vpop.f32.mrb[0].mxu0
      %v2516 = vadd.f32 %v1971, %v2515
      %v2517 = vpop.f32.mrb[0].mxu0
      %v2518 = vpop.f32.mrb[0].mxu0
      %v2519 = vadd.f32 %v1974, %v2518
      %v2520 = vpop.f32.mrb[0].mxu0
      %2521 = vmatprep.mubr.bf16.mxu0 0
      %2522 = vmatmul.mubr.bf16.gmra.mrb[0].mxu0 %v1603
      %v2523 = vpop.f32.mrb[0].mxu0
      %v2524 = vadd.f32 %v1979, %v2523
      %v2525 = vpop.f32.mrb[0].mxu0
      %v2526 = vpop.f32.mrb[0].mxu0
      %v2527 = vadd.f32 %v1982, %v2526
      %v2528 = vpop.f32.mrb[0].mxu0
      %2529 = vmatprep.mubr.bf16.mxu0 0
      %2530 = vmatmul.mubr.bf16.gmra.mrb[0].mxu0 %v1606
      %v2531 = vpop.f32.mrb[0].mxu0
      %v2532 = vadd.f32 %v1987, %v2531
      %v2533 = vpop.f32.mrb[0].mxu0
      %v2534 = vpop.f32.mrb[0].mxu0
      %v2535 = vadd.f32 %v1990, %v2534
      %v2536 = vpop.f32.mrb[0].mxu0
      %2537 = vmatprep.mubr.bf16.mxu0 0
      %2538 = vmatmul.mubr.bf16.gmra.mrb[0].mxu0 %v1609
      %v2539 = vpop.f32.mrb[0].mxu0
      %v2540 = vadd.f32 %v1995, %v2539
      %v2541 = vpop.f32.mrb[0].mxu0
      %v2542 = vpop.f32.mrb[0].mxu0
      %v2543 = vadd.f32 %v1998, %v2542
      %v2544 = vpop.f32.mrb[0].mxu0
      %2545 = vmatprep.mubr.bf16.mxu0 0
      %2546 = vmatmul.mubr.bf16.gmra.mrb[0].mxu0 %v1612
      %v2547 = vpop.f32.mrb[0].mxu0
      %v2548 = vadd.f32 %v2003, %v2547
      %v2549 = vpop.f32.mrb[0].mxu0
      %v2550 = vpop.f32.mrb[0].mxu0
      %v2551 = vadd.f32 %v2006, %v2550
      %v2552 = vpop.f32.mrb[0].mxu0
      %2553 = vmatprep.mubr.bf16.mxu0 0
      %2554 = vmatmul.mubr.bf16.gmra.mrb[0].mxu0 %v1615
      %v2555 = vpop.f32.mrb[0].mxu0
      %v2556 = vadd.f32 %v2011, %v2555
      %v2557 = vpop.f32.mrb[0].mxu0
      %v2558 = vpop.f32.mrb[0].mxu0
      %v2559 = vadd.f32 %v2014, %v2558
      %v2560 = vpop.f32.mrb[0].mxu0
      %2561 = vmatprep.mubr.bf16.mxu0 0
      %2562 = vmatmul.mubr.bf16.gmra.mrb[0].mxu0 %v1618
      %v2563 = vpop.f32.mrb[0].mxu0
      %v2564 = vadd.f32 %v2019, %v2563
      %v2565 = vpop.f32.mrb[0].mxu0
      %v2566 = vpop.f32.mrb[0].mxu0
      %v2567 = vadd.f32 %v2022, %v2566
      %v2568 = vpop.f32.mrb[0].mxu0
      %2569 = vmatprep.mubr.bf16.mxu0 0
      %2570 = vmatmul.mubr.bf16.gmra.mrb[0].mxu0 %v1621
      %v2571 = vpop.f32.mrb[0].mxu0
      %v2572 = vadd.f32 %v2027, %v2571
      %v2573 = vpop.f32.mrb[0].mxu0
      %v2574 = vpop.f32.mrb[0].mxu0
      %v2575 = vadd.f32 %v2030, %v2574
      %v2576 = vpop.f32.mrb[0].mxu0
      %2577 = vmatprep.mubr.bf16.mxu0 0
      %2578 = vmatmul.mubr.bf16.gmra.mrb[0].mxu0 %v1624
      %v2579 = vpop.f32.mrb[0].mxu0
      %v2580 = vadd.f32 %v2035, %v2579
      %v2581 = vpop.f32.mrb[0].mxu0
      %v2582 = vpop.f32.mrb[0].mxu0
      %v2583 = vadd.f32 %v2038, %v2582
      %v2584 = vpop.f32.mrb[0].mxu0
      %2585 = vmatprep.mubr.bf16.mxu0 0
      %2586 = vmatmul.mubr.bf16.gmra.mrb[0].mxu0 %v1627
      %v2587 = vpop.f32.mrb[0].mxu0
      %v2588 = vadd.f32 %v2043, %v2587
      %v2589 = vpop.f32.mrb[0].mxu0
      %v2590 = vpop.f32.mrb[0].mxu0
      %v2591 = vadd.f32 %v2046, %v2590
      %v2592 = vpop.f32.mrb[0].mxu0
      %2593 = vmatprep.mubr.bf16.mxu0 0
      %2594 = vmatmul.mubr.bf16.gmra.mrb[0].mxu0 %v1630
      %v2595 = vpop.f32.mrb[0].mxu0
      %v2596 = vadd.f32 %v2051, %v2595
      %v2597 = vpop.f32.mrb[0].mxu0
      %v2598 = vpop.f32.mrb[0].mxu0
      %v2599 = vadd.f32 %v2054, %v2598
      %v2600 = vpop.f32.mrb[0].mxu0
      %2601 = vmatprep.mubr.bf16.mxu0 0
      %2602 = vmatmul.mubr.bf16.gmra.mrb[0].mxu0 %v1633
      %v2603 = vpop.f32.mrb[0].mxu0
      %v2604 = vadd.f32 %v2059, %v2603
      %v2605 = vpop.f32.mrb[0].mxu0
      %v2606 = vpop.f32.mrb[0].mxu0
      %v2607 = vadd.f32 %v2062, %v2606
      %v2608 = vpop.f32.mrb[0].mxu0
      %2609 = vmatprep.mubr.bf16.mxu0 0
      %2610 = vmatmul.mubr.bf16.gmra.mrb[0].mxu0 %v1636
      %v2611 = vpop.f32.mrb[0].mxu0
      %v2612 = vadd.f32 %v2067, %v2611
      %v2613 = vpop.f32.mrb[0].mxu0
      %v2614 = vpop.f32.mrb[0].mxu0
      %v2615 = vadd.f32 %v2070, %v2614
      %v2616 = vpop.f32.mrb[0].mxu0
      %2617 = vmatprep.mubr.bf16.mxu0 0
      %2618 = vmatmul.mubr.bf16.gmra.mrb[0].mxu0 %v1639
      %v2619 = vpop.f32.mrb[0].mxu0
      %v2620 = vadd.f32 %v2075, %v2619
      %v2621 = vpop.f32.mrb[0].mxu0
      %v2622 = vpop.f32.mrb[0].mxu0
      %v2623 = vadd.f32 %v2078, %v2622
      %v2624 = vpop.f32.mrb[0].mxu0
      %2625 = vmatprep.mubr.bf16.mxu0 0
      %2626 = vmatmul.mubr.bf16.gmra.mrb[0].mxu0 %v1642
      %v2627 = vpop.f32.mrb[0].mxu0
      %v2628 = vadd.f32 %v2083, %v2627
      %v2629 = vpop.f32.mrb[0].mxu0
      %v2630 = vpop.f32.mrb[0].mxu0
      %v2631 = vadd.f32 %v2086, %v2630
      %v2632 = vpop.f32.mrb[0].mxu0
      %2633 = vmatprep.mubr.bf16.mxu0 0
      %2634 = vmatmul.mubr.bf16.gmra.mrb[0].mxu0 %v1645
      %v2635 = vpop.f32.mrb[0].mxu0
      %v2636 = vadd.f32 %v2091, %v2635
      %v2637 = vpop.f32.mrb[0].mxu0
      %v2638 = vpop.f32.mrb[0].mxu0
      %v2639 = vadd.f32 %v2094, %v2638
      %v2640 = vpop.f32.mrb[0].mxu0
      %2641 = vmatprep.mubr.bf16.mxu0 0
      %2642 = vmatmul.mubr.bf16.gmra.mrb[0].mxu0 %v1648
      %v2643 = vpop.f32.mrb[0].mxu0
      %v2644 = vadd.f32 %v2099, %v2643
      %v2645 = vpop.f32.mrb[0].mxu0
      %v2646 = vpop.f32.mrb[0].mxu0
      %v2647 = vadd.f32 %v2102, %v2646
      %v2648 = vpop.f32.mrb[0].mxu0
      %2649 = vmatprep.mubr.bf16.mxu0 0
      %2650 = vmatmul.mubr.bf16.gmra.mrb[0].mxu0 %v1651
      %v2651 = vpop.f32.mrb[0].mxu0
      %v2652 = vadd.f32 %v2107, %v2651
      %v2653 = vpop.f32.mrb[0].mxu0
      %v2654 = vpop.f32.mrb[0].mxu0
      %v2655 = vadd.f32 %v2110, %v2654
      %v2656 = vpop.f32.mrb[0].mxu0
      %2657 = vmatprep.mubr.bf16.mxu0 0
      %2658 = vmatmul.mubr.bf16.gmra.mrb[0].mxu0 %v1654
      %v2659 = vpop.f32.mrb[0].mxu0
      %v2660 = vadd.f32 %v2115, %v2659
      %v2661 = vpop.f32.mrb[0].mxu0
      %v2662 = vpop.f32.mrb[0].mxu0
      %v2663 = vadd.f32 %v2118, %v2662
      %v2664 = vpop.f32.mrb[0].mxu0
      %2665 = vmatprep.mubr.bf16.mxu0 0
      %2666 = vmatmul.mubr.bf16.gmra.mrb[0].mxu0 %v1657
      %v2667 = vpop.f32.mrb[0].mxu0
      %v2668 = vadd.f32 %v2123, %v2667
      %v2669 = vpop.f32.mrb[0].mxu0
      %v2670 = vpop.f32.mrb[0].mxu0
      %v2671 = vadd.f32 %v2126, %v2670
      %v2672 = vpop.f32.mrb[0].mxu0
      %2673 = vmatprep.mubr.bf16.mxu0 0
      %2674 = vmatmul.mubr.bf16.gmra.mrb[0].mxu0 %v1660
      %v2675 = vpop.f32.mrb[0].mxu0
      %v2676 = vadd.f32 %v2131, %v2675
      %v2677 = vpop.f32.mrb[0].mxu0
      %v2678 = vpop.f32.mrb[0].mxu0
      %v2679 = vadd.f32 %v2134, %v2678
      %v2680 = vpop.f32.mrb[0].mxu0
      %2681 = vmatprep.mubr.bf16.mxu0 0
      %2682 = vmatmul.mubr.bf16.gmra.mrb[0].mxu0 %v1663
      %v2683 = vpop.f32.mrb[0].mxu0
      %v2684 = vadd.f32 %v2139, %v2683
      %v2685 = vpop.f32.mrb[0].mxu0
      %v2686 = vpop.f32.mrb[0].mxu0
      %v2687 = vadd.f32 %v2142, %v2686
      %v2688 = vpop.f32.mrb[0].mxu0
      %2689 = vmatprep.mubr.bf16.mxu0 0
      %2690 = vmatmul.mubr.bf16.gmra.mrb[0].mxu0 %v1666
      %v2691 = vpop.f32.mrb[0].mxu0
      %v2692 = vadd.f32 %v2147, %v2691
      %v2693 = vpop.f32.mrb[0].mxu0
      %v2694 = vpop.f32.mrb[0].mxu0
      %v2695 = vadd.f32 %v2150, %v2694
      %v2696 = vpop.f32.mrb[0].mxu0
      %2697 = vmatprep.mubr.bf16.mxu0 0
      %2698 = vmatmul.mubr.bf16.gmra.mrb[0].mxu0 %v1669
      %v2699 = vpop.f32.mrb[0].mxu0
      %v2700 = vadd.f32 %v2155, %v2699
      %v2701 = vpop.f32.mrb[0].mxu0
      %v2702 = vpop.f32.mrb[0].mxu0
      %v2703 = vadd.f32 %v2158, %v2702
      %v2704 = vpop.f32.mrb[0].mxu0
      %2705 = vmatprep.mubr.bf16.mxu0 0
      %2706 = vmatmul.mubr.bf16.gmra.mrb[0].mxu0 %v1672
      %v2707 = vpop.f32.mrb[0].mxu0
      %v2708 = vadd.f32 %v2163, %v2707
      %v2709 = vpop.f32.mrb[0].mxu0
      %v2710 = vpop.f32.mrb[0].mxu0
      %v2711 = vadd.f32 %v2166, %v2710
      %v2712 = vpop.f32.mrb[0].mxu0
      %2713 = vmatprep.mubr.bf16.mxu0 0
      %2714 = vmatmul.mubr.bf16.gmra.mrb[0].mxu0 %v1675
      %v2715 = vpop.f32.mrb[0].mxu0
      %v2716 = vadd.f32 %v2171, %v2715
      %v2717 = vpop.f32.mrb[0].mxu0
      %v2718 = vpop.f32.mrb[0].mxu0
      %v2719 = vadd.f32 %v2174, %v2718
      %v2720 = vpop.f32.mrb[0].mxu0
      %2721 = vmatprep.mubr.bf16.mxu0 0
      %2722 = vmatmul.mubr.bf16.gmra.mrb[0].mxu0 %v1678
      %v2723 = vpop.f32.mrb[0].mxu0
      %v2724 = vadd.f32 %v2179, %v2723
      %v2725 = vpop.f32.mrb[0].mxu0
      %v2726 = vpop.f32.mrb[0].mxu0
      %v2727 = vadd.f32 %v2182, %v2726
      %v2728 = vpop.f32.mrb[0].mxu0
      %2729 = vmatprep.mubr.bf16.mxu0 0
      %2730 = vmatmul.mubr.bf16.gmra.mrb[0].mxu0 %v1681
      %v2731 = vpop.f32.mrb[0].mxu0
      %v2732 = vadd.f32 %v2187, %v2731
      %v2733 = vpop.f32.mrb[0].mxu0
      %v2734 = vpop.f32.mrb[0].mxu0
      %v2735 = vadd.f32 %v2190, %v2734
      %v2736 = vpop.f32.mrb[0].mxu0
      %2737 = vmatprep.mubr.bf16.mxu0 0
      %2738 = vmatmul.mubr.bf16.gmra.mrb[0].mxu0 %v1684
      %v2739 = vpop.f32.mrb[0].mxu0
      %v2740 = vadd.f32 %v2195, %v2739
      %v2741 = vpop.f32.mrb[0].mxu0
      %v2742 = vpop.f32.mrb[0].mxu0
      %v2743 = vadd.f32 %v2198, %v2742
      %v2744 = vpop.f32.mrb[0].mxu0
      %2745 = vmatprep.mubr.bf16.mxu0 0
      %2746 = vmatmul.mubr.bf16.gmra.mrb[0].mxu0 %v1687
      %v2747 = vpop.f32.mrb[0].mxu0
      %v2748 = vadd.f32 %v2203, %v2747
      %v2749 = vpop.f32.mrb[0].mxu0
      %v2750 = vpop.f32.mrb[0].mxu0
      %v2751 = vadd.f32 %v2206, %v2750
      %v2752 = vpop.f32.mrb[0].mxu0
      %2753 = vmatprep.mubr.bf16.mxu0 0
      %2754 = vmatmul.mubr.bf16.gmra.mrb[0].mxu0 %v1690
      %v2755 = vpop.f32.mrb[0].mxu0
      %v2756 = vadd.f32 %v2211, %v2755
      %v2757 = vpop.f32.mrb[0].mxu0
      %v2758 = vpop.f32.mrb[0].mxu0
      %v2759 = vadd.f32 %v2214, %v2758
      %v2760 = vpop.f32.mrb[0].mxu0
      %2761 = vmatprep.mubr.bf16.mxu0 0
      %2762 = vmatmul.mubr.bf16.gmra.mrb[0].mxu0 %v1693
      %v2763 = vpop.f32.mrb[0].mxu0
      %v2764 = vadd.f32 %v2219, %v2763
      %v2765 = vpop.f32.mrb[0].mxu0
      %v2766 = vpop.f32.mrb[0].mxu0
      %v2767 = vadd.f32 %v2222, %v2766
      %v2768 = vpop.f32.mrb[0].mxu0
      %2769 = vmatprep.mubr.bf16.mxu0 0
      %2770 = vmatmul.mubr.bf16.gmra.mrb[0].mxu0 %v1696
      %v2771 = vpop.f32.mrb[0].mxu0
      %v2772 = vadd.f32 %v2227, %v2771
      %v2773 = vpop.f32.mrb[0].mxu0
      %v2774 = vpop.f32.mrb[0].mxu0
      %v2775 = vadd.f32 %v2230, %v2774
      %v2776 = vpop.f32.mrb[0].mxu0
      %2777 = vmatprep.mubr.bf16.mxu0 0
      %2778 = vmatmul.mubr.bf16.gmra.mrb[0].mxu0 %v1699
      %v2779 = vpop.f32.mrb[0].mxu0
      %v2780 = vadd.f32 %v2235, %v2779
      %v2781 = vpop.f32.mrb[0].mxu0
      %v2782 = vpop.f32.mrb[0].mxu0
      %v2783 = vadd.f32 %v2238, %v2782
      %v2784 = vpop.f32.mrb[0].mxu0
      %2785 = vmatprep.mubr.bf16.mxu0 0
      %2786 = vmatmul.mubr.bf16.gmra.mrb[0].mxu0 %v1702
      %v2787 = vpop.f32.mrb[0].mxu0
      %v2788 = vadd.f32 %v2243, %v2787
      %v2789 = vpop.f32.mrb[0].mxu0
      %v2790 = vpop.f32.mrb[0].mxu0
      %v2791 = vadd.f32 %v2246, %v2790
      %v2792 = vpop.f32.mrb[0].mxu0
      %2793 = vdwg.mxu0
      %2794 = vst [vmem:[%s148] sm:$0xff] %v2284
      %2795 = vst [vmem:[%s148 + $0x8] sm:$0xff] %v2287
      %2796 = vst [vmem:[%s148 + $0x10] sm:$0xff] %v2292
      %2797 = vst [vmem:[%s148 + $0x18] sm:$0xff] %v2295
      %2798 = vst [vmem:[%s148 + $0x20] sm:$0xff] %v2300
      %2799 = vst [vmem:[%s148 + $0x28] sm:$0xff] %v2303
      %2800 = vst [vmem:[%s148 + $0x30] sm:$0xff] %v2308
      %2801 = vst [vmem:[%s148 + $0x38] sm:$0xff] %v2311
      %2802 = vst [vmem:[%s148 + $0x40] sm:$0xff] %v2316
      %2803 = vst [vmem:[%s148 + $0x48] sm:$0xff] %v2319
      %2804 = vst [vmem:[%s148 + $0x50] sm:$0xff] %v2324
      %2805 = vst [vmem:[%s148 + $0x58] sm:$0xff] %v2327
      %2806 = vst [vmem:[%s148 + $0x60] sm:$0xff] %v2332
      %2807 = vst [vmem:[%s148 + $0x68] sm:$0xff] %v2335
      %2808 = vst [vmem:[%s148 + $0x70] sm:$0xff] %v2340
      %2809 = vst [vmem:[%s148 + $0x78] sm:$0xff] %v2343
      %2810 = vst [vmem:[%s148 + $0x80] sm:$0xff] %v2348
      %2811 = vst [vmem:[%s148 + $0x88] sm:$0xff] %v2351
      %2812 = vst [vmem:[%s148 + $0x90] sm:$0xff] %v2356
      %2813 = vst [vmem:[%s148 + $0x98] sm:$0xff] %v2359
      %2814 = vst [vmem:[%s148 + $0xa0] sm:$0xff] %v2364
      %2815 = vst [vmem:[%s148 + $0xa8] sm:$0xff] %v2367
      %2816 = vst [vmem:[%s148 + $0xb0] sm:$0xff] %v2372
      %2817 = vst [vmem:[%s148 + $0xb8] sm:$0xff] %v2375
      %2818 = vst [vmem:[%s148 + $0xc0] sm:$0xff] %v2380
      %2819 = vst [vmem:[%s148 + $0xc8] sm:$0xff] %v2383
      %2820 = vst [vmem:[%s148 + $0xd0] sm:$0xff] %v2388
      %2821 = vst [vmem:[%s148 + $0xd8] sm:$0xff] %v2391
      %2822 = vst [vmem:[%s148 + $0xe0] sm:$0xff] %v2396
      %2823 = vst [vmem:[%s148 + $0xe8] sm:$0xff] %v2399
      %2824 = vst [vmem:[%s148 + $0xf0] sm:$0xff] %v2404
      %2825 = vst [vmem:[%s148 + $0xf8] sm:$0xff] %v2407
      %2826 = vst [vmem:[%s148 + $0x100] sm:$0xff] %v2412
      %2827 = vst [vmem:[%s148 + $0x108] sm:$0xff] %v2415
      %2828 = vst [vmem:[%s148 + $0x110] sm:$0xff] %v2420
      %2829 = vst [vmem:[%s148 + $0x118] sm:$0xff] %v2423
      %2830 = vst [vmem:[%s148 + $0x120] sm:$0xff] %v2428
      %2831 = vst [vmem:[%s148 + $0x128] sm:$0xff] %v2431
      %2832 = vst [vmem:[%s148 + $0x130] sm:$0xff] %v2436
      %2833 = vst [vmem:[%s148 + $0x138] sm:$0xff] %v2439
      %2834 = vst [vmem:[%s148 + $0x140] sm:$0xff] %v2444
      %2835 = vst [vmem:[%s148 + $0x148] sm:$0xff] %v2447
      %2836 = vst [vmem:[%s148 + $0x150] sm:$0xff] %v2452
      %2837 = vst [vmem:[%s148 + $0x158] sm:$0xff] %v2455
      %2838 = vst [vmem:[%s148 + $0x160] sm:$0xff] %v2460
      %2839 = vst [vmem:[%s148 + $0x168] sm:$0xff] %v2463
      %2840 = vst [vmem:[%s148 + $0x170] sm:$0xff] %v2468
      %2841 = vst [vmem:[%s148 + $0x178] sm:$0xff] %v2471
      %2842 = vst [vmem:[%s148 + $0x180] sm:$0xff] %v2476
      %2843 = vst [vmem:[%s148 + $0x188] sm:$0xff] %v2479
      %2844 = vst [vmem:[%s148 + $0x190] sm:$0xff] %v2484
      %2845 = vst [vmem:[%s148 + $0x198] sm:$0xff] %v2487
      %2846 = vst [vmem:[%s148 + $0x1a0] sm:$0xff] %v2492
      %2847 = vst [vmem:[%s148 + $0x1a8] sm:$0xff] %v2495
      %2848 = vst [vmem:[%s148 + $0x1b0] sm:$0xff] %v2500
      %2849 = vst [vmem:[%s148 + $0x1b8] sm:$0xff] %v2503
      %2850 = vst [vmem:[%s148 + $0x1c0] sm:$0xff] %v2508
      %2851 = vst [vmem:[%s148 + $0x1c8] sm:$0xff] %v2511
      %2852 = vst [vmem:[%s148 + $0x1d0] sm:$0xff] %v2516
      %2853 = vst [vmem:[%s148 + $0x1d8] sm:$0xff] %v2519
      %2854 = vst [vmem:[%s148 + $0x1e0] sm:$0xff] %v2524
      %2855 = vst [vmem:[%s148 + $0x1e8] sm:$0xff] %v2527
      %2856 = vst [vmem:[%s148 + $0x1f0] sm:$0xff] %v2532
      %2857 = vst [vmem:[%s148 + $0x1f8] sm:$0xff] %v2535
      %2858 = vst [vmem:[%s148 + $0x200] sm:$0xff] %v2540
      %2859 = vst [vmem:[%s148 + $0x208] sm:$0xff] %v2543
      %2860 = vst [vmem:[%s148 + $0x210] sm:$0xff] %v2548
      %2861 = vst [vmem:[%s148 + $0x218] sm:$0xff] %v2551
      %2862 = vst [vmem:[%s148 + $0x220] sm:$0xff] %v2556
      %2863 = vst [vmem:[%s148 + $0x228] sm:$0xff] %v2559
      %2864 = vst [vmem:[%s148 + $0x230] sm:$0xff] %v2564
      %2865 = vst [vmem:[%s148 + $0x238] sm:$0xff] %v2567
      %2866 = vst [vmem:[%s148 + $0x240] sm:$0xff] %v2572
      %2867 = vst [vmem:[%s148 + $0x248] sm:$0xff] %v2575
      %2868 = vst [vmem:[%s148 + $0x250] sm:$0xff] %v2580
      %2869 = vst [vmem:[%s148 + $0x258] sm:$0xff] %v2583
      %2870 = vst [vmem:[%s148 + $0x260] sm:$0xff] %v2588
      %2871 = vst [vmem:[%s148 + $0x268] sm:$0xff] %v2591
      %2872 = vst [vmem:[%s148 + $0x270] sm:$0xff] %v2596
      %2873 = vst [vmem:[%s148 + $0x278] sm:$0xff] %v2599
      %2874 = vst [vmem:[%s148 + $0x280] sm:$0xff] %v2604
      %2875 = vst [vmem:[%s148 + $0x288] sm:$0xff] %v2607
      %2876 = vst [vmem:[%s148 + $0x290] sm:$0xff] %v2612
      %2877 = vst [vmem:[%s148 + $0x298] sm:$0xff] %v2615
      %2878 = vst [vmem:[%s148 + $0x2a0] sm:$0xff] %v2620
      %2879 = vst [vmem:[%s148 + $0x2a8] sm:$0xff] %v2623
      %2880 = vst [vmem:[%s148 + $0x2b0] sm:$0xff] %v2628
      %2881 = vst [vmem:[%s148 + $0x2b8] sm:$0xff] %v2631
      %2882 = vst [vmem:[%s148 + $0x2c0] sm:$0xff] %v2636
      %2883 = vst [vmem:[%s148 + $0x2c8] sm:$0xff] %v2639
      %2884 = vst [vmem:[%s148 + $0x2d0] sm:$0xff] %v2644
      %2885 = vst [vmem:[%s148 + $0x2d8] sm:$0xff] %v2647
      %2886 = vst [vmem:[%s148 + $0x2e0] sm:$0xff] %v2652
      %2887 = vst [vmem:[%s148 + $0x2e8] sm:$0xff] %v2655
      %2888 = vst [vmem:[%s148 + $0x2f0] sm:$0xff] %v2660
      %2889 = vst [vmem:[%s148 + $0x2f8] sm:$0xff] %v2663
      %2890 = vst [vmem:[%s148 + $0x300] sm:$0xff] %v2668
      %2891 = vst [vmem:[%s148 + $0x308] sm:$0xff] %v2671
      %2892 = vst [vmem:[%s148 + $0x310] sm:$0xff] %v2676
      %2893 = vst [vmem:[%s148 + $0x318] sm:$0xff] %v2679
      %2894 = vst [vmem:[%s148 + $0x320] sm:$0xff] %v2684
      %2895 = vst [vmem:[%s148 + $0x328] sm:$0xff] %v2687
      %2896 = vst [vmem:[%s148 + $0x330] sm:$0xff] %v2692
      %2897 = vst [vmem:[%s148 + $0x338] sm:$0xff] %v2695
      %2898 = vst [vmem:[%s148 + $0x340] sm:$0xff] %v2700
      %2899 = vst [vmem:[%s148 + $0x348] sm:$0xff] %v2703
      %2900 = vst [vmem:[%s148 + $0x350] sm:$0xff] %v2708
      %2901 = vst [vmem:[%s148 + $0x358] sm:$0xff] %v2711
      %2902 = vst [vmem:[%s148 + $0x360] sm:$0xff] %v2716
      %2903 = vst [vmem:[%s148 + $0x368] sm:$0xff] %v2719
      %2904 = vst [vmem:[%s148 + $0x370] sm:$0xff] %v2724
      %2905 = vst [vmem:[%s148 + $0x378] sm:$0xff] %v2727
      %2906 = vst [vmem:[%s148 + $0x380] sm:$0xff] %v2732
      %2907 = vst [vmem:[%s148 + $0x388] sm:$0xff] %v2735
      %2908 = vst [vmem:[%s148 + $0x390] sm:$0xff] %v2740
      %2909 = vst [vmem:[%s148 + $0x398] sm:$0xff] %v2743
      %2910 = vst [vmem:[%s148 + $0x3a0] sm:$0xff] %v2748
      %2911 = vst [vmem:[%s148 + $0x3a8] sm:$0xff] %v2751
      %2912 = vst [vmem:[%s148 + $0x3b0] sm:$0xff] %v2756
      %2913 = vst [vmem:[%s148 + $0x3b8] sm:$0xff] %v2759
      %2914 = vst [vmem:[%s148 + $0x3c0] sm:$0xff] %v2764
      %2915 = vst [vmem:[%s148 + $0x3c8] sm:$0xff] %v2767
      %2916 = vst [vmem:[%s148 + $0x3d0] sm:$0xff] %v2772
      %2917 = vst [vmem:[%s148 + $0x3d8] sm:$0xff] %v2775
      %2918 = vst [vmem:[%s148 + $0x3e0] sm:$0xff] %v2780
      %2919 = vst [vmem:[%s148 + $0x3e8] sm:$0xff] %v2783
      %2920 = vst [vmem:[%s148 + $0x3f0] sm:$0xff] %v2788
      %2921 = vst [vmem:[%s148 + $0x3f8] sm:$0xff] %v2791
      %s2922 = smul.u32 128, %s13
      %p2923 = scmp.lt.s32.totalorder %s2922, 255
      %s2924 = scalar_select %p2923, %s2922, 255
      %s2925 = smul.addr %s2924, 8
      %s2926 = scalar_lea.vmem %s2, %s2925
      // Predicated region
      $region29: #{generator_forward.16} parent=27 // pred_check
        %p2927 = pneg %p78
      $region30: #{generator_forward.16} parent=27 // pred_check_branch
        %2929 = sbr.rel (%p2927) target = $region32
      $region31: #{generator_forward.16} parent=27 // pred_region
        %s2930 = smul.u32 128, %s13
      $region32: #{generator_forward.16} parent=27 // pred_fallthru
        _
    $region28: #{generator_forward.16} parent=5 // pred_fallthru
      _
    %p2931 = scmp.le.s32.totalorder 2, %s8
    // Predicated region
    $region33: #{generator_forward.16} parent=5 // pred_check
      %p2932 = pneg %p2931
    $region34: #{generator_forward.16} parent=5 // pred_check_branch
      %2934 = sbr.rel (%p2932) target = $region36
    $region35: #{generator_forward.16} parent=5 // pred_region
      %s2935 = ssub.s32 %s8, 2
      // Predicated region
      $region37: #{generator_forward.16} parent=35 // pred_check
        %p2936 = pneg %p84
      $region38: #{generator_forward.16} parent=35 // pred_check_branch
        %2938 = sbr.rel (%p2936) target = $region40
      $region39: #{generator_forward.16} parent=35 // pred_region
        %s2939 = smul.u32 128, %s14
        %p2940 = scmp.lt.s32.totalorder %s2939, 255
        %s2941 = scalar_select %p2940, %s2939, 255
        %s2942 = smul.addr %s2941, 8
        %s2943 = scalar_lea.vmem %s2, %s2942
      $region40: #{generator_forward.16} parent=35 // pred_fallthru
        _
    $region36: #{generator_forward.16} parent=5 // pred_fallthru
      _
  $region6: #{generator_forward.16} parent=0 // loop_footer
    %s12 = sadd.s32 1, %s8
  $region7: #{generator_forward.16} parent=0 // loop_footer_branch
    %7 = sbr.rel target = $region3
  $region8: #{generator_forward.16} parent=0 // loop_exit
    _

</llo_original>
